<compile_context>
chip_gen: v7x
topology: tpu7x:2x2x1
jax: 0.10.0
libtpu: 0.0.40
codegen_flags: <defaults>
</compile_context>

<pallas_src>
import numpy as np
import jax
import jax.numpy as jnp
from jax.experimental import pallas as pl
from jax.experimental.pallas import tpu as pltpu


# ---------------------------------------------------------------------------
# Fused kernel: per-point MLP + ReLU + running max over points + FC head.
# Grid = (B, N // TN); batch axis "parallel", points axis "arbitrary".
# Activations are (channels, points): points stay lane-dense throughout.
# ---------------------------------------------------------------------------
def _stn3d_kernel(x_ref, w1_ref, b1_ref, w2_ref, b2_ref, w3_ref, b3_ref,
                  w4_ref, b4_ref, w5_ref, b5_ref, w6_ref, b6_ref,
                  out_ref, max_ref):
    n = pl.program_id(1)
    n_last = pl.num_programs(1) - 1

    x = x_ref[0]                                   # (C, TN), points lane-dense
    c_dim = x.shape[0]

    # ---- layer 1: K = C is tiny -> VPU broadcast FMAs, not an MXU matmul ----
    if c_dim <= 8:
        h = w1_ref[:, 0:1] * x[0:1, :]             # (64,1)*(1,TN) -> (64,TN)
        for c in range(1, c_dim):
            h = h + w1_ref[:, c:c + 1] * x[c:c + 1, :]
    else:                                          # generic channel count
        h = jnp.dot(w1_ref[...], x, preferred_element_type=jnp.float32)
    h = jnp.maximum(h + b1_ref[...], 0.0)          # (64, TN)

    # ---- layers 2-3: MXU matmuls (f32 accumulate) ---------------------------
    h = jnp.maximum(jnp.dot(w2_ref[...], h, preferred_element_type=jnp.float32)
                    + b2_ref[...], 0.0)            # (128, TN)
    h = jnp.maximum(jnp.dot(w3_ref[...], h, preferred_element_type=jnp.float32)
                    + b3_ref[...], 0.0)            # (1024, TN)

    # ---- running max over points (XLU lane reduce + VPU elementwise max) ----
    tile_max = jnp.max(h, axis=1, keepdims=True)   # (1024, 1)

    @pl.when(n == 0)
    def _():
        max_ref[...] = jnp.full_like(max_ref, -jnp.inf)

    max_ref[...] = jnp.maximum(max_ref[...], tile_max)   # (1024, 128) replicated

    # ---- fused FC head, only on the final points tile -----------------------
    @pl.when(n == n_last)
    def _():
        p = max_ref[...]                           # (1024, 128), lanes identical
        h4 = jnp.maximum(
            jnp.dot(w4_ref[...], p, preferred_element_type=jnp.float32)
            + b4_ref[...], 0.0)                    # (512, 128)
        h5 = jnp.maximum(
            jnp.dot(w5_ref[...], h4, preferred_element_type=jnp.float32)
            + b5_ref[...], 0.0)                    # (256, 128)
        y = (jnp.dot(w6_ref[...], h5, preferred_element_type=jnp.float32)
             + b6_ref[...])                        # (9, 128); iden folded in b6
        out_ref[0] = y                             # lane 0 holds the answer


def stn3d_forward(x_bcn, params, tile_n=512):
    """x_bcn: (B, C, N) -- same layout as the PyTorch module's Conv1d input."""
    (w1, b1), (w2, b2), (w3, b3), (w4, b4), (w5, b5), (w6, b6) = params
    B, C, N = x_bcn.shape

    # Points-axis tile: full N if it fits, else a multiple of 128 (lane tiling).
    if N <= tile_n:
        TN = N
    else:
        TN = max(128, (min(tile_n, N) // 128) * 128)
        if N % TN:
            # Ragged N: edge-replicate points; duplicates cannot change the max.
            pad = TN - (N % TN)
            x_bcn = jnp.pad(x_bcn, ((0, 0), (0, 0), (0, pad)), mode="edge")
            N = N + pad

    iden = jnp.array([1, 0, 0, 0, 1, 0, 0, 0, 1], jnp.float32).reshape(9, 1)
    b6_eff = b6 + iden                              # fold the identity-matrix bias

    const = lambda b, n: (0, 0)                     # resident weight/bias blocks
    out = pl.pallas_call(
        _stn3d_kernel,
        out_shape=jax.ShapeDtypeStruct((B, 9, 128), jnp.float32),
        grid=(B, N // TN),
        in_specs=[
            pl.BlockSpec((1, C, TN), lambda b, n: (b, 0, n)),   # points, lane-dense
            pl.BlockSpec((64, C), const), pl.BlockSpec((64, 1), const),
            pl.BlockSpec((128, 64), const), pl.BlockSpec((128, 1), const),
            pl.BlockSpec((1024, 128), const), pl.BlockSpec((1024, 1), const),
            pl.BlockSpec((512, 1024), const), pl.BlockSpec((512, 1), const),
            pl.BlockSpec((256, 512), const), pl.BlockSpec((256, 1), const),
            pl.BlockSpec((9, 256), const), pl.BlockSpec((9, 1), const),
        ],
        out_specs=pl.BlockSpec((1, 9, 128), lambda b, n: (b, 0, 0)),
        scratch_shapes=[pltpu.VMEM((1024, 128), jnp.float32)],   # running max
        compiler_params=pltpu.CompilerParams(
            dimension_semantics=("parallel", "arbitrary"),
            vmem_limit_bytes=32 * 1024 * 1024),     # ~12 MiB used; safe on v7x 64 MiB
    )(x_bcn, w1, b1, w2, b2, w3, b3, w4, b4, w5, b5, w6, b6_eff)

    return out[:, :, 0].reshape(B, 3, 3)


# ---------------------------------------------------------------------------
# Parameter setup (deterministic, synthetic) with folded inference-mode BN.
# Weights are stored pre-transposed as (out, in); biases as (out, 1) columns.
# ---------------------------------------------------------------------------
def _fold_bn(w_t, b, gamma, beta, mean, var, eps=1e-5):
    scale = gamma / jnp.sqrt(var + eps)
    return w_t * scale[:, None], (b - mean) * scale + beta


def init_params(key, channel):
    def dense_t(k, din, dout):
        kw, kb = jax.random.split(k)
        w = 0.1 * jax.random.normal(kw, (dout, din), jnp.float32)
        b = 0.01 * jax.random.normal(kb, (dout,), jnp.float32)
        return w, b

    def bn(k, d):
        k1, k2, k3, k4 = jax.random.split(k, 4)
        gamma = 1.0 + 0.1 * jax.random.normal(k1, (d,), jnp.float32)
        beta = 0.1 * jax.random.normal(k2, (d,), jnp.float32)
        mean = 0.1 * jax.random.normal(k3, (d,), jnp.float32)
        var = 1.0 + 0.1 * jnp.abs(jax.random.normal(k4, (d,), jnp.float32))
        return gamma, beta, mean, var

    keys = jax.random.split(key, 12)
    dims = [(channel, 64), (64, 128), (128, 1024), (1024, 512), (512, 256)]
    params = []
    for i, (din, dout) in enumerate(dims):
        w, b = dense_t(keys[2 * i], din, dout)
        wf, bf = _fold_bn(w, b, *bn(keys[2 * i + 1], dout))
        params.append((wf, bf.reshape(dout, 1)))
    w6, b6 = dense_t(keys[10], 256, 9)               # fc3 (no BN)
    params.append((w6, b6.reshape(9, 1)))
    return params


# Pure-JAX reference (correctness check only).
def stn3d_ref(x_bcn, params):
    (w1, b1), (w2, b2), (w3, b3), (w4, b4), (w5, b5), (w6, b6) = params
    relu = jax.nn.relu
    h = relu(jnp.einsum("oc,bcn->bon", w1, x_bcn, precision="highest") + b1[None])
    h = relu(jnp.einsum("oc,bcn->bon", w2, h, precision="highest") + b2[None])
    h = relu(jnp.einsum("oc,bcn->bon", w3, h, precision="highest") + b3[None])
    p = jnp.max(h, axis=2)                           # (B, 1024)
    h = relu(jnp.dot(p, w4.T, precision="highest") + b4[:, 0])
    h = relu(jnp.dot(h, w5.T, precision="highest") + b5[:, 0])
    y = jnp.dot(h, w6.T, precision="highest") + b6[:, 0]
    iden = jnp.array([1, 0, 0, 0, 1, 0, 0, 0, 1], jnp.float32)[None, :]
    return (y + iden).reshape(-1, 3, 3)


if __name__ == "__main__":
    B, C, N = 2, 3, 256          # batch, point channels (xyz), number of points
    key = jax.random.PRNGKey(0)
    kx, kp = jax.random.split(key)
    x = jax.random.normal(kx, (B, C, N), jnp.float32)
    params = init_params(kp, C)

    fwd = jax.jit(stn3d_forward, static_argnames="tile_n")
    out = jax.block_until_ready(fwd(x, params, tile_n=128))   # grid (2, 2): exercises the running max
    assert out.shape == (B, 3, 3) and out.dtype == jnp.float32

    ref = jax.block_until_ready(stn3d_ref(x, params))
    np.testing.assert_allclose(np.asarray(out), np.asarray(ref),
                               rtol=2e-3, atol=2e-3)
    print("KERNEL_OK")
</pallas_src>

<mosaic_0001>
module attributes {stable_mosaic.version = 11 : i64} {
  func.func @_stn3d_kernel(%arg0: i32, %arg1: i32, %arg2: memref<1x3x128xf32, #tpu.memory_space<vmem>>, %arg3: memref<64x3xf32, #tpu.memory_space<vmem>>, %arg4: memref<64x1xf32, #tpu.memory_space<vmem>>, %arg5: memref<128x64xf32, #tpu.memory_space<vmem>>, %arg6: memref<128x1xf32, #tpu.memory_space<vmem>>, %arg7: memref<1024x128xf32, #tpu.memory_space<vmem>>, %arg8: memref<1024x1xf32, #tpu.memory_space<vmem>>, %arg9: memref<512x1024xf32, #tpu.memory_space<vmem>>, %arg10: memref<512x1xf32, #tpu.memory_space<vmem>>, %arg11: memref<256x512xf32, #tpu.memory_space<vmem>>, %arg12: memref<256x1xf32, #tpu.memory_space<vmem>>, %arg13: memref<9x256xf32, #tpu.memory_space<vmem>>, %arg14: memref<9x1xf32, #tpu.memory_space<vmem>>, %arg15: memref<1x9x128xf32, #tpu.memory_space<vmem>>, %arg16: memref<1024x128xf32, #tpu.memory_space<vmem>>) attributes {dimension_semantics = [#tpu.dimension_semantics<parallel>, #tpu.dimension_semantics<arbitrary>], iteration_bounds = array<i64: 2, 2>, scalar_prefetch = 0 : i64, scratch_operands = 1 : i64, tpu.core_type = #tpu.core_type<tc>, window_params = [{transform_indices = @transform_0, window_bounds = array<i64: 1, 3, 128>}, {pipeline_mode = #tpu.pipeline_mode<synchronous>, transform_indices = @transform_1, window_bounds = array<i64: 64, 3>}, {pipeline_mode = #tpu.pipeline_mode<synchronous>, transform_indices = @transform_2, window_bounds = array<i64: 64, 1>}, {pipeline_mode = #tpu.pipeline_mode<synchronous>, transform_indices = @transform_3, window_bounds = array<i64: 128, 64>}, {pipeline_mode = #tpu.pipeline_mode<synchronous>, transform_indices = @transform_4, window_bounds = array<i64: 128, 1>}, {pipeline_mode = #tpu.pipeline_mode<synchronous>, transform_indices = @transform_5, window_bounds = array<i64: 1024, 128>}, {pipeline_mode = #tpu.pipeline_mode<synchronous>, transform_indices = @transform_6, window_bounds = array<i64: 1024, 1>}, {pipeline_mode = #tpu.pipeline_mode<synchronous>, transform_indices = @transform_7, window_bounds = array<i64: 512, 1024>}, {pipeline_mode = #tpu.pipeline_mode<synchronous>, transform_indices = @transform_8, window_bounds = array<i64: 512, 1>}, {pipeline_mode = #tpu.pipeline_mode<synchronous>, transform_indices = @transform_9, window_bounds = array<i64: 256, 512>}, {pipeline_mode = #tpu.pipeline_mode<synchronous>, transform_indices = @transform_10, window_bounds = array<i64: 256, 1>}, {pipeline_mode = #tpu.pipeline_mode<synchronous>, transform_indices = @transform_11, window_bounds = array<i64: 9, 256>}, {pipeline_mode = #tpu.pipeline_mode<synchronous>, transform_indices = @transform_12, window_bounds = array<i64: 9, 1>}, {transform_indices = @transform_13, window_bounds = array<i64: 1, 9, 128>}]} {
    %c0 = arith.constant 0 : index
    %c0_0 = arith.constant 0 : index
    %c0_1 = arith.constant 0 : index
    %0 = vector.load %arg2[%c0, %c0_0, %c0_1] : memref<1x3x128xf32, #tpu.memory_space<vmem>>, vector<1x3x128xf32>
    %1 = vector.shape_cast %0 : vector<1x3x128xf32> to vector<3x128xf32>
    %c0_2 = arith.constant 0 : index
    %c0_3 = arith.constant 0 : index
    %2 = vector.load %arg3[%c0_2, %c0_3] : memref<64x3xf32, #tpu.memory_space<vmem>>, vector<64x1xf32>
    %3 = vector.extract_strided_slice %1 {offsets = [0, 0], sizes = [1, 128], strides = [1, 1]} : vector<3x128xf32> to vector<1x128xf32>
    %4 = vector.broadcast %2 : vector<64x1xf32> to vector<64x128xf32>
    %5 = vector.broadcast %3 : vector<1x128xf32> to vector<64x128xf32>
    %6 = arith.mulf %4, %5 : vector<64x128xf32>
    %c0_4 = arith.constant 0 : index
    %c1 = arith.constant 1 : index
    %7 = vector.load %arg3[%c0_4, %c1] : memref<64x3xf32, #tpu.memory_space<vmem>>, vector<64x1xf32>
    %8 = vector.extract_strided_slice %1 {offsets = [1, 0], sizes = [1, 128], strides = [1, 1]} : vector<3x128xf32> to vector<1x128xf32>
    %9 = vector.broadcast %7 : vector<64x1xf32> to vector<64x128xf32>
    %10 = vector.broadcast %8 : vector<1x128xf32> to vector<64x128xf32>
    %11 = arith.mulf %9, %10 : vector<64x128xf32>
    %12 = arith.addf %6, %11 : vector<64x128xf32>
    %c0_5 = arith.constant 0 : index
    %c2 = arith.constant 2 : index
    %13 = vector.load %arg3[%c0_5, %c2] : memref<64x3xf32, #tpu.memory_space<vmem>>, vector<64x1xf32>
    %14 = vector.extract_strided_slice %1 {offsets = [2, 0], sizes = [1, 128], strides = [1, 1]} : vector<3x128xf32> to vector<1x128xf32>
    %15 = vector.broadcast %13 : vector<64x1xf32> to vector<64x128xf32>
    %16 = vector.broadcast %14 : vector<1x128xf32> to vector<64x128xf32>
    %17 = arith.mulf %15, %16 : vector<64x128xf32>
    %18 = arith.addf %12, %17 : vector<64x128xf32>
    %c0_6 = arith.constant 0 : index
    %c0_7 = arith.constant 0 : index
    %19 = vector.load %arg4[%c0_6, %c0_7] : memref<64x1xf32, #tpu.memory_space<vmem>>, vector<64x1xf32>
    %20 = vector.broadcast %19 : vector<64x1xf32> to vector<64x128xf32>
    %21 = arith.addf %18, %20 : vector<64x128xf32>
    %cst = arith.constant 0.000000e+00 : f32
    %22 = vector.broadcast %cst : f32 to vector<64x128xf32>
    %23 = arith.maximumf %21, %22 : vector<64x128xf32>
    %c0_8 = arith.constant 0 : index
    %c0_9 = arith.constant 0 : index
    %24 = vector.load %arg5[%c0_8, %c0_9] : memref<128x64xf32, #tpu.memory_space<vmem>>, vector<128x64xf32>
    %cst_10 = arith.constant dense<0.000000e+00> : vector<128x128xf32>
    %25 = tpu.matmul %24, %23, %cst_10 {dimension_numbers = #tpu.dot_dimension_numbers<[1], [0], [0], [1], [0, 0, 1, 1], [], []>} : vector<128x64xf32>, vector<64x128xf32>, vector<128x128xf32> -> vector<128x128xf32>
    %c0_11 = arith.constant 0 : index
    %c0_12 = arith.constant 0 : index
    %26 = vector.load %arg6[%c0_11, %c0_12] : memref<128x1xf32, #tpu.memory_space<vmem>>, vector<128x1xf32>
    %27 = vector.broadcast %26 : vector<128x1xf32> to vector<128x128xf32>
    %28 = arith.addf %25, %27 : vector<128x128xf32>
    %cst_13 = arith.constant 0.000000e+00 : f32
    %29 = vector.broadcast %cst_13 : f32 to vector<128x128xf32>
    %30 = arith.maximumf %28, %29 : vector<128x128xf32>
    %c0_14 = arith.constant 0 : index
    %c0_15 = arith.constant 0 : index
    %31 = vector.load %arg7[%c0_14, %c0_15] : memref<1024x128xf32, #tpu.memory_space<vmem>>, vector<1024x128xf32>
    %cst_16 = arith.constant dense<0.000000e+00> : vector<1024x128xf32>
    %32 = tpu.matmul %31, %30, %cst_16 {dimension_numbers = #tpu.dot_dimension_numbers<[1], [0], [0], [1], [0, 0, 1, 1], [], []>} : vector<1024x128xf32>, vector<128x128xf32>, vector<1024x128xf32> -> vector<1024x128xf32>
    %c0_17 = arith.constant 0 : index
    %c0_18 = arith.constant 0 : index
    %33 = vector.load %arg8[%c0_17, %c0_18] : memref<1024x1xf32, #tpu.memory_space<vmem>>, vector<1024x1xf32>
    %34 = vector.broadcast %33 : vector<1024x1xf32> to vector<1024x128xf32>
    %35 = arith.addf %32, %34 : vector<1024x128xf32>
    %cst_19 = arith.constant 0.000000e+00 : f32
    %36 = vector.broadcast %cst_19 : f32 to vector<1024x128xf32>
    %37 = arith.maximumf %35, %36 : vector<1024x128xf32>
    %cst_20 = arith.constant dense<0xFF800000> : vector<1024xf32>
    %38 = vector.multi_reduction <maximumf>, %37, %cst_20 [1] : vector<1024x128xf32> to vector<1024xf32>
    %39 = vector.shape_cast %38 : vector<1024xf32> to vector<1024x1xf32>
    %c0_i32 = arith.constant 0 : i32
    %40 = arith.cmpi eq, %arg1, %c0_i32 : i32
    %41 = arith.extui %40 : i1 to i32
    %c0_i32_21 = arith.constant 0 : i32
    %42 = arith.cmpi ne, %41, %c0_i32_21 : i32
    scf.if %42 {
      %cst_27 = arith.constant 0xFF800000 : f32
      %50 = vector.broadcast %cst_27 : f32 to vector<1024x128xf32>
      %c0_28 = arith.constant 0 : index
      %c0_29 = arith.constant 0 : index
      %51 = vector.load %arg16[%c0_28, %c0_29] : memref<1024x128xf32, #tpu.memory_space<vmem>>, vector<1024x128xf32>
      tpu.vector_store %arg16[%c0_28, %c0_29], %50 {strides = array<i32>} : memref<1024x128xf32, #tpu.memory_space<vmem>>, vector<1024x128xf32>,
    } else {
    }
    %c0_22 = arith.constant 0 : index
    %c0_23 = arith.constant 0 : index
    %43 = vector.load %arg16[%c0_22, %c0_23] : memref<1024x128xf32, #tpu.memory_space<vmem>>, vector<1024x128xf32>
    %44 = vector.broadcast %39 : vector<1024x1xf32> to vector<1024x128xf32>
    %45 = arith.maximumf %43, %44 : vector<1024x128xf32>
    %c0_24 = arith.constant 0 : index
    %c0_25 = arith.constant 0 : index
    %46 = vector.load %arg16[%c0_24, %c0_25] : memref<1024x128xf32, #tpu.memory_space<vmem>>, vector<1024x128xf32>
    tpu.vector_store %arg16[%c0_24, %c0_25], %45 {strides = array<i32>} : memref<1024x128xf32, #tpu.memory_space<vmem>>, vector<1024x128xf32>,
    %c1_i32 = arith.constant 1 : i32
    %47 = arith.cmpi eq, %arg1, %c1_i32 : i32
    %48 = arith.extui %47 : i1 to i32
    %c0_i32_26 = arith.constant 0 : i32
    %49 = arith.cmpi ne, %48, %c0_i32_26 : i32
    scf.if %49 {
      %c0_27 = arith.constant 0 : index
      %c0_28 = arith.constant 0 : index
      %50 = vector.load %arg16[%c0_27, %c0_28] : memref<1024x128xf32, #tpu.memory_space<vmem>>, vector<1024x128xf32>
      %c0_29 = arith.constant 0 : index
      %c0_30 = arith.constant 0 : index
      %51 = vector.load %arg9[%c0_29, %c0_30] : memref<512x1024xf32, #tpu.memory_space<vmem>>, vector<512x1024xf32>
      %cst_31 = arith.constant dense<0.000000e+00> : vector<512x128xf32>
      %52 = tpu.matmul %51, %50, %cst_31 {dimension_numbers = #tpu.dot_dimension_numbers<[1], [0], [0], [1], [0, 0, 1, 1], [], []>} : vector<512x1024xf32>, vector<1024x128xf32>, vector<512x128xf32> -> vector<512x128xf32>
      %c0_32 = arith.constant 0 : index
      %c0_33 = arith.constant 0 : index
      %53 = vector.load %arg10[%c0_32, %c0_33] : memref<512x1xf32, #tpu.memory_space<vmem>>, vector<512x1xf32>
      %54 = vector.broadcast %53 : vector<512x1xf32> to vector<512x128xf32>
      %55 = arith.addf %52, %54 : vector<512x128xf32>
      %cst_34 = arith.constant 0.000000e+00 : f32
      %56 = vector.broadcast %cst_34 : f32 to vector<512x128xf32>
      %57 = arith.maximumf %55, %56 : vector<512x128xf32>
      %c0_35 = arith.constant 0 : index
      %c0_36 = arith.constant 0 : index
      %58 = vector.load %arg11[%c0_35, %c0_36] : memref<256x512xf32, #tpu.memory_space<vmem>>, vector<256x512xf32>
      %cst_37 = arith.constant dense<0.000000e+00> : vector<256x128xf32>
      %59 = tpu.matmul %58, %57, %cst_37 {dimension_numbers = #tpu.dot_dimension_numbers<[1], [0], [0], [1], [0, 0, 1, 1], [], []>} : vector<256x512xf32>, vector<512x128xf32>, vector<256x128xf32> -> vector<256x128xf32>
      %c0_38 = arith.constant 0 : index
      %c0_39 = arith.constant 0 : index
      %60 = vector.load %arg12[%c0_38, %c0_39] : memref<256x1xf32, #tpu.memory_space<vmem>>, vector<256x1xf32>
      %61 = vector.broadcast %60 : vector<256x1xf32> to vector<256x128xf32>
      %62 = arith.addf %59, %61 : vector<256x128xf32>
      %cst_40 = arith.constant 0.000000e+00 : f32
      %63 = vector.broadcast %cst_40 : f32 to vector<256x128xf32>
      %64 = arith.maximumf %62, %63 : vector<256x128xf32>
      %c0_41 = arith.constant 0 : index
      %c0_42 = arith.constant 0 : index
      %65 = vector.load %arg13[%c0_41, %c0_42] : memref<9x256xf32, #tpu.memory_space<vmem>>, vector<9x256xf32>
      %cst_43 = arith.constant dense<0.000000e+00> : vector<9x128xf32>
      %66 = tpu.matmul %65, %64, %cst_43 {dimension_numbers = #tpu.dot_dimension_numbers<[1], [0], [0], [1], [0, 0, 1, 1], [], []>} : vector<9x256xf32>, vector<256x128xf32>, vector<9x128xf32> -> vector<9x128xf32>
      %c0_44 = arith.constant 0 : index
      %c0_45 = arith.constant 0 : index
      %67 = vector.load %arg14[%c0_44, %c0_45] : memref<9x1xf32, #tpu.memory_space<vmem>>, vector<9x1xf32>
      %68 = vector.broadcast %67 : vector<9x1xf32> to vector<9x128xf32>
      %69 = arith.addf %66, %68 : vector<9x128xf32>
      %c0_46 = arith.constant 0 : index
      %c0_47 = arith.constant 0 : index
      %c0_48 = arith.constant 0 : index
      %70 = vector.load %arg15[%c0_46, %c0_47, %c0_48] : memref<1x9x128xf32, #tpu.memory_space<vmem>>, vector<1x9x128xf32>
      %71 = vector.shape_cast %70 : vector<1x9x128xf32> to vector<9x128xf32>
      %72 = vector.shape_cast %69 : vector<9x128xf32> to vector<1x9x128xf32>
      tpu.vector_store %arg15[%c0_46, %c0_47, %c0_48], %72 {strides = array<i32>} : memref<1x9x128xf32, #tpu.memory_space<vmem>>, vector<1x9x128xf32>,
    } else {
    }
    return
  }
  func.func @transform_0(%arg0: i32, %arg1: i32) -> (i32, i32, i32) {
    %c0_i32 = arith.constant 0 : i32
    %c0_i32_0 = arith.constant 0 : i32
    return %arg0, %c0_i32, %arg1 : i32, i32, i32
  }
  func.func @transform_1(%arg0: i32, %arg1: i32) -> (i32, i32) {
    %c0_i32 = arith.constant 0 : i32
    %c0_i32_0 = arith.constant 0 : i32
    %c0_i32_1 = arith.constant 0 : i32
    return %c0_i32, %c0_i32_0 : i32, i32
  }
  func.func @transform_2(%arg0: i32, %arg1: i32) -> (i32, i32) {
    %c0_i32 = arith.constant 0 : i32
    %c0_i32_0 = arith.constant 0 : i32
    %c0_i32_1 = arith.constant 0 : i32
    return %c0_i32, %c0_i32_0 : i32, i32
  }
  func.func @transform_3(%arg0: i32, %arg1: i32) -> (i32, i32) {
    %c0_i32 = arith.constant 0 : i32
    %c0_i32_0 = arith.constant 0 : i32
    %c0_i32_1 = arith.constant 0 : i32
    return %c0_i32, %c0_i32_0 : i32, i32
  }
  func.func @transform_4(%arg0: i32, %arg1: i32) -> (i32, i32) {
    %c0_i32 = arith.constant 0 : i32
    %c0_i32_0 = arith.constant 0 : i32
    %c0_i32_1 = arith.constant 0 : i32
    return %c0_i32, %c0_i32_0 : i32, i32
  }
  func.func @transform_5(%arg0: i32, %arg1: i32) -> (i32, i32) {
    %c0_i32 = arith.constant 0 : i32
    %c0_i32_0 = arith.constant 0 : i32
    %c0_i32_1 = arith.constant 0 : i32
    return %c0_i32, %c0_i32_0 : i32, i32
  }
  func.func @transform_6(%arg0: i32, %arg1: i32) -> (i32, i32) {
    %c0_i32 = arith.constant 0 : i32
    %c0_i32_0 = arith.constant 0 : i32
    %c0_i32_1 = arith.constant 0 : i32
    return %c0_i32, %c0_i32_0 : i32, i32
  }
  func.func @transform_7(%arg0: i32, %arg1: i32) -> (i32, i32) {
    %c0_i32 = arith.constant 0 : i32
    %c0_i32_0 = arith.constant 0 : i32
    %c0_i32_1 = arith.constant 0 : i32
    return %c0_i32, %c0_i32_0 : i32, i32
  }
  func.func @transform_8(%arg0: i32, %arg1: i32) -> (i32, i32) {
    %c0_i32 = arith.constant 0 : i32
    %c0_i32_0 = arith.constant 0 : i32
    %c0_i32_1 = arith.constant 0 : i32
    return %c0_i32, %c0_i32_0 : i32, i32
  }
  func.func @transform_9(%arg0: i32, %arg1: i32) -> (i32, i32) {
    %c0_i32 = arith.constant 0 : i32
    %c0_i32_0 = arith.constant 0 : i32
    %c0_i32_1 = arith.constant 0 : i32
    return %c0_i32, %c0_i32_0 : i32, i32
  }
  func.func @transform_10(%arg0: i32, %arg1: i32) -> (i32, i32) {
    %c0_i32 = arith.constant 0 : i32
    %c0_i32_0 = arith.constant 0 : i32
    %c0_i32_1 = arith.constant 0 : i32
    return %c0_i32, %c0_i32_0 : i32, i32
  }
  func.func @transform_11(%arg0: i32, %arg1: i32) -> (i32, i32) {
    %c0_i32 = arith.constant 0 : i32
    %c0_i32_0 = arith.constant 0 : i32
    %c0_i32_1 = arith.constant 0 : i32
    return %c0_i32, %c0_i32_0 : i32, i32
  }
  func.func @transform_12(%arg0: i32, %arg1: i32) -> (i32, i32) {
    %c0_i32 = arith.constant 0 : i32
    %c0_i32_0 = arith.constant 0 : i32
    %c0_i32_1 = arith.constant 0 : i32
    return %c0_i32, %c0_i32_0 : i32, i32
  }
  func.func @transform_13(%arg0: i32, %arg1: i32) -> (i32, i32, i32) {
    %c0_i32 = arith.constant 0 : i32
    %c0_i32_0 = arith.constant 0 : i32
    %c0_i32_1 = arith.constant 0 : i32
    return %arg0, %c0_i32, %c0_i32_0 : i32, i32, i32
  }
}

</mosaic_0001>

<llo_original>
// kernel: squeeze.1
$region0: #{squeeze.1}
  %s0 = inlined_call_operand.vmem [shape: f32[2,9], index: 0, kind: input, shape index: {}]
  %s1 = inlined_call_operand.vmem [shape: f32[2,3,3], index: 1, kind: output, shape index: {}]
  $region1: #{squeeze.1} parent=0
    #allocation0 [shape = 'u8[8192]{0}', space=vmem, size = 0x2000, scoped, tag = 'scoped mem for output reshape']
    #allocation1 [shape = 'u8[4096]{0}', space=vmem, size = 0x1000, scoped, tag = 'scoped mem for input reshape']
    %s3 = sshllo.u32 0, 2
    %v4 = vld [vmem:[%s0] sm:%s3]
    %5 = vst [vmem:[#allocation1] sm:%s3] %v4
    %v6 = vld [vmem:[#allocation1] sm:$0x3]
    %vm7 = vcmask 23552
    %8 = vst.msk [vmem:[#allocation0] ss:$8 sm:$0x3] %vm7, %v6
    %v9 = vld [vmem:[#allocation1] sm:$0x3]
    %10 = vrot.lane.b32.xlu0 %v9, 125
    %v11 = vpop.permute.xlu0 %10
    %vm12 = vcmask 23552
    %s13 = scalar_lea.vmem [#allocation0], 1
    %14 = vst.msk [vmem:[%s13] ss:$8 sm:$0x3] %vm12, %v11
    %v15 = vld [vmem:[#allocation1] sm:$0x3]
    %16 = vrot.lane.b32.xlu0 %v15, 122
    %v17 = vpop.permute.xlu0 %16
    %vm18 = vcmask 23552
    %s19 = scalar_lea.vmem [#allocation0], 2
    %20 = vst.msk [vmem:[%s19] ss:$8 sm:$0x3] %vm18, %v17
    %s22 = sshllo.u32 0, 4
    %v24 = vld [vmem:[#allocation0] sm:%s22]
    %s25 = sshllo.u32 0, 4
    %26 = vst [vmem:[%s1] sm:%s25] %v24
    %s27 = scalar_lea.vmem [#allocation0], 8
    %v28 = vld [vmem:[%s27] sm:%s22]
    %s29 = sshllo.u32 0, 4
    %s30 = scalar_lea.vmem %s1, 4
    %31 = vst [vmem:[%s30] sm:%s29] %v28

// kernel: stn3d_forward.1
$region0: #{stn3d_forward.1}
  #allocation0 [shape = 'u32[]', space=smem, size = 0x4, offset = 0x4, fixed_abs, tag = 'smem constant byte address 0x4 - core index']
  #allocation1 [shape = 'u32[144,128]{1,0:T(1,128)}', space=vmem, size = 0x12000, scoped, tag = 'internal scratch']
  #allocation2 [shape = 'f32[1024,128]{1,0:T(8,128)}', space=vmem, size = 0x80000, scoped, tag = 'scratch operand']
  %s0 = inlined_call_operand.vmem [shape: f32[2,3,256], index: 0, kind: input, shape index: {}]
  %s1 = inlined_call_operand.vmem [shape: f32[64,3], index: 1, kind: input, shape index: {}]
  %s2 = inlined_call_operand.vmem [shape: f32[64,1], index: 2, kind: input, shape index: {}]
  %s3 = inlined_call_operand.vmem [shape: f32[128,64], index: 3, kind: input, shape index: {}]
  %s4 = inlined_call_operand.vmem [shape: f32[128,1], index: 4, kind: input, shape index: {}]
  %s5 = inlined_call_operand.hbm [shape: f32[1024,128], index: 5, kind: input, shape index: {}]
  %s6 = inlined_call_operand.vmem [shape: f32[1024,1], index: 6, kind: input, shape index: {}]
  %s7 = inlined_call_operand.hbm [shape: f32[512,1024], index: 7, kind: input, shape index: {}]
  %s8 = inlined_call_operand.vmem [shape: f32[512,1], index: 8, kind: input, shape index: {}]
  %s9 = inlined_call_operand.hbm [shape: f32[256,512], index: 9, kind: input, shape index: {}]
  %s10 = inlined_call_operand.vmem [shape: f32[256,1], index: 10, kind: input, shape index: {}]
  %s11 = inlined_call_operand.hbm [shape: f32[9,256], index: 11, kind: input, shape index: {}]
  %s12 = inlined_call_operand.vmem [shape: f32[9,1], index: 12, kind: input, shape index: {}]
  %s13 = inlined_call_operand.vmem [shape: f32[2,9,128], index: 13, kind: output, shape index: {}]
  %s14 = sld [smem:[#allocation0]]
  $region109: #{stn3d_forward.1} parent=0
    _
  %s16 = ssub.s32 1, %s14
  %s17 = scalar_select 0, %s16, %s14
  $region1: #{stn3d_forward.1} parent=0
    #allocation3 [shape = 'u8[524288]{0}', space=vmem, size = 0x80000, scoped, tag = 'input window, operand 5, single buffered']
    #allocation4 [shape = 's32[2]{0}', space=sflag, size = 0x8, scoped, tag = 'scoped memory for stn3d_forward.1']
    #allocation5 [shape = 'u8[2097152]{0}', space=vmem, size = 0x200000, scoped, tag = 'input window, operand 7, single buffered']
    #allocation6 [shape = 's32[1]{0}', space=sflag, size = 0x4, scoped, tag = 'scoped memory for stn3d_forward.1']
    #allocation7 [shape = 'u8[524288]{0}', space=vmem, size = 0x80000, scoped, tag = 'input window, operand 9, single buffered']
    #allocation8 [shape = 'u8[16384]{0}', space=vmem, size = 0x4000, scoped, tag = 'input window, operand 11, single buffered']
    #allocation9 [shape = 's32[1]{0}', space=sflag, size = 0x4, scoped, tag = 'scoped memory for stn3d_forward.1']
    %18 = vsyncpa [#allocation4], 0
    %19 = vsyncpa [#allocation6], 0
    %20 = vsyncpa [#allocation9], 0
    loop: start=0, step=1, limit=6
    $region2: #{stn3d_forward.1} parent=1 // loop_pre_header
      _
    $region3: #{stn3d_forward.1} parent=1 // loop_header
      %s22 = sphi 0, %s26
      %p23 = scmp.ge.s32.totalorder %s22, 6
      %s29 = sphi 0, %s41
      %s30 = sphi 0, %s37
      %s31 = sphi 0, %s29
      %s32 = sphi 0, %s30
      %s33 = sphi 0, %s31
      %s34 = sphi 0, %s32
      %s46 = sphi 0, %s48
      %s49 = sphi 0, %s46
      %s50 = sphi 0, %s49
      %s66 = sphi 0, %s50
      %s70 = sphi 0, %s70
      %s72 = sphi 0, %s70
      %s73 = sphi 0, %s72
      %s87 = sphi 0, %s73
      %s91 = sphi 0, %s91
      %s93 = sphi 0, %s91
      %s94 = sphi 0, %s93
      %s108 = sphi 0, %s94
      %s112 = sphi 0, %s112
      %s114 = sphi 0, %s112
      %s115 = sphi 0, %s114
      %s129 = sphi 0, %s115
      %s133 = sphi 0, %s133
      %s135 = sphi 0, %s133
      %s136 = sphi 0, %s135
      %s150 = sphi 0, %s136
      %s154 = sphi 0, %s154
      %s156 = sphi 0, %s154
      %s157 = sphi 0, %s156
      %s171 = sphi 0, %s157
      %s175 = sphi 0, %s175
      %s177 = sphi 0, %s175
      %s178 = sphi 0, %s177
      %s192 = sphi 0, %s178
      %s196 = sphi 0, %s196
      %s198 = sphi 0, %s196
      %s199 = sphi 0, %s198
      %s213 = sphi 0, %s199
      %s217 = sphi 0, %s217
      %s219 = sphi 0, %s217
      %s220 = sphi 0, %s219
      %s234 = sphi 0, %s220
      %s238 = sphi 0, %s238
      %s240 = sphi 0, %s238
      %s241 = sphi 0, %s240
      %s255 = sphi 0, %s241
      %s259 = sphi 0, %s259
      %s261 = sphi 0, %s259
      %s262 = sphi 0, %s261
      %s276 = sphi 0, %s262
      %s280 = sphi 0, %s280
      %s282 = sphi 0, %s280
      %s283 = sphi 0, %s282
      %s297 = sphi 0, %s283
      %s301 = sphi 0, %s301
      %s303 = sphi 0, %s301
      %s304 = sphi 0, %s303
      %s318 = sphi 0, %s304
      %s324 = sphi 0, %s326
      %s327 = sphi 0, %s324
      %s328 = sphi 0, %s327
      %s344 = sphi 0, %s328
    $region4: #{stn3d_forward.1} parent=1 // loop_header_branch
      %25 = sbr.rel (%p23) target = $region8
    $region5: #{stn3d_forward.1} parent=1 // loop_body
      %s27 = ssub.s32 %s22, 1
      %s28 = ssub.s32 %s22, 2
      %s35 = sadd.s32 1, %s30
      %p36 = scmp.ge.s32.totalorder %s35, 2
      %s37 = scalar_select %p36, 0, %s35
      %s38 = sadd.s32 1, %s29
      %s39 = scalar_select %p36, %s38, %s29
      %p40 = scmp.ge.s32.totalorder %s39, 2
      %s41 = scalar_select %p40, 0, %s39
      %s42 = ssub.s32 %s29, %s41
      %s43 = ssub.s32 %s30, %s37
      %s44 = sor.u32 %s42, %s43
      %p45 = scmp.eq.s32.totalorder %s44, 0
      %s47 = sadd.s32 %s46, 1
      %s48 = scalar_select %p45, %s46, %s47
      %p51 = pneg %p45
      %p52 = scmp.eq.s32.totalorder %s22, 3
      %p53 = por %p51, %p52
      %p54 = scmp.ne.s32.totalorder %s46, %s49
      %p55 = scmp.eq.s32.totalorder %s22, 0
      %p56 = por %p54, %p55
      %p57 = scmp.ne.s32.totalorder %s46, %s49
      %p58 = scmp.eq.s32.totalorder %s27, 3
      %p59 = por %p57, %p58
      %p60 = scmp.ne.s32.totalorder %s49, %s50
      %p61 = scmp.eq.s32.totalorder %s27, 0
      %p62 = por %p60, %p61
      %p63 = scmp.ne.s32.totalorder %s49, %s50
      %p64 = scmp.eq.s32.totalorder %s28, 3
      %p65 = por %p63, %p64
      %p67 = scmp.ne.s32.totalorder %s50, %s66
      %p68 = scmp.eq.s32.totalorder %s28, 0
      %p69 = por %p67, %p68
      %s71 = sadd.s32 %s70, 1
      %p74 = scmp.eq.s32.totalorder %s22, 3
      %p75 = scmp.ne.s32.totalorder %s70, %s72
      %p76 = scmp.eq.s32.totalorder %s22, 0
      %p77 = por %p75, %p76
      %p78 = scmp.ne.s32.totalorder %s70, %s72
      %p79 = scmp.eq.s32.totalorder %s27, 3
      %p80 = por %p78, %p79
      %p81 = scmp.ne.s32.totalorder %s72, %s73
      %p82 = scmp.eq.s32.totalorder %s27, 0
      %p83 = por %p81, %p82
      %p84 = scmp.ne.s32.totalorder %s72, %s73
      %p85 = scmp.eq.s32.totalorder %s28, 3
      %p86 = por %p84, %p85
      %p88 = scmp.ne.s32.totalorder %s73, %s87
      %p89 = scmp.eq.s32.totalorder %s28, 0
      %p90 = por %p88, %p89
      %s92 = sadd.s32 %s91, 1
      %p95 = scmp.eq.s32.totalorder %s22, 3
      %p96 = scmp.ne.s32.totalorder %s91, %s93
      %p97 = scmp.eq.s32.totalorder %s22, 0
      %p98 = por %p96, %p97
      %p99 = scmp.ne.s32.totalorder %s91, %s93
      %p100 = scmp.eq.s32.totalorder %s27, 3
      %p101 = por %p99, %p100
      %p102 = scmp.ne.s32.totalorder %s93, %s94
      %p103 = scmp.eq.s32.totalorder %s27, 0
      %p104 = por %p102, %p103
      %p105 = scmp.ne.s32.totalorder %s93, %s94
      %p106 = scmp.eq.s32.totalorder %s28, 3
      %p107 = por %p105, %p106
      %p109 = scmp.ne.s32.totalorder %s94, %s108
      %p110 = scmp.eq.s32.totalorder %s28, 0
      %p111 = por %p109, %p110
      %s113 = sadd.s32 %s112, 1
      %p116 = scmp.eq.s32.totalorder %s22, 3
      %p117 = scmp.ne.s32.totalorder %s112, %s114
      %p118 = scmp.eq.s32.totalorder %s22, 0
      %p119 = por %p117, %p118
      %p120 = scmp.ne.s32.totalorder %s112, %s114
      %p121 = scmp.eq.s32.totalorder %s27, 3
      %p122 = por %p120, %p121
      %p123 = scmp.ne.s32.totalorder %s114, %s115
      %p124 = scmp.eq.s32.totalorder %s27, 0
      %p125 = por %p123, %p124
      %p126 = scmp.ne.s32.totalorder %s114, %s115
      %p127 = scmp.eq.s32.totalorder %s28, 3
      %p128 = por %p126, %p127
      %p130 = scmp.ne.s32.totalorder %s115, %s129
      %p131 = scmp.eq.s32.totalorder %s28, 0
      %p132 = por %p130, %p131
      %s134 = sadd.s32 %s133, 1
      %p137 = scmp.eq.s32.totalorder %s22, 3
      %p138 = scmp.ne.s32.totalorder %s133, %s135
      %p139 = scmp.eq.s32.totalorder %s22, 0
      %p140 = por %p138, %p139
      %p141 = scmp.ne.s32.totalorder %s133, %s135
      %p142 = scmp.eq.s32.totalorder %s27, 3
      %p143 = por %p141, %p142
      %p144 = scmp.ne.s32.totalorder %s135, %s136
      %p145 = scmp.eq.s32.totalorder %s27, 0
      %p146 = por %p144, %p145
      %p147 = scmp.ne.s32.totalorder %s135, %s136
      %p148 = scmp.eq.s32.totalorder %s28, 3
      %p149 = por %p147, %p148
      %p151 = scmp.ne.s32.totalorder %s136, %s150
      %p152 = scmp.eq.s32.totalorder %s28, 0
      %p153 = por %p151, %p152
      %s155 = sadd.s32 %s154, 1
      %p158 = scmp.eq.s32.totalorder %s22, 3
      %p159 = scmp.ne.s32.totalorder %s154, %s156
      %p160 = scmp.eq.s32.totalorder %s22, 0
      %p161 = por %p159, %p160
      %p162 = scmp.ne.s32.totalorder %s154, %s156
      %p163 = scmp.eq.s32.totalorder %s27, 3
      %p164 = por %p162, %p163
      %p165 = scmp.ne.s32.totalorder %s156, %s157
      %p166 = scmp.eq.s32.totalorder %s27, 0
      %p167 = por %p165, %p166
      %p168 = scmp.ne.s32.totalorder %s156, %s157
      %p169 = scmp.eq.s32.totalorder %s28, 3
      %p170 = por %p168, %p169
      %p172 = scmp.ne.s32.totalorder %s157, %s171
      %p173 = scmp.eq.s32.totalorder %s28, 0
      %p174 = por %p172, %p173
      %s176 = sadd.s32 %s175, 1
      %p179 = scmp.eq.s32.totalorder %s22, 3
      %p180 = scmp.ne.s32.totalorder %s175, %s177
      %p181 = scmp.eq.s32.totalorder %s22, 0
      %p182 = por %p180, %p181
      %p183 = scmp.ne.s32.totalorder %s175, %s177
      %p184 = scmp.eq.s32.totalorder %s27, 3
      %p185 = por %p183, %p184
      %p186 = scmp.ne.s32.totalorder %s177, %s178
      %p187 = scmp.eq.s32.totalorder %s27, 0
      %p188 = por %p186, %p187
      %p189 = scmp.ne.s32.totalorder %s177, %s178
      %p190 = scmp.eq.s32.totalorder %s28, 3
      %p191 = por %p189, %p190
      %p193 = scmp.ne.s32.totalorder %s178, %s192
      %p194 = scmp.eq.s32.totalorder %s28, 0
      %p195 = por %p193, %p194
      %s197 = sadd.s32 %s196, 1
      %p200 = scmp.eq.s32.totalorder %s22, 3
      %p201 = scmp.ne.s32.totalorder %s196, %s198
      %p202 = scmp.eq.s32.totalorder %s22, 0
      %p203 = por %p201, %p202
      %p204 = scmp.ne.s32.totalorder %s196, %s198
      %p205 = scmp.eq.s32.totalorder %s27, 3
      %p206 = por %p204, %p205
      %p207 = scmp.ne.s32.totalorder %s198, %s199
      %p208 = scmp.eq.s32.totalorder %s27, 0
      %p209 = por %p207, %p208
      %p210 = scmp.ne.s32.totalorder %s198, %s199
      %p211 = scmp.eq.s32.totalorder %s28, 3
      %p212 = por %p210, %p211
      %p214 = scmp.ne.s32.totalorder %s199, %s213
      %p215 = scmp.eq.s32.totalorder %s28, 0
      %p216 = por %p214, %p215
      %s218 = sadd.s32 %s217, 1
      %p221 = scmp.eq.s32.totalorder %s22, 3
      %p222 = scmp.ne.s32.totalorder %s217, %s219
      %p223 = scmp.eq.s32.totalorder %s22, 0
      %p224 = por %p222, %p223
      %p225 = scmp.ne.s32.totalorder %s217, %s219
      %p226 = scmp.eq.s32.totalorder %s27, 3
      %p227 = por %p225, %p226
      %p228 = scmp.ne.s32.totalorder %s219, %s220
      %p229 = scmp.eq.s32.totalorder %s27, 0
      %p230 = por %p228, %p229
      %p231 = scmp.ne.s32.totalorder %s219, %s220
      %p232 = scmp.eq.s32.totalorder %s28, 3
      %p233 = por %p231, %p232
      %p235 = scmp.ne.s32.totalorder %s220, %s234
      %p236 = scmp.eq.s32.totalorder %s28, 0
      %p237 = por %p235, %p236
      %s239 = sadd.s32 %s238, 1
      %p242 = scmp.eq.s32.totalorder %s22, 3
      %p243 = scmp.ne.s32.totalorder %s238, %s240
      %p244 = scmp.eq.s32.totalorder %s22, 0
      %p245 = por %p243, %p244
      %p246 = scmp.ne.s32.totalorder %s238, %s240
      %p247 = scmp.eq.s32.totalorder %s27, 3
      %p248 = por %p246, %p247
      %p249 = scmp.ne.s32.totalorder %s240, %s241
      %p250 = scmp.eq.s32.totalorder %s27, 0
      %p251 = por %p249, %p250
      %p252 = scmp.ne.s32.totalorder %s240, %s241
      %p253 = scmp.eq.s32.totalorder %s28, 3
      %p254 = por %p252, %p253
      %p256 = scmp.ne.s32.totalorder %s241, %s255
      %p257 = scmp.eq.s32.totalorder %s28, 0
      %p258 = por %p256, %p257
      %s260 = sadd.s32 %s259, 1
      %p263 = scmp.eq.s32.totalorder %s22, 3
      %p264 = scmp.ne.s32.totalorder %s259, %s261
      %p265 = scmp.eq.s32.totalorder %s22, 0
      %p266 = por %p264, %p265
      %p267 = scmp.ne.s32.totalorder %s259, %s261
      %p268 = scmp.eq.s32.totalorder %s27, 3
      %p269 = por %p267, %p268
      %p270 = scmp.ne.s32.totalorder %s261, %s262
      %p271 = scmp.eq.s32.totalorder %s27, 0
      %p272 = por %p270, %p271
      %p273 = scmp.ne.s32.totalorder %s261, %s262
      %p274 = scmp.eq.s32.totalorder %s28, 3
      %p275 = por %p273, %p274
      %p277 = scmp.ne.s32.totalorder %s262, %s276
      %p278 = scmp.eq.s32.totalorder %s28, 0
      %p279 = por %p277, %p278
      %s281 = sadd.s32 %s280, 1
      %p284 = scmp.eq.s32.totalorder %s22, 3
      %p285 = scmp.ne.s32.totalorder %s280, %s282
      %p286 = scmp.eq.s32.totalorder %s22, 0
      %p287 = por %p285, %p286
      %p288 = scmp.ne.s32.totalorder %s280, %s282
      %p289 = scmp.eq.s32.totalorder %s27, 3
      %p290 = por %p288, %p289
      %p291 = scmp.ne.s32.totalorder %s282, %s283
      %p292 = scmp.eq.s32.totalorder %s27, 0
      %p293 = por %p291, %p292
      %p294 = scmp.ne.s32.totalorder %s282, %s283
      %p295 = scmp.eq.s32.totalorder %s28, 3
      %p296 = por %p294, %p295
      %p298 = scmp.ne.s32.totalorder %s283, %s297
      %p299 = scmp.eq.s32.totalorder %s28, 0
      %p300 = por %p298, %p299
      %s302 = sadd.s32 %s301, 1
      %p305 = scmp.eq.s32.totalorder %s22, 3
      %p306 = scmp.ne.s32.totalorder %s301, %s303
      %p307 = scmp.eq.s32.totalorder %s22, 0
      %p308 = por %p306, %p307
      %p309 = scmp.ne.s32.totalorder %s301, %s303
      %p310 = scmp.eq.s32.totalorder %s27, 3
      %p311 = por %p309, %p310
      %p312 = scmp.ne.s32.totalorder %s303, %s304
      %p313 = scmp.eq.s32.totalorder %s27, 0
      %p314 = por %p312, %p313
      %p315 = scmp.ne.s32.totalorder %s303, %s304
      %p316 = scmp.eq.s32.totalorder %s28, 3
      %p317 = por %p315, %p316
      %p319 = scmp.ne.s32.totalorder %s304, %s318
      %p320 = scmp.eq.s32.totalorder %s28, 0
      %p321 = por %p319, %p320
      %s322 = ssub.s32 %s29, %s41
      %p323 = scmp.eq.s32.totalorder %s322, 0
      %s325 = sadd.s32 %s324, 1
      %s326 = scalar_select %p323, %s324, %s325
      %p329 = pneg %p323
      %p330 = scmp.eq.s32.totalorder %s22, 3
      %p331 = por %p329, %p330
      %p332 = scmp.ne.s32.totalorder %s324, %s327
      %p333 = scmp.eq.s32.totalorder %s22, 0
      %p334 = por %p332, %p333
      %p335 = scmp.ne.s32.totalorder %s324, %s327
      %p336 = scmp.eq.s32.totalorder %s27, 3
      %p337 = por %p335, %p336
      %p338 = scmp.ne.s32.totalorder %s327, %s328
      %p339 = scmp.eq.s32.totalorder %s27, 0
      %p340 = por %p338, %p339
      %p341 = scmp.ne.s32.totalorder %s327, %s328
      %p342 = scmp.eq.s32.totalorder %s28, 3
      %p343 = por %p341, %p342
      %p345 = scmp.ne.s32.totalorder %s328, %s344
      %p346 = scmp.eq.s32.totalorder %s28, 0
      %p347 = por %p345, %p346
      %p348 = scmp.le.s32.totalorder 1, %s22
      %p349 = scmp.lt.s32.totalorder %s22, 5
      %p350 = pnand %p348, %p349
      %p351 = pneg %p350
      // Predicated region
      $region9: #{stn3d_forward.1} parent=5 // pred_check
        _
      $region10: #{stn3d_forward.1} parent=5 // pred_check_branch
        %353 = sbr.rel (%p350) target = $region12
      $region11: #{stn3d_forward.1} parent=5 // pred_region
        %s354 = ssub.s32 %s22, 1
        // Predicated region
        $region13: #{stn3d_forward.1} parent=11 // pred_check
          %p355 = pneg %p83
        $region14: #{stn3d_forward.1} parent=11 // pred_check_branch
          %357 = sbr.rel (%p355) target = $region16
        $region15: #{stn3d_forward.1} parent=11 // pred_region
          _
        $region16: #{stn3d_forward.1} parent=11 // pred_fallthru
          _
        // Predicated region
        $region17: #{stn3d_forward.1} parent=11 // pred_check
          %p358 = pneg %p104
        $region18: #{stn3d_forward.1} parent=11 // pred_check_branch
          %360 = sbr.rel (%p358) target = $region20
        $region19: #{stn3d_forward.1} parent=11 // pred_region
          _
        $region20: #{stn3d_forward.1} parent=11 // pred_fallthru
          _
        // Predicated region
        $region21: #{stn3d_forward.1} parent=11 // pred_check
          %p361 = pneg %p125
        $region22: #{stn3d_forward.1} parent=11 // pred_check_branch
          %363 = sbr.rel (%p361) target = $region24
        $region23: #{stn3d_forward.1} parent=11 // pred_region
          _
        $region24: #{stn3d_forward.1} parent=11 // pred_fallthru
          _
        // Predicated region
        $region25: #{stn3d_forward.1} parent=11 // pred_check
          %p364 = pneg %p146
        $region26: #{stn3d_forward.1} parent=11 // pred_check_branch
          %366 = sbr.rel (%p364) target = $region28
        $region27: #{stn3d_forward.1} parent=11 // pred_region
          _
        $region28: #{stn3d_forward.1} parent=11 // pred_fallthru
          _
        // Predicated region
        $region29: #{stn3d_forward.1} parent=11 // pred_check
          %p367 = pneg %p167
        $region30: #{stn3d_forward.1} parent=11 // pred_check_branch
          %369 = sbr.rel (%p367) target = $region32
        $region31: #{stn3d_forward.1} parent=11 // pred_region
          %s371 = ssub.s32 16384, 16384
          %372 = vsyncadd [#allocation4], %s371
          %s373 = sshll.u32 [#allocation3], 4
          %s374 = int_to_ptr.vmem [resolvable:$true] %s373
          %379 = dma.hbm_to_vmem [thread:$0]  %s5, 16384, %s374, [#allocation4], 128, 128, 8
        $region32: #{stn3d_forward.1} parent=11 // pred_fallthru
          _
        // Predicated region
        $region33: #{stn3d_forward.1} parent=11 // pred_check
          %p380 = pneg %p188
        $region34: #{stn3d_forward.1} parent=11 // pred_check_branch
          %382 = sbr.rel (%p380) target = $region36
        $region35: #{stn3d_forward.1} parent=11 // pred_region
          _
        $region36: #{stn3d_forward.1} parent=11 // pred_fallthru
          _
        // Predicated region
        $region37: #{stn3d_forward.1} parent=11 // pred_check
          %p383 = pneg %p209
        $region38: #{stn3d_forward.1} parent=11 // pred_check_branch
          %385 = sbr.rel (%p383) target = $region40
        $region39: #{stn3d_forward.1} parent=11 // pred_region
          %s387 = ssub.s32 65536, 65536
          %388 = vsyncadd [#allocation6], %s387
          %s389 = sshll.u32 [#allocation5], 4
          %s390 = int_to_ptr.vmem [resolvable:$true] %s389
          %395 = dma.hbm_to_vmem [thread:$0]  %s7, 65536, %s390, [#allocation6], 1024, 1024, 64
        $region40: #{stn3d_forward.1} parent=11 // pred_fallthru
          _
        // Predicated region
        $region41: #{stn3d_forward.1} parent=11 // pred_check
          %p396 = pneg %p230
        $region42: #{stn3d_forward.1} parent=11 // pred_check_branch
          %398 = sbr.rel (%p396) target = $region44
        $region43: #{stn3d_forward.1} parent=11 // pred_region
          _
        $region44: #{stn3d_forward.1} parent=11 // pred_fallthru
          _
        // Predicated region
        $region45: #{stn3d_forward.1} parent=11 // pred_check
          %p399 = pneg %p251
        $region46: #{stn3d_forward.1} parent=11 // pred_check_branch
          %401 = sbr.rel (%p399) target = $region48
        $region47: #{stn3d_forward.1} parent=11 // pred_region
          %s403 = ssub.s32 16384, 16384
          %404 = vsyncadd [#allocation6], %s403
          %s405 = sshll.u32 [#allocation7], 4
          %s406 = int_to_ptr.vmem [resolvable:$true] %s405
          %411 = dma.hbm_to_vmem [thread:$0]  %s9, 16384, %s406, [#allocation6], 512, 512, 32
        $region48: #{stn3d_forward.1} parent=11 // pred_fallthru
          _
        // Predicated region
        $region49: #{stn3d_forward.1} parent=11 // pred_check
          %p412 = pneg %p272
        $region50: #{stn3d_forward.1} parent=11 // pred_check_branch
          %414 = sbr.rel (%p412) target = $region52
        $region51: #{stn3d_forward.1} parent=11 // pred_region
          _
        $region52: #{stn3d_forward.1} parent=11 // pred_fallthru
          _
        // Predicated region
        $region53: #{stn3d_forward.1} parent=11 // pred_check
          %p415 = pneg %p293
        $region54: #{stn3d_forward.1} parent=11 // pred_check_branch
          %417 = sbr.rel (%p415) target = $region56
        $region55: #{stn3d_forward.1} parent=11 // pred_region
          %s419 = ssub.s32 512, 512
          %420 = vsyncadd [#allocation9], %s419
          %s421 = sshll.u32 [#allocation8], 4
          %s422 = int_to_ptr.vmem [resolvable:$true] %s421
          %427 = dma.hbm_to_vmem [thread:$0]  %s11, 512, %s422, [#allocation9], 256, 256, 16
        $region56: #{stn3d_forward.1} parent=11 // pred_fallthru
          _
        // Predicated region
        $region57: #{stn3d_forward.1} parent=11 // pred_check
          %p428 = pneg %p314
        $region58: #{stn3d_forward.1} parent=11 // pred_check_branch
          %430 = sbr.rel (%p428) target = $region60
        $region59: #{stn3d_forward.1} parent=11 // pred_region
          _
        $region60: #{stn3d_forward.1} parent=11 // pred_fallthru
          _
      $region12: #{stn3d_forward.1} parent=5 // pred_fallthru
        _
      %p431 = scmp.lt.s32.totalorder %s22, 4
      // Predicated region
      $region61: #{stn3d_forward.1} parent=5 // pred_check
        %p432 = pneg %p431
      $region62: #{stn3d_forward.1} parent=5 // pred_check_branch
        %434 = sbr.rel (%p432) target = $region64
      $region63: #{stn3d_forward.1} parent=5 // pred_region
        // Predicated region
        $region65: #{stn3d_forward.1} parent=63 // pred_check
          %p435 = pneg %p56
        $region66: #{stn3d_forward.1} parent=63 // pred_check_branch
          %437 = sbr.rel (%p435) target = $region68
        $region67: #{stn3d_forward.1} parent=63 // pred_region
          %p438 = scmp.lt.s32.totalorder %s29, 1
          %s439 = scalar_select %p438, %s29, 1
          %p440 = scmp.lt.s32.totalorder %s30, 1
          %s441 = scalar_select %p440, %s30, 1
          %s442 = smul.addr %s439, 2
          %s443 = sadd.s32 %s441, %s442
          %s444 = smul.addr %s443, 4
          %s445 = scalar_lea.vmem %s0, %s444
        $region68: #{stn3d_forward.1} parent=63 // pred_fallthru
          _
      $region64: #{stn3d_forward.1} parent=5 // pred_fallthru
        _
      %p446 = scmp.le.s32.totalorder 1, %s22
      %p447 = scmp.lt.s32.totalorder %s22, 5
      %p448 = pnand %p446, %p447
      %p449 = pneg %p448
      // Predicated region
      $region69: #{stn3d_forward.1} parent=5 // pred_check
        _
      $region70: #{stn3d_forward.1} parent=5 // pred_check_branch
        %451 = sbr.rel (%p448) target = $region72
      $region71: #{stn3d_forward.1} parent=5 // pred_region
        %s452 = ssub.s32 %s22, 1
        // Predicated region
        $region73: #{stn3d_forward.1} parent=71 // pred_check
          %p453 = pneg %p167
        $region74: #{stn3d_forward.1} parent=71 // pred_check_branch
          %455 = sbr.rel (%p453) target = $region76
        $region75: #{stn3d_forward.1} parent=71 // pred_region
          %456 = dma.done [#allocation4], 16384
        $region76: #{stn3d_forward.1} parent=71 // pred_fallthru
          _
        // Predicated region
        $region77: #{stn3d_forward.1} parent=71 // pred_check
          %p457 = pneg %p209
        $region78: #{stn3d_forward.1} parent=71 // pred_check_branch
          %459 = sbr.rel (%p457) target = $region80
        $region79: #{stn3d_forward.1} parent=71 // pred_region
          %460 = dma.done [#allocation6], 65536
        $region80: #{stn3d_forward.1} parent=71 // pred_fallthru
          _
        // Predicated region
        $region81: #{stn3d_forward.1} parent=71 // pred_check
          %p461 = pneg %p251
        $region82: #{stn3d_forward.1} parent=71 // pred_check_branch
          %463 = sbr.rel (%p461) target = $region84
        $region83: #{stn3d_forward.1} parent=71 // pred_region
          %464 = dma.done [#allocation6], 16384
        $region84: #{stn3d_forward.1} parent=71 // pred_fallthru
          _
        // Predicated region
        $region85: #{stn3d_forward.1} parent=71 // pred_check
          %p465 = pneg %p293
        $region86: #{stn3d_forward.1} parent=71 // pred_check_branch
          %467 = sbr.rel (%p465) target = $region88
        $region87: #{stn3d_forward.1} parent=71 // pred_region
          %468 = dma.done [#allocation9], 512
        $region88: #{stn3d_forward.1} parent=71 // pred_fallthru
          _
        %p469 = scmp.lt.s32.totalorder %s31, 1
        %s470 = scalar_select %p469, %s31, 1
        %p471 = scmp.lt.s32.totalorder %s32, 1
        %s472 = scalar_select %p471, %s32, 1
        %s473 = smul.addr %s470, 2
        %s474 = sadd.s32 %s472, %s473
        %s475 = smul.addr %s474, 4
        %s476 = scalar_lea.vmem %s0, %s475
        %p477 = pneg %p62
        %p478 = pneg %p59
        %p479 = pneg %p83
        %p480 = pneg %p80
        %p481 = pneg %p104
        %p482 = pneg %p101
        %p483 = pneg %p125
        %p484 = pneg %p122
        %p485 = pneg %p146
        %p486 = pneg %p143
        %p487 = pneg %p167
        %p488 = pneg %p164
        %p489 = pneg %p188
        %p490 = pneg %p185
        %p491 = pneg %p209
        %p492 = pneg %p206
        %p493 = pneg %p230
        %p494 = pneg %p227
        %p495 = pneg %p251
        %p496 = pneg %p248
        %p497 = pneg %p272
        %p498 = pneg %p269
        %p499 = pneg %p293
        %p500 = pneg %p290
        %p501 = pneg %p314
        %p502 = pneg %p311
        %p503 = pneg %p340
        %p504 = pneg %p337
        %p505 = scmp.lt.s32.totalorder %s31, 1
        %s506 = scalar_select %p505, %s31, 1
        %s507 = smul.addr %s506, 2
        %s508 = smul.addr %s507, 8
        %s509 = scalar_lea.vmem %s13, %s508
        %p510 = scmp.lt.s32.totalorder %s31, 1
        %s511 = scalar_select %p510, %s31, 1
        %p512 = scmp.lt.s32.totalorder %s32, 1
        %s513 = scalar_select %p512, %s32, 1
        %s514 = smul.addr %s511, 2
        %s515 = sadd.s32 %s513, %s514
        %s516 = smul.addr %s515, 4
        %s517 = scalar_lea.vmem %s0, %s516
        %p518 = scmp.lt.s32.totalorder %s31, 1
        %s519 = scalar_select %p518, %s31, 1
        %s520 = smul.addr %s519, 2
        %s521 = smul.addr %s520, 8
        %s522 = scalar_lea.vmem %s13, %s521
        %v523 = vld [vmem:[%s517] sm:$0x7]
        %v524 = vld [vmem:[%s1] sm:$0xff]
        %v525 = vld [vmem:[%s1 + $0x8] sm:$0xff]
        %v526 = vld [vmem:[%s1 + $0x10] sm:$0xff]
        %v527 = vld [vmem:[%s1 + $0x18] sm:$0xff]
        %v528 = vld [vmem:[%s1 + $0x20] sm:$0xff]
        %v529 = vld [vmem:[%s1 + $0x28] sm:$0xff]
        %v530 = vld [vmem:[%s1 + $0x30] sm:$0xff]
        %v531 = vld [vmem:[%s1 + $0x38] sm:$0xff]
        %533 = vset.pattern.permute.xlu0 0
        %534 = vperm.xlu0 %533, %v524
        %v535 = vpop.permute.xlu0 %534
        %538 = vset.pattern.permute.xlu0 0
        %539 = vperm.xlu0 %538, %v525
        %v540 = vpop.permute.xlu0 %539
        %543 = vset.pattern.permute.xlu0 0
        %544 = vperm.xlu0 %543, %v526
        %v545 = vpop.permute.xlu0 %544
        %548 = vset.pattern.permute.xlu0 0
        %549 = vperm.xlu0 %548, %v527
        %v550 = vpop.permute.xlu0 %549
        %553 = vset.pattern.permute.xlu0 0
        %554 = vperm.xlu0 %553, %v528
        %v555 = vpop.permute.xlu0 %554
        %558 = vset.pattern.permute.xlu0 0
        %559 = vperm.xlu0 %558, %v529
        %v560 = vpop.permute.xlu0 %559
        %563 = vset.pattern.permute.xlu0 0
        %564 = vperm.xlu0 %563, %v530
        %v565 = vpop.permute.xlu0 %564
        %568 = vset.pattern.permute.xlu0 0
        %569 = vperm.xlu0 %568, %v531
        %v570 = vpop.permute.xlu0 %569
        %v572 = vlaneseq
        %v573 = vshrl.u32 %v572, 7
        %v574 = vsub.s32 0, %v573
        %v575 = vrot.slane %v523, %v574
        %v576 = vmul.f32 %v535, %v575
        %v577 = vmul.f32 %v540, %v575
        %v578 = vmul.f32 %v545, %v575
        %v579 = vmul.f32 %v550, %v575
        %v580 = vmul.f32 %v555, %v575
        %v581 = vmul.f32 %v560, %v575
        %v582 = vmul.f32 %v565, %v575
        %v583 = vmul.f32 %v570, %v575
        %584 = vset.pattern.permute.xlu0 1
        %585 = vperm.xlu0 %584, %v524
        %v586 = vpop.permute.xlu0 %585
        %588 = vset.pattern.permute.xlu0 1
        %589 = vperm.xlu0 %588, %v525
        %v590 = vpop.permute.xlu0 %589
        %592 = vset.pattern.permute.xlu0 1
        %593 = vperm.xlu0 %592, %v526
        %v594 = vpop.permute.xlu0 %593
        %596 = vset.pattern.permute.xlu0 1
        %597 = vperm.xlu0 %596, %v527
        %v598 = vpop.permute.xlu0 %597
        %600 = vset.pattern.permute.xlu0 1
        %601 = vperm.xlu0 %600, %v528
        %v602 = vpop.permute.xlu0 %601
        %604 = vset.pattern.permute.xlu0 1
        %605 = vperm.xlu0 %604, %v529
        %v606 = vpop.permute.xlu0 %605
        %608 = vset.pattern.permute.xlu0 1
        %609 = vperm.xlu0 %608, %v530
        %v610 = vpop.permute.xlu0 %609
        %612 = vset.pattern.permute.xlu0 1
        %613 = vperm.xlu0 %612, %v531
        %v614 = vpop.permute.xlu0 %613
        %v616 = vlaneseq
        %v617 = vshrl.u32 %v616, 7
        %v618 = vsub.s32 1, %v617
        %v619 = vrot.slane %v523, %v618
        %v620 = vmul.f32 %v586, %v619
        %v621 = vmul.f32 %v590, %v619
        %v622 = vmul.f32 %v594, %v619
        %v623 = vmul.f32 %v598, %v619
        %v624 = vmul.f32 %v602, %v619
        %v625 = vmul.f32 %v606, %v619
        %v626 = vmul.f32 %v610, %v619
        %v627 = vmul.f32 %v614, %v619
        %v628 = vadd.f32 %v576, %v620
        %v629 = vadd.f32 %v577, %v621
        %v630 = vadd.f32 %v578, %v622
        %v631 = vadd.f32 %v579, %v623
        %v632 = vadd.f32 %v580, %v624
        %v633 = vadd.f32 %v581, %v625
        %v634 = vadd.f32 %v582, %v626
        %v635 = vadd.f32 %v583, %v627
        %636 = vset.pattern.permute.xlu0 2
        %637 = vperm.xlu0 %636, %v524
        %v638 = vpop.permute.xlu0 %637
        %640 = vset.pattern.permute.xlu0 2
        %641 = vperm.xlu0 %640, %v525
        %v642 = vpop.permute.xlu0 %641
        %644 = vset.pattern.permute.xlu0 2
        %645 = vperm.xlu0 %644, %v526
        %v646 = vpop.permute.xlu0 %645
        %648 = vset.pattern.permute.xlu0 2
        %649 = vperm.xlu0 %648, %v527
        %v650 = vpop.permute.xlu0 %649
        %652 = vset.pattern.permute.xlu0 2
        %653 = vperm.xlu0 %652, %v528
        %v654 = vpop.permute.xlu0 %653
        %656 = vset.pattern.permute.xlu0 2
        %657 = vperm.xlu0 %656, %v529
        %v658 = vpop.permute.xlu0 %657
        %660 = vset.pattern.permute.xlu0 2
        %661 = vperm.xlu0 %660, %v530
        %v662 = vpop.permute.xlu0 %661
        %664 = vset.pattern.permute.xlu0 2
        %665 = vperm.xlu0 %664, %v531
        %v666 = vpop.permute.xlu0 %665
        %v668 = vlaneseq
        %v669 = vshrl.u32 %v668, 7
        %v670 = vsub.s32 2, %v669
        %v671 = vrot.slane %v523, %v670
        %v672 = vmul.f32 %v638, %v671
        %v673 = vmul.f32 %v642, %v671
        %v674 = vmul.f32 %v646, %v671
        %v675 = vmul.f32 %v650, %v671
        %v676 = vmul.f32 %v654, %v671
        %v677 = vmul.f32 %v658, %v671
        %v678 = vmul.f32 %v662, %v671
        %v679 = vmul.f32 %v666, %v671
        %v680 = vadd.f32 %v628, %v672
        %v681 = vadd.f32 %v629, %v673
        %v682 = vadd.f32 %v630, %v674
        %v683 = vadd.f32 %v631, %v675
        %v684 = vadd.f32 %v632, %v676
        %v685 = vadd.f32 %v633, %v677
        %v686 = vadd.f32 %v634, %v678
        %v687 = vadd.f32 %v635, %v679
        %v688 = vld [vmem:[%s2] sm:$0xff]
        %v689 = vld [vmem:[%s2 + $0x8] sm:$0xff]
        %v690 = vld [vmem:[%s2 + $0x10] sm:$0xff]
        %v691 = vld [vmem:[%s2 + $0x18] sm:$0xff]
        %v692 = vld [vmem:[%s2 + $0x20] sm:$0xff]
        %v693 = vld [vmem:[%s2 + $0x28] sm:$0xff]
        %v694 = vld [vmem:[%s2 + $0x30] sm:$0xff]
        %v695 = vld [vmem:[%s2 + $0x38] sm:$0xff]
        %697 = vset.pattern.permute.xlu0 0
        %698 = vperm.xlu0 %697, %v688
        %v699 = vpop.permute.xlu0 %698
        %702 = vset.pattern.permute.xlu0 0
        %703 = vperm.xlu0 %702, %v689
        %v704 = vpop.permute.xlu0 %703
        %707 = vset.pattern.permute.xlu0 0
        %708 = vperm.xlu0 %707, %v690
        %v709 = vpop.permute.xlu0 %708
        %712 = vset.pattern.permute.xlu0 0
        %713 = vperm.xlu0 %712, %v691
        %v714 = vpop.permute.xlu0 %713
        %717 = vset.pattern.permute.xlu0 0
        %718 = vperm.xlu0 %717, %v692
        %v719 = vpop.permute.xlu0 %718
        %722 = vset.pattern.permute.xlu0 0
        %723 = vperm.xlu0 %722, %v693
        %v724 = vpop.permute.xlu0 %723
        %727 = vset.pattern.permute.xlu0 0
        %728 = vperm.xlu0 %727, %v694
        %v729 = vpop.permute.xlu0 %728
        %732 = vset.pattern.permute.xlu0 0
        %733 = vperm.xlu0 %732, %v695
        %v734 = vpop.permute.xlu0 %733
        %v736 = vadd.f32 %v680, %v699
        %v737 = vadd.f32 %v681, %v704
        %v738 = vadd.f32 %v682, %v709
        %v739 = vadd.f32 %v683, %v714
        %v740 = vadd.f32 %v684, %v719
        %v741 = vadd.f32 %v685, %v724
        %v742 = vadd.f32 %v686, %v729
        %v743 = vadd.f32 %v687, %v734
        %v744 = vmax.f32 %v736, 0.0
        %v745 = vmax.f32 %v737, 0.0
        %v746 = vmax.f32 %v738, 0.0
        %v747 = vmax.f32 %v739, 0.0
        %v748 = vmax.f32 %v740, 0.0
        %v749 = vmax.f32 %v741, 0.0
        %v750 = vmax.f32 %v742, 0.0
        %v751 = vmax.f32 %v743, 0.0
        %v752 = vld [vmem:[%s3] sm:$0xff]
        %v753 = vld [vmem:[%s3 + $0x8] sm:$0xff]
        %v754 = vld [vmem:[%s3 + $0x10] sm:$0xff]
        %v755 = vld [vmem:[%s3 + $0x18] sm:$0xff]
        %v756 = vld [vmem:[%s3 + $0x20] sm:$0xff]
        %v757 = vld [vmem:[%s3 + $0x28] sm:$0xff]
        %v758 = vld [vmem:[%s3 + $0x30] sm:$0xff]
        %v759 = vld [vmem:[%s3 + $0x38] sm:$0xff]
        %v760 = vld [vmem:[%s3 + $0x40] sm:$0xff]
        %v761 = vld [vmem:[%s3 + $0x48] sm:$0xff]
        %v762 = vld [vmem:[%s3 + $0x50] sm:$0xff]
        %v763 = vld [vmem:[%s3 + $0x58] sm:$0xff]
        %v764 = vld [vmem:[%s3 + $0x60] sm:$0xff]
        %v765 = vld [vmem:[%s3 + $0x68] sm:$0xff]
        %v766 = vld [vmem:[%s3 + $0x70] sm:$0xff]
        %v767 = vld [vmem:[%s3 + $0x78] sm:$0xff]
        %v768 = vld [vmem:[%s4] sm:$0xff]
        %v769 = vld [vmem:[%s4 + $0x8] sm:$0xff]
        %v770 = vld [vmem:[%s4 + $0x10] sm:$0xff]
        %v771 = vld [vmem:[%s4 + $0x18] sm:$0xff]
        %v772 = vld [vmem:[%s4 + $0x20] sm:$0xff]
        %v773 = vld [vmem:[%s4 + $0x28] sm:$0xff]
        %v774 = vld [vmem:[%s4 + $0x30] sm:$0xff]
        %v775 = vld [vmem:[%s4 + $0x38] sm:$0xff]
        %v776 = vld [vmem:[%s4 + $0x40] sm:$0xff]
        %v777 = vld [vmem:[%s4 + $0x48] sm:$0xff]
        %v778 = vld [vmem:[%s4 + $0x50] sm:$0xff]
        %v779 = vld [vmem:[%s4 + $0x58] sm:$0xff]
        %v780 = vld [vmem:[%s4 + $0x60] sm:$0xff]
        %v781 = vld [vmem:[%s4 + $0x68] sm:$0xff]
        %v782 = vld [vmem:[%s4 + $0x70] sm:$0xff]
        %v783 = vld [vmem:[%s4 + $0x78] sm:$0xff]
        %785 = vset.pattern.permute.xlu0 0
        %786 = vperm.xlu0 %785, %v768
        %v787 = vpop.permute.xlu0 %786
        %790 = vset.pattern.permute.xlu0 0
        %791 = vperm.xlu0 %790, %v769
        %v792 = vpop.permute.xlu0 %791
        %795 = vset.pattern.permute.xlu0 0
        %796 = vperm.xlu0 %795, %v770
        %v797 = vpop.permute.xlu0 %796
        %800 = vset.pattern.permute.xlu0 0
        %801 = vperm.xlu0 %800, %v771
        %v802 = vpop.permute.xlu0 %801
        %805 = vset.pattern.permute.xlu0 0
        %806 = vperm.xlu0 %805, %v772
        %v807 = vpop.permute.xlu0 %806
        %810 = vset.pattern.permute.xlu0 0
        %811 = vperm.xlu0 %810, %v773
        %v812 = vpop.permute.xlu0 %811
        %815 = vset.pattern.permute.xlu0 0
        %816 = vperm.xlu0 %815, %v774
        %v817 = vpop.permute.xlu0 %816
        %820 = vset.pattern.permute.xlu0 0
        %821 = vperm.xlu0 %820, %v775
        %v822 = vpop.permute.xlu0 %821
        %825 = vset.pattern.permute.xlu0 0
        %826 = vperm.xlu0 %825, %v776
        %v827 = vpop.permute.xlu0 %826
        %830 = vset.pattern.permute.xlu0 0
        %831 = vperm.xlu0 %830, %v777
        %v832 = vpop.permute.xlu0 %831
        %835 = vset.pattern.permute.xlu0 0
        %836 = vperm.xlu0 %835, %v778
        %v837 = vpop.permute.xlu0 %836
        %840 = vset.pattern.permute.xlu0 0
        %841 = vperm.xlu0 %840, %v779
        %v842 = vpop.permute.xlu0 %841
        %845 = vset.pattern.permute.xlu0 0
        %846 = vperm.xlu0 %845, %v780
        %v847 = vpop.permute.xlu0 %846
        %850 = vset.pattern.permute.xlu0 0
        %851 = vperm.xlu0 %850, %v781
        %v852 = vpop.permute.xlu0 %851
        %855 = vset.pattern.permute.xlu0 0
        %856 = vperm.xlu0 %855, %v782
        %v857 = vpop.permute.xlu0 %856
        %860 = vset.pattern.permute.xlu0 0
        %861 = vperm.xlu0 %860, %v783
        %v862 = vpop.permute.xlu0 %861
        %vm864 = vcmask 523264
        %v866 = vsel %vm864, %v752, 0
        %v869 = vsel %vm864, %v753, 0
        %v872 = vsel %vm864, %v754, 0
        %v875 = vsel %vm864, %v755, 0
        %v878 = vsel %vm864, %v756, 0
        %v881 = vsel %vm864, %v757, 0
        %v884 = vsel %vm864, %v758, 0
        %v887 = vsel %vm864, %v759, 0
        %v890 = vsel %vm864, %v760, 0
        %v893 = vsel %vm864, %v761, 0
        %v896 = vsel %vm864, %v762, 0
        %v899 = vsel %vm864, %v763, 0
        %v902 = vsel %vm864, %v764, 0
        %v905 = vsel %vm864, %v765, 0
        %v908 = vsel %vm864, %v766, 0
        %v911 = vsel %vm864, %v767, 0
        %913 = vmatprep.subr.mxu0 0.0
        %914 = vmatpush1.msra.mxu0 %v744
        %915 = vmatprep.subr.mxu0 0.0
        %916 = vmatpush1.msra.mxu0 %v745
        %917 = vmatprep.subr.mxu0 0.0
        %918 = vmatpush1.msra.mxu0 %v746
        %919 = vmatprep.subr.mxu0 0.0
        %920 = vmatpush1.msra.mxu0 %v747
        %921 = vmatprep.subr.mxu0 0.0
        %922 = vmatpush1.msra.mxu0 %v748
        %923 = vmatprep.subr.mxu0 0.0
        %924 = vmatpush1.msra.mxu0 %v749
        %925 = vmatprep.subr.mxu0 0.0
        %926 = vmatpush1.msra.mxu0 %v750
        %927 = vmatprep.subr.mxu0 0.0
        %928 = vmatpush1.msra.mxu0 %v751
        %929 = vmatprep.subr.mxu0 0.0
        %930 = vmatpush1.msra.mxu0 0.0
        %931 = vmatprep.subr.mxu0 0.0
        %932 = vmatpush1.msra.mxu0 0.0
        %933 = vmatprep.subr.mxu0 0.0
        %934 = vmatpush1.msra.mxu0 0.0
        %935 = vmatprep.subr.mxu0 0.0
        %936 = vmatpush1.msra.mxu0 0.0
        %937 = vmatprep.subr.mxu0 0.0
        %938 = vmatpush1.msra.mxu0 0.0
        %939 = vmatprep.subr.mxu0 0.0
        %940 = vmatpush1.msra.mxu0 0.0
        %941 = vmatprep.subr.mxu0 0.0
        %942 = vmatpush1.msra.mxu0 0.0
        %943 = vmatprep.subr.mxu0 0.0
        %944 = vmatpush1.msra.mxu0 0.0
        %945 = vmatprep.subr.mxu0 0.0
        %946 = vmatpush1.msra.mxu0 0.0
        %947 = vmatprep.subr.mxu0 0.0
        %948 = vmatpush1.msra.mxu0 0.0
        %949 = vmatprep.subr.mxu0 0.0
        %950 = vmatpush1.msra.mxu0 0.0
        %951 = vmatprep.subr.mxu0 0.0
        %952 = vmatpush1.msra.mxu0 0.0
        %953 = vmatprep.subr.mxu0 0.0
        %954 = vmatpush1.msra.mxu0 0.0
        %955 = vmatprep.subr.mxu0 0.0
        %956 = vmatpush1.msra.mxu0 0.0
        %957 = vmatprep.subr.mxu0 0.0
        %958 = vmatpush1.msra.mxu0 0.0
        %959 = vmatprep.subr.mxu0 0.0
        %960 = vmatpush1.msra.mxu0 0.0
        %961 = vmatprep.subr.mxu0 0.0
        %962 = vmatpush1.msra.mxu0 0.0
        %963 = vmatprep.subr.mxu0 0.0
        %964 = vmatpush1.msra.mxu0 0.0
        %965 = vmatprep.subr.mxu0 0.0
        %966 = vmatpush1.msra.mxu0 0.0
        %967 = vmatprep.subr.mxu0 0.0
        %968 = vmatpush1.msra.mxu0 0.0
        %969 = vmatprep.subr.mxu0 0.0
        %970 = vmatpush1.msra.mxu0 0.0
        %971 = vmatprep.subr.mxu0 0.0
        %972 = vmatpush1.msra.mxu0 0.0
        %973 = vmatprep.subr.mxu0 0.0
        %974 = vmatpush1.msra.mxu0 0.0
        %975 = vmatprep.subr.mxu0 0.0
        %976 = vmatpush1.msra.mxu0 0.0
        %977 = vmatprep.mubr.f32.mxu0 0.0
        %978 = vmatmul.mubr.f32.gmra.mrb[0].mxu0 %v866
        %v979 = vpop.f32.mrb[0].mxu0
        %v980 = vadd.f32 %v787, %v979
        %v981 = vpop.f32.mrb[0].mxu0
        %982 = vmatprep.mubr.f32.mxu0 0.0
        %983 = vmatmul.mubr.f32.gmra.mrb[0].mxu0 %v869
        %v984 = vpop.f32.mrb[0].mxu0
        %v985 = vadd.f32 %v792, %v984
        %v986 = vpop.f32.mrb[0].mxu0
        %987 = vmatprep.mubr.f32.mxu0 0.0
        %988 = vmatmul.mubr.f32.gmra.mrb[0].mxu0 %v872
        %v989 = vpop.f32.mrb[0].mxu0
        %v990 = vadd.f32 %v797, %v989
        %v991 = vpop.f32.mrb[0].mxu0
        %992 = vmatprep.mubr.f32.mxu0 0.0
        %993 = vmatmul.mubr.f32.gmra.mrb[0].mxu0 %v875
        %v994 = vpop.f32.mrb[0].mxu0
        %v995 = vadd.f32 %v802, %v994
        %v996 = vpop.f32.mrb[0].mxu0
        %997 = vmatprep.mubr.f32.mxu0 0.0
        %998 = vmatmul.mubr.f32.gmra.mrb[0].mxu0 %v878
        %v999 = vpop.f32.mrb[0].mxu0
        %v1000 = vadd.f32 %v807, %v999
        %v1001 = vpop.f32.mrb[0].mxu0
        %1002 = vmatprep.mubr.f32.mxu0 0.0
        %1003 = vmatmul.mubr.f32.gmra.mrb[0].mxu0 %v881
        %v1004 = vpop.f32.mrb[0].mxu0
        %v1005 = vadd.f32 %v812, %v1004
        %v1006 = vpop.f32.mrb[0].mxu0
        %1007 = vmatprep.mubr.f32.mxu0 0.0
        %1008 = vmatmul.mubr.f32.gmra.mrb[0].mxu0 %v884
        %v1009 = vpop.f32.mrb[0].mxu0
        %v1010 = vadd.f32 %v817, %v1009
        %v1011 = vpop.f32.mrb[0].mxu0
        %1012 = vmatprep.mubr.f32.mxu0 0.0
        %1013 = vmatmul.mubr.f32.gmra.mrb[0].mxu0 %v887
        %v1014 = vpop.f32.mrb[0].mxu0
        %v1015 = vadd.f32 %v822, %v1014
        %v1016 = vpop.f32.mrb[0].mxu0
        %1017 = vmatprep.mubr.f32.mxu0 0.0
        %1018 = vmatmul.mubr.f32.gmra.mrb[0].mxu0 %v890
        %v1019 = vpop.f32.mrb[0].mxu0
        %v1020 = vadd.f32 %v827, %v1019
        %v1021 = vpop.f32.mrb[0].mxu0
        %1022 = vmatprep.mubr.f32.mxu0 0.0
        %1023 = vmatmul.mubr.f32.gmra.mrb[0].mxu0 %v893
        %v1024 = vpop.f32.mrb[0].mxu0
        %v1025 = vadd.f32 %v832, %v1024
        %v1026 = vpop.f32.mrb[0].mxu0
        %1027 = vmatprep.mubr.f32.mxu0 0.0
        %1028 = vmatmul.mubr.f32.gmra.mrb[0].mxu0 %v896
        %v1029 = vpop.f32.mrb[0].mxu0
        %v1030 = vadd.f32 %v837, %v1029
        %v1031 = vpop.f32.mrb[0].mxu0
        %1032 = vmatprep.mubr.f32.mxu0 0.0
        %1033 = vmatmul.mubr.f32.gmra.mrb[0].mxu0 %v899
        %v1034 = vpop.f32.mrb[0].mxu0
        %v1035 = vadd.f32 %v842, %v1034
        %v1036 = vpop.f32.mrb[0].mxu0
        %1037 = vmatprep.mubr.f32.mxu0 0.0
        %1038 = vmatmul.mubr.f32.gmra.mrb[0].mxu0 %v902
        %v1039 = vpop.f32.mrb[0].mxu0
        %v1040 = vadd.f32 %v847, %v1039
        %v1041 = vpop.f32.mrb[0].mxu0
        %1042 = vmatprep.mubr.f32.mxu0 0.0
        %1043 = vmatmul.mubr.f32.gmra.mrb[0].mxu0 %v905
        %v1044 = vpop.f32.mrb[0].mxu0
        %v1045 = vadd.f32 %v852, %v1044
        %v1046 = vpop.f32.mrb[0].mxu0
        %1047 = vmatprep.mubr.f32.mxu0 0.0
        %1048 = vmatmul.mubr.f32.gmra.mrb[0].mxu0 %v908
        %v1049 = vpop.f32.mrb[0].mxu0
        %v1050 = vadd.f32 %v857, %v1049
        %v1051 = vpop.f32.mrb[0].mxu0
        %1052 = vmatprep.mubr.f32.mxu0 0.0
        %1053 = vmatmul.mubr.f32.gmra.mrb[0].mxu0 %v911
        %v1054 = vpop.f32.mrb[0].mxu0
        %v1055 = vadd.f32 %v862, %v1054
        %v1056 = vpop.f32.mrb[0].mxu0
        %1057 = vdwg.mxu0
        %v1058 = vmax.f32 %v980, 0.0
        %v1059 = vmax.f32 %v985, 0.0
        %v1060 = vmax.f32 %v990, 0.0
        %v1061 = vmax.f32 %v995, 0.0
        %v1062 = vmax.f32 %v1000, 0.0
        %v1063 = vmax.f32 %v1005, 0.0
        %v1064 = vmax.f32 %v1010, 0.0
        %v1065 = vmax.f32 %v1015, 0.0
        %v1066 = vmax.f32 %v1020, 0.0
        %v1067 = vmax.f32 %v1025, 0.0
        %v1068 = vmax.f32 %v1030, 0.0
        %v1069 = vmax.f32 %v1035, 0.0
        %v1070 = vmax.f32 %v1040, 0.0
        %v1071 = vmax.f32 %v1045, 0.0
        %v1072 = vmax.f32 %v1050, 0.0
        %v1073 = vmax.f32 %v1055, 0.0
        %v1074 = vld [vmem:[#allocation3] sm:$0xff]
        %v1075 = vld [vmem:[#allocation3 + $0x8] sm:$0xff]
        %v1076 = vld [vmem:[#allocation3 + $0x10] sm:$0xff]
        %v1077 = vld [vmem:[#allocation3 + $0x18] sm:$0xff]
        %v1078 = vld [vmem:[#allocation3 + $0x20] sm:$0xff]
        %v1079 = vld [vmem:[#allocation3 + $0x28] sm:$0xff]
        %v1080 = vld [vmem:[#allocation3 + $0x30] sm:$0xff]
        %v1081 = vld [vmem:[#allocation3 + $0x38] sm:$0xff]
        %v1082 = vld [vmem:[#allocation3 + $0x40] sm:$0xff]
        %v1083 = vld [vmem:[#allocation3 + $0x48] sm:$0xff]
        %v1084 = vld [vmem:[#allocation3 + $0x50] sm:$0xff]
        %v1085 = vld [vmem:[#allocation3 + $0x58] sm:$0xff]
        %v1086 = vld [vmem:[#allocation3 + $0x60] sm:$0xff]
        %v1087 = vld [vmem:[#allocation3 + $0x68] sm:$0xff]
        %v1088 = vld [vmem:[#allocation3 + $0x70] sm:$0xff]
        %v1089 = vld [vmem:[#allocation3 + $0x78] sm:$0xff]
        %v1090 = vld [vmem:[#allocation3 + $0x80] sm:$0xff]
        %v1091 = vld [vmem:[#allocation3 + $0x88] sm:$0xff]
        %v1092 = vld [vmem:[#allocation3 + $0x90] sm:$0xff]
        %v1093 = vld [vmem:[#allocation3 + $0x98] sm:$0xff]
        %v1094 = vld [vmem:[#allocation3 + $0xa0] sm:$0xff]
        %v1095 = vld [vmem:[#allocation3 + $0xa8] sm:$0xff]
        %v1096 = vld [vmem:[#allocation3 + $0xb0] sm:$0xff]
        %v1097 = vld [vmem:[#allocation3 + $0xb8] sm:$0xff]
        %v1098 = vld [vmem:[#allocation3 + $0xc0] sm:$0xff]
        %v1099 = vld [vmem:[#allocation3 + $0xc8] sm:$0xff]
        %v1100 = vld [vmem:[#allocation3 + $0xd0] sm:$0xff]
        %v1101 = vld [vmem:[#allocation3 + $0xd8] sm:$0xff]
        %v1102 = vld [vmem:[#allocation3 + $0xe0] sm:$0xff]
        %v1103 = vld [vmem:[#allocation3 + $0xe8] sm:$0xff]
        %v1104 = vld [vmem:[#allocation3 + $0xf0] sm:$0xff]
        %v1105 = vld [vmem:[#allocation3 + $0xf8] sm:$0xff]
        %v1106 = vld [vmem:[#allocation3 + $0x100] sm:$0xff]
        %v1107 = vld [vmem:[#allocation3 + $0x108] sm:$0xff]
        %v1108 = vld [vmem:[#allocation3 + $0x110] sm:$0xff]
        %v1109 = vld [vmem:[#allocation3 + $0x118] sm:$0xff]
        %v1110 = vld [vmem:[#allocation3 + $0x120] sm:$0xff]
        %v1111 = vld [vmem:[#allocation3 + $0x128] sm:$0xff]
        %v1112 = vld [vmem:[#allocation3 + $0x130] sm:$0xff]
        %v1113 = vld [vmem:[#allocation3 + $0x138] sm:$0xff]
        %v1114 = vld [vmem:[#allocation3 + $0x140] sm:$0xff]
        %v1115 = vld [vmem:[#allocation3 + $0x148] sm:$0xff]
        %v1116 = vld [vmem:[#allocation3 + $0x150] sm:$0xff]
        %v1117 = vld [vmem:[#allocation3 + $0x158] sm:$0xff]
        %v1118 = vld [vmem:[#allocation3 + $0x160] sm:$0xff]
        %v1119 = vld [vmem:[#allocation3 + $0x168] sm:$0xff]
        %v1120 = vld [vmem:[#allocation3 + $0x170] sm:$0xff]
        %v1121 = vld [vmem:[#allocation3 + $0x178] sm:$0xff]
        %v1122 = vld [vmem:[#allocation3 + $0x180] sm:$0xff]
        %v1123 = vld [vmem:[#allocation3 + $0x188] sm:$0xff]
        %v1124 = vld [vmem:[#allocation3 + $0x190] sm:$0xff]
        %v1125 = vld [vmem:[#allocation3 + $0x198] sm:$0xff]
        %v1126 = vld [vmem:[#allocation3 + $0x1a0] sm:$0xff]
        %v1127 = vld [vmem:[#allocation3 + $0x1a8] sm:$0xff]
        %v1128 = vld [vmem:[#allocation3 + $0x1b0] sm:$0xff]
        %v1129 = vld [vmem:[#allocation3 + $0x1b8] sm:$0xff]
        %v1130 = vld [vmem:[#allocation3 + $0x1c0] sm:$0xff]
        %v1131 = vld [vmem:[#allocation3 + $0x1c8] sm:$0xff]
        %v1132 = vld [vmem:[#allocation3 + $0x1d0] sm:$0xff]
        %v1133 = vld [vmem:[#allocation3 + $0x1d8] sm:$0xff]
        %v1134 = vld [vmem:[#allocation3 + $0x1e0] sm:$0xff]
        %v1135 = vld [vmem:[#allocation3 + $0x1e8] sm:$0xff]
        %v1136 = vld [vmem:[#allocation3 + $0x1f0] sm:$0xff]
        %v1137 = vld [vmem:[#allocation3 + $0x1f8] sm:$0xff]
        %v1138 = vld [vmem:[#allocation3 + $0x200] sm:$0xff]
        %v1139 = vld [vmem:[#allocation3 + $0x208] sm:$0xff]
        %v1140 = vld [vmem:[#allocation3 + $0x210] sm:$0xff]
        %v1141 = vld [vmem:[#allocation3 + $0x218] sm:$0xff]
        %v1142 = vld [vmem:[#allocation3 + $0x220] sm:$0xff]
        %v1143 = vld [vmem:[#allocation3 + $0x228] sm:$0xff]
        %v1144 = vld [vmem:[#allocation3 + $0x230] sm:$0xff]
        %v1145 = vld [vmem:[#allocation3 + $0x238] sm:$0xff]
        %v1146 = vld [vmem:[#allocation3 + $0x240] sm:$0xff]
        %v1147 = vld [vmem:[#allocation3 + $0x248] sm:$0xff]
        %v1148 = vld [vmem:[#allocation3 + $0x250] sm:$0xff]
        %v1149 = vld [vmem:[#allocation3 + $0x258] sm:$0xff]
        %v1150 = vld [vmem:[#allocation3 + $0x260] sm:$0xff]
        %v1151 = vld [vmem:[#allocation3 + $0x268] sm:$0xff]
        %v1152 = vld [vmem:[#allocation3 + $0x270] sm:$0xff]
        %v1153 = vld [vmem:[#allocation3 + $0x278] sm:$0xff]
        %v1154 = vld [vmem:[#allocation3 + $0x280] sm:$0xff]
        %v1155 = vld [vmem:[#allocation3 + $0x288] sm:$0xff]
        %v1156 = vld [vmem:[#allocation3 + $0x290] sm:$0xff]
        %v1157 = vld [vmem:[#allocation3 + $0x298] sm:$0xff]
        %v1158 = vld [vmem:[#allocation3 + $0x2a0] sm:$0xff]
        %v1159 = vld [vmem:[#allocation3 + $0x2a8] sm:$0xff]
        %v1160 = vld [vmem:[#allocation3 + $0x2b0] sm:$0xff]
        %v1161 = vld [vmem:[#allocation3 + $0x2b8] sm:$0xff]
        %v1162 = vld [vmem:[#allocation3 + $0x2c0] sm:$0xff]
        %v1163 = vld [vmem:[#allocation3 + $0x2c8] sm:$0xff]
        %v1164 = vld [vmem:[#allocation3 + $0x2d0] sm:$0xff]
        %v1165 = vld [vmem:[#allocation3 + $0x2d8] sm:$0xff]
        %v1166 = vld [vmem:[#allocation3 + $0x2e0] sm:$0xff]
        %v1167 = vld [vmem:[#allocation3 + $0x2e8] sm:$0xff]
        %v1168 = vld [vmem:[#allocation3 + $0x2f0] sm:$0xff]
        %v1169 = vld [vmem:[#allocation3 + $0x2f8] sm:$0xff]
        %v1170 = vld [vmem:[#allocation3 + $0x300] sm:$0xff]
        %v1171 = vld [vmem:[#allocation3 + $0x308] sm:$0xff]
        %v1172 = vld [vmem:[#allocation3 + $0x310] sm:$0xff]
        %v1173 = vld [vmem:[#allocation3 + $0x318] sm:$0xff]
        %v1174 = vld [vmem:[#allocation3 + $0x320] sm:$0xff]
        %v1175 = vld [vmem:[#allocation3 + $0x328] sm:$0xff]
        %v1176 = vld [vmem:[#allocation3 + $0x330] sm:$0xff]
        %v1177 = vld [vmem:[#allocation3 + $0x338] sm:$0xff]
        %v1178 = vld [vmem:[#allocation3 + $0x340] sm:$0xff]
        %v1179 = vld [vmem:[#allocation3 + $0x348] sm:$0xff]
        %v1180 = vld [vmem:[#allocation3 + $0x350] sm:$0xff]
        %v1181 = vld [vmem:[#allocation3 + $0x358] sm:$0xff]
        %v1182 = vld [vmem:[#allocation3 + $0x360] sm:$0xff]
        %v1183 = vld [vmem:[#allocation3 + $0x368] sm:$0xff]
        %v1184 = vld [vmem:[#allocation3 + $0x370] sm:$0xff]
        %v1185 = vld [vmem:[#allocation3 + $0x378] sm:$0xff]
        %v1186 = vld [vmem:[#allocation3 + $0x380] sm:$0xff]
        %v1187 = vld [vmem:[#allocation3 + $0x388] sm:$0xff]
        %v1188 = vld [vmem:[#allocation3 + $0x390] sm:$0xff]
        %v1189 = vld [vmem:[#allocation3 + $0x398] sm:$0xff]
        %v1190 = vld [vmem:[#allocation3 + $0x3a0] sm:$0xff]
        %v1191 = vld [vmem:[#allocation3 + $0x3a8] sm:$0xff]
        %v1192 = vld [vmem:[#allocation3 + $0x3b0] sm:$0xff]
        %v1193 = vld [vmem:[#allocation3 + $0x3b8] sm:$0xff]
        %v1194 = vld [vmem:[#allocation3 + $0x3c0] sm:$0xff]
        %v1195 = vld [vmem:[#allocation3 + $0x3c8] sm:$0xff]
        %v1196 = vld [vmem:[#allocation3 + $0x3d0] sm:$0xff]
        %v1197 = vld [vmem:[#allocation3 + $0x3d8] sm:$0xff]
        %v1198 = vld [vmem:[#allocation3 + $0x3e0] sm:$0xff]
        %v1199 = vld [vmem:[#allocation3 + $0x3e8] sm:$0xff]
        %v1200 = vld [vmem:[#allocation3 + $0x3f0] sm:$0xff]
        %v1201 = vld [vmem:[#allocation3 + $0x3f8] sm:$0xff]
        %v1202 = vld [vmem:[%s6] sm:$0xff]
        %v1203 = vld [vmem:[%s6 + $0x8] sm:$0xff]
        %v1204 = vld [vmem:[%s6 + $0x10] sm:$0xff]
        %v1205 = vld [vmem:[%s6 + $0x18] sm:$0xff]
        %v1206 = vld [vmem:[%s6 + $0x20] sm:$0xff]
        %v1207 = vld [vmem:[%s6 + $0x28] sm:$0xff]
        %v1208 = vld [vmem:[%s6 + $0x30] sm:$0xff]
        %v1209 = vld [vmem:[%s6 + $0x38] sm:$0xff]
        %v1210 = vld [vmem:[%s6 + $0x40] sm:$0xff]
        %v1211 = vld [vmem:[%s6 + $0x48] sm:$0xff]
        %v1212 = vld [vmem:[%s6 + $0x50] sm:$0xff]
        %v1213 = vld [vmem:[%s6 + $0x58] sm:$0xff]
        %v1214 = vld [vmem:[%s6 + $0x60] sm:$0xff]
        %v1215 = vld [vmem:[%s6 + $0x68] sm:$0xff]
        %v1216 = vld [vmem:[%s6 + $0x70] sm:$0xff]
        %v1217 = vld [vmem:[%s6 + $0x78] sm:$0xff]
        %v1218 = vld [vmem:[%s6 + $0x80] sm:$0xff]
        %v1219 = vld [vmem:[%s6 + $0x88] sm:$0xff]
        %v1220 = vld [vmem:[%s6 + $0x90] sm:$0xff]
        %v1221 = vld [vmem:[%s6 + $0x98] sm:$0xff]
        %v1222 = vld [vmem:[%s6 + $0xa0] sm:$0xff]
        %v1223 = vld [vmem:[%s6 + $0xa8] sm:$0xff]
        %v1224 = vld [vmem:[%s6 + $0xb0] sm:$0xff]
        %v1225 = vld [vmem:[%s6 + $0xb8] sm:$0xff]
        %v1226 = vld [vmem:[%s6 + $0xc0] sm:$0xff]
        %v1227 = vld [vmem:[%s6 + $0xc8] sm:$0xff]
        %v1228 = vld [vmem:[%s6 + $0xd0] sm:$0xff]
        %v1229 = vld [vmem:[%s6 + $0xd8] sm:$0xff]
        %v1230 = vld [vmem:[%s6 + $0xe0] sm:$0xff]
        %v1231 = vld [vmem:[%s6 + $0xe8] sm:$0xff]
        %v1232 = vld [vmem:[%s6 + $0xf0] sm:$0xff]
        %v1233 = vld [vmem:[%s6 + $0xf8] sm:$0xff]
        %v1234 = vld [vmem:[%s6 + $0x100] sm:$0xff]
        %v1235 = vld [vmem:[%s6 + $0x108] sm:$0xff]
        %v1236 = vld [vmem:[%s6 + $0x110] sm:$0xff]
        %v1237 = vld [vmem:[%s6 + $0x118] sm:$0xff]
        %v1238 = vld [vmem:[%s6 + $0x120] sm:$0xff]
        %v1239 = vld [vmem:[%s6 + $0x128] sm:$0xff]
        %v1240 = vld [vmem:[%s6 + $0x130] sm:$0xff]
        %v1241 = vld [vmem:[%s6 + $0x138] sm:$0xff]
        %v1242 = vld [vmem:[%s6 + $0x140] sm:$0xff]
        %v1243 = vld [vmem:[%s6 + $0x148] sm:$0xff]
        %v1244 = vld [vmem:[%s6 + $0x150] sm:$0xff]
        %v1245 = vld [vmem:[%s6 + $0x158] sm:$0xff]
        %v1246 = vld [vmem:[%s6 + $0x160] sm:$0xff]
        %v1247 = vld [vmem:[%s6 + $0x168] sm:$0xff]
        %v1248 = vld [vmem:[%s6 + $0x170] sm:$0xff]
        %v1249 = vld [vmem:[%s6 + $0x178] sm:$0xff]
        %v1250 = vld [vmem:[%s6 + $0x180] sm:$0xff]
        %v1251 = vld [vmem:[%s6 + $0x188] sm:$0xff]
        %v1252 = vld [vmem:[%s6 + $0x190] sm:$0xff]
        %v1253 = vld [vmem:[%s6 + $0x198] sm:$0xff]
        %v1254 = vld [vmem:[%s6 + $0x1a0] sm:$0xff]
        %v1255 = vld [vmem:[%s6 + $0x1a8] sm:$0xff]
        %v1256 = vld [vmem:[%s6 + $0x1b0] sm:$0xff]
        %v1257 = vld [vmem:[%s6 + $0x1b8] sm:$0xff]
        %v1258 = vld [vmem:[%s6 + $0x1c0] sm:$0xff]
        %v1259 = vld [vmem:[%s6 + $0x1c8] sm:$0xff]
        %v1260 = vld [vmem:[%s6 + $0x1d0] sm:$0xff]
        %v1261 = vld [vmem:[%s6 + $0x1d8] sm:$0xff]
        %v1262 = vld [vmem:[%s6 + $0x1e0] sm:$0xff]
        %v1263 = vld [vmem:[%s6 + $0x1e8] sm:$0xff]
        %v1264 = vld [vmem:[%s6 + $0x1f0] sm:$0xff]
        %v1265 = vld [vmem:[%s6 + $0x1f8] sm:$0xff]
        %v1266 = vld [vmem:[%s6 + $0x200] sm:$0xff]
        %v1267 = vld [vmem:[%s6 + $0x208] sm:$0xff]
        %v1268 = vld [vmem:[%s6 + $0x210] sm:$0xff]
        %v1269 = vld [vmem:[%s6 + $0x218] sm:$0xff]
        %v1270 = vld [vmem:[%s6 + $0x220] sm:$0xff]
        %v1271 = vld [vmem:[%s6 + $0x228] sm:$0xff]
        %v1272 = vld [vmem:[%s6 + $0x230] sm:$0xff]
        %v1273 = vld [vmem:[%s6 + $0x238] sm:$0xff]
        %v1274 = vld [vmem:[%s6 + $0x240] sm:$0xff]
        %v1275 = vld [vmem:[%s6 + $0x248] sm:$0xff]
        %v1276 = vld [vmem:[%s6 + $0x250] sm:$0xff]
        %v1277 = vld [vmem:[%s6 + $0x258] sm:$0xff]
        %v1278 = vld [vmem:[%s6 + $0x260] sm:$0xff]
        %v1279 = vld [vmem:[%s6 + $0x268] sm:$0xff]
        %v1280 = vld [vmem:[%s6 + $0x270] sm:$0xff]
        %v1281 = vld [vmem:[%s6 + $0x278] sm:$0xff]
        %v1282 = vld [vmem:[%s6 + $0x280] sm:$0xff]
        %v1283 = vld [vmem:[%s6 + $0x288] sm:$0xff]
        %v1284 = vld [vmem:[%s6 + $0x290] sm:$0xff]
        %v1285 = vld [vmem:[%s6 + $0x298] sm:$0xff]
        %v1286 = vld [vmem:[%s6 + $0x2a0] sm:$0xff]
        %v1287 = vld [vmem:[%s6 + $0x2a8] sm:$0xff]
        %v1288 = vld [vmem:[%s6 + $0x2b0] sm:$0xff]
        %v1289 = vld [vmem:[%s6 + $0x2b8] sm:$0xff]
        %v1290 = vld [vmem:[%s6 + $0x2c0] sm:$0xff]
        %v1291 = vld [vmem:[%s6 + $0x2c8] sm:$0xff]
        %v1292 = vld [vmem:[%s6 + $0x2d0] sm:$0xff]
        %v1293 = vld [vmem:[%s6 + $0x2d8] sm:$0xff]
        %v1294 = vld [vmem:[%s6 + $0x2e0] sm:$0xff]
        %v1295 = vld [vmem:[%s6 + $0x2e8] sm:$0xff]
        %v1296 = vld [vmem:[%s6 + $0x2f0] sm:$0xff]
        %v1297 = vld [vmem:[%s6 + $0x2f8] sm:$0xff]
        %v1298 = vld [vmem:[%s6 + $0x300] sm:$0xff]
        %v1299 = vld [vmem:[%s6 + $0x308] sm:$0xff]
        %v1300 = vld [vmem:[%s6 + $0x310] sm:$0xff]
        %v1301 = vld [vmem:[%s6 + $0x318] sm:$0xff]
        %v1302 = vld [vmem:[%s6 + $0x320] sm:$0xff]
        %v1303 = vld [vmem:[%s6 + $0x328] sm:$0xff]
        %v1304 = vld [vmem:[%s6 + $0x330] sm:$0xff]
        %v1305 = vld [vmem:[%s6 + $0x338] sm:$0xff]
        %v1306 = vld [vmem:[%s6 + $0x340] sm:$0xff]
        %v1307 = vld [vmem:[%s6 + $0x348] sm:$0xff]
        %v1308 = vld [vmem:[%s6 + $0x350] sm:$0xff]
        %v1309 = vld [vmem:[%s6 + $0x358] sm:$0xff]
        %v1310 = vld [vmem:[%s6 + $0x360] sm:$0xff]
        %v1311 = vld [vmem:[%s6 + $0x368] sm:$0xff]
        %v1312 = vld [vmem:[%s6 + $0x370] sm:$0xff]
        %v1313 = vld [vmem:[%s6 + $0x378] sm:$0xff]
        %v1314 = vld [vmem:[%s6 + $0x380] sm:$0xff]
        %v1315 = vld [vmem:[%s6 + $0x388] sm:$0xff]
        %v1316 = vld [vmem:[%s6 + $0x390] sm:$0xff]
        %v1317 = vld [vmem:[%s6 + $0x398] sm:$0xff]
        %v1318 = vld [vmem:[%s6 + $0x3a0] sm:$0xff]
        %v1319 = vld [vmem:[%s6 + $0x3a8] sm:$0xff]
        %v1320 = vld [vmem:[%s6 + $0x3b0] sm:$0xff]
        %v1321 = vld [vmem:[%s6 + $0x3b8] sm:$0xff]
        %v1322 = vld [vmem:[%s6 + $0x3c0] sm:$0xff]
        %v1323 = vld [vmem:[%s6 + $0x3c8] sm:$0xff]
        %v1324 = vld [vmem:[%s6 + $0x3d0] sm:$0xff]
        %v1325 = vld [vmem:[%s6 + $0x3d8] sm:$0xff]
        %v1326 = vld [vmem:[%s6 + $0x3e0] sm:$0xff]
        %v1327 = vld [vmem:[%s6 + $0x3e8] sm:$0xff]
        %v1328 = vld [vmem:[%s6 + $0x3f0] sm:$0xff]
        %v1329 = vld [vmem:[%s6 + $0x3f8] sm:$0xff]
        %1331 = vset.pattern.permute.xlu0 0
        %1332 = vperm.xlu0 %1331, %v1202
        %v1333 = vpop.permute.xlu0 %1332
        %1336 = vset.pattern.permute.xlu0 0
        %1337 = vperm.xlu0 %1336, %v1203
        %v1338 = vpop.permute.xlu0 %1337
        %1341 = vset.pattern.permute.xlu0 0
        %1342 = vperm.xlu0 %1341, %v1204
        %v1343 = vpop.permute.xlu0 %1342
        %1346 = vset.pattern.permute.xlu0 0
        %1347 = vperm.xlu0 %1346, %v1205
        %v1348 = vpop.permute.xlu0 %1347
        %1351 = vset.pattern.permute.xlu0 0
        %1352 = vperm.xlu0 %1351, %v1206
        %v1353 = vpop.permute.xlu0 %1352
        %1356 = vset.pattern.permute.xlu0 0
        %1357 = vperm.xlu0 %1356, %v1207
        %v1358 = vpop.permute.xlu0 %1357
        %1361 = vset.pattern.permute.xlu0 0
        %1362 = vperm.xlu0 %1361, %v1208
        %v1363 = vpop.permute.xlu0 %1362
        %1366 = vset.pattern.permute.xlu0 0
        %1367 = vperm.xlu0 %1366, %v1209
        %v1368 = vpop.permute.xlu0 %1367
        %1371 = vset.pattern.permute.xlu0 0
        %1372 = vperm.xlu0 %1371, %v1210
        %v1373 = vpop.permute.xlu0 %1372
        %1376 = vset.pattern.permute.xlu0 0
        %1377 = vperm.xlu0 %1376, %v1211
        %v1378 = vpop.permute.xlu0 %1377
        %1381 = vset.pattern.permute.xlu0 0
        %1382 = vperm.xlu0 %1381, %v1212
        %v1383 = vpop.permute.xlu0 %1382
        %1386 = vset.pattern.permute.xlu0 0
        %1387 = vperm.xlu0 %1386, %v1213
        %v1388 = vpop.permute.xlu0 %1387
        %1391 = vset.pattern.permute.xlu0 0
        %1392 = vperm.xlu0 %1391, %v1214
        %v1393 = vpop.permute.xlu0 %1392
        %1396 = vset.pattern.permute.xlu0 0
        %1397 = vperm.xlu0 %1396, %v1215
        %v1398 = vpop.permute.xlu0 %1397
        %1401 = vset.pattern.permute.xlu0 0
        %1402 = vperm.xlu0 %1401, %v1216
        %v1403 = vpop.permute.xlu0 %1402
        %1406 = vset.pattern.permute.xlu0 0
        %1407 = vperm.xlu0 %1406, %v1217
        %v1408 = vpop.permute.xlu0 %1407
        %1411 = vset.pattern.permute.xlu0 0
        %1412 = vperm.xlu0 %1411, %v1218
        %v1413 = vpop.permute.xlu0 %1412
        %1416 = vset.pattern.permute.xlu0 0
        %1417 = vperm.xlu0 %1416, %v1219
        %v1418 = vpop.permute.xlu0 %1417
        %1421 = vset.pattern.permute.xlu0 0
        %1422 = vperm.xlu0 %1421, %v1220
        %v1423 = vpop.permute.xlu0 %1422
        %1426 = vset.pattern.permute.xlu0 0
        %1427 = vperm.xlu0 %1426, %v1221
        %v1428 = vpop.permute.xlu0 %1427
        %1431 = vset.pattern.permute.xlu0 0
        %1432 = vperm.xlu0 %1431, %v1222
        %v1433 = vpop.permute.xlu0 %1432
        %1436 = vset.pattern.permute.xlu0 0
        %1437 = vperm.xlu0 %1436, %v1223
        %v1438 = vpop.permute.xlu0 %1437
        %1441 = vset.pattern.permute.xlu0 0
        %1442 = vperm.xlu0 %1441, %v1224
        %v1443 = vpop.permute.xlu0 %1442
        %1446 = vset.pattern.permute.xlu0 0
        %1447 = vperm.xlu0 %1446, %v1225
        %v1448 = vpop.permute.xlu0 %1447
        %1451 = vset.pattern.permute.xlu0 0
        %1452 = vperm.xlu0 %1451, %v1226
        %v1453 = vpop.permute.xlu0 %1452
        %1456 = vset.pattern.permute.xlu0 0
        %1457 = vperm.xlu0 %1456, %v1227
        %v1458 = vpop.permute.xlu0 %1457
        %1461 = vset.pattern.permute.xlu0 0
        %1462 = vperm.xlu0 %1461, %v1228
        %v1463 = vpop.permute.xlu0 %1462
        %1466 = vset.pattern.permute.xlu0 0
        %1467 = vperm.xlu0 %1466, %v1229
        %v1468 = vpop.permute.xlu0 %1467
        %1471 = vset.pattern.permute.xlu0 0
        %1472 = vperm.xlu0 %1471, %v1230
        %v1473 = vpop.permute.xlu0 %1472
        %1476 = vset.pattern.permute.xlu0 0
        %1477 = vperm.xlu0 %1476, %v1231
        %v1478 = vpop.permute.xlu0 %1477
        %1481 = vset.pattern.permute.xlu0 0
        %1482 = vperm.xlu0 %1481, %v1232
        %v1483 = vpop.permute.xlu0 %1482
        %1486 = vset.pattern.permute.xlu0 0
        %1487 = vperm.xlu0 %1486, %v1233
        %v1488 = vpop.permute.xlu0 %1487
        %1491 = vset.pattern.permute.xlu0 0
        %1492 = vperm.xlu0 %1491, %v1234
        %v1493 = vpop.permute.xlu0 %1492
        %1496 = vset.pattern.permute.xlu0 0
        %1497 = vperm.xlu0 %1496, %v1235
        %v1498 = vpop.permute.xlu0 %1497
        %1501 = vset.pattern.permute.xlu0 0
        %1502 = vperm.xlu0 %1501, %v1236
        %v1503 = vpop.permute.xlu0 %1502
        %1506 = vset.pattern.permute.xlu0 0
        %1507 = vperm.xlu0 %1506, %v1237
        %v1508 = vpop.permute.xlu0 %1507
        %1511 = vset.pattern.permute.xlu0 0
        %1512 = vperm.xlu0 %1511, %v1238
        %v1513 = vpop.permute.xlu0 %1512
        %1516 = vset.pattern.permute.xlu0 0
        %1517 = vperm.xlu0 %1516, %v1239
        %v1518 = vpop.permute.xlu0 %1517
        %1521 = vset.pattern.permute.xlu0 0
        %1522 = vperm.xlu0 %1521, %v1240
        %v1523 = vpop.permute.xlu0 %1522
        %1526 = vset.pattern.permute.xlu0 0
        %1527 = vperm.xlu0 %1526, %v1241
        %v1528 = vpop.permute.xlu0 %1527
        %1531 = vset.pattern.permute.xlu0 0
        %1532 = vperm.xlu0 %1531, %v1242
        %v1533 = vpop.permute.xlu0 %1532
        %1536 = vset.pattern.permute.xlu0 0
        %1537 = vperm.xlu0 %1536, %v1243
        %v1538 = vpop.permute.xlu0 %1537
        %1541 = vset.pattern.permute.xlu0 0
        %1542 = vperm.xlu0 %1541, %v1244
        %v1543 = vpop.permute.xlu0 %1542
        %1546 = vset.pattern.permute.xlu0 0
        %1547 = vperm.xlu0 %1546, %v1245
        %v1548 = vpop.permute.xlu0 %1547
        %1551 = vset.pattern.permute.xlu0 0
        %1552 = vperm.xlu0 %1551, %v1246
        %v1553 = vpop.permute.xlu0 %1552
        %1556 = vset.pattern.permute.xlu0 0
        %1557 = vperm.xlu0 %1556, %v1247
        %v1558 = vpop.permute.xlu0 %1557
        %1561 = vset.pattern.permute.xlu0 0
        %1562 = vperm.xlu0 %1561, %v1248
        %v1563 = vpop.permute.xlu0 %1562
        %1566 = vset.pattern.permute.xlu0 0
        %1567 = vperm.xlu0 %1566, %v1249
        %v1568 = vpop.permute.xlu0 %1567
        %1571 = vset.pattern.permute.xlu0 0
        %1572 = vperm.xlu0 %1571, %v1250
        %v1573 = vpop.permute.xlu0 %1572
        %1576 = vset.pattern.permute.xlu0 0
        %1577 = vperm.xlu0 %1576, %v1251
        %v1578 = vpop.permute.xlu0 %1577
        %1581 = vset.pattern.permute.xlu0 0
        %1582 = vperm.xlu0 %1581, %v1252
        %v1583 = vpop.permute.xlu0 %1582
        %1586 = vset.pattern.permute.xlu0 0
        %1587 = vperm.xlu0 %1586, %v1253
        %v1588 = vpop.permute.xlu0 %1587
        %1591 = vset.pattern.permute.xlu0 0
        %1592 = vperm.xlu0 %1591, %v1254
        %v1593 = vpop.permute.xlu0 %1592
        %1596 = vset.pattern.permute.xlu0 0
        %1597 = vperm.xlu0 %1596, %v1255
        %v1598 = vpop.permute.xlu0 %1597
        %1601 = vset.pattern.permute.xlu0 0
        %1602 = vperm.xlu0 %1601, %v1256
        %v1603 = vpop.permute.xlu0 %1602
        %1606 = vset.pattern.permute.xlu0 0
        %1607 = vperm.xlu0 %1606, %v1257
        %v1608 = vpop.permute.xlu0 %1607
        %1611 = vset.pattern.permute.xlu0 0
        %1612 = vperm.xlu0 %1611, %v1258
        %v1613 = vpop.permute.xlu0 %1612
        %1616 = vset.pattern.permute.xlu0 0
        %1617 = vperm.xlu0 %1616, %v1259
        %v1618 = vpop.permute.xlu0 %1617
        %1621 = vset.pattern.permute.xlu0 0
        %1622 = vperm.xlu0 %1621, %v1260
        %v1623 = vpop.permute.xlu0 %1622
        %1626 = vset.pattern.permute.xlu0 0
        %1627 = vperm.xlu0 %1626, %v1261
        %v1628 = vpop.permute.xlu0 %1627
        %1631 = vset.pattern.permute.xlu0 0
        %1632 = vperm.xlu0 %1631, %v1262
        %v1633 = vpop.permute.xlu0 %1632
        %1636 = vset.pattern.permute.xlu0 0
        %1637 = vperm.xlu0 %1636, %v1263
        %v1638 = vpop.permute.xlu0 %1637
        %1641 = vset.pattern.permute.xlu0 0
        %1642 = vperm.xlu0 %1641, %v1264
        %v1643 = vpop.permute.xlu0 %1642
        %1646 = vset.pattern.permute.xlu0 0
        %1647 = vperm.xlu0 %1646, %v1265
        %v1648 = vpop.permute.xlu0 %1647
        %1651 = vset.pattern.permute.xlu0 0
        %1652 = vperm.xlu0 %1651, %v1266
        %v1653 = vpop.permute.xlu0 %1652
        %1656 = vset.pattern.permute.xlu0 0
        %1657 = vperm.xlu0 %1656, %v1267
        %v1658 = vpop.permute.xlu0 %1657
        %1661 = vset.pattern.permute.xlu0 0
        %1662 = vperm.xlu0 %1661, %v1268
        %v1663 = vpop.permute.xlu0 %1662
        %1666 = vset.pattern.permute.xlu0 0
        %1667 = vperm.xlu0 %1666, %v1269
        %v1668 = vpop.permute.xlu0 %1667
        %1671 = vset.pattern.permute.xlu0 0
        %1672 = vperm.xlu0 %1671, %v1270
        %v1673 = vpop.permute.xlu0 %1672
        %1676 = vset.pattern.permute.xlu0 0
        %1677 = vperm.xlu0 %1676, %v1271
        %v1678 = vpop.permute.xlu0 %1677
        %1681 = vset.pattern.permute.xlu0 0
        %1682 = vperm.xlu0 %1681, %v1272
        %v1683 = vpop.permute.xlu0 %1682
        %1686 = vset.pattern.permute.xlu0 0
        %1687 = vperm.xlu0 %1686, %v1273
        %v1688 = vpop.permute.xlu0 %1687
        %1691 = vset.pattern.permute.xlu0 0
        %1692 = vperm.xlu0 %1691, %v1274
        %v1693 = vpop.permute.xlu0 %1692
        %1696 = vset.pattern.permute.xlu0 0
        %1697 = vperm.xlu0 %1696, %v1275
        %v1698 = vpop.permute.xlu0 %1697
        %1701 = vset.pattern.permute.xlu0 0
        %1702 = vperm.xlu0 %1701, %v1276
        %v1703 = vpop.permute.xlu0 %1702
        %1706 = vset.pattern.permute.xlu0 0
        %1707 = vperm.xlu0 %1706, %v1277
        %v1708 = vpop.permute.xlu0 %1707
        %1711 = vset.pattern.permute.xlu0 0
        %1712 = vperm.xlu0 %1711, %v1278
        %v1713 = vpop.permute.xlu0 %1712
        %1716 = vset.pattern.permute.xlu0 0
        %1717 = vperm.xlu0 %1716, %v1279
        %v1718 = vpop.permute.xlu0 %1717
        %1721 = vset.pattern.permute.xlu0 0
        %1722 = vperm.xlu0 %1721, %v1280
        %v1723 = vpop.permute.xlu0 %1722
        %1726 = vset.pattern.permute.xlu0 0
        %1727 = vperm.xlu0 %1726, %v1281
        %v1728 = vpop.permute.xlu0 %1727
        %1731 = vset.pattern.permute.xlu0 0
        %1732 = vperm.xlu0 %1731, %v1282
        %v1733 = vpop.permute.xlu0 %1732
        %1736 = vset.pattern.permute.xlu0 0
        %1737 = vperm.xlu0 %1736, %v1283
        %v1738 = vpop.permute.xlu0 %1737
        %1741 = vset.pattern.permute.xlu0 0
        %1742 = vperm.xlu0 %1741, %v1284
        %v1743 = vpop.permute.xlu0 %1742
        %1746 = vset.pattern.permute.xlu0 0
        %1747 = vperm.xlu0 %1746, %v1285
        %v1748 = vpop.permute.xlu0 %1747
        %1751 = vset.pattern.permute.xlu0 0
        %1752 = vperm.xlu0 %1751, %v1286
        %v1753 = vpop.permute.xlu0 %1752
        %1756 = vset.pattern.permute.xlu0 0
        %1757 = vperm.xlu0 %1756, %v1287
        %v1758 = vpop.permute.xlu0 %1757
        %1761 = vset.pattern.permute.xlu0 0
        %1762 = vperm.xlu0 %1761, %v1288
        %v1763 = vpop.permute.xlu0 %1762
        %1766 = vset.pattern.permute.xlu0 0
        %1767 = vperm.xlu0 %1766, %v1289
        %v1768 = vpop.permute.xlu0 %1767
        %1771 = vset.pattern.permute.xlu0 0
        %1772 = vperm.xlu0 %1771, %v1290
        %v1773 = vpop.permute.xlu0 %1772
        %1776 = vset.pattern.permute.xlu0 0
        %1777 = vperm.xlu0 %1776, %v1291
        %v1778 = vpop.permute.xlu0 %1777
        %1781 = vset.pattern.permute.xlu0 0
        %1782 = vperm.xlu0 %1781, %v1292
        %v1783 = vpop.permute.xlu0 %1782
        %1786 = vset.pattern.permute.xlu0 0
        %1787 = vperm.xlu0 %1786, %v1293
        %v1788 = vpop.permute.xlu0 %1787
        %1791 = vset.pattern.permute.xlu0 0
        %1792 = vperm.xlu0 %1791, %v1294
        %v1793 = vpop.permute.xlu0 %1792
        %1796 = vset.pattern.permute.xlu0 0
        %1797 = vperm.xlu0 %1796, %v1295
        %v1798 = vpop.permute.xlu0 %1797
        %1801 = vset.pattern.permute.xlu0 0
        %1802 = vperm.xlu0 %1801, %v1296
        %v1803 = vpop.permute.xlu0 %1802
        %1806 = vset.pattern.permute.xlu0 0
        %1807 = vperm.xlu0 %1806, %v1297
        %v1808 = vpop.permute.xlu0 %1807
        %1811 = vset.pattern.permute.xlu0 0
        %1812 = vperm.xlu0 %1811, %v1298
        %v1813 = vpop.permute.xlu0 %1812
        %1816 = vset.pattern.permute.xlu0 0
        %1817 = vperm.xlu0 %1816, %v1299
        %v1818 = vpop.permute.xlu0 %1817
        %1821 = vset.pattern.permute.xlu0 0
        %1822 = vperm.xlu0 %1821, %v1300
        %v1823 = vpop.permute.xlu0 %1822
        %1826 = vset.pattern.permute.xlu0 0
        %1827 = vperm.xlu0 %1826, %v1301
        %v1828 = vpop.permute.xlu0 %1827
        %1831 = vset.pattern.permute.xlu0 0
        %1832 = vperm.xlu0 %1831, %v1302
        %v1833 = vpop.permute.xlu0 %1832
        %1836 = vset.pattern.permute.xlu0 0
        %1837 = vperm.xlu0 %1836, %v1303
        %v1838 = vpop.permute.xlu0 %1837
        %1841 = vset.pattern.permute.xlu0 0
        %1842 = vperm.xlu0 %1841, %v1304
        %v1843 = vpop.permute.xlu0 %1842
        %1846 = vset.pattern.permute.xlu0 0
        %1847 = vperm.xlu0 %1846, %v1305
        %v1848 = vpop.permute.xlu0 %1847
        %1851 = vset.pattern.permute.xlu0 0
        %1852 = vperm.xlu0 %1851, %v1306
        %v1853 = vpop.permute.xlu0 %1852
        %1856 = vset.pattern.permute.xlu0 0
        %1857 = vperm.xlu0 %1856, %v1307
        %v1858 = vpop.permute.xlu0 %1857
        %1861 = vset.pattern.permute.xlu0 0
        %1862 = vperm.xlu0 %1861, %v1308
        %v1863 = vpop.permute.xlu0 %1862
        %1866 = vset.pattern.permute.xlu0 0
        %1867 = vperm.xlu0 %1866, %v1309
        %v1868 = vpop.permute.xlu0 %1867
        %1871 = vset.pattern.permute.xlu0 0
        %1872 = vperm.xlu0 %1871, %v1310
        %v1873 = vpop.permute.xlu0 %1872
        %1876 = vset.pattern.permute.xlu0 0
        %1877 = vperm.xlu0 %1876, %v1311
        %v1878 = vpop.permute.xlu0 %1877
        %1881 = vset.pattern.permute.xlu0 0
        %1882 = vperm.xlu0 %1881, %v1312
        %v1883 = vpop.permute.xlu0 %1882
        %1886 = vset.pattern.permute.xlu0 0
        %1887 = vperm.xlu0 %1886, %v1313
        %v1888 = vpop.permute.xlu0 %1887
        %1891 = vset.pattern.permute.xlu0 0
        %1892 = vperm.xlu0 %1891, %v1314
        %v1893 = vpop.permute.xlu0 %1892
        %1896 = vset.pattern.permute.xlu0 0
        %1897 = vperm.xlu0 %1896, %v1315
        %v1898 = vpop.permute.xlu0 %1897
        %1901 = vset.pattern.permute.xlu0 0
        %1902 = vperm.xlu0 %1901, %v1316
        %v1903 = vpop.permute.xlu0 %1902
        %1906 = vset.pattern.permute.xlu0 0
        %1907 = vperm.xlu0 %1906, %v1317
        %v1908 = vpop.permute.xlu0 %1907
        %1911 = vset.pattern.permute.xlu0 0
        %1912 = vperm.xlu0 %1911, %v1318
        %v1913 = vpop.permute.xlu0 %1912
        %1916 = vset.pattern.permute.xlu0 0
        %1917 = vperm.xlu0 %1916, %v1319
        %v1918 = vpop.permute.xlu0 %1917
        %1921 = vset.pattern.permute.xlu0 0
        %1922 = vperm.xlu0 %1921, %v1320
        %v1923 = vpop.permute.xlu0 %1922
        %1926 = vset.pattern.permute.xlu0 0
        %1927 = vperm.xlu0 %1926, %v1321
        %v1928 = vpop.permute.xlu0 %1927
        %1931 = vset.pattern.permute.xlu0 0
        %1932 = vperm.xlu0 %1931, %v1322
        %v1933 = vpop.permute.xlu0 %1932
        %1936 = vset.pattern.permute.xlu0 0
        %1937 = vperm.xlu0 %1936, %v1323
        %v1938 = vpop.permute.xlu0 %1937
        %1941 = vset.pattern.permute.xlu0 0
        %1942 = vperm.xlu0 %1941, %v1324
        %v1943 = vpop.permute.xlu0 %1942
        %1946 = vset.pattern.permute.xlu0 0
        %1947 = vperm.xlu0 %1946, %v1325
        %v1948 = vpop.permute.xlu0 %1947
        %1951 = vset.pattern.permute.xlu0 0
        %1952 = vperm.xlu0 %1951, %v1326
        %v1953 = vpop.permute.xlu0 %1952
        %1956 = vset.pattern.permute.xlu0 0
        %1957 = vperm.xlu0 %1956, %v1327
        %v1958 = vpop.permute.xlu0 %1957
        %1961 = vset.pattern.permute.xlu0 0
        %1962 = vperm.xlu0 %1961, %v1328
        %v1963 = vpop.permute.xlu0 %1962
        %1966 = vset.pattern.permute.xlu0 0
        %1967 = vperm.xlu0 %1966, %v1329
        %v1968 = vpop.permute.xlu0 %1967
        %1970 = vmatprep.subr.mxu0 0.0
        %1971 = vmatpush1.msra.mxu0 %v1058
        %1972 = vmatprep.subr.mxu0 0.0
        %1973 = vmatpush1.msra.mxu0 %v1059
        %1974 = vmatprep.subr.mxu0 0.0
        %1975 = vmatpush1.msra.mxu0 %v1060
        %1976 = vmatprep.subr.mxu0 0.0
        %1977 = vmatpush1.msra.mxu0 %v1061
        %1978 = vmatprep.subr.mxu0 0.0
        %1979 = vmatpush1.msra.mxu0 %v1062
        %1980 = vmatprep.subr.mxu0 0.0
        %1981 = vmatpush1.msra.mxu0 %v1063
        %1982 = vmatprep.subr.mxu0 0.0
        %1983 = vmatpush1.msra.mxu0 %v1064
        %1984 = vmatprep.subr.mxu0 0.0
        %1985 = vmatpush1.msra.mxu0 %v1065
        %1986 = vmatprep.subr.mxu0 0.0
        %1987 = vmatpush1.msra.mxu0 %v1066
        %1988 = vmatprep.subr.mxu0 0.0
        %1989 = vmatpush1.msra.mxu0 %v1067
        %1990 = vmatprep.subr.mxu0 0.0
        %1991 = vmatpush1.msra.mxu0 %v1068
        %1992 = vmatprep.subr.mxu0 0.0
        %1993 = vmatpush1.msra.mxu0 %v1069
        %1994 = vmatprep.subr.mxu0 0.0
        %1995 = vmatpush1.msra.mxu0 %v1070
        %1996 = vmatprep.subr.mxu0 0.0
        %1997 = vmatpush1.msra.mxu0 %v1071
        %1998 = vmatprep.subr.mxu0 0.0
        %1999 = vmatpush1.msra.mxu0 %v1072
        %2000 = vmatprep.subr.mxu0 0.0
        %2001 = vmatpush1.msra.mxu0 %v1073
        %2002 = vmatprep.subr.mxu0 0.0
        %2003 = vmatpush1.msra.mxu0 0.0
        %2004 = vmatprep.subr.mxu0 0.0
        %2005 = vmatpush1.msra.mxu0 0.0
        %2006 = vmatprep.subr.mxu0 0.0
        %2007 = vmatpush1.msra.mxu0 0.0
        %2008 = vmatprep.subr.mxu0 0.0
        %2009 = vmatpush1.msra.mxu0 0.0
        %2010 = vmatprep.subr.mxu0 0.0
        %2011 = vmatpush1.msra.mxu0 0.0
        %2012 = vmatprep.subr.mxu0 0.0
        %2013 = vmatpush1.msra.mxu0 0.0
        %2014 = vmatprep.subr.mxu0 0.0
        %2015 = vmatpush1.msra.mxu0 0.0
        %2016 = vmatprep.subr.mxu0 0.0
        %2017 = vmatpush1.msra.mxu0 0.0
        %2018 = vmatprep.subr.mxu0 0.0
        %2019 = vmatpush1.msra.mxu0 0.0
        %2020 = vmatprep.subr.mxu0 0.0
        %2021 = vmatpush1.msra.mxu0 0.0
        %2022 = vmatprep.subr.mxu0 0.0
        %2023 = vmatpush1.msra.mxu0 0.0
        %2024 = vmatprep.subr.mxu0 0.0
        %2025 = vmatpush1.msra.mxu0 0.0
        %2026 = vmatprep.subr.mxu0 0.0
        %2027 = vmatpush1.msra.mxu0 0.0
        %2028 = vmatprep.subr.mxu0 0.0
        %2029 = vmatpush1.msra.mxu0 0.0
        %2030 = vmatprep.subr.mxu0 0.0
        %2031 = vmatpush1.msra.mxu0 0.0
        %2032 = vmatprep.subr.mxu0 0.0
        %2033 = vmatpush1.msra.mxu0 0.0
        %2034 = vmatprep.mubr.f32.mxu0 0.0
        %2035 = vmatmul.mubr.f32.gmra.mrb[0].mxu0 %v1074
        %v2036 = vpop.f32.mrb[0].mxu0
        %v2037 = vadd.f32 %v1333, %v2036
        %v2038 = vpop.f32.mrb[0].mxu0
        %2039 = vmatprep.mubr.f32.mxu0 0.0
        %2040 = vmatmul.mubr.f32.gmra.mrb[0].mxu0 %v1075
        %v2041 = vpop.f32.mrb[0].mxu0
        %v2042 = vadd.f32 %v1338, %v2041
        %v2043 = vpop.f32.mrb[0].mxu0
        %2044 = vmatprep.mubr.f32.mxu0 0.0
        %2045 = vmatmul.mubr.f32.gmra.mrb[0].mxu0 %v1076
        %v2046 = vpop.f32.mrb[0].mxu0
        %v2047 = vadd.f32 %v1343, %v2046
        %v2048 = vpop.f32.mrb[0].mxu0
        %2049 = vmatprep.mubr.f32.mxu0 0.0
        %2050 = vmatmul.mubr.f32.gmra.mrb[0].mxu0 %v1077
        %v2051 = vpop.f32.mrb[0].mxu0
        %v2052 = vadd.f32 %v1348, %v2051
        %v2053 = vpop.f32.mrb[0].mxu0
        %2054 = vmatprep.mubr.f32.mxu0 0.0
        %2055 = vmatmul.mubr.f32.gmra.mrb[0].mxu0 %v1078
        %v2056 = vpop.f32.mrb[0].mxu0
        %v2057 = vadd.f32 %v1353, %v2056
        %v2058 = vpop.f32.mrb[0].mxu0
        %2059 = vmatprep.mubr.f32.mxu0 0.0
        %2060 = vmatmul.mubr.f32.gmra.mrb[0].mxu0 %v1079
        %v2061 = vpop.f32.mrb[0].mxu0
        %v2062 = vadd.f32 %v1358, %v2061
        %v2063 = vpop.f32.mrb[0].mxu0
        %2064 = vmatprep.mubr.f32.mxu0 0.0
        %2065 = vmatmul.mubr.f32.gmra.mrb[0].mxu0 %v1080
        %v2066 = vpop.f32.mrb[0].mxu0
        %v2067 = vadd.f32 %v1363, %v2066
        %v2068 = vpop.f32.mrb[0].mxu0
        %2069 = vmatprep.mubr.f32.mxu0 0.0
        %2070 = vmatmul.mubr.f32.gmra.mrb[0].mxu0 %v1081
        %v2071 = vpop.f32.mrb[0].mxu0
        %v2072 = vadd.f32 %v1368, %v2071
        %v2073 = vpop.f32.mrb[0].mxu0
        %2074 = vmatprep.mubr.f32.mxu0 0.0
        %2075 = vmatmul.mubr.f32.gmra.mrb[0].mxu0 %v1082
        %v2076 = vpop.f32.mrb[0].mxu0
        %v2077 = vadd.f32 %v1373, %v2076
        %v2078 = vpop.f32.mrb[0].mxu0
        %2079 = vmatprep.mubr.f32.mxu0 0.0
        %2080 = vmatmul.mubr.f32.gmra.mrb[0].mxu0 %v1083
        %v2081 = vpop.f32.mrb[0].mxu0
        %v2082 = vadd.f32 %v1378, %v2081
        %v2083 = vpop.f32.mrb[0].mxu0
        %2084 = vmatprep.mubr.f32.mxu0 0.0
        %2085 = vmatmul.mubr.f32.gmra.mrb[0].mxu0 %v1084
        %v2086 = vpop.f32.mrb[0].mxu0
        %v2087 = vadd.f32 %v1383, %v2086
        %v2088 = vpop.f32.mrb[0].mxu0
        %2089 = vmatprep.mubr.f32.mxu0 0.0
        %2090 = vmatmul.mubr.f32.gmra.mrb[0].mxu0 %v1085
        %v2091 = vpop.f32.mrb[0].mxu0
        %v2092 = vadd.f32 %v1388, %v2091
        %v2093 = vpop.f32.mrb[0].mxu0
        %2094 = vmatprep.mubr.f32.mxu0 0.0
        %2095 = vmatmul.mubr.f32.gmra.mrb[0].mxu0 %v1086
        %v2096 = vpop.f32.mrb[0].mxu0
        %v2097 = vadd.f32 %v1393, %v2096
        %v2098 = vpop.f32.mrb[0].mxu0
        %2099 = vmatprep.mubr.f32.mxu0 0.0
        %2100 = vmatmul.mubr.f32.gmra.mrb[0].mxu0 %v1087
        %v2101 = vpop.f32.mrb[0].mxu0
        %v2102 = vadd.f32 %v1398, %v2101
        %v2103 = vpop.f32.mrb[0].mxu0
        %2104 = vmatprep.mubr.f32.mxu0 0.0
        %2105 = vmatmul.mubr.f32.gmra.mrb[0].mxu0 %v1088
        %v2106 = vpop.f32.mrb[0].mxu0
        %v2107 = vadd.f32 %v1403, %v2106
        %v2108 = vpop.f32.mrb[0].mxu0
        %2109 = vmatprep.mubr.f32.mxu0 0.0
        %2110 = vmatmul.mubr.f32.gmra.mrb[0].mxu0 %v1089
        %v2111 = vpop.f32.mrb[0].mxu0
        %v2112 = vadd.f32 %v1408, %v2111
        %v2113 = vpop.f32.mrb[0].mxu0
        %2114 = vmatprep.mubr.f32.mxu0 0.0
        %2115 = vmatmul.mubr.f32.gmra.mrb[0].mxu0 %v1090
        %v2116 = vpop.f32.mrb[0].mxu0
        %v2117 = vadd.f32 %v1413, %v2116
        %v2118 = vpop.f32.mrb[0].mxu0
        %2119 = vmatprep.mubr.f32.mxu0 0.0
        %2120 = vmatmul.mubr.f32.gmra.mrb[0].mxu0 %v1091
        %v2121 = vpop.f32.mrb[0].mxu0
        %v2122 = vadd.f32 %v1418, %v2121
        %v2123 = vpop.f32.mrb[0].mxu0
        %2124 = vmatprep.mubr.f32.mxu0 0.0
        %2125 = vmatmul.mubr.f32.gmra.mrb[0].mxu0 %v1092
        %v2126 = vpop.f32.mrb[0].mxu0
        %v2127 = vadd.f32 %v1423, %v2126
        %v2128 = vpop.f32.mrb[0].mxu0
        %2129 = vmatprep.mubr.f32.mxu0 0.0
        %2130 = vmatmul.mubr.f32.gmra.mrb[0].mxu0 %v1093
        %v2131 = vpop.f32.mrb[0].mxu0
        %v2132 = vadd.f32 %v1428, %v2131
        %v2133 = vpop.f32.mrb[0].mxu0
        %2134 = vmatprep.mubr.f32.mxu0 0.0
        %2135 = vmatmul.mubr.f32.gmra.mrb[0].mxu0 %v1094
        %v2136 = vpop.f32.mrb[0].mxu0
        %v2137 = vadd.f32 %v1433, %v2136
        %v2138 = vpop.f32.mrb[0].mxu0
        %2139 = vmatprep.mubr.f32.mxu0 0.0
        %2140 = vmatmul.mubr.f32.gmra.mrb[0].mxu0 %v1095
        %v2141 = vpop.f32.mrb[0].mxu0
        %v2142 = vadd.f32 %v1438, %v2141
        %v2143 = vpop.f32.mrb[0].mxu0
        %2144 = vmatprep.mubr.f32.mxu0 0.0
        %2145 = vmatmul.mubr.f32.gmra.mrb[0].mxu0 %v1096
        %v2146 = vpop.f32.mrb[0].mxu0
        %v2147 = vadd.f32 %v1443, %v2146
        %v2148 = vpop.f32.mrb[0].mxu0
        %2149 = vmatprep.mubr.f32.mxu0 0.0
        %2150 = vmatmul.mubr.f32.gmra.mrb[0].mxu0 %v1097
        %v2151 = vpop.f32.mrb[0].mxu0
        %v2152 = vadd.f32 %v1448, %v2151
        %v2153 = vpop.f32.mrb[0].mxu0
        %2154 = vmatprep.mubr.f32.mxu0 0.0
        %2155 = vmatmul.mubr.f32.gmra.mrb[0].mxu0 %v1098
        %v2156 = vpop.f32.mrb[0].mxu0
        %v2157 = vadd.f32 %v1453, %v2156
        %v2158 = vpop.f32.mrb[0].mxu0
        %2159 = vmatprep.mubr.f32.mxu0 0.0
        %2160 = vmatmul.mubr.f32.gmra.mrb[0].mxu0 %v1099
        %v2161 = vpop.f32.mrb[0].mxu0
        %v2162 = vadd.f32 %v1458, %v2161
        %v2163 = vpop.f32.mrb[0].mxu0
        %2164 = vmatprep.mubr.f32.mxu0 0.0
        %2165 = vmatmul.mubr.f32.gmra.mrb[0].mxu0 %v1100
        %v2166 = vpop.f32.mrb[0].mxu0
        %v2167 = vadd.f32 %v1463, %v2166
        %v2168 = vpop.f32.mrb[0].mxu0
        %2169 = vmatprep.mubr.f32.mxu0 0.0
        %2170 = vmatmul.mubr.f32.gmra.mrb[0].mxu0 %v1101
        %v2171 = vpop.f32.mrb[0].mxu0
        %v2172 = vadd.f32 %v1468, %v2171
        %v2173 = vpop.f32.mrb[0].mxu0
        %2174 = vmatprep.mubr.f32.mxu0 0.0
        %2175 = vmatmul.mubr.f32.gmra.mrb[0].mxu0 %v1102
        %v2176 = vpop.f32.mrb[0].mxu0
        %v2177 = vadd.f32 %v1473, %v2176
        %v2178 = vpop.f32.mrb[0].mxu0
        %2179 = vmatprep.mubr.f32.mxu0 0.0
        %2180 = vmatmul.mubr.f32.gmra.mrb[0].mxu0 %v1103
        %v2181 = vpop.f32.mrb[0].mxu0
        %v2182 = vadd.f32 %v1478, %v2181
        %v2183 = vpop.f32.mrb[0].mxu0
        %2184 = vmatprep.mubr.f32.mxu0 0.0
        %2185 = vmatmul.mubr.f32.gmra.mrb[0].mxu0 %v1104
        %v2186 = vpop.f32.mrb[0].mxu0
        %v2187 = vadd.f32 %v1483, %v2186
        %v2188 = vpop.f32.mrb[0].mxu0
        %2189 = vmatprep.mubr.f32.mxu0 0.0
        %2190 = vmatmul.mubr.f32.gmra.mrb[0].mxu0 %v1105
        %v2191 = vpop.f32.mrb[0].mxu0
        %v2192 = vadd.f32 %v1488, %v2191
        %v2193 = vpop.f32.mrb[0].mxu0
        %2194 = vmatprep.mubr.f32.mxu0 0.0
        %2195 = vmatmul.mubr.f32.gmra.mrb[0].mxu0 %v1106
        %v2196 = vpop.f32.mrb[0].mxu0
        %v2197 = vadd.f32 %v1493, %v2196
        %v2198 = vpop.f32.mrb[0].mxu0
        %2199 = vmatprep.mubr.f32.mxu0 0.0
        %2200 = vmatmul.mubr.f32.gmra.mrb[0].mxu0 %v1107
        %v2201 = vpop.f32.mrb[0].mxu0
        %v2202 = vadd.f32 %v1498, %v2201
        %v2203 = vpop.f32.mrb[0].mxu0
        %2204 = vmatprep.mubr.f32.mxu0 0.0
        %2205 = vmatmul.mubr.f32.gmra.mrb[0].mxu0 %v1108
        %v2206 = vpop.f32.mrb[0].mxu0
        %v2207 = vadd.f32 %v1503, %v2206
        %v2208 = vpop.f32.mrb[0].mxu0
        %2209 = vmatprep.mubr.f32.mxu0 0.0
        %2210 = vmatmul.mubr.f32.gmra.mrb[0].mxu0 %v1109
        %v2211 = vpop.f32.mrb[0].mxu0
        %v2212 = vadd.f32 %v1508, %v2211
        %v2213 = vpop.f32.mrb[0].mxu0
        %2214 = vmatprep.mubr.f32.mxu0 0.0
        %2215 = vmatmul.mubr.f32.gmra.mrb[0].mxu0 %v1110
        %v2216 = vpop.f32.mrb[0].mxu0
        %v2217 = vadd.f32 %v1513, %v2216
        %v2218 = vpop.f32.mrb[0].mxu0
        %2219 = vmatprep.mubr.f32.mxu0 0.0
        %2220 = vmatmul.mubr.f32.gmra.mrb[0].mxu0 %v1111
        %v2221 = vpop.f32.mrb[0].mxu0
        %v2222 = vadd.f32 %v1518, %v2221
        %v2223 = vpop.f32.mrb[0].mxu0
        %2224 = vmatprep.mubr.f32.mxu0 0.0
        %2225 = vmatmul.mubr.f32.gmra.mrb[0].mxu0 %v1112
        %v2226 = vpop.f32.mrb[0].mxu0
        %v2227 = vadd.f32 %v1523, %v2226
        %v2228 = vpop.f32.mrb[0].mxu0
        %2229 = vmatprep.mubr.f32.mxu0 0.0
        %2230 = vmatmul.mubr.f32.gmra.mrb[0].mxu0 %v1113
        %v2231 = vpop.f32.mrb[0].mxu0
        %v2232 = vadd.f32 %v1528, %v2231
        %v2233 = vpop.f32.mrb[0].mxu0
        %2234 = vmatprep.mubr.f32.mxu0 0.0
        %2235 = vmatmul.mubr.f32.gmra.mrb[0].mxu0 %v1114
        %v2236 = vpop.f32.mrb[0].mxu0
        %v2237 = vadd.f32 %v1533, %v2236
        %v2238 = vpop.f32.mrb[0].mxu0
        %2239 = vmatprep.mubr.f32.mxu0 0.0
        %2240 = vmatmul.mubr.f32.gmra.mrb[0].mxu0 %v1115
        %v2241 = vpop.f32.mrb[0].mxu0
        %v2242 = vadd.f32 %v1538, %v2241
        %v2243 = vpop.f32.mrb[0].mxu0
        %2244 = vmatprep.mubr.f32.mxu0 0.0
        %2245 = vmatmul.mubr.f32.gmra.mrb[0].mxu0 %v1116
        %v2246 = vpop.f32.mrb[0].mxu0
        %v2247 = vadd.f32 %v1543, %v2246
        %v2248 = vpop.f32.mrb[0].mxu0
        %2249 = vmatprep.mubr.f32.mxu0 0.0
        %2250 = vmatmul.mubr.f32.gmra.mrb[0].mxu0 %v1117
        %v2251 = vpop.f32.mrb[0].mxu0
        %v2252 = vadd.f32 %v1548, %v2251
        %v2253 = vpop.f32.mrb[0].mxu0
        %2254 = vmatprep.mubr.f32.mxu0 0.0
        %2255 = vmatmul.mubr.f32.gmra.mrb[0].mxu0 %v1118
        %v2256 = vpop.f32.mrb[0].mxu0
        %v2257 = vadd.f32 %v1553, %v2256
        %v2258 = vpop.f32.mrb[0].mxu0
        %2259 = vmatprep.mubr.f32.mxu0 0.0
        %2260 = vmatmul.mubr.f32.gmra.mrb[0].mxu0 %v1119
        %v2261 = vpop.f32.mrb[0].mxu0
        %v2262 = vadd.f32 %v1558, %v2261
        %v2263 = vpop.f32.mrb[0].mxu0
        %2264 = vmatprep.mubr.f32.mxu0 0.0
        %2265 = vmatmul.mubr.f32.gmra.mrb[0].mxu0 %v1120
        %v2266 = vpop.f32.mrb[0].mxu0
        %v2267 = vadd.f32 %v1563, %v2266
        %v2268 = vpop.f32.mrb[0].mxu0
        %2269 = vmatprep.mubr.f32.mxu0 0.0
        %2270 = vmatmul.mubr.f32.gmra.mrb[0].mxu0 %v1121
        %v2271 = vpop.f32.mrb[0].mxu0
        %v2272 = vadd.f32 %v1568, %v2271
        %v2273 = vpop.f32.mrb[0].mxu0
        %2274 = vmatprep.mubr.f32.mxu0 0.0
        %2275 = vmatmul.mubr.f32.gmra.mrb[0].mxu0 %v1122
        %v2276 = vpop.f32.mrb[0].mxu0
        %v2277 = vadd.f32 %v1573, %v2276
        %v2278 = vpop.f32.mrb[0].mxu0
        %2279 = vmatprep.mubr.f32.mxu0 0.0
        %2280 = vmatmul.mubr.f32.gmra.mrb[0].mxu0 %v1123
        %v2281 = vpop.f32.mrb[0].mxu0
        %v2282 = vadd.f32 %v1578, %v2281
        %v2283 = vpop.f32.mrb[0].mxu0
        %2284 = vmatprep.mubr.f32.mxu0 0.0
        %2285 = vmatmul.mubr.f32.gmra.mrb[0].mxu0 %v1124
        %v2286 = vpop.f32.mrb[0].mxu0
        %v2287 = vadd.f32 %v1583, %v2286
        %v2288 = vpop.f32.mrb[0].mxu0
        %2289 = vmatprep.mubr.f32.mxu0 0.0
        %2290 = vmatmul.mubr.f32.gmra.mrb[0].mxu0 %v1125
        %v2291 = vpop.f32.mrb[0].mxu0
        %v2292 = vadd.f32 %v1588, %v2291
        %v2293 = vpop.f32.mrb[0].mxu0
        %2294 = vmatprep.mubr.f32.mxu0 0.0
        %2295 = vmatmul.mubr.f32.gmra.mrb[0].mxu0 %v1126
        %v2296 = vpop.f32.mrb[0].mxu0
        %v2297 = vadd.f32 %v1593, %v2296
        %v2298 = vpop.f32.mrb[0].mxu0
        %2299 = vmatprep.mubr.f32.mxu0 0.0
        %2300 = vmatmul.mubr.f32.gmra.mrb[0].mxu0 %v1127
        %v2301 = vpop.f32.mrb[0].mxu0
        %v2302 = vadd.f32 %v1598, %v2301
        %v2303 = vpop.f32.mrb[0].mxu0
        %2304 = vmatprep.mubr.f32.mxu0 0.0
        %2305 = vmatmul.mubr.f32.gmra.mrb[0].mxu0 %v1128
        %v2306 = vpop.f32.mrb[0].mxu0
        %v2307 = vadd.f32 %v1603, %v2306
        %v2308 = vpop.f32.mrb[0].mxu0
        %2309 = vmatprep.mubr.f32.mxu0 0.0
        %2310 = vmatmul.mubr.f32.gmra.mrb[0].mxu0 %v1129
        %v2311 = vpop.f32.mrb[0].mxu0
        %v2312 = vadd.f32 %v1608, %v2311
        %v2313 = vpop.f32.mrb[0].mxu0
        %2314 = vmatprep.mubr.f32.mxu0 0.0
        %2315 = vmatmul.mubr.f32.gmra.mrb[0].mxu0 %v1130
        %v2316 = vpop.f32.mrb[0].mxu0
        %v2317 = vadd.f32 %v1613, %v2316
        %v2318 = vpop.f32.mrb[0].mxu0
        %2319 = vmatprep.mubr.f32.mxu0 0.0
        %2320 = vmatmul.mubr.f32.gmra.mrb[0].mxu0 %v1131
        %v2321 = vpop.f32.mrb[0].mxu0
        %v2322 = vadd.f32 %v1618, %v2321
        %v2323 = vpop.f32.mrb[0].mxu0
        %2324 = vmatprep.mubr.f32.mxu0 0.0
        %2325 = vmatmul.mubr.f32.gmra.mrb[0].mxu0 %v1132
        %v2326 = vpop.f32.mrb[0].mxu0
        %v2327 = vadd.f32 %v1623, %v2326
        %v2328 = vpop.f32.mrb[0].mxu0
        %2329 = vmatprep.mubr.f32.mxu0 0.0
        %2330 = vmatmul.mubr.f32.gmra.mrb[0].mxu0 %v1133
        %v2331 = vpop.f32.mrb[0].mxu0
        %v2332 = vadd.f32 %v1628, %v2331
        %v2333 = vpop.f32.mrb[0].mxu0
        %2334 = vmatprep.mubr.f32.mxu0 0.0
        %2335 = vmatmul.mubr.f32.gmra.mrb[0].mxu0 %v1134
        %v2336 = vpop.f32.mrb[0].mxu0
        %v2337 = vadd.f32 %v1633, %v2336
        %v2338 = vpop.f32.mrb[0].mxu0
        %2339 = vmatprep.mubr.f32.mxu0 0.0
        %2340 = vmatmul.mubr.f32.gmra.mrb[0].mxu0 %v1135
        %v2341 = vpop.f32.mrb[0].mxu0
        %v2342 = vadd.f32 %v1638, %v2341
        %v2343 = vpop.f32.mrb[0].mxu0
        %2344 = vmatprep.mubr.f32.mxu0 0.0
        %2345 = vmatmul.mubr.f32.gmra.mrb[0].mxu0 %v1136
        %v2346 = vpop.f32.mrb[0].mxu0
        %v2347 = vadd.f32 %v1643, %v2346
        %v2348 = vpop.f32.mrb[0].mxu0
        %2349 = vmatprep.mubr.f32.mxu0 0.0
        %2350 = vmatmul.mubr.f32.gmra.mrb[0].mxu0 %v1137
        %v2351 = vpop.f32.mrb[0].mxu0
        %v2352 = vadd.f32 %v1648, %v2351
        %v2353 = vpop.f32.mrb[0].mxu0
        %2354 = vmatprep.mubr.f32.mxu0 0.0
        %2355 = vmatmul.mubr.f32.gmra.mrb[0].mxu0 %v1138
        %v2356 = vpop.f32.mrb[0].mxu0
        %v2357 = vadd.f32 %v1653, %v2356
        %v2358 = vpop.f32.mrb[0].mxu0
        %2359 = vmatprep.mubr.f32.mxu0 0.0
        %2360 = vmatmul.mubr.f32.gmra.mrb[0].mxu0 %v1139
        %v2361 = vpop.f32.mrb[0].mxu0
        %v2362 = vadd.f32 %v1658, %v2361
        %v2363 = vpop.f32.mrb[0].mxu0
        %2364 = vmatprep.mubr.f32.mxu0 0.0
        %2365 = vmatmul.mubr.f32.gmra.mrb[0].mxu0 %v1140
        %v2366 = vpop.f32.mrb[0].mxu0
        %v2367 = vadd.f32 %v1663, %v2366
        %v2368 = vpop.f32.mrb[0].mxu0
        %2369 = vmatprep.mubr.f32.mxu0 0.0
        %2370 = vmatmul.mubr.f32.gmra.mrb[0].mxu0 %v1141
        %v2371 = vpop.f32.mrb[0].mxu0
        %v2372 = vadd.f32 %v1668, %v2371
        %v2373 = vpop.f32.mrb[0].mxu0
        %2374 = vmatprep.mubr.f32.mxu0 0.0
        %2375 = vmatmul.mubr.f32.gmra.mrb[0].mxu0 %v1142
        %v2376 = vpop.f32.mrb[0].mxu0
        %v2377 = vadd.f32 %v1673, %v2376
        %v2378 = vpop.f32.mrb[0].mxu0
        %2379 = vmatprep.mubr.f32.mxu0 0.0
        %2380 = vmatmul.mubr.f32.gmra.mrb[0].mxu0 %v1143
        %v2381 = vpop.f32.mrb[0].mxu0
        %v2382 = vadd.f32 %v1678, %v2381
        %v2383 = vpop.f32.mrb[0].mxu0
        %2384 = vmatprep.mubr.f32.mxu0 0.0
        %2385 = vmatmul.mubr.f32.gmra.mrb[0].mxu0 %v1144
        %v2386 = vpop.f32.mrb[0].mxu0
        %v2387 = vadd.f32 %v1683, %v2386
        %v2388 = vpop.f32.mrb[0].mxu0
        %2389 = vmatprep.mubr.f32.mxu0 0.0
        %2390 = vmatmul.mubr.f32.gmra.mrb[0].mxu0 %v1145
        %v2391 = vpop.f32.mrb[0].mxu0
        %v2392 = vadd.f32 %v1688, %v2391
        %v2393 = vpop.f32.mrb[0].mxu0
        %2394 = vmatprep.mubr.f32.mxu0 0.0
        %2395 = vmatmul.mubr.f32.gmra.mrb[0].mxu0 %v1146
        %v2396 = vpop.f32.mrb[0].mxu0
        %v2397 = vadd.f32 %v1693, %v2396
        %v2398 = vpop.f32.mrb[0].mxu0
        %2399 = vmatprep.mubr.f32.mxu0 0.0
        %2400 = vmatmul.mubr.f32.gmra.mrb[0].mxu0 %v1147
        %v2401 = vpop.f32.mrb[0].mxu0
        %v2402 = vadd.f32 %v1698, %v2401
        %v2403 = vpop.f32.mrb[0].mxu0
        %2404 = vmatprep.mubr.f32.mxu0 0.0
        %2405 = vmatmul.mubr.f32.gmra.mrb[0].mxu0 %v1148
        %v2406 = vpop.f32.mrb[0].mxu0
        %v2407 = vadd.f32 %v1703, %v2406
        %v2408 = vpop.f32.mrb[0].mxu0
        %2409 = vmatprep.mubr.f32.mxu0 0.0
        %2410 = vmatmul.mubr.f32.gmra.mrb[0].mxu0 %v1149
        %v2411 = vpop.f32.mrb[0].mxu0
        %v2412 = vadd.f32 %v1708, %v2411
        %v2413 = vpop.f32.mrb[0].mxu0
        %2414 = vmatprep.mubr.f32.mxu0 0.0
        %2415 = vmatmul.mubr.f32.gmra.mrb[0].mxu0 %v1150
        %v2416 = vpop.f32.mrb[0].mxu0
        %v2417 = vadd.f32 %v1713, %v2416
        %v2418 = vpop.f32.mrb[0].mxu0
        %2419 = vmatprep.mubr.f32.mxu0 0.0
        %2420 = vmatmul.mubr.f32.gmra.mrb[0].mxu0 %v1151
        %v2421 = vpop.f32.mrb[0].mxu0
        %v2422 = vadd.f32 %v1718, %v2421
        %v2423 = vpop.f32.mrb[0].mxu0
        %2424 = vmatprep.mubr.f32.mxu0 0.0
        %2425 = vmatmul.mubr.f32.gmra.mrb[0].mxu0 %v1152
        %v2426 = vpop.f32.mrb[0].mxu0
        %v2427 = vadd.f32 %v1723, %v2426
        %v2428 = vpop.f32.mrb[0].mxu0
        %2429 = vmatprep.mubr.f32.mxu0 0.0
        %2430 = vmatmul.mubr.f32.gmra.mrb[0].mxu0 %v1153
        %v2431 = vpop.f32.mrb[0].mxu0
        %v2432 = vadd.f32 %v1728, %v2431
        %v2433 = vpop.f32.mrb[0].mxu0
        %2434 = vmatprep.mubr.f32.mxu0 0.0
        %2435 = vmatmul.mubr.f32.gmra.mrb[0].mxu0 %v1154
        %v2436 = vpop.f32.mrb[0].mxu0
        %v2437 = vadd.f32 %v1733, %v2436
        %v2438 = vpop.f32.mrb[0].mxu0
        %2439 = vmatprep.mubr.f32.mxu0 0.0
        %2440 = vmatmul.mubr.f32.gmra.mrb[0].mxu0 %v1155
        %v2441 = vpop.f32.mrb[0].mxu0
        %v2442 = vadd.f32 %v1738, %v2441
        %v2443 = vpop.f32.mrb[0].mxu0
        %2444 = vmatprep.mubr.f32.mxu0 0.0
        %2445 = vmatmul.mubr.f32.gmra.mrb[0].mxu0 %v1156
        %v2446 = vpop.f32.mrb[0].mxu0
        %v2447 = vadd.f32 %v1743, %v2446
        %v2448 = vpop.f32.mrb[0].mxu0
        %2449 = vmatprep.mubr.f32.mxu0 0.0
        %2450 = vmatmul.mubr.f32.gmra.mrb[0].mxu0 %v1157
        %v2451 = vpop.f32.mrb[0].mxu0
        %v2452 = vadd.f32 %v1748, %v2451
        %v2453 = vpop.f32.mrb[0].mxu0
        %2454 = vmatprep.mubr.f32.mxu0 0.0
        %2455 = vmatmul.mubr.f32.gmra.mrb[0].mxu0 %v1158
        %v2456 = vpop.f32.mrb[0].mxu0
        %v2457 = vadd.f32 %v1753, %v2456
        %v2458 = vpop.f32.mrb[0].mxu0
        %2459 = vmatprep.mubr.f32.mxu0 0.0
        %2460 = vmatmul.mubr.f32.gmra.mrb[0].mxu0 %v1159
        %v2461 = vpop.f32.mrb[0].mxu0
        %v2462 = vadd.f32 %v1758, %v2461
        %v2463 = vpop.f32.mrb[0].mxu0
        %2464 = vmatprep.mubr.f32.mxu0 0.0
        %2465 = vmatmul.mubr.f32.gmra.mrb[0].mxu0 %v1160
        %v2466 = vpop.f32.mrb[0].mxu0
        %v2467 = vadd.f32 %v1763, %v2466
        %v2468 = vpop.f32.mrb[0].mxu0
        %2469 = vmatprep.mubr.f32.mxu0 0.0
        %2470 = vmatmul.mubr.f32.gmra.mrb[0].mxu0 %v1161
        %v2471 = vpop.f32.mrb[0].mxu0
        %v2472 = vadd.f32 %v1768, %v2471
        %v2473 = vpop.f32.mrb[0].mxu0
        %2474 = vmatprep.mubr.f32.mxu0 0.0
        %2475 = vmatmul.mubr.f32.gmra.mrb[0].mxu0 %v1162
        %v2476 = vpop.f32.mrb[0].mxu0
        %v2477 = vadd.f32 %v1773, %v2476
        %v2478 = vpop.f32.mrb[0].mxu0
        %2479 = vmatprep.mubr.f32.mxu0 0.0
        %2480 = vmatmul.mubr.f32.gmra.mrb[0].mxu0 %v1163
        %v2481 = vpop.f32.mrb[0].mxu0
        %v2482 = vadd.f32 %v1778, %v2481
        %v2483 = vpop.f32.mrb[0].mxu0
        %2484 = vmatprep.mubr.f32.mxu0 0.0
        %2485 = vmatmul.mubr.f32.gmra.mrb[0].mxu0 %v1164
        %v2486 = vpop.f32.mrb[0].mxu0
        %v2487 = vadd.f32 %v1783, %v2486
        %v2488 = vpop.f32.mrb[0].mxu0
        %2489 = vmatprep.mubr.f32.mxu0 0.0
        %2490 = vmatmul.mubr.f32.gmra.mrb[0].mxu0 %v1165
        %v2491 = vpop.f32.mrb[0].mxu0
        %v2492 = vadd.f32 %v1788, %v2491
        %v2493 = vpop.f32.mrb[0].mxu0
        %2494 = vmatprep.mubr.f32.mxu0 0.0
        %2495 = vmatmul.mubr.f32.gmra.mrb[0].mxu0 %v1166
        %v2496 = vpop.f32.mrb[0].mxu0
        %v2497 = vadd.f32 %v1793, %v2496
        %v2498 = vpop.f32.mrb[0].mxu0
        %2499 = vmatprep.mubr.f32.mxu0 0.0
        %2500 = vmatmul.mubr.f32.gmra.mrb[0].mxu0 %v1167
        %v2501 = vpop.f32.mrb[0].mxu0
        %v2502 = vadd.f32 %v1798, %v2501
        %v2503 = vpop.f32.mrb[0].mxu0
        %2504 = vmatprep.mubr.f32.mxu0 0.0
        %2505 = vmatmul.mubr.f32.gmra.mrb[0].mxu0 %v1168
        %v2506 = vpop.f32.mrb[0].mxu0
        %v2507 = vadd.f32 %v1803, %v2506
        %v2508 = vpop.f32.mrb[0].mxu0
        %2509 = vmatprep.mubr.f32.mxu0 0.0
        %2510 = vmatmul.mubr.f32.gmra.mrb[0].mxu0 %v1169
        %v2511 = vpop.f32.mrb[0].mxu0
        %v2512 = vadd.f32 %v1808, %v2511
        %v2513 = vpop.f32.mrb[0].mxu0
        %2514 = vmatprep.mubr.f32.mxu0 0.0
        %2515 = vmatmul.mubr.f32.gmra.mrb[0].mxu0 %v1170
        %v2516 = vpop.f32.mrb[0].mxu0
        %v2517 = vadd.f32 %v1813, %v2516
        %v2518 = vpop.f32.mrb[0].mxu0
        %2519 = vmatprep.mubr.f32.mxu0 0.0
        %2520 = vmatmul.mubr.f32.gmra.mrb[0].mxu0 %v1171
        %v2521 = vpop.f32.mrb[0].mxu0
        %v2522 = vadd.f32 %v1818, %v2521
        %v2523 = vpop.f32.mrb[0].mxu0
        %2524 = vmatprep.mubr.f32.mxu0 0.0
        %2525 = vmatmul.mubr.f32.gmra.mrb[0].mxu0 %v1172
        %v2526 = vpop.f32.mrb[0].mxu0
        %v2527 = vadd.f32 %v1823, %v2526
        %v2528 = vpop.f32.mrb[0].mxu0
        %2529 = vmatprep.mubr.f32.mxu0 0.0
        %2530 = vmatmul.mubr.f32.gmra.mrb[0].mxu0 %v1173
        %v2531 = vpop.f32.mrb[0].mxu0
        %v2532 = vadd.f32 %v1828, %v2531
        %v2533 = vpop.f32.mrb[0].mxu0
        %2534 = vmatprep.mubr.f32.mxu0 0.0
        %2535 = vmatmul.mubr.f32.gmra.mrb[0].mxu0 %v1174
        %v2536 = vpop.f32.mrb[0].mxu0
        %v2537 = vadd.f32 %v1833, %v2536
        %v2538 = vpop.f32.mrb[0].mxu0
        %2539 = vmatprep.mubr.f32.mxu0 0.0
        %2540 = vmatmul.mubr.f32.gmra.mrb[0].mxu0 %v1175
        %v2541 = vpop.f32.mrb[0].mxu0
        %v2542 = vadd.f32 %v1838, %v2541
        %v2543 = vpop.f32.mrb[0].mxu0
        %2544 = vmatprep.mubr.f32.mxu0 0.0
        %2545 = vmatmul.mubr.f32.gmra.mrb[0].mxu0 %v1176
        %v2546 = vpop.f32.mrb[0].mxu0
        %v2547 = vadd.f32 %v1843, %v2546
        %v2548 = vpop.f32.mrb[0].mxu0
        %2549 = vmatprep.mubr.f32.mxu0 0.0
        %2550 = vmatmul.mubr.f32.gmra.mrb[0].mxu0 %v1177
        %v2551 = vpop.f32.mrb[0].mxu0
        %v2552 = vadd.f32 %v1848, %v2551
        %v2553 = vpop.f32.mrb[0].mxu0
        %2554 = vmatprep.mubr.f32.mxu0 0.0
        %2555 = vmatmul.mubr.f32.gmra.mrb[0].mxu0 %v1178
        %v2556 = vpop.f32.mrb[0].mxu0
        %v2557 = vadd.f32 %v1853, %v2556
        %v2558 = vpop.f32.mrb[0].mxu0
        %2559 = vmatprep.mubr.f32.mxu0 0.0
        %2560 = vmatmul.mubr.f32.gmra.mrb[0].mxu0 %v1179
        %v2561 = vpop.f32.mrb[0].mxu0
        %v2562 = vadd.f32 %v1858, %v2561
        %v2563 = vpop.f32.mrb[0].mxu0
        %2564 = vmatprep.mubr.f32.mxu0 0.0
        %2565 = vmatmul.mubr.f32.gmra.mrb[0].mxu0 %v1180
        %v2566 = vpop.f32.mrb[0].mxu0
        %v2567 = vadd.f32 %v1863, %v2566
        %v2568 = vpop.f32.mrb[0].mxu0
        %2569 = vmatprep.mubr.f32.mxu0 0.0
        %2570 = vmatmul.mubr.f32.gmra.mrb[0].mxu0 %v1181
        %v2571 = vpop.f32.mrb[0].mxu0
        %v2572 = vadd.f32 %v1868, %v2571
        %v2573 = vpop.f32.mrb[0].mxu0
        %2574 = vmatprep.mubr.f32.mxu0 0.0
        %2575 = vmatmul.mubr.f32.gmra.mrb[0].mxu0 %v1182
        %v2576 = vpop.f32.mrb[0].mxu0
        %v2577 = vadd.f32 %v1873, %v2576
        %v2578 = vpop.f32.mrb[0].mxu0
        %2579 = vmatprep.mubr.f32.mxu0 0.0
        %2580 = vmatmul.mubr.f32.gmra.mrb[0].mxu0 %v1183
        %v2581 = vpop.f32.mrb[0].mxu0
        %v2582 = vadd.f32 %v1878, %v2581
        %v2583 = vpop.f32.mrb[0].mxu0
        %2584 = vmatprep.mubr.f32.mxu0 0.0
        %2585 = vmatmul.mubr.f32.gmra.mrb[0].mxu0 %v1184
        %v2586 = vpop.f32.mrb[0].mxu0
        %v2587 = vadd.f32 %v1883, %v2586
        %v2588 = vpop.f32.mrb[0].mxu0
        %2589 = vmatprep.mubr.f32.mxu0 0.0
        %2590 = vmatmul.mubr.f32.gmra.mrb[0].mxu0 %v1185
        %v2591 = vpop.f32.mrb[0].mxu0
        %v2592 = vadd.f32 %v1888, %v2591
        %v2593 = vpop.f32.mrb[0].mxu0
        %2594 = vmatprep.mubr.f32.mxu0 0.0
        %2595 = vmatmul.mubr.f32.gmra.mrb[0].mxu0 %v1186
        %v2596 = vpop.f32.mrb[0].mxu0
        %v2597 = vadd.f32 %v1893, %v2596
        %v2598 = vpop.f32.mrb[0].mxu0
        %2599 = vmatprep.mubr.f32.mxu0 0.0
        %2600 = vmatmul.mubr.f32.gmra.mrb[0].mxu0 %v1187
        %v2601 = vpop.f32.mrb[0].mxu0
        %v2602 = vadd.f32 %v1898, %v2601
        %v2603 = vpop.f32.mrb[0].mxu0
        %2604 = vmatprep.mubr.f32.mxu0 0.0
        %2605 = vmatmul.mubr.f32.gmra.mrb[0].mxu0 %v1188
        %v2606 = vpop.f32.mrb[0].mxu0
        %v2607 = vadd.f32 %v1903, %v2606
        %v2608 = vpop.f32.mrb[0].mxu0
        %2609 = vmatprep.mubr.f32.mxu0 0.0
        %2610 = vmatmul.mubr.f32.gmra.mrb[0].mxu0 %v1189
        %v2611 = vpop.f32.mrb[0].mxu0
        %v2612 = vadd.f32 %v1908, %v2611
        %v2613 = vpop.f32.mrb[0].mxu0
        %2614 = vmatprep.mubr.f32.mxu0 0.0
        %2615 = vmatmul.mubr.f32.gmra.mrb[0].mxu0 %v1190
        %v2616 = vpop.f32.mrb[0].mxu0
        %v2617 = vadd.f32 %v1913, %v2616
        %v2618 = vpop.f32.mrb[0].mxu0
        %2619 = vmatprep.mubr.f32.mxu0 0.0
        %2620 = vmatmul.mubr.f32.gmra.mrb[0].mxu0 %v1191
        %v2621 = vpop.f32.mrb[0].mxu0
        %v2622 = vadd.f32 %v1918, %v2621
        %v2623 = vpop.f32.mrb[0].mxu0
        %2624 = vmatprep.mubr.f32.mxu0 0.0
        %2625 = vmatmul.mubr.f32.gmra.mrb[0].mxu0 %v1192
        %v2626 = vpop.f32.mrb[0].mxu0
        %v2627 = vadd.f32 %v1923, %v2626
        %v2628 = vpop.f32.mrb[0].mxu0
        %2629 = vmatprep.mubr.f32.mxu0 0.0
        %2630 = vmatmul.mubr.f32.gmra.mrb[0].mxu0 %v1193
        %v2631 = vpop.f32.mrb[0].mxu0
        %v2632 = vadd.f32 %v1928, %v2631
        %v2633 = vpop.f32.mrb[0].mxu0
        %2634 = vmatprep.mubr.f32.mxu0 0.0
        %2635 = vmatmul.mubr.f32.gmra.mrb[0].mxu0 %v1194
        %v2636 = vpop.f32.mrb[0].mxu0
        %v2637 = vadd.f32 %v1933, %v2636
        %v2638 = vpop.f32.mrb[0].mxu0
        %2639 = vmatprep.mubr.f32.mxu0 0.0
        %2640 = vmatmul.mubr.f32.gmra.mrb[0].mxu0 %v1195
        %v2641 = vpop.f32.mrb[0].mxu0
        %v2642 = vadd.f32 %v1938, %v2641
        %v2643 = vpop.f32.mrb[0].mxu0
        %2644 = vmatprep.mubr.f32.mxu0 0.0
        %2645 = vmatmul.mubr.f32.gmra.mrb[0].mxu0 %v1196
        %v2646 = vpop.f32.mrb[0].mxu0
        %v2647 = vadd.f32 %v1943, %v2646
        %v2648 = vpop.f32.mrb[0].mxu0
        %2649 = vmatprep.mubr.f32.mxu0 0.0
        %2650 = vmatmul.mubr.f32.gmra.mrb[0].mxu0 %v1197
        %v2651 = vpop.f32.mrb[0].mxu0
        %v2652 = vadd.f32 %v1948, %v2651
        %v2653 = vpop.f32.mrb[0].mxu0
        %2654 = vmatprep.mubr.f32.mxu0 0.0
        %2655 = vmatmul.mubr.f32.gmra.mrb[0].mxu0 %v1198
        %v2656 = vpop.f32.mrb[0].mxu0
        %v2657 = vadd.f32 %v1953, %v2656
        %v2658 = vpop.f32.mrb[0].mxu0
        %2659 = vmatprep.mubr.f32.mxu0 0.0
        %2660 = vmatmul.mubr.f32.gmra.mrb[0].mxu0 %v1199
        %v2661 = vpop.f32.mrb[0].mxu0
        %v2662 = vadd.f32 %v1958, %v2661
        %v2663 = vpop.f32.mrb[0].mxu0
        %2664 = vmatprep.mubr.f32.mxu0 0.0
        %2665 = vmatmul.mubr.f32.gmra.mrb[0].mxu0 %v1200
        %v2666 = vpop.f32.mrb[0].mxu0
        %v2667 = vadd.f32 %v1963, %v2666
        %v2668 = vpop.f32.mrb[0].mxu0
        %2669 = vmatprep.mubr.f32.mxu0 0.0
        %2670 = vmatmul.mubr.f32.gmra.mrb[0].mxu0 %v1201
        %v2671 = vpop.f32.mrb[0].mxu0
        %v2672 = vadd.f32 %v1968, %v2671
        %v2673 = vpop.f32.mrb[0].mxu0
        %2674 = vdwg.mxu0
        %v2675 = vmax.f32 %v2037, 0.0
        %v2676 = vmax.f32 %v2042, 0.0
        %v2677 = vmax.f32 %v2047, 0.0
        %v2678 = vmax.f32 %v2052, 0.0
        %v2679 = vmax.f32 %v2057, 0.0
        %v2680 = vmax.f32 %v2062, 0.0
        %v2681 = vmax.f32 %v2067, 0.0
        %v2682 = vmax.f32 %v2072, 0.0
        %v2683 = vmax.f32 %v2077, 0.0
        %v2684 = vmax.f32 %v2082, 0.0
        %v2685 = vmax.f32 %v2087, 0.0
        %v2686 = vmax.f32 %v2092, 0.0
        %v2687 = vmax.f32 %v2097, 0.0
        %v2688 = vmax.f32 %v2102, 0.0
        %v2689 = vmax.f32 %v2107, 0.0
        %v2690 = vmax.f32 %v2112, 0.0
        %v2691 = vmax.f32 %v2117, 0.0
        %v2692 = vmax.f32 %v2122, 0.0
        %v2693 = vmax.f32 %v2127, 0.0
        %v2694 = vmax.f32 %v2132, 0.0
        %v2695 = vmax.f32 %v2137, 0.0
        %v2696 = vmax.f32 %v2142, 0.0
        %v2697 = vmax.f32 %v2147, 0.0
        %v2698 = vmax.f32 %v2152, 0.0
        %v2699 = vmax.f32 %v2157, 0.0
        %v2700 = vmax.f32 %v2162, 0.0
        %v2701 = vmax.f32 %v2167, 0.0
        %v2702 = vmax.f32 %v2172, 0.0
        %v2703 = vmax.f32 %v2177, 0.0
        %v2704 = vmax.f32 %v2182, 0.0
        %v2705 = vmax.f32 %v2187, 0.0
        %v2706 = vmax.f32 %v2192, 0.0
        %v2707 = vmax.f32 %v2197, 0.0
        %v2708 = vmax.f32 %v2202, 0.0
        %v2709 = vmax.f32 %v2207, 0.0
        %v2710 = vmax.f32 %v2212, 0.0
        %v2711 = vmax.f32 %v2217, 0.0
        %v2712 = vmax.f32 %v2222, 0.0
        %v2713 = vmax.f32 %v2227, 0.0
        %v2714 = vmax.f32 %v2232, 0.0
        %v2715 = vmax.f32 %v2237, 0.0
        %v2716 = vmax.f32 %v2242, 0.0
        %v2717 = vmax.f32 %v2247, 0.0
        %v2718 = vmax.f32 %v2252, 0.0
        %v2719 = vmax.f32 %v2257, 0.0
        %v2720 = vmax.f32 %v2262, 0.0
        %v2721 = vmax.f32 %v2267, 0.0
        %v2722 = vmax.f32 %v2272, 0.0
        %v2723 = vmax.f32 %v2277, 0.0
        %v2724 = vmax.f32 %v2282, 0.0
        %v2725 = vmax.f32 %v2287, 0.0
        %v2726 = vmax.f32 %v2292, 0.0
        %v2727 = vmax.f32 %v2297, 0.0
        %v2728 = vmax.f32 %v2302, 0.0
        %v2729 = vmax.f32 %v2307, 0.0
        %v2730 = vmax.f32 %v2312, 0.0
        %v2731 = vmax.f32 %v2317, 0.0
        %v2732 = vmax.f32 %v2322, 0.0
        %v2733 = vmax.f32 %v2327, 0.0
        %v2734 = vmax.f32 %v2332, 0.0
        %v2735 = vmax.f32 %v2337, 0.0
        %v2736 = vmax.f32 %v2342, 0.0
        %v2737 = vmax.f32 %v2347, 0.0
        %v2738 = vmax.f32 %v2352, 0.0
        %v2739 = vmax.f32 %v2357, 0.0
        %v2740 = vmax.f32 %v2362, 0.0
        %v2741 = vmax.f32 %v2367, 0.0
        %v2742 = vmax.f32 %v2372, 0.0
        %v2743 = vmax.f32 %v2377, 0.0
        %v2744 = vmax.f32 %v2382, 0.0
        %v2745 = vmax.f32 %v2387, 0.0
        %v2746 = vmax.f32 %v2392, 0.0
        %v2747 = vmax.f32 %v2397, 0.0
        %v2748 = vmax.f32 %v2402, 0.0
        %v2749 = vmax.f32 %v2407, 0.0
        %v2750 = vmax.f32 %v2412, 0.0
        %v2751 = vmax.f32 %v2417, 0.0
        %v2752 = vmax.f32 %v2422, 0.0
        %v2753 = vmax.f32 %v2427, 0.0
        %v2754 = vmax.f32 %v2432, 0.0
        %v2755 = vmax.f32 %v2437, 0.0
        %v2756 = vmax.f32 %v2442, 0.0
        %v2757 = vmax.f32 %v2447, 0.0
        %v2758 = vmax.f32 %v2452, 0.0
        %v2759 = vmax.f32 %v2457, 0.0
        %v2760 = vmax.f32 %v2462, 0.0
        %v2761 = vmax.f32 %v2467, 0.0
        %v2762 = vmax.f32 %v2472, 0.0
        %v2763 = vmax.f32 %v2477, 0.0
        %v2764 = vmax.f32 %v2482, 0.0
        %v2765 = vmax.f32 %v2487, 0.0
        %v2766 = vmax.f32 %v2492, 0.0
        %v2767 = vmax.f32 %v2497, 0.0
        %v2768 = vmax.f32 %v2502, 0.0
        %v2769 = vmax.f32 %v2507, 0.0
        %v2770 = vmax.f32 %v2512, 0.0
        %v2771 = vmax.f32 %v2517, 0.0
        %v2772 = vmax.f32 %v2522, 0.0
        %v2773 = vmax.f32 %v2527, 0.0
        %v2774 = vmax.f32 %v2532, 0.0
        %v2775 = vmax.f32 %v2537, 0.0
        %v2776 = vmax.f32 %v2542, 0.0
        %v2777 = vmax.f32 %v2547, 0.0
        %v2778 = vmax.f32 %v2552, 0.0
        %v2779 = vmax.f32 %v2557, 0.0
        %v2780 = vmax.f32 %v2562, 0.0
        %v2781 = vmax.f32 %v2567, 0.0
        %v2782 = vmax.f32 %v2572, 0.0
        %v2783 = vmax.f32 %v2577, 0.0
        %v2784 = vmax.f32 %v2582, 0.0
        %v2785 = vmax.f32 %v2587, 0.0
        %v2786 = vmax.f32 %v2592, 0.0
        %v2787 = vmax.f32 %v2597, 0.0
        %v2788 = vmax.f32 %v2602, 0.0
        %v2789 = vmax.f32 %v2607, 0.0
        %v2790 = vmax.f32 %v2612, 0.0
        %v2791 = vmax.f32 %v2617, 0.0
        %v2792 = vmax.f32 %v2622, 0.0
        %v2793 = vmax.f32 %v2627, 0.0
        %v2794 = vmax.f32 %v2632, 0.0
        %v2795 = vmax.f32 %v2637, 0.0
        %v2796 = vmax.f32 %v2642, 0.0
        %v2797 = vmax.f32 %v2647, 0.0
        %v2798 = vmax.f32 %v2652, 0.0
        %v2799 = vmax.f32 %v2657, 0.0
        %v2800 = vmax.f32 %v2662, 0.0
        %v2801 = vmax.f32 %v2667, 0.0
        %v2802 = vmax.f32 %v2672, 0.0
        %2803 = vmax.xlane.f32.xlu0 %v2675
        %v2804 = vpop.xlane.xlu0 %2803
        %2805 = vmax.xlane.f32.xlu0 %v2676
        %v2806 = vpop.xlane.xlu0 %2805
        %2807 = vmax.xlane.f32.xlu0 %v2677
        %v2808 = vpop.xlane.xlu0 %2807
        %2809 = vmax.xlane.f32.xlu0 %v2678
        %v2810 = vpop.xlane.xlu0 %2809
        %2811 = vmax.xlane.f32.xlu0 %v2679
        %v2812 = vpop.xlane.xlu0 %2811
        %2813 = vmax.xlane.f32.xlu0 %v2680
        %v2814 = vpop.xlane.xlu0 %2813
        %2815 = vmax.xlane.f32.xlu0 %v2681
        %v2816 = vpop.xlane.xlu0 %2815
        %2817 = vmax.xlane.f32.xlu0 %v2682
        %v2818 = vpop.xlane.xlu0 %2817
        %2819 = vmax.xlane.f32.xlu0 %v2683
        %v2820 = vpop.xlane.xlu0 %2819
        %2821 = vmax.xlane.f32.xlu0 %v2684
        %v2822 = vpop.xlane.xlu0 %2821
        %2823 = vmax.xlane.f32.xlu0 %v2685
        %v2824 = vpop.xlane.xlu0 %2823
        %2825 = vmax.xlane.f32.xlu0 %v2686
        %v2826 = vpop.xlane.xlu0 %2825
        %2827 = vmax.xlane.f32.xlu0 %v2687
        %v2828 = vpop.xlane.xlu0 %2827
        %2829 = vmax.xlane.f32.xlu0 %v2688
        %v2830 = vpop.xlane.xlu0 %2829
        %2831 = vmax.xlane.f32.xlu0 %v2689
        %v2832 = vpop.xlane.xlu0 %2831
        %2833 = vmax.xlane.f32.xlu0 %v2690
        %v2834 = vpop.xlane.xlu0 %2833
        %2835 = vmax.xlane.f32.xlu0 %v2691
        %v2836 = vpop.xlane.xlu0 %2835
        %2837 = vmax.xlane.f32.xlu0 %v2692
        %v2838 = vpop.xlane.xlu0 %2837
        %2839 = vmax.xlane.f32.xlu0 %v2693
        %v2840 = vpop.xlane.xlu0 %2839
        %2841 = vmax.xlane.f32.xlu0 %v2694
        %v2842 = vpop.xlane.xlu0 %2841
        %2843 = vmax.xlane.f32.xlu0 %v2695
        %v2844 = vpop.xlane.xlu0 %2843
        %2845 = vmax.xlane.f32.xlu0 %v2696
        %v2846 = vpop.xlane.xlu0 %2845
        %2847 = vmax.xlane.f32.xlu0 %v2697
        %v2848 = vpop.xlane.xlu0 %2847
        %2849 = vmax.xlane.f32.xlu0 %v2698
        %v2850 = vpop.xlane.xlu0 %2849
        %2851 = vmax.xlane.f32.xlu0 %v2699
        %v2852 = vpop.xlane.xlu0 %2851
        %2853 = vmax.xlane.f32.xlu0 %v2700
        %v2854 = vpop.xlane.xlu0 %2853
        %2855 = vmax.xlane.f32.xlu0 %v2701
        %v2856 = vpop.xlane.xlu0 %2855
        %2857 = vmax.xlane.f32.xlu0 %v2702
        %v2858 = vpop.xlane.xlu0 %2857
        %2859 = vmax.xlane.f32.xlu0 %v2703
        %v2860 = vpop.xlane.xlu0 %2859
        %2861 = vmax.xlane.f32.xlu0 %v2704
        %v2862 = vpop.xlane.xlu0 %2861
        %2863 = vmax.xlane.f32.xlu0 %v2705
        %v2864 = vpop.xlane.xlu0 %2863
        %2865 = vmax.xlane.f32.xlu0 %v2706
        %v2866 = vpop.xlane.xlu0 %2865
        %2867 = vmax.xlane.f32.xlu0 %v2707
        %v2868 = vpop.xlane.xlu0 %2867
        %2869 = vmax.xlane.f32.xlu0 %v2708
        %v2870 = vpop.xlane.xlu0 %2869
        %2871 = vmax.xlane.f32.xlu0 %v2709
        %v2872 = vpop.xlane.xlu0 %2871
        %2873 = vmax.xlane.f32.xlu0 %v2710
        %v2874 = vpop.xlane.xlu0 %2873
        %2875 = vmax.xlane.f32.xlu0 %v2711
        %v2876 = vpop.xlane.xlu0 %2875
        %2877 = vmax.xlane.f32.xlu0 %v2712
        %v2878 = vpop.xlane.xlu0 %2877
        %2879 = vmax.xlane.f32.xlu0 %v2713
        %v2880 = vpop.xlane.xlu0 %2879
        %2881 = vmax.xlane.f32.xlu0 %v2714
        %v2882 = vpop.xlane.xlu0 %2881
        %2883 = vmax.xlane.f32.xlu0 %v2715
        %v2884 = vpop.xlane.xlu0 %2883
        %2885 = vmax.xlane.f32.xlu0 %v2716
        %v2886 = vpop.xlane.xlu0 %2885
        %2887 = vmax.xlane.f32.xlu0 %v2717
        %v2888 = vpop.xlane.xlu0 %2887
        %2889 = vmax.xlane.f32.xlu0 %v2718
        %v2890 = vpop.xlane.xlu0 %2889
        %2891 = vmax.xlane.f32.xlu0 %v2719
        %v2892 = vpop.xlane.xlu0 %2891
        %2893 = vmax.xlane.f32.xlu0 %v2720
        %v2894 = vpop.xlane.xlu0 %2893
        %2895 = vmax.xlane.f32.xlu0 %v2721
        %v2896 = vpop.xlane.xlu0 %2895
        %2897 = vmax.xlane.f32.xlu0 %v2722
        %v2898 = vpop.xlane.xlu0 %2897
        %2899 = vmax.xlane.f32.xlu0 %v2723
        %v2900 = vpop.xlane.xlu0 %2899
        %2901 = vmax.xlane.f32.xlu0 %v2724
        %v2902 = vpop.xlane.xlu0 %2901
        %2903 = vmax.xlane.f32.xlu0 %v2725
        %v2904 = vpop.xlane.xlu0 %2903
        %2905 = vmax.xlane.f32.xlu0 %v2726
        %v2906 = vpop.xlane.xlu0 %2905
        %2907 = vmax.xlane.f32.xlu0 %v2727
        %v2908 = vpop.xlane.xlu0 %2907
        %2909 = vmax.xlane.f32.xlu0 %v2728
        %v2910 = vpop.xlane.xlu0 %2909
        %2911 = vmax.xlane.f32.xlu0 %v2729
        %v2912 = vpop.xlane.xlu0 %2911
        %2913 = vmax.xlane.f32.xlu0 %v2730
        %v2914 = vpop.xlane.xlu0 %2913
        %2915 = vmax.xlane.f32.xlu0 %v2731
        %v2916 = vpop.xlane.xlu0 %2915
        %2917 = vmax.xlane.f32.xlu0 %v2732
        %v2918 = vpop.xlane.xlu0 %2917
        %2919 = vmax.xlane.f32.xlu0 %v2733
        %v2920 = vpop.xlane.xlu0 %2919
        %2921 = vmax.xlane.f32.xlu0 %v2734
        %v2922 = vpop.xlane.xlu0 %2921
        %2923 = vmax.xlane.f32.xlu0 %v2735
        %v2924 = vpop.xlane.xlu0 %2923
        %2925 = vmax.xlane.f32.xlu0 %v2736
        %v2926 = vpop.xlane.xlu0 %2925
        %2927 = vmax.xlane.f32.xlu0 %v2737
        %v2928 = vpop.xlane.xlu0 %2927
        %2929 = vmax.xlane.f32.xlu0 %v2738
        %v2930 = vpop.xlane.xlu0 %2929
        %2931 = vmax.xlane.f32.xlu0 %v2739
        %v2932 = vpop.xlane.xlu0 %2931
        %2933 = vmax.xlane.f32.xlu0 %v2740
        %v2934 = vpop.xlane.xlu0 %2933
        %2935 = vmax.xlane.f32.xlu0 %v2741
        %v2936 = vpop.xlane.xlu0 %2935
        %2937 = vmax.xlane.f32.xlu0 %v2742
        %v2938 = vpop.xlane.xlu0 %2937
        %2939 = vmax.xlane.f32.xlu0 %v2743
        %v2940 = vpop.xlane.xlu0 %2939
        %2941 = vmax.xlane.f32.xlu0 %v2744
        %v2942 = vpop.xlane.xlu0 %2941
        %2943 = vmax.xlane.f32.xlu0 %v2745
        %v2944 = vpop.xlane.xlu0 %2943
        %2945 = vmax.xlane.f32.xlu0 %v2746
        %v2946 = vpop.xlane.xlu0 %2945
        %2947 = vmax.xlane.f32.xlu0 %v2747
        %v2948 = vpop.xlane.xlu0 %2947
        %2949 = vmax.xlane.f32.xlu0 %v2748
        %v2950 = vpop.xlane.xlu0 %2949
        %2951 = vmax.xlane.f32.xlu0 %v2749
        %v2952 = vpop.xlane.xlu0 %2951
        %2953 = vmax.xlane.f32.xlu0 %v2750
        %v2954 = vpop.xlane.xlu0 %2953
        %2955 = vmax.xlane.f32.xlu0 %v2751
        %v2956 = vpop.xlane.xlu0 %2955
        %2957 = vmax.xlane.f32.xlu0 %v2752
        %v2958 = vpop.xlane.xlu0 %2957
        %2959 = vmax.xlane.f32.xlu0 %v2753
        %v2960 = vpop.xlane.xlu0 %2959
        %2961 = vmax.xlane.f32.xlu0 %v2754
        %v2962 = vpop.xlane.xlu0 %2961
        %2963 = vmax.xlane.f32.xlu0 %v2755
        %v2964 = vpop.xlane.xlu0 %2963
        %2965 = vmax.xlane.f32.xlu0 %v2756
        %v2966 = vpop.xlane.xlu0 %2965
        %2967 = vmax.xlane.f32.xlu0 %v2757
        %v2968 = vpop.xlane.xlu0 %2967
        %2969 = vmax.xlane.f32.xlu0 %v2758
        %v2970 = vpop.xlane.xlu0 %2969
        %2971 = vmax.xlane.f32.xlu0 %v2759
        %v2972 = vpop.xlane.xlu0 %2971
        %2973 = vmax.xlane.f32.xlu0 %v2760
        %v2974 = vpop.xlane.xlu0 %2973
        %2975 = vmax.xlane.f32.xlu0 %v2761
        %v2976 = vpop.xlane.xlu0 %2975
        %2977 = vmax.xlane.f32.xlu0 %v2762
        %v2978 = vpop.xlane.xlu0 %2977
        %2979 = vmax.xlane.f32.xlu0 %v2763
        %v2980 = vpop.xlane.xlu0 %2979
        %2981 = vmax.xlane.f32.xlu0 %v2764
        %v2982 = vpop.xlane.xlu0 %2981
        %2983 = vmax.xlane.f32.xlu0 %v2765
        %v2984 = vpop.xlane.xlu0 %2983
        %2985 = vmax.xlane.f32.xlu0 %v2766
        %v2986 = vpop.xlane.xlu0 %2985
        %2987 = vmax.xlane.f32.xlu0 %v2767
        %v2988 = vpop.xlane.xlu0 %2987
        %2989 = vmax.xlane.f32.xlu0 %v2768
        %v2990 = vpop.xlane.xlu0 %2989
        %2991 = vmax.xlane.f32.xlu0 %v2769
        %v2992 = vpop.xlane.xlu0 %2991
        %2993 = vmax.xlane.f32.xlu0 %v2770
        %v2994 = vpop.xlane.xlu0 %2993
        %2995 = vmax.xlane.f32.xlu0 %v2771
        %v2996 = vpop.xlane.xlu0 %2995
        %2997 = vmax.xlane.f32.xlu0 %v2772
        %v2998 = vpop.xlane.xlu0 %2997
        %2999 = vmax.xlane.f32.xlu0 %v2773
        %v3000 = vpop.xlane.xlu0 %2999
        %3001 = vmax.xlane.f32.xlu0 %v2774
        %v3002 = vpop.xlane.xlu0 %3001
        %3003 = vmax.xlane.f32.xlu0 %v2775
        %v3004 = vpop.xlane.xlu0 %3003
        %3005 = vmax.xlane.f32.xlu0 %v2776
        %v3006 = vpop.xlane.xlu0 %3005
        %3007 = vmax.xlane.f32.xlu0 %v2777
        %v3008 = vpop.xlane.xlu0 %3007
        %3009 = vmax.xlane.f32.xlu0 %v2778
        %v3010 = vpop.xlane.xlu0 %3009
        %3011 = vmax.xlane.f32.xlu0 %v2779
        %v3012 = vpop.xlane.xlu0 %3011
        %3013 = vmax.xlane.f32.xlu0 %v2780
        %v3014 = vpop.xlane.xlu0 %3013
        %3015 = vmax.xlane.f32.xlu0 %v2781
        %v3016 = vpop.xlane.xlu0 %3015
        %3017 = vmax.xlane.f32.xlu0 %v2782
        %v3018 = vpop.xlane.xlu0 %3017
        %3019 = vmax.xlane.f32.xlu0 %v2783
        %v3020 = vpop.xlane.xlu0 %3019
        %3021 = vmax.xlane.f32.xlu0 %v2784
        %v3022 = vpop.xlane.xlu0 %3021
        %3023 = vmax.xlane.f32.xlu0 %v2785
        %v3024 = vpop.xlane.xlu0 %3023
        %3025 = vmax.xlane.f32.xlu0 %v2786
        %v3026 = vpop.xlane.xlu0 %3025
        %3027 = vmax.xlane.f32.xlu0 %v2787
        %v3028 = vpop.xlane.xlu0 %3027
        %3029 = vmax.xlane.f32.xlu0 %v2788
        %v3030 = vpop.xlane.xlu0 %3029
        %3031 = vmax.xlane.f32.xlu0 %v2789
        %v3032 = vpop.xlane.xlu0 %3031
        %3033 = vmax.xlane.f32.xlu0 %v2790
        %v3034 = vpop.xlane.xlu0 %3033
        %3035 = vmax.xlane.f32.xlu0 %v2791
        %v3036 = vpop.xlane.xlu0 %3035
        %3037 = vmax.xlane.f32.xlu0 %v2792
        %v3038 = vpop.xlane.xlu0 %3037
        %3039 = vmax.xlane.f32.xlu0 %v2793
        %v3040 = vpop.xlane.xlu0 %3039
        %3041 = vmax.xlane.f32.xlu0 %v2794
        %v3042 = vpop.xlane.xlu0 %3041
        %3043 = vmax.xlane.f32.xlu0 %v2795
        %v3044 = vpop.xlane.xlu0 %3043
        %3045 = vmax.xlane.f32.xlu0 %v2796
        %v3046 = vpop.xlane.xlu0 %3045
        %3047 = vmax.xlane.f32.xlu0 %v2797
        %v3048 = vpop.xlane.xlu0 %3047
        %3049 = vmax.xlane.f32.xlu0 %v2798
        %v3050 = vpop.xlane.xlu0 %3049
        %3051 = vmax.xlane.f32.xlu0 %v2799
        %v3052 = vpop.xlane.xlu0 %3051
        %3053 = vmax.xlane.f32.xlu0 %v2800
        %v3054 = vpop.xlane.xlu0 %3053
        %3055 = vmax.xlane.f32.xlu0 %v2801
        %v3056 = vpop.xlane.xlu0 %3055
        %3057 = vmax.xlane.f32.xlu0 %v2802
        %v3058 = vpop.xlane.xlu0 %3057
        %p3059 = scmp.eq.s32.totalorder %s32, 0
        // Predicated region
        $region89: #{stn3d_forward.1} parent=71 // pred_check
          %p3060 = pneg %p3059
        $region90: #{stn3d_forward.1} parent=71 // pred_check_branch
          %3062 = sbr.rel (%p3060) target = $region92
        $region91: #{stn3d_forward.1} parent=71 // pred_region
          %3063 = vst [vmem:[#allocation2] sm:$0xff] -inf
          %3064 = vst [vmem:[#allocation2 + $0x8] sm:$0xff] -inf
          %3065 = vst [vmem:[#allocation2 + $0x10] sm:$0xff] -inf
          %3066 = vst [vmem:[#allocation2 + $0x18] sm:$0xff] -inf
          %3067 = vst [vmem:[#allocation2 + $0x20] sm:$0xff] -inf
          %3068 = vst [vmem:[#allocation2 + $0x28] sm:$0xff] -inf
          %3069 = vst [vmem:[#allocation2 + $0x30] sm:$0xff] -inf
          %3070 = vst [vmem:[#allocation2 + $0x38] sm:$0xff] -inf
          %3071 = vst [vmem:[#allocation2 + $0x40] sm:$0xff] -inf
          %3072 = vst [vmem:[#allocation2 + $0x48] sm:$0xff] -inf
          %3073 = vst [vmem:[#allocation2 + $0x50] sm:$0xff] -inf
          %3074 = vst [vmem:[#allocation2 + $0x58] sm:$0xff] -inf
          %3075 = vst [vmem:[#allocation2 + $0x60] sm:$0xff] -inf
          %3076 = vst [vmem:[#allocation2 + $0x68] sm:$0xff] -inf
          %3077 = vst [vmem:[#allocation2 + $0x70] sm:$0xff] -inf
          %3078 = vst [vmem:[#allocation2 + $0x78] sm:$0xff] -inf
          %3079 = vst [vmem:[#allocation2 + $0x80] sm:$0xff] -inf
          %3080 = vst [vmem:[#allocation2 + $0x88] sm:$0xff] -inf
          %3081 = vst [vmem:[#allocation2 + $0x90] sm:$0xff] -inf
          %3082 = vst [vmem:[#allocation2 + $0x98] sm:$0xff] -inf
          %3083 = vst [vmem:[#allocation2 + $0xa0] sm:$0xff] -inf
          %3084 = vst [vmem:[#allocation2 + $0xa8] sm:$0xff] -inf
          %3085 = vst [vmem:[#allocation2 + $0xb0] sm:$0xff] -inf
          %3086 = vst [vmem:[#allocation2 + $0xb8] sm:$0xff] -inf
          %3087 = vst [vmem:[#allocation2 + $0xc0] sm:$0xff] -inf
          %3088 = vst [vmem:[#allocation2 + $0xc8] sm:$0xff] -inf
          %3089 = vst [vmem:[#allocation2 + $0xd0] sm:$0xff] -inf
          %3090 = vst [vmem:[#allocation2 + $0xd8] sm:$0xff] -inf
          %3091 = vst [vmem:[#allocation2 + $0xe0] sm:$0xff] -inf
          %3092 = vst [vmem:[#allocation2 + $0xe8] sm:$0xff] -inf
          %3093 = vst [vmem:[#allocation2 + $0xf0] sm:$0xff] -inf
          %3094 = vst [vmem:[#allocation2 + $0xf8] sm:$0xff] -inf
          %3095 = vst [vmem:[#allocation2 + $0x100] sm:$0xff] -inf
          %3096 = vst [vmem:[#allocation2 + $0x108] sm:$0xff] -inf
          %3097 = vst [vmem:[#allocation2 + $0x110] sm:$0xff] -inf
          %3098 = vst [vmem:[#allocation2 + $0x118] sm:$0xff] -inf
          %3099 = vst [vmem:[#allocation2 + $0x120] sm:$0xff] -inf
          %3100 = vst [vmem:[#allocation2 + $0x128] sm:$0xff] -inf
          %3101 = vst [vmem:[#allocation2 + $0x130] sm:$0xff] -inf
          %3102 = vst [vmem:[#allocation2 + $0x138] sm:$0xff] -inf
          %3103 = vst [vmem:[#allocation2 + $0x140] sm:$0xff] -inf
          %3104 = vst [vmem:[#allocation2 + $0x148] sm:$0xff] -inf
          %3105 = vst [vmem:[#allocation2 + $0x150] sm:$0xff] -inf
          %3106 = vst [vmem:[#allocation2 + $0x158] sm:$0xff] -inf
          %3107 = vst [vmem:[#allocation2 + $0x160] sm:$0xff] -inf
          %3108 = vst [vmem:[#allocation2 + $0x168] sm:$0xff] -inf
          %3109 = vst [vmem:[#allocation2 + $0x170] sm:$0xff] -inf
          %3110 = vst [vmem:[#allocation2 + $0x178] sm:$0xff] -inf
          %3111 = vst [vmem:[#allocation2 + $0x180] sm:$0xff] -inf
          %3112 = vst [vmem:[#allocation2 + $0x188] sm:$0xff] -inf
          %3113 = vst [vmem:[#allocation2 + $0x190] sm:$0xff] -inf
          %3114 = vst [vmem:[#allocation2 + $0x198] sm:$0xff] -inf
          %3115 = vst [vmem:[#allocation2 + $0x1a0] sm:$0xff] -inf
          %3116 = vst [vmem:[#allocation2 + $0x1a8] sm:$0xff] -inf
          %3117 = vst [vmem:[#allocation2 + $0x1b0] sm:$0xff] -inf
          %3118 = vst [vmem:[#allocation2 + $0x1b8] sm:$0xff] -inf
          %3119 = vst [vmem:[#allocation2 + $0x1c0] sm:$0xff] -inf
          %3120 = vst [vmem:[#allocation2 + $0x1c8] sm:$0xff] -inf
          %3121 = vst [vmem:[#allocation2 + $0x1d0] sm:$0xff] -inf
          %3122 = vst [vmem:[#allocation2 + $0x1d8] sm:$0xff] -inf
          %3123 = vst [vmem:[#allocation2 + $0x1e0] sm:$0xff] -inf
          %3124 = vst [vmem:[#allocation2 + $0x1e8] sm:$0xff] -inf
          %3125 = vst [vmem:[#allocation2 + $0x1f0] sm:$0xff] -inf
          %3126 = vst [vmem:[#allocation2 + $0x1f8] sm:$0xff] -inf
          %3127 = vst [vmem:[#allocation2 + $0x200] sm:$0xff] -inf
          %3128 = vst [vmem:[#allocation2 + $0x208] sm:$0xff] -inf
          %3129 = vst [vmem:[#allocation2 + $0x210] sm:$0xff] -inf
          %3130 = vst [vmem:[#allocation2 + $0x218] sm:$0xff] -inf
          %3131 = vst [vmem:[#allocation2 + $0x220] sm:$0xff] -inf
          %3132 = vst [vmem:[#allocation2 + $0x228] sm:$0xff] -inf
          %3133 = vst [vmem:[#allocation2 + $0x230] sm:$0xff] -inf
          %3134 = vst [vmem:[#allocation2 + $0x238] sm:$0xff] -inf
          %3135 = vst [vmem:[#allocation2 + $0x240] sm:$0xff] -inf
          %3136 = vst [vmem:[#allocation2 + $0x248] sm:$0xff] -inf
          %3137 = vst [vmem:[#allocation2 + $0x250] sm:$0xff] -inf
          %3138 = vst [vmem:[#allocation2 + $0x258] sm:$0xff] -inf
          %3139 = vst [vmem:[#allocation2 + $0x260] sm:$0xff] -inf
          %3140 = vst [vmem:[#allocation2 + $0x268] sm:$0xff] -inf
          %3141 = vst [vmem:[#allocation2 + $0x270] sm:$0xff] -inf
          %3142 = vst [vmem:[#allocation2 + $0x278] sm:$0xff] -inf
          %3143 = vst [vmem:[#allocation2 + $0x280] sm:$0xff] -inf
          %3144 = vst [vmem:[#allocation2 + $0x288] sm:$0xff] -inf
          %3145 = vst [vmem:[#allocation2 + $0x290] sm:$0xff] -inf
          %3146 = vst [vmem:[#allocation2 + $0x298] sm:$0xff] -inf
          %3147 = vst [vmem:[#allocation2 + $0x2a0] sm:$0xff] -inf
          %3148 = vst [vmem:[#allocation2 + $0x2a8] sm:$0xff] -inf
          %3149 = vst [vmem:[#allocation2 + $0x2b0] sm:$0xff] -inf
          %3150 = vst [vmem:[#allocation2 + $0x2b8] sm:$0xff] -inf
          %3151 = vst [vmem:[#allocation2 + $0x2c0] sm:$0xff] -inf
          %3152 = vst [vmem:[#allocation2 + $0x2c8] sm:$0xff] -inf
          %3153 = vst [vmem:[#allocation2 + $0x2d0] sm:$0xff] -inf
          %3154 = vst [vmem:[#allocation2 + $0x2d8] sm:$0xff] -inf
          %3155 = vst [vmem:[#allocation2 + $0x2e0] sm:$0xff] -inf
          %3156 = vst [vmem:[#allocation2 + $0x2e8] sm:$0xff] -inf
          %3157 = vst [vmem:[#allocation2 + $0x2f0] sm:$0xff] -inf
          %3158 = vst [vmem:[#allocation2 + $0x2f8] sm:$0xff] -inf
          %3159 = vst [vmem:[#allocation2 + $0x300] sm:$0xff] -inf
          %3160 = vst [vmem:[#allocation2 + $0x308] sm:$0xff] -inf
          %3161 = vst [vmem:[#allocation2 + $0x310] sm:$0xff] -inf
          %3162 = vst [vmem:[#allocation2 + $0x318] sm:$0xff] -inf
          %3163 = vst [vmem:[#allocation2 + $0x320] sm:$0xff] -inf
          %3164 = vst [vmem:[#allocation2 + $0x328] sm:$0xff] -inf
          %3165 = vst [vmem:[#allocation2 + $0x330] sm:$0xff] -inf
          %3166 = vst [vmem:[#allocation2 + $0x338] sm:$0xff] -inf
          %3167 = vst [vmem:[#allocation2 + $0x340] sm:$0xff] -inf
          %3168 = vst [vmem:[#allocation2 + $0x348] sm:$0xff] -inf
          %3169 = vst [vmem:[#allocation2 + $0x350] sm:$0xff] -inf
          %3170 = vst [vmem:[#allocation2 + $0x358] sm:$0xff] -inf
          %3171 = vst [vmem:[#allocation2 + $0x360] sm:$0xff] -inf
          %3172 = vst [vmem:[#allocation2 + $0x368] sm:$0xff] -inf
          %3173 = vst [vmem:[#allocation2 + $0x370] sm:$0xff] -inf
          %3174 = vst [vmem:[#allocation2 + $0x378] sm:$0xff] -inf
          %3175 = vst [vmem:[#allocation2 + $0x380] sm:$0xff] -inf
          %3176 = vst [vmem:[#allocation2 + $0x388] sm:$0xff] -inf
          %3177 = vst [vmem:[#allocation2 + $0x390] sm:$0xff] -inf
          %3178 = vst [vmem:[#allocation2 + $0x398] sm:$0xff] -inf
          %3179 = vst [vmem:[#allocation2 + $0x3a0] sm:$0xff] -inf
          %3180 = vst [vmem:[#allocation2 + $0x3a8] sm:$0xff] -inf
          %3181 = vst [vmem:[#allocation2 + $0x3b0] sm:$0xff] -inf
          %3182 = vst [vmem:[#allocation2 + $0x3b8] sm:$0xff] -inf
          %3183 = vst [vmem:[#allocation2 + $0x3c0] sm:$0xff] -inf
          %3184 = vst [vmem:[#allocation2 + $0x3c8] sm:$0xff] -inf
          %3185 = vst [vmem:[#allocation2 + $0x3d0] sm:$0xff] -inf
          %3186 = vst [vmem:[#allocation2 + $0x3d8] sm:$0xff] -inf
          %3187 = vst [vmem:[#allocation2 + $0x3e0] sm:$0xff] -inf
          %3188 = vst [vmem:[#allocation2 + $0x3e8] sm:$0xff] -inf
          %3189 = vst [vmem:[#allocation2 + $0x3f0] sm:$0xff] -inf
          %3190 = vst [vmem:[#allocation2 + $0x3f8] sm:$0xff] -inf
        $region92: #{stn3d_forward.1} parent=71 // pred_fallthru
          _
        %v3191 = vld [vmem:[#allocation2] sm:$0xff]
        %v3192 = vld [vmem:[#allocation2 + $0x8] sm:$0xff]
        %v3193 = vld [vmem:[#allocation2 + $0x10] sm:$0xff]
        %v3194 = vld [vmem:[#allocation2 + $0x18] sm:$0xff]
        %v3195 = vld [vmem:[#allocation2 + $0x20] sm:$0xff]
        %v3196 = vld [vmem:[#allocation2 + $0x28] sm:$0xff]
        %v3197 = vld [vmem:[#allocation2 + $0x30] sm:$0xff]
        %v3198 = vld [vmem:[#allocation2 + $0x38] sm:$0xff]
        %v3199 = vld [vmem:[#allocation2 + $0x40] sm:$0xff]
        %v3200 = vld [vmem:[#allocation2 + $0x48] sm:$0xff]
        %v3201 = vld [vmem:[#allocation2 + $0x50] sm:$0xff]
        %v3202 = vld [vmem:[#allocation2 + $0x58] sm:$0xff]
        %v3203 = vld [vmem:[#allocation2 + $0x60] sm:$0xff]
        %v3204 = vld [vmem:[#allocation2 + $0x68] sm:$0xff]
        %v3205 = vld [vmem:[#allocation2 + $0x70] sm:$0xff]
        %v3206 = vld [vmem:[#allocation2 + $0x78] sm:$0xff]
        %v3207 = vld [vmem:[#allocation2 + $0x80] sm:$0xff]
        %v3208 = vld [vmem:[#allocation2 + $0x88] sm:$0xff]
        %v3209 = vld [vmem:[#allocation2 + $0x90] sm:$0xff]
        %v3210 = vld [vmem:[#allocation2 + $0x98] sm:$0xff]
        %v3211 = vld [vmem:[#allocation2 + $0xa0] sm:$0xff]
        %v3212 = vld [vmem:[#allocation2 + $0xa8] sm:$0xff]
        %v3213 = vld [vmem:[#allocation2 + $0xb0] sm:$0xff]
        %v3214 = vld [vmem:[#allocation2 + $0xb8] sm:$0xff]
        %v3215 = vld [vmem:[#allocation2 + $0xc0] sm:$0xff]
        %v3216 = vld [vmem:[#allocation2 + $0xc8] sm:$0xff]
        %v3217 = vld [vmem:[#allocation2 + $0xd0] sm:$0xff]
        %v3218 = vld [vmem:[#allocation2 + $0xd8] sm:$0xff]
        %v3219 = vld [vmem:[#allocation2 + $0xe0] sm:$0xff]
        %v3220 = vld [vmem:[#allocation2 + $0xe8] sm:$0xff]
        %v3221 = vld [vmem:[#allocation2 + $0xf0] sm:$0xff]
        %v3222 = vld [vmem:[#allocation2 + $0xf8] sm:$0xff]
        %v3223 = vld [vmem:[#allocation2 + $0x100] sm:$0xff]
        %v3224 = vld [vmem:[#allocation2 + $0x108] sm:$0xff]
        %v3225 = vld [vmem:[#allocation2 + $0x110] sm:$0xff]
        %v3226 = vld [vmem:[#allocation2 + $0x118] sm:$0xff]
        %v3227 = vld [vmem:[#allocation2 + $0x120] sm:$0xff]
        %v3228 = vld [vmem:[#allocation2 + $0x128] sm:$0xff]
        %v3229 = vld [vmem:[#allocation2 + $0x130] sm:$0xff]
        %v3230 = vld [vmem:[#allocation2 + $0x138] sm:$0xff]
        %v3231 = vld [vmem:[#allocation2 + $0x140] sm:$0xff]
        %v3232 = vld [vmem:[#allocation2 + $0x148] sm:$0xff]
        %v3233 = vld [vmem:[#allocation2 + $0x150] sm:$0xff]
        %v3234 = vld [vmem:[#allocation2 + $0x158] sm:$0xff]
        %v3235 = vld [vmem:[#allocation2 + $0x160] sm:$0xff]
        %v3236 = vld [vmem:[#allocation2 + $0x168] sm:$0xff]
        %v3237 = vld [vmem:[#allocation2 + $0x170] sm:$0xff]
        %v3238 = vld [vmem:[#allocation2 + $0x178] sm:$0xff]
        %v3239 = vld [vmem:[#allocation2 + $0x180] sm:$0xff]
        %v3240 = vld [vmem:[#allocation2 + $0x188] sm:$0xff]
        %v3241 = vld [vmem:[#allocation2 + $0x190] sm:$0xff]
        %v3242 = vld [vmem:[#allocation2 + $0x198] sm:$0xff]
        %v3243 = vld [vmem:[#allocation2 + $0x1a0] sm:$0xff]
        %v3244 = vld [vmem:[#allocation2 + $0x1a8] sm:$0xff]
        %v3245 = vld [vmem:[#allocation2 + $0x1b0] sm:$0xff]
        %v3246 = vld [vmem:[#allocation2 + $0x1b8] sm:$0xff]
        %v3247 = vld [vmem:[#allocation2 + $0x1c0] sm:$0xff]
        %v3248 = vld [vmem:[#allocation2 + $0x1c8] sm:$0xff]
        %v3249 = vld [vmem:[#allocation2 + $0x1d0] sm:$0xff]
        %v3250 = vld [vmem:[#allocation2 + $0x1d8] sm:$0xff]
        %v3251 = vld [vmem:[#allocation2 + $0x1e0] sm:$0xff]
        %v3252 = vld [vmem:[#allocation2 + $0x1e8] sm:$0xff]
        %v3253 = vld [vmem:[#allocation2 + $0x1f0] sm:$0xff]
        %v3254 = vld [vmem:[#allocation2 + $0x1f8] sm:$0xff]
        %v3255 = vld [vmem:[#allocation2 + $0x200] sm:$0xff]
        %v3256 = vld [vmem:[#allocation2 + $0x208] sm:$0xff]
        %v3257 = vld [vmem:[#allocation2 + $0x210] sm:$0xff]
        %v3258 = vld [vmem:[#allocation2 + $0x218] sm:$0xff]
        %v3259 = vld [vmem:[#allocation2 + $0x220] sm:$0xff]
        %v3260 = vld [vmem:[#allocation2 + $0x228] sm:$0xff]
        %v3261 = vld [vmem:[#allocation2 + $0x230] sm:$0xff]
        %v3262 = vld [vmem:[#allocation2 + $0x238] sm:$0xff]
        %v3263 = vld [vmem:[#allocation2 + $0x240] sm:$0xff]
        %v3264 = vld [vmem:[#allocation2 + $0x248] sm:$0xff]
        %v3265 = vld [vmem:[#allocation2 + $0x250] sm:$0xff]
        %v3266 = vld [vmem:[#allocation2 + $0x258] sm:$0xff]
        %v3267 = vld [vmem:[#allocation2 + $0x260] sm:$0xff]
        %v3268 = vld [vmem:[#allocation2 + $0x268] sm:$0xff]
        %v3269 = vld [vmem:[#allocation2 + $0x270] sm:$0xff]
        %v3270 = vld [vmem:[#allocation2 + $0x278] sm:$0xff]
        %v3271 = vld [vmem:[#allocation2 + $0x280] sm:$0xff]
        %v3272 = vld [vmem:[#allocation2 + $0x288] sm:$0xff]
        %v3273 = vld [vmem:[#allocation2 + $0x290] sm:$0xff]
        %v3274 = vld [vmem:[#allocation2 + $0x298] sm:$0xff]
        %v3275 = vld [vmem:[#allocation2 + $0x2a0] sm:$0xff]
        %v3276 = vld [vmem:[#allocation2 + $0x2a8] sm:$0xff]
        %v3277 = vld [vmem:[#allocation2 + $0x2b0] sm:$0xff]
        %v3278 = vld [vmem:[#allocation2 + $0x2b8] sm:$0xff]
        %v3279 = vld [vmem:[#allocation2 + $0x2c0] sm:$0xff]
        %v3280 = vld [vmem:[#allocation2 + $0x2c8] sm:$0xff]
        %v3281 = vld [vmem:[#allocation2 + $0x2d0] sm:$0xff]
        %v3282 = vld [vmem:[#allocation2 + $0x2d8] sm:$0xff]
        %v3283 = vld [vmem:[#allocation2 + $0x2e0] sm:$0xff]
        %v3284 = vld [vmem:[#allocation2 + $0x2e8] sm:$0xff]
        %v3285 = vld [vmem:[#allocation2 + $0x2f0] sm:$0xff]
        %v3286 = vld [vmem:[#allocation2 + $0x2f8] sm:$0xff]
        %v3287 = vld [vmem:[#allocation2 + $0x300] sm:$0xff]
        %v3288 = vld [vmem:[#allocation2 + $0x308] sm:$0xff]
        %v3289 = vld [vmem:[#allocation2 + $0x310] sm:$0xff]
        %v3290 = vld [vmem:[#allocation2 + $0x318] sm:$0xff]
        %v3291 = vld [vmem:[#allocation2 + $0x320] sm:$0xff]
        %v3292 = vld [vmem:[#allocation2 + $0x328] sm:$0xff]
        %v3293 = vld [vmem:[#allocation2 + $0x330] sm:$0xff]
        %v3294 = vld [vmem:[#allocation2 + $0x338] sm:$0xff]
        %v3295 = vld [vmem:[#allocation2 + $0x340] sm:$0xff]
        %v3296 = vld [vmem:[#allocation2 + $0x348] sm:$0xff]
        %v3297 = vld [vmem:[#allocation2 + $0x350] sm:$0xff]
        %v3298 = vld [vmem:[#allocation2 + $0x358] sm:$0xff]
        %v3299 = vld [vmem:[#allocation2 + $0x360] sm:$0xff]
        %v3300 = vld [vmem:[#allocation2 + $0x368] sm:$0xff]
        %v3301 = vld [vmem:[#allocation2 + $0x370] sm:$0xff]
        %v3302 = vld [vmem:[#allocation2 + $0x378] sm:$0xff]
        %v3303 = vld [vmem:[#allocation2 + $0x380] sm:$0xff]
        %v3304 = vld [vmem:[#allocation2 + $0x388] sm:$0xff]
        %v3305 = vld [vmem:[#allocation2 + $0x390] sm:$0xff]
        %v3306 = vld [vmem:[#allocation2 + $0x398] sm:$0xff]
        %v3307 = vld [vmem:[#allocation2 + $0x3a0] sm:$0xff]
        %v3308 = vld [vmem:[#allocation2 + $0x3a8] sm:$0xff]
        %v3309 = vld [vmem:[#allocation2 + $0x3b0] sm:$0xff]
        %v3310 = vld [vmem:[#allocation2 + $0x3b8] sm:$0xff]
        %v3311 = vld [vmem:[#allocation2 + $0x3c0] sm:$0xff]
        %v3312 = vld [vmem:[#allocation2 + $0x3c8] sm:$0xff]
        %v3313 = vld [vmem:[#allocation2 + $0x3d0] sm:$0xff]
        %v3314 = vld [vmem:[#allocation2 + $0x3d8] sm:$0xff]
        %v3315 = vld [vmem:[#allocation2 + $0x3e0] sm:$0xff]
        %v3316 = vld [vmem:[#allocation2 + $0x3e8] sm:$0xff]
        %v3317 = vld [vmem:[#allocation2 + $0x3f0] sm:$0xff]
        %v3318 = vld [vmem:[#allocation2 + $0x3f8] sm:$0xff]
        %v3319 = vmax.f32 %v3191, %v2804
        %v3320 = vmax.f32 %v3192, %v2806
        %v3321 = vmax.f32 %v3193, %v2808
        %v3322 = vmax.f32 %v3194, %v2810
        %v3323 = vmax.f32 %v3195, %v2812
        %v3324 = vmax.f32 %v3196, %v2814
        %v3325 = vmax.f32 %v3197, %v2816
        %v3326 = vmax.f32 %v3198, %v2818
        %v3327 = vmax.f32 %v3199, %v2820
        %v3328 = vmax.f32 %v3200, %v2822
        %v3329 = vmax.f32 %v3201, %v2824
        %v3330 = vmax.f32 %v3202, %v2826
        %v3331 = vmax.f32 %v3203, %v2828
        %v3332 = vmax.f32 %v3204, %v2830
        %v3333 = vmax.f32 %v3205, %v2832
        %v3334 = vmax.f32 %v3206, %v2834
        %v3335 = vmax.f32 %v3207, %v2836
        %v3336 = vmax.f32 %v3208, %v2838
        %v3337 = vmax.f32 %v3209, %v2840
        %v3338 = vmax.f32 %v3210, %v2842
        %v3339 = vmax.f32 %v3211, %v2844
        %v3340 = vmax.f32 %v3212, %v2846
        %v3341 = vmax.f32 %v3213, %v2848
        %v3342 = vmax.f32 %v3214, %v2850
        %v3343 = vmax.f32 %v3215, %v2852
        %v3344 = vmax.f32 %v3216, %v2854
        %v3345 = vmax.f32 %v3217, %v2856
        %v3346 = vmax.f32 %v3218, %v2858
        %v3347 = vmax.f32 %v3219, %v2860
        %v3348 = vmax.f32 %v3220, %v2862
        %v3349 = vmax.f32 %v3221, %v2864
        %v3350 = vmax.f32 %v3222, %v2866
        %v3351 = vmax.f32 %v3223, %v2868
        %v3352 = vmax.f32 %v3224, %v2870
        %v3353 = vmax.f32 %v3225, %v2872
        %v3354 = vmax.f32 %v3226, %v2874
        %v3355 = vmax.f32 %v3227, %v2876
        %v3356 = vmax.f32 %v3228, %v2878
        %v3357 = vmax.f32 %v3229, %v2880
        %v3358 = vmax.f32 %v3230, %v2882
        %v3359 = vmax.f32 %v3231, %v2884
        %v3360 = vmax.f32 %v3232, %v2886
        %v3361 = vmax.f32 %v3233, %v2888
        %v3362 = vmax.f32 %v3234, %v2890
        %v3363 = vmax.f32 %v3235, %v2892
        %v3364 = vmax.f32 %v3236, %v2894
        %v3365 = vmax.f32 %v3237, %v2896
        %v3366 = vmax.f32 %v3238, %v2898
        %v3367 = vmax.f32 %v3239, %v2900
        %v3368 = vmax.f32 %v3240, %v2902
        %v3369 = vmax.f32 %v3241, %v2904
        %v3370 = vmax.f32 %v3242, %v2906
        %v3371 = vmax.f32 %v3243, %v2908
        %v3372 = vmax.f32 %v3244, %v2910
        %v3373 = vmax.f32 %v3245, %v2912
        %v3374 = vmax.f32 %v3246, %v2914
        %v3375 = vmax.f32 %v3247, %v2916
        %v3376 = vmax.f32 %v3248, %v2918
        %v3377 = vmax.f32 %v3249, %v2920
        %v3378 = vmax.f32 %v3250, %v2922
        %v3379 = vmax.f32 %v3251, %v2924
        %v3380 = vmax.f32 %v3252, %v2926
        %v3381 = vmax.f32 %v3253, %v2928
        %v3382 = vmax.f32 %v3254, %v2930
        %v3383 = vmax.f32 %v3255, %v2932
        %v3384 = vmax.f32 %v3256, %v2934
        %v3385 = vmax.f32 %v3257, %v2936
        %v3386 = vmax.f32 %v3258, %v2938
        %v3387 = vmax.f32 %v3259, %v2940
        %v3388 = vmax.f32 %v3260, %v2942
        %v3389 = vmax.f32 %v3261, %v2944
        %v3390 = vmax.f32 %v3262, %v2946
        %v3391 = vmax.f32 %v3263, %v2948
        %v3392 = vmax.f32 %v3264, %v2950
        %v3393 = vmax.f32 %v3265, %v2952
        %v3394 = vmax.f32 %v3266, %v2954
        %v3395 = vmax.f32 %v3267, %v2956
        %v3396 = vmax.f32 %v3268, %v2958
        %v3397 = vmax.f32 %v3269, %v2960
        %v3398 = vmax.f32 %v3270, %v2962
        %v3399 = vmax.f32 %v3271, %v2964
        %v3400 = vmax.f32 %v3272, %v2966
        %v3401 = vmax.f32 %v3273, %v2968
        %v3402 = vmax.f32 %v3274, %v2970
        %v3403 = vmax.f32 %v3275, %v2972
        %v3404 = vmax.f32 %v3276, %v2974
        %v3405 = vmax.f32 %v3277, %v2976
        %v3406 = vmax.f32 %v3278, %v2978
        %v3407 = vmax.f32 %v3279, %v2980
        %v3408 = vmax.f32 %v3280, %v2982
        %v3409 = vmax.f32 %v3281, %v2984
        %v3410 = vmax.f32 %v3282, %v2986
        %v3411 = vmax.f32 %v3283, %v2988
        %v3412 = vmax.f32 %v3284, %v2990
        %v3413 = vmax.f32 %v3285, %v2992
        %v3414 = vmax.f32 %v3286, %v2994
        %v3415 = vmax.f32 %v3287, %v2996
        %v3416 = vmax.f32 %v3288, %v2998
        %v3417 = vmax.f32 %v3289, %v3000
        %v3418 = vmax.f32 %v3290, %v3002
        %v3419 = vmax.f32 %v3291, %v3004
        %v3420 = vmax.f32 %v3292, %v3006
        %v3421 = vmax.f32 %v3293, %v3008
        %v3422 = vmax.f32 %v3294, %v3010
        %v3423 = vmax.f32 %v3295, %v3012
        %v3424 = vmax.f32 %v3296, %v3014
        %v3425 = vmax.f32 %v3297, %v3016
        %v3426 = vmax.f32 %v3298, %v3018
        %v3427 = vmax.f32 %v3299, %v3020
        %v3428 = vmax.f32 %v3300, %v3022
        %v3429 = vmax.f32 %v3301, %v3024
        %v3430 = vmax.f32 %v3302, %v3026
        %v3431 = vmax.f32 %v3303, %v3028
        %v3432 = vmax.f32 %v3304, %v3030
        %v3433 = vmax.f32 %v3305, %v3032
        %v3434 = vmax.f32 %v3306, %v3034
        %v3435 = vmax.f32 %v3307, %v3036
        %v3436 = vmax.f32 %v3308, %v3038
        %v3437 = vmax.f32 %v3309, %v3040
        %v3438 = vmax.f32 %v3310, %v3042
        %v3439 = vmax.f32 %v3311, %v3044
        %v3440 = vmax.f32 %v3312, %v3046
        %v3441 = vmax.f32 %v3313, %v3048
        %v3442 = vmax.f32 %v3314, %v3050
        %v3443 = vmax.f32 %v3315, %v3052
        %v3444 = vmax.f32 %v3316, %v3054
        %v3445 = vmax.f32 %v3317, %v3056
        %v3446 = vmax.f32 %v3318, %v3058
        %3447 = vst [vmem:[#allocation2] sm:$0xff] %v3319
        %3448 = vst [vmem:[#allocation2 + $0x8] sm:$0xff] %v3320
        %3449 = vst [vmem:[#allocation2 + $0x10] sm:$0xff] %v3321
        %3450 = vst [vmem:[#allocation2 + $0x18] sm:$0xff] %v3322
        %3451 = vst [vmem:[#allocation2 + $0x20] sm:$0xff] %v3323
        %3452 = vst [vmem:[#allocation2 + $0x28] sm:$0xff] %v3324
        %3453 = vst [vmem:[#allocation2 + $0x30] sm:$0xff] %v3325
        %3454 = vst [vmem:[#allocation2 + $0x38] sm:$0xff] %v3326
        %3455 = vst [vmem:[#allocation2 + $0x40] sm:$0xff] %v3327
        %3456 = vst [vmem:[#allocation2 + $0x48] sm:$0xff] %v3328
        %3457 = vst [vmem:[#allocation2 + $0x50] sm:$0xff] %v3329
        %3458 = vst [vmem:[#allocation2 + $0x58] sm:$0xff] %v3330
        %3459 = vst [vmem:[#allocation2 + $0x60] sm:$0xff] %v3331
        %3460 = vst [vmem:[#allocation2 + $0x68] sm:$0xff] %v3332
        %3461 = vst [vmem:[#allocation2 + $0x70] sm:$0xff] %v3333
        %3462 = vst [vmem:[#allocation2 + $0x78] sm:$0xff] %v3334
        %3463 = vst [vmem:[#allocation2 + $0x80] sm:$0xff] %v3335
        %3464 = vst [vmem:[#allocation2 + $0x88] sm:$0xff] %v3336
        %3465 = vst [vmem:[#allocation2 + $0x90] sm:$0xff] %v3337
        %3466 = vst [vmem:[#allocation2 + $0x98] sm:$0xff] %v3338
        %3467 = vst [vmem:[#allocation2 + $0xa0] sm:$0xff] %v3339
        %3468 = vst [vmem:[#allocation2 + $0xa8] sm:$0xff] %v3340
        %3469 = vst [vmem:[#allocation2 + $0xb0] sm:$0xff] %v3341
        %3470 = vst [vmem:[#allocation2 + $0xb8] sm:$0xff] %v3342
        %3471 = vst [vmem:[#allocation2 + $0xc0] sm:$0xff] %v3343
        %3472 = vst [vmem:[#allocation2 + $0xc8] sm:$0xff] %v3344
        %3473 = vst [vmem:[#allocation2 + $0xd0] sm:$0xff] %v3345
        %3474 = vst [vmem:[#allocation2 + $0xd8] sm:$0xff] %v3346
        %3475 = vst [vmem:[#allocation2 + $0xe0] sm:$0xff] %v3347
        %3476 = vst [vmem:[#allocation2 + $0xe8] sm:$0xff] %v3348
        %3477 = vst [vmem:[#allocation2 + $0xf0] sm:$0xff] %v3349
        %3478 = vst [vmem:[#allocation2 + $0xf8] sm:$0xff] %v3350
        %3479 = vst [vmem:[#allocation2 + $0x100] sm:$0xff] %v3351
        %3480 = vst [vmem:[#allocation2 + $0x108] sm:$0xff] %v3352
        %3481 = vst [vmem:[#allocation2 + $0x110] sm:$0xff] %v3353
        %3482 = vst [vmem:[#allocation2 + $0x118] sm:$0xff] %v3354
        %3483 = vst [vmem:[#allocation2 + $0x120] sm:$0xff] %v3355
        %3484 = vst [vmem:[#allocation2 + $0x128] sm:$0xff] %v3356
        %3485 = vst [vmem:[#allocation2 + $0x130] sm:$0xff] %v3357
        %3486 = vst [vmem:[#allocation2 + $0x138] sm:$0xff] %v3358
        %3487 = vst [vmem:[#allocation2 + $0x140] sm:$0xff] %v3359
        %3488 = vst [vmem:[#allocation2 + $0x148] sm:$0xff] %v3360
        %3489 = vst [vmem:[#allocation2 + $0x150] sm:$0xff] %v3361
        %3490 = vst [vmem:[#allocation2 + $0x158] sm:$0xff] %v3362
        %3491 = vst [vmem:[#allocation2 + $0x160] sm:$0xff] %v3363
        %3492 = vst [vmem:[#allocation2 + $0x168] sm:$0xff] %v3364
        %3493 = vst [vmem:[#allocation2 + $0x170] sm:$0xff] %v3365
        %3494 = vst [vmem:[#allocation2 + $0x178] sm:$0xff] %v3366
        %3495 = vst [vmem:[#allocation2 + $0x180] sm:$0xff] %v3367
        %3496 = vst [vmem:[#allocation2 + $0x188] sm:$0xff] %v3368
        %3497 = vst [vmem:[#allocation2 + $0x190] sm:$0xff] %v3369
        %3498 = vst [vmem:[#allocation2 + $0x198] sm:$0xff] %v3370
        %3499 = vst [vmem:[#allocation2 + $0x1a0] sm:$0xff] %v3371
        %3500 = vst [vmem:[#allocation2 + $0x1a8] sm:$0xff] %v3372
        %3501 = vst [vmem:[#allocation2 + $0x1b0] sm:$0xff] %v3373
        %3502 = vst [vmem:[#allocation2 + $0x1b8] sm:$0xff] %v3374
        %3503 = vst [vmem:[#allocation2 + $0x1c0] sm:$0xff] %v3375
        %3504 = vst [vmem:[#allocation2 + $0x1c8] sm:$0xff] %v3376
        %3505 = vst [vmem:[#allocation2 + $0x1d0] sm:$0xff] %v3377
        %3506 = vst [vmem:[#allocation2 + $0x1d8] sm:$0xff] %v3378
        %3507 = vst [vmem:[#allocation2 + $0x1e0] sm:$0xff] %v3379
        %3508 = vst [vmem:[#allocation2 + $0x1e8] sm:$0xff] %v3380
        %3509 = vst [vmem:[#allocation2 + $0x1f0] sm:$0xff] %v3381
        %3510 = vst [vmem:[#allocation2 + $0x1f8] sm:$0xff] %v3382
        %3511 = vst [vmem:[#allocation2 + $0x200] sm:$0xff] %v3383
        %3512 = vst [vmem:[#allocation2 + $0x208] sm:$0xff] %v3384
        %3513 = vst [vmem:[#allocation2 + $0x210] sm:$0xff] %v3385
        %3514 = vst [vmem:[#allocation2 + $0x218] sm:$0xff] %v3386
        %3515 = vst [vmem:[#allocation2 + $0x220] sm:$0xff] %v3387
        %3516 = vst [vmem:[#allocation2 + $0x228] sm:$0xff] %v3388
        %3517 = vst [vmem:[#allocation2 + $0x230] sm:$0xff] %v3389
        %3518 = vst [vmem:[#allocation2 + $0x238] sm:$0xff] %v3390
        %3519 = vst [vmem:[#allocation2 + $0x240] sm:$0xff] %v3391
        %3520 = vst [vmem:[#allocation2 + $0x248] sm:$0xff] %v3392
        %3521 = vst [vmem:[#allocation2 + $0x250] sm:$0xff] %v3393
        %3522 = vst [vmem:[#allocation2 + $0x258] sm:$0xff] %v3394
        %3523 = vst [vmem:[#allocation2 + $0x260] sm:$0xff] %v3395
        %3524 = vst [vmem:[#allocation2 + $0x268] sm:$0xff] %v3396
        %3525 = vst [vmem:[#allocation2 + $0x270] sm:$0xff] %v3397
        %3526 = vst [vmem:[#allocation2 + $0x278] sm:$0xff] %v3398
        %3527 = vst [vmem:[#allocation2 + $0x280] sm:$0xff] %v3399
        %3528 = vst [vmem:[#allocation2 + $0x288] sm:$0xff] %v3400
        %3529 = vst [vmem:[#allocation2 + $0x290] sm:$0xff] %v3401
        %3530 = vst [vmem:[#allocation2 + $0x298] sm:$0xff] %v3402
        %3531 = vst [vmem:[#allocation2 + $0x2a0] sm:$0xff] %v3403
        %3532 = vst [vmem:[#allocation2 + $0x2a8] sm:$0xff] %v3404
        %3533 = vst [vmem:[#allocation2 + $0x2b0] sm:$0xff] %v3405
        %3534 = vst [vmem:[#allocation2 + $0x2b8] sm:$0xff] %v3406
        %3535 = vst [vmem:[#allocation2 + $0x2c0] sm:$0xff] %v3407
        %3536 = vst [vmem:[#allocation2 + $0x2c8] sm:$0xff] %v3408
        %3537 = vst [vmem:[#allocation2 + $0x2d0] sm:$0xff] %v3409
        %3538 = vst [vmem:[#allocation2 + $0x2d8] sm:$0xff] %v3410
        %3539 = vst [vmem:[#allocation2 + $0x2e0] sm:$0xff] %v3411
        %3540 = vst [vmem:[#allocation2 + $0x2e8] sm:$0xff] %v3412
        %3541 = vst [vmem:[#allocation2 + $0x2f0] sm:$0xff] %v3413
        %3542 = vst [vmem:[#allocation2 + $0x2f8] sm:$0xff] %v3414
        %3543 = vst [vmem:[#allocation2 + $0x300] sm:$0xff] %v3415
        %3544 = vst [vmem:[#allocation2 + $0x308] sm:$0xff] %v3416
        %3545 = vst [vmem:[#allocation2 + $0x310] sm:$0xff] %v3417
        %3546 = vst [vmem:[#allocation2 + $0x318] sm:$0xff] %v3418
        %3547 = vst [vmem:[#allocation2 + $0x320] sm:$0xff] %v3419
        %3548 = vst [vmem:[#allocation2 + $0x328] sm:$0xff] %v3420
        %3549 = vst [vmem:[#allocation2 + $0x330] sm:$0xff] %v3421
        %3550 = vst [vmem:[#allocation2 + $0x338] sm:$0xff] %v3422
        %3551 = vst [vmem:[#allocation2 + $0x340] sm:$0xff] %v3423
        %3552 = vst [vmem:[#allocation2 + $0x348] sm:$0xff] %v3424
        %3553 = vst [vmem:[#allocation2 + $0x350] sm:$0xff] %v3425
        %3554 = vst [vmem:[#allocation2 + $0x358] sm:$0xff] %v3426
        %3555 = vst [vmem:[#allocation2 + $0x360] sm:$0xff] %v3427
        %3556 = vst [vmem:[#allocation2 + $0x368] sm:$0xff] %v3428
        %3557 = vst [vmem:[#allocation2 + $0x370] sm:$0xff] %v3429
        %3558 = vst [vmem:[#allocation2 + $0x378] sm:$0xff] %v3430
        %3559 = vst [vmem:[#allocation2 + $0x380] sm:$0xff] %v3431
        %3560 = vst [vmem:[#allocation2 + $0x388] sm:$0xff] %v3432
        %3561 = vst [vmem:[#allocation2 + $0x390] sm:$0xff] %v3433
        %3562 = vst [vmem:[#allocation2 + $0x398] sm:$0xff] %v3434
        %3563 = vst [vmem:[#allocation2 + $0x3a0] sm:$0xff] %v3435
        %3564 = vst [vmem:[#allocation2 + $0x3a8] sm:$0xff] %v3436
        %3565 = vst [vmem:[#allocation2 + $0x3b0] sm:$0xff] %v3437
        %3566 = vst [vmem:[#allocation2 + $0x3b8] sm:$0xff] %v3438
        %3567 = vst [vmem:[#allocation2 + $0x3c0] sm:$0xff] %v3439
        %3568 = vst [vmem:[#allocation2 + $0x3c8] sm:$0xff] %v3440
        %3569 = vst [vmem:[#allocation2 + $0x3d0] sm:$0xff] %v3441
        %3570 = vst [vmem:[#allocation2 + $0x3d8] sm:$0xff] %v3442
        %3571 = vst [vmem:[#allocation2 + $0x3e0] sm:$0xff] %v3443
        %3572 = vst [vmem:[#allocation2 + $0x3e8] sm:$0xff] %v3444
        %3573 = vst [vmem:[#allocation2 + $0x3f0] sm:$0xff] %v3445
        %3574 = vst [vmem:[#allocation2 + $0x3f8] sm:$0xff] %v3446
        %p3575 = scmp.eq.s32.totalorder %s32, 1
        // Predicated region
        $region93: #{stn3d_forward.1} parent=71 // pred_check
          %p3576 = pneg %p3575
        $region94: #{stn3d_forward.1} parent=71 // pred_check_branch
          %3578 = sbr.rel (%p3576) target = $region96
        $region95: #{stn3d_forward.1} parent=71 // pred_region
          %v3579 = vld [vmem:[#allocation2] sm:$0xff]
          %v3580 = vld [vmem:[#allocation2 + $0x8] sm:$0xff]
          %v3581 = vld [vmem:[#allocation2 + $0x10] sm:$0xff]
          %v3582 = vld [vmem:[#allocation2 + $0x18] sm:$0xff]
          %v3583 = vld [vmem:[#allocation2 + $0x20] sm:$0xff]
          %v3584 = vld [vmem:[#allocation2 + $0x28] sm:$0xff]
          %v3585 = vld [vmem:[#allocation2 + $0x30] sm:$0xff]
          %v3586 = vld [vmem:[#allocation2 + $0x38] sm:$0xff]
          %v3587 = vld [vmem:[#allocation2 + $0x40] sm:$0xff]
          %v3588 = vld [vmem:[#allocation2 + $0x48] sm:$0xff]
          %v3589 = vld [vmem:[#allocation2 + $0x50] sm:$0xff]
          %v3590 = vld [vmem:[#allocation2 + $0x58] sm:$0xff]
          %v3591 = vld [vmem:[#allocation2 + $0x60] sm:$0xff]
          %v3592 = vld [vmem:[#allocation2 + $0x68] sm:$0xff]
          %v3593 = vld [vmem:[#allocation2 + $0x70] sm:$0xff]
          %v3594 = vld [vmem:[#allocation2 + $0x78] sm:$0xff]
          %v3595 = vld [vmem:[#allocation2 + $0x80] sm:$0xff]
          %v3596 = vld [vmem:[#allocation2 + $0x88] sm:$0xff]
          %v3597 = vld [vmem:[#allocation2 + $0x90] sm:$0xff]
          %v3598 = vld [vmem:[#allocation2 + $0x98] sm:$0xff]
          %v3599 = vld [vmem:[#allocation2 + $0xa0] sm:$0xff]
          %v3600 = vld [vmem:[#allocation2 + $0xa8] sm:$0xff]
          %v3601 = vld [vmem:[#allocation2 + $0xb0] sm:$0xff]
          %v3602 = vld [vmem:[#allocation2 + $0xb8] sm:$0xff]
          %v3603 = vld [vmem:[#allocation2 + $0xc0] sm:$0xff]
          %v3604 = vld [vmem:[#allocation2 + $0xc8] sm:$0xff]
          %v3605 = vld [vmem:[#allocation2 + $0xd0] sm:$0xff]
          %v3606 = vld [vmem:[#allocation2 + $0xd8] sm:$0xff]
          %v3607 = vld [vmem:[#allocation2 + $0xe0] sm:$0xff]
          %v3608 = vld [vmem:[#allocation2 + $0xe8] sm:$0xff]
          %v3609 = vld [vmem:[#allocation2 + $0xf0] sm:$0xff]
          %v3610 = vld [vmem:[#allocation2 + $0xf8] sm:$0xff]
          %v3611 = vld [vmem:[#allocation2 + $0x100] sm:$0xff]
          %v3612 = vld [vmem:[#allocation2 + $0x108] sm:$0xff]
          %v3613 = vld [vmem:[#allocation2 + $0x110] sm:$0xff]
          %v3614 = vld [vmem:[#allocation2 + $0x118] sm:$0xff]
          %v3615 = vld [vmem:[#allocation2 + $0x120] sm:$0xff]
          %v3616 = vld [vmem:[#allocation2 + $0x128] sm:$0xff]
          %v3617 = vld [vmem:[#allocation2 + $0x130] sm:$0xff]
          %v3618 = vld [vmem:[#allocation2 + $0x138] sm:$0xff]
          %v3619 = vld [vmem:[#allocation2 + $0x140] sm:$0xff]
          %v3620 = vld [vmem:[#allocation2 + $0x148] sm:$0xff]
          %v3621 = vld [vmem:[#allocation2 + $0x150] sm:$0xff]
          %v3622 = vld [vmem:[#allocation2 + $0x158] sm:$0xff]
          %v3623 = vld [vmem:[#allocation2 + $0x160] sm:$0xff]
          %v3624 = vld [vmem:[#allocation2 + $0x168] sm:$0xff]
          %v3625 = vld [vmem:[#allocation2 + $0x170] sm:$0xff]
          %v3626 = vld [vmem:[#allocation2 + $0x178] sm:$0xff]
          %v3627 = vld [vmem:[#allocation2 + $0x180] sm:$0xff]
          %v3628 = vld [vmem:[#allocation2 + $0x188] sm:$0xff]
          %v3629 = vld [vmem:[#allocation2 + $0x190] sm:$0xff]
          %v3630 = vld [vmem:[#allocation2 + $0x198] sm:$0xff]
          %v3631 = vld [vmem:[#allocation2 + $0x1a0] sm:$0xff]
          %v3632 = vld [vmem:[#allocation2 + $0x1a8] sm:$0xff]
          %v3633 = vld [vmem:[#allocation2 + $0x1b0] sm:$0xff]
          %v3634 = vld [vmem:[#allocation2 + $0x1b8] sm:$0xff]
          %v3635 = vld [vmem:[#allocation2 + $0x1c0] sm:$0xff]
          %v3636 = vld [vmem:[#allocation2 + $0x1c8] sm:$0xff]
          %v3637 = vld [vmem:[#allocation2 + $0x1d0] sm:$0xff]
          %v3638 = vld [vmem:[#allocation2 + $0x1d8] sm:$0xff]
          %v3639 = vld [vmem:[#allocation2 + $0x1e0] sm:$0xff]
          %v3640 = vld [vmem:[#allocation2 + $0x1e8] sm:$0xff]
          %v3641 = vld [vmem:[#allocation2 + $0x1f0] sm:$0xff]
          %v3642 = vld [vmem:[#allocation2 + $0x1f8] sm:$0xff]
          %v3643 = vld [vmem:[#allocation2 + $0x200] sm:$0xff]
          %v3644 = vld [vmem:[#allocation2 + $0x208] sm:$0xff]
          %v3645 = vld [vmem:[#allocation2 + $0x210] sm:$0xff]
          %v3646 = vld [vmem:[#allocation2 + $0x218] sm:$0xff]
          %v3647 = vld [vmem:[#allocation2 + $0x220] sm:$0xff]
          %v3648 = vld [vmem:[#allocation2 + $0x228] sm:$0xff]
          %v3649 = vld [vmem:[#allocation2 + $0x230] sm:$0xff]
          %v3650 = vld [vmem:[#allocation2 + $0x238] sm:$0xff]
          %v3651 = vld [vmem:[#allocation2 + $0x240] sm:$0xff]
          %v3652 = vld [vmem:[#allocation2 + $0x248] sm:$0xff]
          %v3653 = vld [vmem:[#allocation2 + $0x250] sm:$0xff]
          %v3654 = vld [vmem:[#allocation2 + $0x258] sm:$0xff]
          %v3655 = vld [vmem:[#allocation2 + $0x260] sm:$0xff]
          %v3656 = vld [vmem:[#allocation2 + $0x268] sm:$0xff]
          %v3657 = vld [vmem:[#allocation2 + $0x270] sm:$0xff]
          %v3658 = vld [vmem:[#allocation2 + $0x278] sm:$0xff]
          %v3659 = vld [vmem:[#allocation2 + $0x280] sm:$0xff]
          %v3660 = vld [vmem:[#allocation2 + $0x288] sm:$0xff]
          %v3661 = vld [vmem:[#allocation2 + $0x290] sm:$0xff]
          %v3662 = vld [vmem:[#allocation2 + $0x298] sm:$0xff]
          %v3663 = vld [vmem:[#allocation2 + $0x2a0] sm:$0xff]
          %v3664 = vld [vmem:[#allocation2 + $0x2a8] sm:$0xff]
          %v3665 = vld [vmem:[#allocation2 + $0x2b0] sm:$0xff]
          %v3666 = vld [vmem:[#allocation2 + $0x2b8] sm:$0xff]
          %v3667 = vld [vmem:[#allocation2 + $0x2c0] sm:$0xff]
          %v3668 = vld [vmem:[#allocation2 + $0x2c8] sm:$0xff]
          %v3669 = vld [vmem:[#allocation2 + $0x2d0] sm:$0xff]
          %v3670 = vld [vmem:[#allocation2 + $0x2d8] sm:$0xff]
          %v3671 = vld [vmem:[#allocation2 + $0x2e0] sm:$0xff]
          %v3672 = vld [vmem:[#allocation2 + $0x2e8] sm:$0xff]
          %v3673 = vld [vmem:[#allocation2 + $0x2f0] sm:$0xff]
          %v3674 = vld [vmem:[#allocation2 + $0x2f8] sm:$0xff]
          %v3675 = vld [vmem:[#allocation2 + $0x300] sm:$0xff]
          %v3676 = vld [vmem:[#allocation2 + $0x308] sm:$0xff]
          %v3677 = vld [vmem:[#allocation2 + $0x310] sm:$0xff]
          %v3678 = vld [vmem:[#allocation2 + $0x318] sm:$0xff]
          %v3679 = vld [vmem:[#allocation2 + $0x320] sm:$0xff]
          %v3680 = vld [vmem:[#allocation2 + $0x328] sm:$0xff]
          %v3681 = vld [vmem:[#allocation2 + $0x330] sm:$0xff]
          %v3682 = vld [vmem:[#allocation2 + $0x338] sm:$0xff]
          %v3683 = vld [vmem:[#allocation2 + $0x340] sm:$0xff]
          %v3684 = vld [vmem:[#allocation2 + $0x348] sm:$0xff]
          %v3685 = vld [vmem:[#allocation2 + $0x350] sm:$0xff]
          %v3686 = vld [vmem:[#allocation2 + $0x358] sm:$0xff]
          %v3687 = vld [vmem:[#allocation2 + $0x360] sm:$0xff]
          %v3688 = vld [vmem:[#allocation2 + $0x368] sm:$0xff]
          %v3689 = vld [vmem:[#allocation2 + $0x370] sm:$0xff]
          %v3690 = vld [vmem:[#allocation2 + $0x378] sm:$0xff]
          %v3691 = vld [vmem:[#allocation2 + $0x380] sm:$0xff]
          %v3692 = vld [vmem:[#allocation2 + $0x388] sm:$0xff]
          %v3693 = vld [vmem:[#allocation2 + $0x390] sm:$0xff]
          %v3694 = vld [vmem:[#allocation2 + $0x398] sm:$0xff]
          %v3695 = vld [vmem:[#allocation2 + $0x3a0] sm:$0xff]
          %v3696 = vld [vmem:[#allocation2 + $0x3a8] sm:$0xff]
          %v3697 = vld [vmem:[#allocation2 + $0x3b0] sm:$0xff]
          %v3698 = vld [vmem:[#allocation2 + $0x3b8] sm:$0xff]
          %v3699 = vld [vmem:[#allocation2 + $0x3c0] sm:$0xff]
          %v3700 = vld [vmem:[#allocation2 + $0x3c8] sm:$0xff]
          %v3701 = vld [vmem:[#allocation2 + $0x3d0] sm:$0xff]
          %v3702 = vld [vmem:[#allocation2 + $0x3d8] sm:$0xff]
          %v3703 = vld [vmem:[#allocation2 + $0x3e0] sm:$0xff]
          %v3704 = vld [vmem:[#allocation2 + $0x3e8] sm:$0xff]
          %v3705 = vld [vmem:[#allocation2 + $0x3f0] sm:$0xff]
          %v3706 = vld [vmem:[#allocation2 + $0x3f8] sm:$0xff]
          %v3707 = vld [vmem:[#allocation5] sm:$0xff]
          %v3708 = vld [vmem:[#allocation5 + $0x8] sm:$0xff]
          %v3709 = vld [vmem:[#allocation5 + $0x10] sm:$0xff]
          %v3710 = vld [vmem:[#allocation5 + $0x18] sm:$0xff]
          %v3711 = vld [vmem:[#allocation5 + $0x20] sm:$0xff]
          %v3712 = vld [vmem:[#allocation5 + $0x28] sm:$0xff]
          %v3713 = vld [vmem:[#allocation5 + $0x30] sm:$0xff]
          %v3714 = vld [vmem:[#allocation5 + $0x38] sm:$0xff]
          %v3715 = vld [vmem:[#allocation5 + $0x40] sm:$0xff]
          %v3716 = vld [vmem:[#allocation5 + $0x48] sm:$0xff]
          %v3717 = vld [vmem:[#allocation5 + $0x50] sm:$0xff]
          %v3718 = vld [vmem:[#allocation5 + $0x58] sm:$0xff]
          %v3719 = vld [vmem:[#allocation5 + $0x60] sm:$0xff]
          %v3720 = vld [vmem:[#allocation5 + $0x68] sm:$0xff]
          %v3721 = vld [vmem:[#allocation5 + $0x70] sm:$0xff]
          %v3722 = vld [vmem:[#allocation5 + $0x78] sm:$0xff]
          %v3723 = vld [vmem:[#allocation5 + $0x80] sm:$0xff]
          %v3724 = vld [vmem:[#allocation5 + $0x88] sm:$0xff]
          %v3725 = vld [vmem:[#allocation5 + $0x90] sm:$0xff]
          %v3726 = vld [vmem:[#allocation5 + $0x98] sm:$0xff]
          %v3727 = vld [vmem:[#allocation5 + $0xa0] sm:$0xff]
          %v3728 = vld [vmem:[#allocation5 + $0xa8] sm:$0xff]
          %v3729 = vld [vmem:[#allocation5 + $0xb0] sm:$0xff]
          %v3730 = vld [vmem:[#allocation5 + $0xb8] sm:$0xff]
          %v3731 = vld [vmem:[#allocation5 + $0xc0] sm:$0xff]
          %v3732 = vld [vmem:[#allocation5 + $0xc8] sm:$0xff]
          %v3733 = vld [vmem:[#allocation5 + $0xd0] sm:$0xff]
          %v3734 = vld [vmem:[#allocation5 + $0xd8] sm:$0xff]
          %v3735 = vld [vmem:[#allocation5 + $0xe0] sm:$0xff]
          %v3736 = vld [vmem:[#allocation5 + $0xe8] sm:$0xff]
          %v3737 = vld [vmem:[#allocation5 + $0xf0] sm:$0xff]
          %v3738 = vld [vmem:[#allocation5 + $0xf8] sm:$0xff]
          %v3739 = vld [vmem:[#allocation5 + $0x100] sm:$0xff]
          %v3740 = vld [vmem:[#allocation5 + $0x108] sm:$0xff]
          %v3741 = vld [vmem:[#allocation5 + $0x110] sm:$0xff]
          %v3742 = vld [vmem:[#allocation5 + $0x118] sm:$0xff]
          %v3743 = vld [vmem:[#allocation5 + $0x120] sm:$0xff]
          %v3744 = vld [vmem:[#allocation5 + $0x128] sm:$0xff]
          %v3745 = vld [vmem:[#allocation5 + $0x130] sm:$0xff]
          %v3746 = vld [vmem:[#allocation5 + $0x138] sm:$0xff]
          %v3747 = vld [vmem:[#allocation5 + $0x140] sm:$0xff]
          %v3748 = vld [vmem:[#allocation5 + $0x148] sm:$0xff]
          %v3749 = vld [vmem:[#allocation5 + $0x150] sm:$0xff]
          %v3750 = vld [vmem:[#allocation5 + $0x158] sm:$0xff]
          %v3751 = vld [vmem:[#allocation5 + $0x160] sm:$0xff]
          %v3752 = vld [vmem:[#allocation5 + $0x168] sm:$0xff]
          %v3753 = vld [vmem:[#allocation5 + $0x170] sm:$0xff]
          %v3754 = vld [vmem:[#allocation5 + $0x178] sm:$0xff]
          %v3755 = vld [vmem:[#allocation5 + $0x180] sm:$0xff]
          %v3756 = vld [vmem:[#allocation5 + $0x188] sm:$0xff]
          %v3757 = vld [vmem:[#allocation5 + $0x190] sm:$0xff]
          %v3758 = vld [vmem:[#allocation5 + $0x198] sm:$0xff]
          %v3759 = vld [vmem:[#allocation5 + $0x1a0] sm:$0xff]
          %v3760 = vld [vmem:[#allocation5 + $0x1a8] sm:$0xff]
          %v3761 = vld [vmem:[#allocation5 + $0x1b0] sm:$0xff]
          %v3762 = vld [vmem:[#allocation5 + $0x1b8] sm:$0xff]
          %v3763 = vld [vmem:[#allocation5 + $0x1c0] sm:$0xff]
          %v3764 = vld [vmem:[#allocation5 + $0x1c8] sm:$0xff]
          %v3765 = vld [vmem:[#allocation5 + $0x1d0] sm:$0xff]
          %v3766 = vld [vmem:[#allocation5 + $0x1d8] sm:$0xff]
          %v3767 = vld [vmem:[#allocation5 + $0x1e0] sm:$0xff]
          %v3768 = vld [vmem:[#allocation5 + $0x1e8] sm:$0xff]
          %v3769 = vld [vmem:[#allocation5 + $0x1f0] sm:$0xff]
          %v3770 = vld [vmem:[#allocation5 + $0x1f8] sm:$0xff]
          %v3771 = vld [vmem:[#allocation5 + $0x200] sm:$0xff]
          %v3772 = vld [vmem:[#allocation5 + $0x208] sm:$0xff]
          %v3773 = vld [vmem:[#allocation5 + $0x210] sm:$0xff]
          %v3774 = vld [vmem:[#allocation5 + $0x218] sm:$0xff]
          %v3775 = vld [vmem:[#allocation5 + $0x220] sm:$0xff]
          %v3776 = vld [vmem:[#allocation5 + $0x228] sm:$0xff]
          %v3777 = vld [vmem:[#allocation5 + $0x230] sm:$0xff]
          %v3778 = vld [vmem:[#allocation5 + $0x238] sm:$0xff]
          %v3779 = vld [vmem:[#allocation5 + $0x240] sm:$0xff]
          %v3780 = vld [vmem:[#allocation5 + $0x248] sm:$0xff]
          %v3781 = vld [vmem:[#allocation5 + $0x250] sm:$0xff]
          %v3782 = vld [vmem:[#allocation5 + $0x258] sm:$0xff]
          %v3783 = vld [vmem:[#allocation5 + $0x260] sm:$0xff]
          %v3784 = vld [vmem:[#allocation5 + $0x268] sm:$0xff]
          %v3785 = vld [vmem:[#allocation5 + $0x270] sm:$0xff]
          %v3786 = vld [vmem:[#allocation5 + $0x278] sm:$0xff]
          %v3787 = vld [vmem:[#allocation5 + $0x280] sm:$0xff]
          %v3788 = vld [vmem:[#allocation5 + $0x288] sm:$0xff]
          %v3789 = vld [vmem:[#allocation5 + $0x290] sm:$0xff]
          %v3790 = vld [vmem:[#allocation5 + $0x298] sm:$0xff]
          %v3791 = vld [vmem:[#allocation5 + $0x2a0] sm:$0xff]
          %v3792 = vld [vmem:[#allocation5 + $0x2a8] sm:$0xff]
          %v3793 = vld [vmem:[#allocation5 + $0x2b0] sm:$0xff]
          %v3794 = vld [vmem:[#allocation5 + $0x2b8] sm:$0xff]
          %v3795 = vld [vmem:[#allocation5 + $0x2c0] sm:$0xff]
          %v3796 = vld [vmem:[#allocation5 + $0x2c8] sm:$0xff]
          %v3797 = vld [vmem:[#allocation5 + $0x2d0] sm:$0xff]
          %v3798 = vld [vmem:[#allocation5 + $0x2d8] sm:$0xff]
          %v3799 = vld [vmem:[#allocation5 + $0x2e0] sm:$0xff]
          %v3800 = vld [vmem:[#allocation5 + $0x2e8] sm:$0xff]
          %v3801 = vld [vmem:[#allocation5 + $0x2f0] sm:$0xff]
          %v3802 = vld [vmem:[#allocation5 + $0x2f8] sm:$0xff]
          %v3803 = vld [vmem:[#allocation5 + $0x300] sm:$0xff]
          %v3804 = vld [vmem:[#allocation5 + $0x308] sm:$0xff]
          %v3805 = vld [vmem:[#allocation5 + $0x310] sm:$0xff]
          %v3806 = vld [vmem:[#allocation5 + $0x318] sm:$0xff]
          %v3807 = vld [vmem:[#allocation5 + $0x320] sm:$0xff]
          %v3808 = vld [vmem:[#allocation5 + $0x328] sm:$0xff]
          %v3809 = vld [vmem:[#allocation5 + $0x330] sm:$0xff]
          %v3810 = vld [vmem:[#allocation5 + $0x338] sm:$0xff]
          %v3811 = vld [vmem:[#allocation5 + $0x340] sm:$0xff]
          %v3812 = vld [vmem:[#allocation5 + $0x348] sm:$0xff]
          %v3813 = vld [vmem:[#allocation5 + $0x350] sm:$0xff]
          %v3814 = vld [vmem:[#allocation5 + $0x358] sm:$0xff]
          %v3815 = vld [vmem:[#allocation5 + $0x360] sm:$0xff]
          %v3816 = vld [vmem:[#allocation5 + $0x368] sm:$0xff]
          %v3817 = vld [vmem:[#allocation5 + $0x370] sm:$0xff]
          %v3818 = vld [vmem:[#allocation5 + $0x378] sm:$0xff]
          %v3819 = vld [vmem:[#allocation5 + $0x380] sm:$0xff]
          %v3820 = vld [vmem:[#allocation5 + $0x388] sm:$0xff]
          %v3821 = vld [vmem:[#allocation5 + $0x390] sm:$0xff]
          %v3822 = vld [vmem:[#allocation5 + $0x398] sm:$0xff]
          %v3823 = vld [vmem:[#allocation5 + $0x3a0] sm:$0xff]
          %v3824 = vld [vmem:[#allocation5 + $0x3a8] sm:$0xff]
          %v3825 = vld [vmem:[#allocation5 + $0x3b0] sm:$0xff]
          %v3826 = vld [vmem:[#allocation5 + $0x3b8] sm:$0xff]
          %v3827 = vld [vmem:[#allocation5 + $0x3c0] sm:$0xff]
          %v3828 = vld [vmem:[#allocation5 + $0x3c8] sm:$0xff]
          %v3829 = vld [vmem:[#allocation5 + $0x3d0] sm:$0xff]
          %v3830 = vld [vmem:[#allocation5 + $0x3d8] sm:$0xff]
          %v3831 = vld [vmem:[#allocation5 + $0x3e0] sm:$0xff]
          %v3832 = vld [vmem:[#allocation5 + $0x3e8] sm:$0xff]
          %v3833 = vld [vmem:[#allocation5 + $0x3f0] sm:$0xff]
          %v3834 = vld [vmem:[#allocation5 + $0x3f8] sm:$0xff]
          %v3835 = vld [vmem:[#allocation5 + $0x400] sm:$0xff]
          %v3836 = vld [vmem:[#allocation5 + $0x408] sm:$0xff]
          %v3837 = vld [vmem:[#allocation5 + $0x410] sm:$0xff]
          %v3838 = vld [vmem:[#allocation5 + $0x418] sm:$0xff]
          %v3839 = vld [vmem:[#allocation5 + $0x420] sm:$0xff]
          %v3840 = vld [vmem:[#allocation5 + $0x428] sm:$0xff]
          %v3841 = vld [vmem:[#allocation5 + $0x430] sm:$0xff]
          %v3842 = vld [vmem:[#allocation5 + $0x438] sm:$0xff]
          %v3843 = vld [vmem:[#allocation5 + $0x440] sm:$0xff]
          %v3844 = vld [vmem:[#allocation5 + $0x448] sm:$0xff]
          %v3845 = vld [vmem:[#allocation5 + $0x450] sm:$0xff]
          %v3846 = vld [vmem:[#allocation5 + $0x458] sm:$0xff]
          %v3847 = vld [vmem:[#allocation5 + $0x460] sm:$0xff]
          %v3848 = vld [vmem:[#allocation5 + $0x468] sm:$0xff]
          %v3849 = vld [vmem:[#allocation5 + $0x470] sm:$0xff]
          %v3850 = vld [vmem:[#allocation5 + $0x478] sm:$0xff]
          %v3851 = vld [vmem:[#allocation5 + $0x480] sm:$0xff]
          %v3852 = vld [vmem:[#allocation5 + $0x488] sm:$0xff]
          %v3853 = vld [vmem:[#allocation5 + $0x490] sm:$0xff]
          %v3854 = vld [vmem:[#allocation5 + $0x498] sm:$0xff]
          %v3855 = vld [vmem:[#allocation5 + $0x4a0] sm:$0xff]
          %v3856 = vld [vmem:[#allocation5 + $0x4a8] sm:$0xff]
          %v3857 = vld [vmem:[#allocation5 + $0x4b0] sm:$0xff]
          %v3858 = vld [vmem:[#allocation5 + $0x4b8] sm:$0xff]
          %v3859 = vld [vmem:[#allocation5 + $0x4c0] sm:$0xff]
          %v3860 = vld [vmem:[#allocation5 + $0x4c8] sm:$0xff]
          %v3861 = vld [vmem:[#allocation5 + $0x4d0] sm:$0xff]
          %v3862 = vld [vmem:[#allocation5 + $0x4d8] sm:$0xff]
          %v3863 = vld [vmem:[#allocation5 + $0x4e0] sm:$0xff]
          %v3864 = vld [vmem:[#allocation5 + $0x4e8] sm:$0xff]
          %v3865 = vld [vmem:[#allocation5 + $0x4f0] sm:$0xff]
          %v3866 = vld [vmem:[#allocation5 + $0x4f8] sm:$0xff]
          %v3867 = vld [vmem:[#allocation5 + $0x500] sm:$0xff]
          %v3868 = vld [vmem:[#allocation5 + $0x508] sm:$0xff]
          %v3869 = vld [vmem:[#allocation5 + $0x510] sm:$0xff]
          %v3870 = vld [vmem:[#allocation5 + $0x518] sm:$0xff]
          %v3871 = vld [vmem:[#allocation5 + $0x520] sm:$0xff]
          %v3872 = vld [vmem:[#allocation5 + $0x528] sm:$0xff]
          %v3873 = vld [vmem:[#allocation5 + $0x530] sm:$0xff]
          %v3874 = vld [vmem:[#allocation5 + $0x538] sm:$0xff]
          %v3875 = vld [vmem:[#allocation5 + $0x540] sm:$0xff]
          %v3876 = vld [vmem:[#allocation5 + $0x548] sm:$0xff]
          %v3877 = vld [vmem:[#allocation5 + $0x550] sm:$0xff]
          %v3878 = vld [vmem:[#allocation5 + $0x558] sm:$0xff]
          %v3879 = vld [vmem:[#allocation5 + $0x560] sm:$0xff]
          %v3880 = vld [vmem:[#allocation5 + $0x568] sm:$0xff]
          %v3881 = vld [vmem:[#allocation5 + $0x570] sm:$0xff]
          %v3882 = vld [vmem:[#allocation5 + $0x578] sm:$0xff]
          %v3883 = vld [vmem:[#allocation5 + $0x580] sm:$0xff]
          %v3884 = vld [vmem:[#allocation5 + $0x588] sm:$0xff]
          %v3885 = vld [vmem:[#allocation5 + $0x590] sm:$0xff]
          %v3886 = vld [vmem:[#allocation5 + $0x598] sm:$0xff]
          %v3887 = vld [vmem:[#allocation5 + $0x5a0] sm:$0xff]
          %v3888 = vld [vmem:[#allocation5 + $0x5a8] sm:$0xff]
          %v3889 = vld [vmem:[#allocation5 + $0x5b0] sm:$0xff]
          %v3890 = vld [vmem:[#allocation5 + $0x5b8] sm:$0xff]
          %v3891 = vld [vmem:[#allocation5 + $0x5c0] sm:$0xff]
          %v3892 = vld [vmem:[#allocation5 + $0x5c8] sm:$0xff]
          %v3893 = vld [vmem:[#allocation5 + $0x5d0] sm:$0xff]
          %v3894 = vld [vmem:[#allocation5 + $0x5d8] sm:$0xff]
          %v3895 = vld [vmem:[#allocation5 + $0x5e0] sm:$0xff]
          %v3896 = vld [vmem:[#allocation5 + $0x5e8] sm:$0xff]
          %v3897 = vld [vmem:[#allocation5 + $0x5f0] sm:$0xff]
          %v3898 = vld [vmem:[#allocation5 + $0x5f8] sm:$0xff]
          %v3899 = vld [vmem:[#allocation5 + $0x600] sm:$0xff]
          %v3900 = vld [vmem:[#allocation5 + $0x608] sm:$0xff]
          %v3901 = vld [vmem:[#allocation5 + $0x610] sm:$0xff]
          %v3902 = vld [vmem:[#allocation5 + $0x618] sm:$0xff]
          %v3903 = vld [vmem:[#allocation5 + $0x620] sm:$0xff]
          %v3904 = vld [vmem:[#allocation5 + $0x628] sm:$0xff]
          %v3905 = vld [vmem:[#allocation5 + $0x630] sm:$0xff]
          %v3906 = vld [vmem:[#allocation5 + $0x638] sm:$0xff]
          %v3907 = vld [vmem:[#allocation5 + $0x640] sm:$0xff]
          %v3908 = vld [vmem:[#allocation5 + $0x648] sm:$0xff]
          %v3909 = vld [vmem:[#allocation5 + $0x650] sm:$0xff]
          %v3910 = vld [vmem:[#allocation5 + $0x658] sm:$0xff]
          %v3911 = vld [vmem:[#allocation5 + $0x660] sm:$0xff]
          %v3912 = vld [vmem:[#allocation5 + $0x668] sm:$0xff]
          %v3913 = vld [vmem:[#allocation5 + $0x670] sm:$0xff]
          %v3914 = vld [vmem:[#allocation5 + $0x678] sm:$0xff]
          %v3915 = vld [vmem:[#allocation5 + $0x680] sm:$0xff]
          %v3916 = vld [vmem:[#allocation5 + $0x688] sm:$0xff]
          %v3917 = vld [vmem:[#allocation5 + $0x690] sm:$0xff]
          %v3918 = vld [vmem:[#allocation5 + $0x698] sm:$0xff]
          %v3919 = vld [vmem:[#allocation5 + $0x6a0] sm:$0xff]
          %v3920 = vld [vmem:[#allocation5 + $0x6a8] sm:$0xff]
          %v3921 = vld [vmem:[#allocation5 + $0x6b0] sm:$0xff]
          %v3922 = vld [vmem:[#allocation5 + $0x6b8] sm:$0xff]
          %v3923 = vld [vmem:[#allocation5 + $0x6c0] sm:$0xff]
          %v3924 = vld [vmem:[#allocation5 + $0x6c8] sm:$0xff]
          %v3925 = vld [vmem:[#allocation5 + $0x6d0] sm:$0xff]
          %v3926 = vld [vmem:[#allocation5 + $0x6d8] sm:$0xff]
          %v3927 = vld [vmem:[#allocation5 + $0x6e0] sm:$0xff]
          %v3928 = vld [vmem:[#allocation5 + $0x6e8] sm:$0xff]
          %v3929 = vld [vmem:[#allocation5 + $0x6f0] sm:$0xff]
          %v3930 = vld [vmem:[#allocation5 + $0x6f8] sm:$0xff]
          %v3931 = vld [vmem:[#allocation5 + $0x700] sm:$0xff]
          %v3932 = vld [vmem:[#allocation5 + $0x708] sm:$0xff]
          %v3933 = vld [vmem:[#allocation5 + $0x710] sm:$0xff]
          %v3934 = vld [vmem:[#allocation5 + $0x718] sm:$0xff]
          %v3935 = vld [vmem:[#allocation5 + $0x720] sm:$0xff]
          %v3936 = vld [vmem:[#allocation5 + $0x728] sm:$0xff]
          %v3937 = vld [vmem:[#allocation5 + $0x730] sm:$0xff]
          %v3938 = vld [vmem:[#allocation5 + $0x738] sm:$0xff]
          %v3939 = vld [vmem:[#allocation5 + $0x740] sm:$0xff]
          %v3940 = vld [vmem:[#allocation5 + $0x748] sm:$0xff]
          %v3941 = vld [vmem:[#allocation5 + $0x750] sm:$0xff]
          %v3942 = vld [vmem:[#allocation5 + $0x758] sm:$0xff]
          %v3943 = vld [vmem:[#allocation5 + $0x760] sm:$0xff]
          %v3944 = vld [vmem:[#allocation5 + $0x768] sm:$0xff]
          %v3945 = vld [vmem:[#allocation5 + $0x770] sm:$0xff]
          %v3946 = vld [vmem:[#allocation5 + $0x778] sm:$0xff]
          %v3947 = vld [vmem:[#allocation5 + $0x780] sm:$0xff]
          %v3948 = vld [vmem:[#allocation5 + $0x788] sm:$0xff]
          %v3949 = vld [vmem:[#allocation5 + $0x790] sm:$0xff]
          %v3950 = vld [vmem:[#allocation5 + $0x798] sm:$0xff]
          %v3951 = vld [vmem:[#allocation5 + $0x7a0] sm:$0xff]
          %v3952 = vld [vmem:[#allocation5 + $0x7a8] sm:$0xff]
          %v3953 = vld [vmem:[#allocation5 + $0x7b0] sm:$0xff]
          %v3954 = vld [vmem:[#allocation5 + $0x7b8] sm:$0xff]
          %v3955 = vld [vmem:[#allocation5 + $0x7c0] sm:$0xff]
          %v3956 = vld [vmem:[#allocation5 + $0x7c8] sm:$0xff]
          %v3957 = vld [vmem:[#allocation5 + $0x7d0] sm:$0xff]
          %v3958 = vld [vmem:[#allocation5 + $0x7d8] sm:$0xff]
          %v3959 = vld [vmem:[#allocation5 + $0x7e0] sm:$0xff]
          %v3960 = vld [vmem:[#allocation5 + $0x7e8] sm:$0xff]
          %v3961 = vld [vmem:[#allocation5 + $0x7f0] sm:$0xff]
          %v3962 = vld [vmem:[#allocation5 + $0x7f8] sm:$0xff]
          %v3963 = vld [vmem:[#allocation5 + $0x800] sm:$0xff]
          %v3964 = vld [vmem:[#allocation5 + $0x808] sm:$0xff]
          %v3965 = vld [vmem:[#allocation5 + $0x810] sm:$0xff]
          %v3966 = vld [vmem:[#allocation5 + $0x818] sm:$0xff]
          %v3967 = vld [vmem:[#allocation5 + $0x820] sm:$0xff]
          %v3968 = vld [vmem:[#allocation5 + $0x828] sm:$0xff]
          %v3969 = vld [vmem:[#allocation5 + $0x830] sm:$0xff]
          %v3970 = vld [vmem:[#allocation5 + $0x838] sm:$0xff]
          %v3971 = vld [vmem:[#allocation5 + $0x840] sm:$0xff]
          %v3972 = vld [vmem:[#allocation5 + $0x848] sm:$0xff]
          %v3973 = vld [vmem:[#allocation5 + $0x850] sm:$0xff]
          %v3974 = vld [vmem:[#allocation5 + $0x858] sm:$0xff]
          %v3975 = vld [vmem:[#allocation5 + $0x860] sm:$0xff]
          %v3976 = vld [vmem:[#allocation5 + $0x868] sm:$0xff]
          %v3977 = vld [vmem:[#allocation5 + $0x870] sm:$0xff]
          %v3978 = vld [vmem:[#allocation5 + $0x878] sm:$0xff]
          %v3979 = vld [vmem:[#allocation5 + $0x880] sm:$0xff]
          %v3980 = vld [vmem:[#allocation5 + $0x888] sm:$0xff]
          %v3981 = vld [vmem:[#allocation5 + $0x890] sm:$0xff]
          %v3982 = vld [vmem:[#allocation5 + $0x898] sm:$0xff]
          %v3983 = vld [vmem:[#allocation5 + $0x8a0] sm:$0xff]
          %v3984 = vld [vmem:[#allocation5 + $0x8a8] sm:$0xff]
          %v3985 = vld [vmem:[#allocation5 + $0x8b0] sm:$0xff]
          %v3986 = vld [vmem:[#allocation5 + $0x8b8] sm:$0xff]
          %v3987 = vld [vmem:[#allocation5 + $0x8c0] sm:$0xff]
          %v3988 = vld [vmem:[#allocation5 + $0x8c8] sm:$0xff]
          %v3989 = vld [vmem:[#allocation5 + $0x8d0] sm:$0xff]
          %v3990 = vld [vmem:[#allocation5 + $0x8d8] sm:$0xff]
          %v3991 = vld [vmem:[#allocation5 + $0x8e0] sm:$0xff]
          %v3992 = vld [vmem:[#allocation5 + $0x8e8] sm:$0xff]
          %v3993 = vld [vmem:[#allocation5 + $0x8f0] sm:$0xff]
          %v3994 = vld [vmem:[#allocation5 + $0x8f8] sm:$0xff]
          %v3995 = vld [vmem:[#allocation5 + $0x900] sm:$0xff]
          %v3996 = vld [vmem:[#allocation5 + $0x908] sm:$0xff]
          %v3997 = vld [vmem:[#allocation5 + $0x910] sm:$0xff]
          %v3998 = vld [vmem:[#allocation5 + $0x918] sm:$0xff]
          %v3999 = vld [vmem:[#allocation5 + $0x920] sm:$0xff]
          %v4000 = vld [vmem:[#allocation5 + $0x928] sm:$0xff]
          %v4001 = vld [vmem:[#allocation5 + $0x930] sm:$0xff]
          %v4002 = vld [vmem:[#allocation5 + $0x938] sm:$0xff]
          %v4003 = vld [vmem:[#allocation5 + $0x940] sm:$0xff]
          %v4004 = vld [vmem:[#allocation5 + $0x948] sm:$0xff]
          %v4005 = vld [vmem:[#allocation5 + $0x950] sm:$0xff]
          %v4006 = vld [vmem:[#allocation5 + $0x958] sm:$0xff]
          %v4007 = vld [vmem:[#allocation5 + $0x960] sm:$0xff]
          %v4008 = vld [vmem:[#allocation5 + $0x968] sm:$0xff]
          %v4009 = vld [vmem:[#allocation5 + $0x970] sm:$0xff]
          %v4010 = vld [vmem:[#allocation5 + $0x978] sm:$0xff]
          %v4011 = vld [vmem:[#allocation5 + $0x980] sm:$0xff]
          %v4012 = vld [vmem:[#allocation5 + $0x988] sm:$0xff]
          %v4013 = vld [vmem:[#allocation5 + $0x990] sm:$0xff]
          %v4014 = vld [vmem:[#allocation5 + $0x998] sm:$0xff]
          %v4015 = vld [vmem:[#allocation5 + $0x9a0] sm:$0xff]
          %v4016 = vld [vmem:[#allocation5 + $0x9a8] sm:$0xff]
          %v4017 = vld [vmem:[#allocation5 + $0x9b0] sm:$0xff]
          %v4018 = vld [vmem:[#allocation5 + $0x9b8] sm:$0xff]
          %v4019 = vld [vmem:[#allocation5 + $0x9c0] sm:$0xff]
          %v4020 = vld [vmem:[#allocation5 + $0x9c8] sm:$0xff]
          %v4021 = vld [vmem:[#allocation5 + $0x9d0] sm:$0xff]
          %v4022 = vld [vmem:[#allocation5 + $0x9d8] sm:$0xff]
          %v4023 = vld [vmem:[#allocation5 + $0x9e0] sm:$0xff]
          %v4024 = vld [vmem:[#allocation5 + $0x9e8] sm:$0xff]
          %v4025 = vld [vmem:[#allocation5 + $0x9f0] sm:$0xff]
          %v4026 = vld [vmem:[#allocation5 + $0x9f8] sm:$0xff]
          %v4027 = vld [vmem:[#allocation5 + $0xa00] sm:$0xff]
          %v4028 = vld [vmem:[#allocation5 + $0xa08] sm:$0xff]
          %v4029 = vld [vmem:[#allocation5 + $0xa10] sm:$0xff]
          %v4030 = vld [vmem:[#allocation5 + $0xa18] sm:$0xff]
          %v4031 = vld [vmem:[#allocation5 + $0xa20] sm:$0xff]
          %v4032 = vld [vmem:[#allocation5 + $0xa28] sm:$0xff]
          %v4033 = vld [vmem:[#allocation5 + $0xa30] sm:$0xff]
          %v4034 = vld [vmem:[#allocation5 + $0xa38] sm:$0xff]
          %v4035 = vld [vmem:[#allocation5 + $0xa40] sm:$0xff]
          %v4036 = vld [vmem:[#allocation5 + $0xa48] sm:$0xff]
          %v4037 = vld [vmem:[#allocation5 + $0xa50] sm:$0xff]
          %v4038 = vld [vmem:[#allocation5 + $0xa58] sm:$0xff]
          %v4039 = vld [vmem:[#allocation5 + $0xa60] sm:$0xff]
          %v4040 = vld [vmem:[#allocation5 + $0xa68] sm:$0xff]
          %v4041 = vld [vmem:[#allocation5 + $0xa70] sm:$0xff]
          %v4042 = vld [vmem:[#allocation5 + $0xa78] sm:$0xff]
          %v4043 = vld [vmem:[#allocation5 + $0xa80] sm:$0xff]
          %v4044 = vld [vmem:[#allocation5 + $0xa88] sm:$0xff]
          %v4045 = vld [vmem:[#allocation5 + $0xa90] sm:$0xff]
          %v4046 = vld [vmem:[#allocation5 + $0xa98] sm:$0xff]
          %v4047 = vld [vmem:[#allocation5 + $0xaa0] sm:$0xff]
          %v4048 = vld [vmem:[#allocation5 + $0xaa8] sm:$0xff]
          %v4049 = vld [vmem:[#allocation5 + $0xab0] sm:$0xff]
          %v4050 = vld [vmem:[#allocation5 + $0xab8] sm:$0xff]
          %v4051 = vld [vmem:[#allocation5 + $0xac0] sm:$0xff]
          %v4052 = vld [vmem:[#allocation5 + $0xac8] sm:$0xff]
          %v4053 = vld [vmem:[#allocation5 + $0xad0] sm:$0xff]
          %v4054 = vld [vmem:[#allocation5 + $0xad8] sm:$0xff]
          %v4055 = vld [vmem:[#allocation5 + $0xae0] sm:$0xff]
          %v4056 = vld [vmem:[#allocation5 + $0xae8] sm:$0xff]
          %v4057 = vld [vmem:[#allocation5 + $0xaf0] sm:$0xff]
          %v4058 = vld [vmem:[#allocation5 + $0xaf8] sm:$0xff]
          %v4059 = vld [vmem:[#allocation5 + $0xb00] sm:$0xff]
          %v4060 = vld [vmem:[#allocation5 + $0xb08] sm:$0xff]
          %v4061 = vld [vmem:[#allocation5 + $0xb10] sm:$0xff]
          %v4062 = vld [vmem:[#allocation5 + $0xb18] sm:$0xff]
          %v4063 = vld [vmem:[#allocation5 + $0xb20] sm:$0xff]
          %v4064 = vld [vmem:[#allocation5 + $0xb28] sm:$0xff]
          %v4065 = vld [vmem:[#allocation5 + $0xb30] sm:$0xff]
          %v4066 = vld [vmem:[#allocation5 + $0xb38] sm:$0xff]
          %v4067 = vld [vmem:[#allocation5 + $0xb40] sm:$0xff]
          %v4068 = vld [vmem:[#allocation5 + $0xb48] sm:$0xff]
          %v4069 = vld [vmem:[#allocation5 + $0xb50] sm:$0xff]
          %v4070 = vld [vmem:[#allocation5 + $0xb58] sm:$0xff]
          %v4071 = vld [vmem:[#allocation5 + $0xb60] sm:$0xff]
          %v4072 = vld [vmem:[#allocation5 + $0xb68] sm:$0xff]
          %v4073 = vld [vmem:[#allocation5 + $0xb70] sm:$0xff]
          %v4074 = vld [vmem:[#allocation5 + $0xb78] sm:$0xff]
          %v4075 = vld [vmem:[#allocation5 + $0xb80] sm:$0xff]
          %v4076 = vld [vmem:[#allocation5 + $0xb88] sm:$0xff]
          %v4077 = vld [vmem:[#allocation5 + $0xb90] sm:$0xff]
          %v4078 = vld [vmem:[#allocation5 + $0xb98] sm:$0xff]
          %v4079 = vld [vmem:[#allocation5 + $0xba0] sm:$0xff]
          %v4080 = vld [vmem:[#allocation5 + $0xba8] sm:$0xff]
          %v4081 = vld [vmem:[#allocation5 + $0xbb0] sm:$0xff]
          %v4082 = vld [vmem:[#allocation5 + $0xbb8] sm:$0xff]
          %v4083 = vld [vmem:[#allocation5 + $0xbc0] sm:$0xff]
          %v4084 = vld [vmem:[#allocation5 + $0xbc8] sm:$0xff]
          %v4085 = vld [vmem:[#allocation5 + $0xbd0] sm:$0xff]
          %v4086 = vld [vmem:[#allocation5 + $0xbd8] sm:$0xff]
          %v4087 = vld [vmem:[#allocation5 + $0xbe0] sm:$0xff]
          %v4088 = vld [vmem:[#allocation5 + $0xbe8] sm:$0xff]
          %v4089 = vld [vmem:[#allocation5 + $0xbf0] sm:$0xff]
          %v4090 = vld [vmem:[#allocation5 + $0xbf8] sm:$0xff]
          %v4091 = vld [vmem:[#allocation5 + $0xc00] sm:$0xff]
          %v4092 = vld [vmem:[#allocation5 + $0xc08] sm:$0xff]
          %v4093 = vld [vmem:[#allocation5 + $0xc10] sm:$0xff]
          %v4094 = vld [vmem:[#allocation5 + $0xc18] sm:$0xff]
          %v4095 = vld [vmem:[#allocation5 + $0xc20] sm:$0xff]
          %v4096 = vld [vmem:[#allocation5 + $0xc28] sm:$0xff]
          %v4097 = vld [vmem:[#allocation5 + $0xc30] sm:$0xff]
          %v4098 = vld [vmem:[#allocation5 + $0xc38] sm:$0xff]
          %v4099 = vld [vmem:[#allocation5 + $0xc40] sm:$0xff]
          %v4100 = vld [vmem:[#allocation5 + $0xc48] sm:$0xff]
          %v4101 = vld [vmem:[#allocation5 + $0xc50] sm:$0xff]
          %v4102 = vld [vmem:[#allocation5 + $0xc58] sm:$0xff]
          %v4103 = vld [vmem:[#allocation5 + $0xc60] sm:$0xff]
          %v4104 = vld [vmem:[#allocation5 + $0xc68] sm:$0xff]
          %v4105 = vld [vmem:[#allocation5 + $0xc70] sm:$0xff]
          %v4106 = vld [vmem:[#allocation5 + $0xc78] sm:$0xff]
          %v4107 = vld [vmem:[#allocation5 + $0xc80] sm:$0xff]
          %v4108 = vld [vmem:[#allocation5 + $0xc88] sm:$0xff]
          %v4109 = vld [vmem:[#allocation5 + $0xc90] sm:$0xff]
          %v4110 = vld [vmem:[#allocation5 + $0xc98] sm:$0xff]
          %v4111 = vld [vmem:[#allocation5 + $0xca0] sm:$0xff]
          %v4112 = vld [vmem:[#allocation5 + $0xca8] sm:$0xff]
          %v4113 = vld [vmem:[#allocation5 + $0xcb0] sm:$0xff]
          %v4114 = vld [vmem:[#allocation5 + $0xcb8] sm:$0xff]
          %v4115 = vld [vmem:[#allocation5 + $0xcc0] sm:$0xff]
          %v4116 = vld [vmem:[#allocation5 + $0xcc8] sm:$0xff]
          %v4117 = vld [vmem:[#allocation5 + $0xcd0] sm:$0xff]
          %v4118 = vld [vmem:[#allocation5 + $0xcd8] sm:$0xff]
          %v4119 = vld [vmem:[#allocation5 + $0xce0] sm:$0xff]
          %v4120 = vld [vmem:[#allocation5 + $0xce8] sm:$0xff]
          %v4121 = vld [vmem:[#allocation5 + $0xcf0] sm:$0xff]
          %v4122 = vld [vmem:[#allocation5 + $0xcf8] sm:$0xff]
          %v4123 = vld [vmem:[#allocation5 + $0xd00] sm:$0xff]
          %v4124 = vld [vmem:[#allocation5 + $0xd08] sm:$0xff]
          %v4125 = vld [vmem:[#allocation5 + $0xd10] sm:$0xff]
          %v4126 = vld [vmem:[#allocation5 + $0xd18] sm:$0xff]
          %v4127 = vld [vmem:[#allocation5 + $0xd20] sm:$0xff]
          %v4128 = vld [vmem:[#allocation5 + $0xd28] sm:$0xff]
          %v4129 = vld [vmem:[#allocation5 + $0xd30] sm:$0xff]
          %v4130 = vld [vmem:[#allocation5 + $0xd38] sm:$0xff]
          %v4131 = vld [vmem:[#allocation5 + $0xd40] sm:$0xff]
          %v4132 = vld [vmem:[#allocation5 + $0xd48] sm:$0xff]
          %v4133 = vld [vmem:[#allocation5 + $0xd50] sm:$0xff]
          %v4134 = vld [vmem:[#allocation5 + $0xd58] sm:$0xff]
          %v4135 = vld [vmem:[#allocation5 + $0xd60] sm:$0xff]
          %v4136 = vld [vmem:[#allocation5 + $0xd68] sm:$0xff]
          %v4137 = vld [vmem:[#allocation5 + $0xd70] sm:$0xff]
          %v4138 = vld [vmem:[#allocation5 + $0xd78] sm:$0xff]
          %v4139 = vld [vmem:[#allocation5 + $0xd80] sm:$0xff]
          %v4140 = vld [vmem:[#allocation5 + $0xd88] sm:$0xff]
          %v4141 = vld [vmem:[#allocation5 + $0xd90] sm:$0xff]
          %v4142 = vld [vmem:[#allocation5 + $0xd98] sm:$0xff]
          %v4143 = vld [vmem:[#allocation5 + $0xda0] sm:$0xff]
          %v4144 = vld [vmem:[#allocation5 + $0xda8] sm:$0xff]
          %v4145 = vld [vmem:[#allocation5 + $0xdb0] sm:$0xff]
          %v4146 = vld [vmem:[#allocation5 + $0xdb8] sm:$0xff]
          %v4147 = vld [vmem:[#allocation5 + $0xdc0] sm:$0xff]
          %v4148 = vld [vmem:[#allocation5 + $0xdc8] sm:$0xff]
          %v4149 = vld [vmem:[#allocation5 + $0xdd0] sm:$0xff]
          %v4150 = vld [vmem:[#allocation5 + $0xdd8] sm:$0xff]
          %v4151 = vld [vmem:[#allocation5 + $0xde0] sm:$0xff]
          %v4152 = vld [vmem:[#allocation5 + $0xde8] sm:$0xff]
          %v4153 = vld [vmem:[#allocation5 + $0xdf0] sm:$0xff]
          %v4154 = vld [vmem:[#allocation5 + $0xdf8] sm:$0xff]
          %v4155 = vld [vmem:[#allocation5 + $0xe00] sm:$0xff]
          %v4156 = vld [vmem:[#allocation5 + $0xe08] sm:$0xff]
          %v4157 = vld [vmem:[#allocation5 + $0xe10] sm:$0xff]
          %v4158 = vld [vmem:[#allocation5 + $0xe18] sm:$0xff]
          %v4159 = vld [vmem:[#allocation5 + $0xe20] sm:$0xff]
          %v4160 = vld [vmem:[#allocation5 + $0xe28] sm:$0xff]
          %v4161 = vld [vmem:[#allocation5 + $0xe30] sm:$0xff]
          %v4162 = vld [vmem:[#allocation5 + $0xe38] sm:$0xff]
          %v4163 = vld [vmem:[#allocation5 + $0xe40] sm:$0xff]
          %v4164 = vld [vmem:[#allocation5 + $0xe48] sm:$0xff]
          %v4165 = vld [vmem:[#allocation5 + $0xe50] sm:$0xff]
          %v4166 = vld [vmem:[#allocation5 + $0xe58] sm:$0xff]
          %v4167 = vld [vmem:[#allocation5 + $0xe60] sm:$0xff]
          %v4168 = vld [vmem:[#allocation5 + $0xe68] sm:$0xff]
          %v4169 = vld [vmem:[#allocation5 + $0xe70] sm:$0xff]
          %v4170 = vld [vmem:[#allocation5 + $0xe78] sm:$0xff]
          %v4171 = vld [vmem:[#allocation5 + $0xe80] sm:$0xff]
          %v4172 = vld [vmem:[#allocation5 + $0xe88] sm:$0xff]
          %v4173 = vld [vmem:[#allocation5 + $0xe90] sm:$0xff]
          %v4174 = vld [vmem:[#allocation5 + $0xe98] sm:$0xff]
          %v4175 = vld [vmem:[#allocation5 + $0xea0] sm:$0xff]
          %v4176 = vld [vmem:[#allocation5 + $0xea8] sm:$0xff]
          %v4177 = vld [vmem:[#allocation5 + $0xeb0] sm:$0xff]
          %v4178 = vld [vmem:[#allocation5 + $0xeb8] sm:$0xff]
          %v4179 = vld [vmem:[#allocation5 + $0xec0] sm:$0xff]
          %v4180 = vld [vmem:[#allocation5 + $0xec8] sm:$0xff]
          %v4181 = vld [vmem:[#allocation5 + $0xed0] sm:$0xff]
          %v4182 = vld [vmem:[#allocation5 + $0xed8] sm:$0xff]
          %v4183 = vld [vmem:[#allocation5 + $0xee0] sm:$0xff]
          %v4184 = vld [vmem:[#allocation5 + $0xee8] sm:$0xff]
          %v4185 = vld [vmem:[#allocation5 + $0xef0] sm:$0xff]
          %v4186 = vld [vmem:[#allocation5 + $0xef8] sm:$0xff]
          %v4187 = vld [vmem:[#allocation5 + $0xf00] sm:$0xff]
          %v4188 = vld [vmem:[#allocation5 + $0xf08] sm:$0xff]
          %v4189 = vld [vmem:[#allocation5 + $0xf10] sm:$0xff]
          %v4190 = vld [vmem:[#allocation5 + $0xf18] sm:$0xff]
          %v4191 = vld [vmem:[#allocation5 + $0xf20] sm:$0xff]
          %v4192 = vld [vmem:[#allocation5 + $0xf28] sm:$0xff]
          %v4193 = vld [vmem:[#allocation5 + $0xf30] sm:$0xff]
          %v4194 = vld [vmem:[#allocation5 + $0xf38] sm:$0xff]
          %v4195 = vld [vmem:[#allocation5 + $0xf40] sm:$0xff]
          %v4196 = vld [vmem:[#allocation5 + $0xf48] sm:$0xff]
          %v4197 = vld [vmem:[#allocation5 + $0xf50] sm:$0xff]
          %v4198 = vld [vmem:[#allocation5 + $0xf58] sm:$0xff]
          %v4199 = vld [vmem:[#allocation5 + $0xf60] sm:$0xff]
          %v4200 = vld [vmem:[#allocation5 + $0xf68] sm:$0xff]
          %v4201 = vld [vmem:[#allocation5 + $0xf70] sm:$0xff]
          %v4202 = vld [vmem:[#allocation5 + $0xf78] sm:$0xff]
          %v4203 = vld [vmem:[#allocation5 + $0xf80] sm:$0xff]
          %v4204 = vld [vmem:[#allocation5 + $0xf88] sm:$0xff]
          %v4205 = vld [vmem:[#allocation5 + $0xf90] sm:$0xff]
          %v4206 = vld [vmem:[#allocation5 + $0xf98] sm:$0xff]
          %v4207 = vld [vmem:[#allocation5 + $0xfa0] sm:$0xff]
          %v4208 = vld [vmem:[#allocation5 + $0xfa8] sm:$0xff]
          %v4209 = vld [vmem:[#allocation5 + $0xfb0] sm:$0xff]
          %v4210 = vld [vmem:[#allocation5 + $0xfb8] sm:$0xff]
          %v4211 = vld [vmem:[#allocation5 + $0xfc0] sm:$0xff]
          %v4212 = vld [vmem:[#allocation5 + $0xfc8] sm:$0xff]
          %v4213 = vld [vmem:[#allocation5 + $0xfd0] sm:$0xff]
          %v4214 = vld [vmem:[#allocation5 + $0xfd8] sm:$0xff]
          %v4215 = vld [vmem:[#allocation5 + $0xfe0] sm:$0xff]
          %v4216 = vld [vmem:[#allocation5 + $0xfe8] sm:$0xff]
          %v4217 = vld [vmem:[#allocation5 + $0xff0] sm:$0xff]
          %v4218 = vld [vmem:[#allocation5 + $0xff8] sm:$0xff]
          %v4219 = vld [vmem:[%s8] sm:$0xff]
          %v4220 = vld [vmem:[%s8 + $0x8] sm:$0xff]
          %v4221 = vld [vmem:[%s8 + $0x10] sm:$0xff]
          %v4222 = vld [vmem:[%s8 + $0x18] sm:$0xff]
          %v4223 = vld [vmem:[%s8 + $0x20] sm:$0xff]
          %v4224 = vld [vmem:[%s8 + $0x28] sm:$0xff]
          %v4225 = vld [vmem:[%s8 + $0x30] sm:$0xff]
          %v4226 = vld [vmem:[%s8 + $0x38] sm:$0xff]
          %v4227 = vld [vmem:[%s8 + $0x40] sm:$0xff]
          %v4228 = vld [vmem:[%s8 + $0x48] sm:$0xff]
          %v4229 = vld [vmem:[%s8 + $0x50] sm:$0xff]
          %v4230 = vld [vmem:[%s8 + $0x58] sm:$0xff]
          %v4231 = vld [vmem:[%s8 + $0x60] sm:$0xff]
          %v4232 = vld [vmem:[%s8 + $0x68] sm:$0xff]
          %v4233 = vld [vmem:[%s8 + $0x70] sm:$0xff]
          %v4234 = vld [vmem:[%s8 + $0x78] sm:$0xff]
          %v4235 = vld [vmem:[%s8 + $0x80] sm:$0xff]
          %v4236 = vld [vmem:[%s8 + $0x88] sm:$0xff]
          %v4237 = vld [vmem:[%s8 + $0x90] sm:$0xff]
          %v4238 = vld [vmem:[%s8 + $0x98] sm:$0xff]
          %v4239 = vld [vmem:[%s8 + $0xa0] sm:$0xff]
          %v4240 = vld [vmem:[%s8 + $0xa8] sm:$0xff]
          %v4241 = vld [vmem:[%s8 + $0xb0] sm:$0xff]
          %v4242 = vld [vmem:[%s8 + $0xb8] sm:$0xff]
          %v4243 = vld [vmem:[%s8 + $0xc0] sm:$0xff]
          %v4244 = vld [vmem:[%s8 + $0xc8] sm:$0xff]
          %v4245 = vld [vmem:[%s8 + $0xd0] sm:$0xff]
          %v4246 = vld [vmem:[%s8 + $0xd8] sm:$0xff]
          %v4247 = vld [vmem:[%s8 + $0xe0] sm:$0xff]
          %v4248 = vld [vmem:[%s8 + $0xe8] sm:$0xff]
          %v4249 = vld [vmem:[%s8 + $0xf0] sm:$0xff]
          %v4250 = vld [vmem:[%s8 + $0xf8] sm:$0xff]
          %v4251 = vld [vmem:[%s8 + $0x100] sm:$0xff]
          %v4252 = vld [vmem:[%s8 + $0x108] sm:$0xff]
          %v4253 = vld [vmem:[%s8 + $0x110] sm:$0xff]
          %v4254 = vld [vmem:[%s8 + $0x118] sm:$0xff]
          %v4255 = vld [vmem:[%s8 + $0x120] sm:$0xff]
          %v4256 = vld [vmem:[%s8 + $0x128] sm:$0xff]
          %v4257 = vld [vmem:[%s8 + $0x130] sm:$0xff]
          %v4258 = vld [vmem:[%s8 + $0x138] sm:$0xff]
          %v4259 = vld [vmem:[%s8 + $0x140] sm:$0xff]
          %v4260 = vld [vmem:[%s8 + $0x148] sm:$0xff]
          %v4261 = vld [vmem:[%s8 + $0x150] sm:$0xff]
          %v4262 = vld [vmem:[%s8 + $0x158] sm:$0xff]
          %v4263 = vld [vmem:[%s8 + $0x160] sm:$0xff]
          %v4264 = vld [vmem:[%s8 + $0x168] sm:$0xff]
          %v4265 = vld [vmem:[%s8 + $0x170] sm:$0xff]
          %v4266 = vld [vmem:[%s8 + $0x178] sm:$0xff]
          %v4267 = vld [vmem:[%s8 + $0x180] sm:$0xff]
          %v4268 = vld [vmem:[%s8 + $0x188] sm:$0xff]
          %v4269 = vld [vmem:[%s8 + $0x190] sm:$0xff]
          %v4270 = vld [vmem:[%s8 + $0x198] sm:$0xff]
          %v4271 = vld [vmem:[%s8 + $0x1a0] sm:$0xff]
          %v4272 = vld [vmem:[%s8 + $0x1a8] sm:$0xff]
          %v4273 = vld [vmem:[%s8 + $0x1b0] sm:$0xff]
          %v4274 = vld [vmem:[%s8 + $0x1b8] sm:$0xff]
          %v4275 = vld [vmem:[%s8 + $0x1c0] sm:$0xff]
          %v4276 = vld [vmem:[%s8 + $0x1c8] sm:$0xff]
          %v4277 = vld [vmem:[%s8 + $0x1d0] sm:$0xff]
          %v4278 = vld [vmem:[%s8 + $0x1d8] sm:$0xff]
          %v4279 = vld [vmem:[%s8 + $0x1e0] sm:$0xff]
          %v4280 = vld [vmem:[%s8 + $0x1e8] sm:$0xff]
          %v4281 = vld [vmem:[%s8 + $0x1f0] sm:$0xff]
          %v4282 = vld [vmem:[%s8 + $0x1f8] sm:$0xff]
          %4284 = vset.pattern.permute.xlu0 0
          %4285 = vperm.xlu0 %4284, %v4219
          %v4286 = vpop.permute.xlu0 %4285
          %4289 = vset.pattern.permute.xlu0 0
          %4290 = vperm.xlu0 %4289, %v4220
          %v4291 = vpop.permute.xlu0 %4290
          %4294 = vset.pattern.permute.xlu0 0
          %4295 = vperm.xlu0 %4294, %v4221
          %v4296 = vpop.permute.xlu0 %4295
          %4299 = vset.pattern.permute.xlu0 0
          %4300 = vperm.xlu0 %4299, %v4222
          %v4301 = vpop.permute.xlu0 %4300
          %4304 = vset.pattern.permute.xlu0 0
          %4305 = vperm.xlu0 %4304, %v4223
          %v4306 = vpop.permute.xlu0 %4305
          %4309 = vset.pattern.permute.xlu0 0
          %4310 = vperm.xlu0 %4309, %v4224
          %v4311 = vpop.permute.xlu0 %4310
          %4314 = vset.pattern.permute.xlu0 0
          %4315 = vperm.xlu0 %4314, %v4225
          %v4316 = vpop.permute.xlu0 %4315
          %4319 = vset.pattern.permute.xlu0 0
          %4320 = vperm.xlu0 %4319, %v4226
          %v4321 = vpop.permute.xlu0 %4320
          %4324 = vset.pattern.permute.xlu0 0
          %4325 = vperm.xlu0 %4324, %v4227
          %v4326 = vpop.permute.xlu0 %4325
          %4329 = vset.pattern.permute.xlu0 0
          %4330 = vperm.xlu0 %4329, %v4228
          %v4331 = vpop.permute.xlu0 %4330
          %4334 = vset.pattern.permute.xlu0 0
          %4335 = vperm.xlu0 %4334, %v4229
          %v4336 = vpop.permute.xlu0 %4335
          %4339 = vset.pattern.permute.xlu0 0
          %4340 = vperm.xlu0 %4339, %v4230
          %v4341 = vpop.permute.xlu0 %4340
          %4344 = vset.pattern.permute.xlu0 0
          %4345 = vperm.xlu0 %4344, %v4231
          %v4346 = vpop.permute.xlu0 %4345
          %4349 = vset.pattern.permute.xlu0 0
          %4350 = vperm.xlu0 %4349, %v4232
          %v4351 = vpop.permute.xlu0 %4350
          %4354 = vset.pattern.permute.xlu0 0
          %4355 = vperm.xlu0 %4354, %v4233
          %v4356 = vpop.permute.xlu0 %4355
          %4359 = vset.pattern.permute.xlu0 0
          %4360 = vperm.xlu0 %4359, %v4234
          %v4361 = vpop.permute.xlu0 %4360
          %4364 = vset.pattern.permute.xlu0 0
          %4365 = vperm.xlu0 %4364, %v4235
          %v4366 = vpop.permute.xlu0 %4365
          %4369 = vset.pattern.permute.xlu0 0
          %4370 = vperm.xlu0 %4369, %v4236
          %v4371 = vpop.permute.xlu0 %4370
          %4374 = vset.pattern.permute.xlu0 0
          %4375 = vperm.xlu0 %4374, %v4237
          %v4376 = vpop.permute.xlu0 %4375
          %4379 = vset.pattern.permute.xlu0 0
          %4380 = vperm.xlu0 %4379, %v4238
          %v4381 = vpop.permute.xlu0 %4380
          %4384 = vset.pattern.permute.xlu0 0
          %4385 = vperm.xlu0 %4384, %v4239
          %v4386 = vpop.permute.xlu0 %4385
          %4389 = vset.pattern.permute.xlu0 0
          %4390 = vperm.xlu0 %4389, %v4240
          %v4391 = vpop.permute.xlu0 %4390
          %4394 = vset.pattern.permute.xlu0 0
          %4395 = vperm.xlu0 %4394, %v4241
          %v4396 = vpop.permute.xlu0 %4395
          %4399 = vset.pattern.permute.xlu0 0
          %4400 = vperm.xlu0 %4399, %v4242
          %v4401 = vpop.permute.xlu0 %4400
          %4404 = vset.pattern.permute.xlu0 0
          %4405 = vperm.xlu0 %4404, %v4243
          %v4406 = vpop.permute.xlu0 %4405
          %4409 = vset.pattern.permute.xlu0 0
          %4410 = vperm.xlu0 %4409, %v4244
          %v4411 = vpop.permute.xlu0 %4410
          %4414 = vset.pattern.permute.xlu0 0
          %4415 = vperm.xlu0 %4414, %v4245
          %v4416 = vpop.permute.xlu0 %4415
          %4419 = vset.pattern.permute.xlu0 0
          %4420 = vperm.xlu0 %4419, %v4246
          %v4421 = vpop.permute.xlu0 %4420
          %4424 = vset.pattern.permute.xlu0 0
          %4425 = vperm.xlu0 %4424, %v4247
          %v4426 = vpop.permute.xlu0 %4425
          %4429 = vset.pattern.permute.xlu0 0
          %4430 = vperm.xlu0 %4429, %v4248
          %v4431 = vpop.permute.xlu0 %4430
          %4434 = vset.pattern.permute.xlu0 0
          %4435 = vperm.xlu0 %4434, %v4249
          %v4436 = vpop.permute.xlu0 %4435
          %4439 = vset.pattern.permute.xlu0 0
          %4440 = vperm.xlu0 %4439, %v4250
          %v4441 = vpop.permute.xlu0 %4440
          %4444 = vset.pattern.permute.xlu0 0
          %4445 = vperm.xlu0 %4444, %v4251
          %v4446 = vpop.permute.xlu0 %4445
          %4449 = vset.pattern.permute.xlu0 0
          %4450 = vperm.xlu0 %4449, %v4252
          %v4451 = vpop.permute.xlu0 %4450
          %4454 = vset.pattern.permute.xlu0 0
          %4455 = vperm.xlu0 %4454, %v4253
          %v4456 = vpop.permute.xlu0 %4455
          %4459 = vset.pattern.permute.xlu0 0
          %4460 = vperm.xlu0 %4459, %v4254
          %v4461 = vpop.permute.xlu0 %4460
          %4464 = vset.pattern.permute.xlu0 0
          %4465 = vperm.xlu0 %4464, %v4255
          %v4466 = vpop.permute.xlu0 %4465
          %4469 = vset.pattern.permute.xlu0 0
          %4470 = vperm.xlu0 %4469, %v4256
          %v4471 = vpop.permute.xlu0 %4470
          %4474 = vset.pattern.permute.xlu0 0
          %4475 = vperm.xlu0 %4474, %v4257
          %v4476 = vpop.permute.xlu0 %4475
          %4479 = vset.pattern.permute.xlu0 0
          %4480 = vperm.xlu0 %4479, %v4258
          %v4481 = vpop.permute.xlu0 %4480
          %4484 = vset.pattern.permute.xlu0 0
          %4485 = vperm.xlu0 %4484, %v4259
          %v4486 = vpop.permute.xlu0 %4485
          %4489 = vset.pattern.permute.xlu0 0
          %4490 = vperm.xlu0 %4489, %v4260
          %v4491 = vpop.permute.xlu0 %4490
          %4494 = vset.pattern.permute.xlu0 0
          %4495 = vperm.xlu0 %4494, %v4261
          %v4496 = vpop.permute.xlu0 %4495
          %4499 = vset.pattern.permute.xlu0 0
          %4500 = vperm.xlu0 %4499, %v4262
          %v4501 = vpop.permute.xlu0 %4500
          %4504 = vset.pattern.permute.xlu0 0
          %4505 = vperm.xlu0 %4504, %v4263
          %v4506 = vpop.permute.xlu0 %4505
          %4509 = vset.pattern.permute.xlu0 0
          %4510 = vperm.xlu0 %4509, %v4264
          %v4511 = vpop.permute.xlu0 %4510
          %4514 = vset.pattern.permute.xlu0 0
          %4515 = vperm.xlu0 %4514, %v4265
          %v4516 = vpop.permute.xlu0 %4515
          %4519 = vset.pattern.permute.xlu0 0
          %4520 = vperm.xlu0 %4519, %v4266
          %v4521 = vpop.permute.xlu0 %4520
          %4524 = vset.pattern.permute.xlu0 0
          %4525 = vperm.xlu0 %4524, %v4267
          %v4526 = vpop.permute.xlu0 %4525
          %4529 = vset.pattern.permute.xlu0 0
          %4530 = vperm.xlu0 %4529, %v4268
          %v4531 = vpop.permute.xlu0 %4530
          %4534 = vset.pattern.permute.xlu0 0
          %4535 = vperm.xlu0 %4534, %v4269
          %v4536 = vpop.permute.xlu0 %4535
          %4539 = vset.pattern.permute.xlu0 0
          %4540 = vperm.xlu0 %4539, %v4270
          %v4541 = vpop.permute.xlu0 %4540
          %4544 = vset.pattern.permute.xlu0 0
          %4545 = vperm.xlu0 %4544, %v4271
          %v4546 = vpop.permute.xlu0 %4545
          %4549 = vset.pattern.permute.xlu0 0
          %4550 = vperm.xlu0 %4549, %v4272
          %v4551 = vpop.permute.xlu0 %4550
          %4554 = vset.pattern.permute.xlu0 0
          %4555 = vperm.xlu0 %4554, %v4273
          %v4556 = vpop.permute.xlu0 %4555
          %4559 = vset.pattern.permute.xlu0 0
          %4560 = vperm.xlu0 %4559, %v4274
          %v4561 = vpop.permute.xlu0 %4560
          %4564 = vset.pattern.permute.xlu0 0
          %4565 = vperm.xlu0 %4564, %v4275
          %v4566 = vpop.permute.xlu0 %4565
          %4569 = vset.pattern.permute.xlu0 0
          %4570 = vperm.xlu0 %4569, %v4276
          %v4571 = vpop.permute.xlu0 %4570
          %4574 = vset.pattern.permute.xlu0 0
          %4575 = vperm.xlu0 %4574, %v4277
          %v4576 = vpop.permute.xlu0 %4575
          %4579 = vset.pattern.permute.xlu0 0
          %4580 = vperm.xlu0 %4579, %v4278
          %v4581 = vpop.permute.xlu0 %4580
          %4584 = vset.pattern.permute.xlu0 0
          %4585 = vperm.xlu0 %4584, %v4279
          %v4586 = vpop.permute.xlu0 %4585
          %4589 = vset.pattern.permute.xlu0 0
          %4590 = vperm.xlu0 %4589, %v4280
          %v4591 = vpop.permute.xlu0 %4590
          %4594 = vset.pattern.permute.xlu0 0
          %4595 = vperm.xlu0 %4594, %v4281
          %v4596 = vpop.permute.xlu0 %4595
          %4599 = vset.pattern.permute.xlu0 0
          %4600 = vperm.xlu0 %4599, %v4282
          %v4601 = vpop.permute.xlu0 %4600
          %4603 = vmatprep.subr.mxu0 0.0
          %4604 = vmatpush1.msra.mxu0 %v3579
          %4605 = vmatprep.subr.mxu0 0.0
          %4606 = vmatpush1.msra.mxu0 %v3580
          %4607 = vmatprep.subr.mxu0 0.0
          %4608 = vmatpush1.msra.mxu0 %v3581
          %4609 = vmatprep.subr.mxu0 0.0
          %4610 = vmatpush1.msra.mxu0 %v3582
          %4611 = vmatprep.subr.mxu0 0.0
          %4612 = vmatpush1.msra.mxu0 %v3583
          %4613 = vmatprep.subr.mxu0 0.0
          %4614 = vmatpush1.msra.mxu0 %v3584
          %4615 = vmatprep.subr.mxu0 0.0
          %4616 = vmatpush1.msra.mxu0 %v3585
          %4617 = vmatprep.subr.mxu0 0.0
          %4618 = vmatpush1.msra.mxu0 %v3586
          %4619 = vmatprep.subr.mxu0 0.0
          %4620 = vmatpush1.msra.mxu0 %v3587
          %4621 = vmatprep.subr.mxu0 0.0
          %4622 = vmatpush1.msra.mxu0 %v3588
          %4623 = vmatprep.subr.mxu0 0.0
          %4624 = vmatpush1.msra.mxu0 %v3589
          %4625 = vmatprep.subr.mxu0 0.0
          %4626 = vmatpush1.msra.mxu0 %v3590
          %4627 = vmatprep.subr.mxu0 0.0
          %4628 = vmatpush1.msra.mxu0 %v3591
          %4629 = vmatprep.subr.mxu0 0.0
          %4630 = vmatpush1.msra.mxu0 %v3592
          %4631 = vmatprep.subr.mxu0 0.0
          %4632 = vmatpush1.msra.mxu0 %v3593
          %4633 = vmatprep.subr.mxu0 0.0
          %4634 = vmatpush1.msra.mxu0 %v3594
          %4635 = vmatprep.subr.mxu0 0.0
          %4636 = vmatpush1.msra.mxu0 %v3595
          %4637 = vmatprep.subr.mxu0 0.0
          %4638 = vmatpush1.msra.mxu0 %v3596
          %4639 = vmatprep.subr.mxu0 0.0
          %4640 = vmatpush1.msra.mxu0 %v3597
          %4641 = vmatprep.subr.mxu0 0.0
          %4642 = vmatpush1.msra.mxu0 %v3598
          %4643 = vmatprep.subr.mxu0 0.0
          %4644 = vmatpush1.msra.mxu0 %v3599
          %4645 = vmatprep.subr.mxu0 0.0
          %4646 = vmatpush1.msra.mxu0 %v3600
          %4647 = vmatprep.subr.mxu0 0.0
          %4648 = vmatpush1.msra.mxu0 %v3601
          %4649 = vmatprep.subr.mxu0 0.0
          %4650 = vmatpush1.msra.mxu0 %v3602
          %4651 = vmatprep.subr.mxu0 0.0
          %4652 = vmatpush1.msra.mxu0 %v3603
          %4653 = vmatprep.subr.mxu0 0.0
          %4654 = vmatpush1.msra.mxu0 %v3604
          %4655 = vmatprep.subr.mxu0 0.0
          %4656 = vmatpush1.msra.mxu0 %v3605
          %4657 = vmatprep.subr.mxu0 0.0
          %4658 = vmatpush1.msra.mxu0 %v3606
          %4659 = vmatprep.subr.mxu0 0.0
          %4660 = vmatpush1.msra.mxu0 %v3607
          %4661 = vmatprep.subr.mxu0 0.0
          %4662 = vmatpush1.msra.mxu0 %v3608
          %4663 = vmatprep.subr.mxu0 0.0
          %4664 = vmatpush1.msra.mxu0 %v3609
          %4665 = vmatprep.subr.mxu0 0.0
          %4666 = vmatpush1.msra.mxu0 %v3610
          %4667 = vmatprep.mubr.f32.mxu0 %v3708
          %4668 = vmatmul.mubr.f32.gmra.mrb[0].mxu0 %v3707
          %v4669 = vpop.f32.mrb[0].mxu0
          %v4670 = vadd.f32 %v4286, %v4669
          %v4671 = vpop.f32.mrb[0].mxu0
          %4672 = vmatprep.mubr.f32.mxu0 %v3716
          %4673 = vmatmul.mubr.f32.gmra.mrb[0].mxu0 %v3715
          %v4674 = vpop.f32.mrb[0].mxu0
          %v4675 = vadd.f32 %v4291, %v4674
          %v4676 = vpop.f32.mrb[0].mxu0
          %4677 = vmatprep.mubr.f32.mxu0 %v3724
          %4678 = vmatmul.mubr.f32.gmra.mrb[0].mxu0 %v3723
          %v4679 = vpop.f32.mrb[0].mxu0
          %v4680 = vadd.f32 %v4296, %v4679
          %v4681 = vpop.f32.mrb[0].mxu0
          %4682 = vmatprep.mubr.f32.mxu0 %v3732
          %4683 = vmatmul.mubr.f32.gmra.mrb[0].mxu0 %v3731
          %v4684 = vpop.f32.mrb[0].mxu0
          %v4685 = vadd.f32 %v4301, %v4684
          %v4686 = vpop.f32.mrb[0].mxu0
          %4687 = vmatprep.mubr.f32.mxu0 %v3740
          %4688 = vmatmul.mubr.f32.gmra.mrb[0].mxu0 %v3739
          %v4689 = vpop.f32.mrb[0].mxu0
          %v4690 = vadd.f32 %v4306, %v4689
          %v4691 = vpop.f32.mrb[0].mxu0
          %4692 = vmatprep.mubr.f32.mxu0 %v3748
          %4693 = vmatmul.mubr.f32.gmra.mrb[0].mxu0 %v3747
          %v4694 = vpop.f32.mrb[0].mxu0
          %v4695 = vadd.f32 %v4311, %v4694
          %v4696 = vpop.f32.mrb[0].mxu0
          %4697 = vmatprep.mubr.f32.mxu0 %v3756
          %4698 = vmatmul.mubr.f32.gmra.mrb[0].mxu0 %v3755
          %v4699 = vpop.f32.mrb[0].mxu0
          %v4700 = vadd.f32 %v4316, %v4699
          %v4701 = vpop.f32.mrb[0].mxu0
          %4702 = vmatprep.mubr.f32.mxu0 %v3764
          %4703 = vmatmul.mubr.f32.gmra.mrb[0].mxu0 %v3763
          %v4704 = vpop.f32.mrb[0].mxu0
          %v4705 = vadd.f32 %v4321, %v4704
          %v4706 = vpop.f32.mrb[0].mxu0
          %4707 = vmatprep.mubr.f32.mxu0 %v3772
          %4708 = vmatmul.mubr.f32.gmra.mrb[0].mxu0 %v3771
          %v4709 = vpop.f32.mrb[0].mxu0
          %v4710 = vadd.f32 %v4326, %v4709
          %v4711 = vpop.f32.mrb[0].mxu0
          %4712 = vmatprep.mubr.f32.mxu0 %v3780
          %4713 = vmatmul.mubr.f32.gmra.mrb[0].mxu0 %v3779
          %v4714 = vpop.f32.mrb[0].mxu0
          %v4715 = vadd.f32 %v4331, %v4714
          %v4716 = vpop.f32.mrb[0].mxu0
          %4717 = vmatprep.mubr.f32.mxu0 %v3788
          %4718 = vmatmul.mubr.f32.gmra.mrb[0].mxu0 %v3787
          %v4719 = vpop.f32.mrb[0].mxu0
          %v4720 = vadd.f32 %v4336, %v4719
          %v4721 = vpop.f32.mrb[0].mxu0
          %4722 = vmatprep.mubr.f32.mxu0 %v3796
          %4723 = vmatmul.mubr.f32.gmra.mrb[0].mxu0 %v3795
          %v4724 = vpop.f32.mrb[0].mxu0
          %v4725 = vadd.f32 %v4341, %v4724
          %v4726 = vpop.f32.mrb[0].mxu0
          %4727 = vmatprep.mubr.f32.mxu0 %v3804
          %4728 = vmatmul.mubr.f32.gmra.mrb[0].mxu0 %v3803
          %v4729 = vpop.f32.mrb[0].mxu0
          %v4730 = vadd.f32 %v4346, %v4729
          %v4731 = vpop.f32.mrb[0].mxu0
          %4732 = vmatprep.mubr.f32.mxu0 %v3812
          %4733 = vmatmul.mubr.f32.gmra.mrb[0].mxu0 %v3811
          %v4734 = vpop.f32.mrb[0].mxu0
          %v4735 = vadd.f32 %v4351, %v4734
          %v4736 = vpop.f32.mrb[0].mxu0
          %4737 = vmatprep.mubr.f32.mxu0 %v3820
          %4738 = vmatmul.mubr.f32.gmra.mrb[0].mxu0 %v3819
          %v4739 = vpop.f32.mrb[0].mxu0
          %v4740 = vadd.f32 %v4356, %v4739
          %v4741 = vpop.f32.mrb[0].mxu0
          %4742 = vmatprep.mubr.f32.mxu0 %v3828
          %4743 = vmatmul.mubr.f32.gmra.mrb[0].mxu0 %v3827
          %v4744 = vpop.f32.mrb[0].mxu0
          %v4745 = vadd.f32 %v4361, %v4744
          %v4746 = vpop.f32.mrb[0].mxu0
          %4747 = vmatprep.mubr.f32.mxu0 %v3836
          %4748 = vmatmul.mubr.f32.gmra.mrb[0].mxu0 %v3835
          %v4749 = vpop.f32.mrb[0].mxu0
          %v4750 = vadd.f32 %v4366, %v4749
          %v4751 = vpop.f32.mrb[0].mxu0
          %4752 = vmatprep.mubr.f32.mxu0 %v3844
          %4753 = vmatmul.mubr.f32.gmra.mrb[0].mxu0 %v3843
          %v4754 = vpop.f32.mrb[0].mxu0
          %v4755 = vadd.f32 %v4371, %v4754
          %v4756 = vpop.f32.mrb[0].mxu0
          %4757 = vmatprep.mubr.f32.mxu0 %v3852
          %4758 = vmatmul.mubr.f32.gmra.mrb[0].mxu0 %v3851
          %v4759 = vpop.f32.mrb[0].mxu0
          %v4760 = vadd.f32 %v4376, %v4759
          %v4761 = vpop.f32.mrb[0].mxu0
          %4762 = vmatprep.mubr.f32.mxu0 %v3860
          %4763 = vmatmul.mubr.f32.gmra.mrb[0].mxu0 %v3859
          %v4764 = vpop.f32.mrb[0].mxu0
          %v4765 = vadd.f32 %v4381, %v4764
          %v4766 = vpop.f32.mrb[0].mxu0
          %4767 = vmatprep.mubr.f32.mxu0 %v3868
          %4768 = vmatmul.mubr.f32.gmra.mrb[0].mxu0 %v3867
          %v4769 = vpop.f32.mrb[0].mxu0
          %v4770 = vadd.f32 %v4386, %v4769
          %v4771 = vpop.f32.mrb[0].mxu0
          %4772 = vmatprep.mubr.f32.mxu0 %v3876
          %4773 = vmatmul.mubr.f32.gmra.mrb[0].mxu0 %v3875
          %v4774 = vpop.f32.mrb[0].mxu0
          %v4775 = vadd.f32 %v4391, %v4774
          %v4776 = vpop.f32.mrb[0].mxu0
          %4777 = vmatprep.mubr.f32.mxu0 %v3884
          %4778 = vmatmul.mubr.f32.gmra.mrb[0].mxu0 %v3883
          %v4779 = vpop.f32.mrb[0].mxu0
          %v4780 = vadd.f32 %v4396, %v4779
          %v4781 = vpop.f32.mrb[0].mxu0
          %4782 = vmatprep.mubr.f32.mxu0 %v3892
          %4783 = vmatmul.mubr.f32.gmra.mrb[0].mxu0 %v3891
          %v4784 = vpop.f32.mrb[0].mxu0
          %v4785 = vadd.f32 %v4401, %v4784
          %v4786 = vpop.f32.mrb[0].mxu0
          %4787 = vmatprep.mubr.f32.mxu0 %v3900
          %4788 = vmatmul.mubr.f32.gmra.mrb[0].mxu0 %v3899
          %v4789 = vpop.f32.mrb[0].mxu0
          %v4790 = vadd.f32 %v4406, %v4789
          %v4791 = vpop.f32.mrb[0].mxu0
          %4792 = vmatprep.mubr.f32.mxu0 %v3908
          %4793 = vmatmul.mubr.f32.gmra.mrb[0].mxu0 %v3907
          %v4794 = vpop.f32.mrb[0].mxu0
          %v4795 = vadd.f32 %v4411, %v4794
          %v4796 = vpop.f32.mrb[0].mxu0
          %4797 = vmatprep.mubr.f32.mxu0 %v3916
          %4798 = vmatmul.mubr.f32.gmra.mrb[0].mxu0 %v3915
          %v4799 = vpop.f32.mrb[0].mxu0
          %v4800 = vadd.f32 %v4416, %v4799
          %v4801 = vpop.f32.mrb[0].mxu0
          %4802 = vmatprep.mubr.f32.mxu0 %v3924
          %4803 = vmatmul.mubr.f32.gmra.mrb[0].mxu0 %v3923
          %v4804 = vpop.f32.mrb[0].mxu0
          %v4805 = vadd.f32 %v4421, %v4804
          %v4806 = vpop.f32.mrb[0].mxu0
          %4807 = vmatprep.mubr.f32.mxu0 %v3932
          %4808 = vmatmul.mubr.f32.gmra.mrb[0].mxu0 %v3931
          %v4809 = vpop.f32.mrb[0].mxu0
          %v4810 = vadd.f32 %v4426, %v4809
          %v4811 = vpop.f32.mrb[0].mxu0
          %4812 = vmatprep.mubr.f32.mxu0 %v3940
          %4813 = vmatmul.mubr.f32.gmra.mrb[0].mxu0 %v3939
          %v4814 = vpop.f32.mrb[0].mxu0
          %v4815 = vadd.f32 %v4431, %v4814
          %v4816 = vpop.f32.mrb[0].mxu0
          %4817 = vmatprep.mubr.f32.mxu0 %v3948
          %4818 = vmatmul.mubr.f32.gmra.mrb[0].mxu0 %v3947
          %v4819 = vpop.f32.mrb[0].mxu0
          %v4820 = vadd.f32 %v4436, %v4819
          %v4821 = vpop.f32.mrb[0].mxu0
          %4822 = vmatprep.mubr.f32.mxu0 %v3956
          %4823 = vmatmul.mubr.f32.gmra.mrb[0].mxu0 %v3955
          %v4824 = vpop.f32.mrb[0].mxu0
          %v4825 = vadd.f32 %v4441, %v4824
          %v4826 = vpop.f32.mrb[0].mxu0
          %4827 = vmatprep.mubr.f32.mxu0 %v3964
          %4828 = vmatmul.mubr.f32.gmra.mrb[0].mxu0 %v3963
          %v4829 = vpop.f32.mrb[0].mxu0
          %v4830 = vadd.f32 %v4446, %v4829
          %v4831 = vpop.f32.mrb[0].mxu0
          %4832 = vmatprep.mubr.f32.mxu0 %v3972
          %4833 = vmatmul.mubr.f32.gmra.mrb[0].mxu0 %v3971
          %v4834 = vpop.f32.mrb[0].mxu0
          %v4835 = vadd.f32 %v4451, %v4834
          %v4836 = vpop.f32.mrb[0].mxu0
          %4837 = vmatprep.mubr.f32.mxu0 %v3980
          %4838 = vmatmul.mubr.f32.gmra.mrb[0].mxu0 %v3979
          %v4839 = vpop.f32.mrb[0].mxu0
          %v4840 = vadd.f32 %v4456, %v4839
          %v4841 = vpop.f32.mrb[0].mxu0
          %4842 = vmatprep.mubr.f32.mxu0 %v3988
          %4843 = vmatmul.mubr.f32.gmra.mrb[0].mxu0 %v3987
          %v4844 = vpop.f32.mrb[0].mxu0
          %v4845 = vadd.f32 %v4461, %v4844
          %v4846 = vpop.f32.mrb[0].mxu0
          %4847 = vmatprep.mubr.f32.mxu0 %v3996
          %4848 = vmatmul.mubr.f32.gmra.mrb[0].mxu0 %v3995
          %v4849 = vpop.f32.mrb[0].mxu0
          %v4850 = vadd.f32 %v4466, %v4849
          %v4851 = vpop.f32.mrb[0].mxu0
          %4852 = vmatprep.mubr.f32.mxu0 %v4004
          %4853 = vmatmul.mubr.f32.gmra.mrb[0].mxu0 %v4003
          %v4854 = vpop.f32.mrb[0].mxu0
          %v4855 = vadd.f32 %v4471, %v4854
          %v4856 = vpop.f32.mrb[0].mxu0
          %4857 = vmatprep.mubr.f32.mxu0 %v4012
          %4858 = vmatmul.mubr.f32.gmra.mrb[0].mxu0 %v4011
          %v4859 = vpop.f32.mrb[0].mxu0
          %v4860 = vadd.f32 %v4476, %v4859
          %v4861 = vpop.f32.mrb[0].mxu0
          %4862 = vmatprep.mubr.f32.mxu0 %v4020
          %4863 = vmatmul.mubr.f32.gmra.mrb[0].mxu0 %v4019
          %v4864 = vpop.f32.mrb[0].mxu0
          %v4865 = vadd.f32 %v4481, %v4864
          %v4866 = vpop.f32.mrb[0].mxu0
          %4867 = vmatprep.mubr.f32.mxu0 %v4028
          %4868 = vmatmul.mubr.f32.gmra.mrb[0].mxu0 %v4027
          %v4869 = vpop.f32.mrb[0].mxu0
          %v4870 = vadd.f32 %v4486, %v4869
          %v4871 = vpop.f32.mrb[0].mxu0
          %4872 = vmatprep.mubr.f32.mxu0 %v4036
          %4873 = vmatmul.mubr.f32.gmra.mrb[0].mxu0 %v4035
          %v4874 = vpop.f32.mrb[0].mxu0
          %v4875 = vadd.f32 %v4491, %v4874
          %v4876 = vpop.f32.mrb[0].mxu0
          %4877 = vmatprep.mubr.f32.mxu0 %v4044
          %4878 = vmatmul.mubr.f32.gmra.mrb[0].mxu0 %v4043
          %v4879 = vpop.f32.mrb[0].mxu0
          %v4880 = vadd.f32 %v4496, %v4879
          %v4881 = vpop.f32.mrb[0].mxu0
          %4882 = vmatprep.mubr.f32.mxu0 %v4052
          %4883 = vmatmul.mubr.f32.gmra.mrb[0].mxu0 %v4051
          %v4884 = vpop.f32.mrb[0].mxu0
          %v4885 = vadd.f32 %v4501, %v4884
          %v4886 = vpop.f32.mrb[0].mxu0
          %4887 = vmatprep.mubr.f32.mxu0 %v4060
          %4888 = vmatmul.mubr.f32.gmra.mrb[0].mxu0 %v4059
          %v4889 = vpop.f32.mrb[0].mxu0
          %v4890 = vadd.f32 %v4506, %v4889
          %v4891 = vpop.f32.mrb[0].mxu0
          %4892 = vmatprep.mubr.f32.mxu0 %v4068
          %4893 = vmatmul.mubr.f32.gmra.mrb[0].mxu0 %v4067
          %v4894 = vpop.f32.mrb[0].mxu0
          %v4895 = vadd.f32 %v4511, %v4894
          %v4896 = vpop.f32.mrb[0].mxu0
          %4897 = vmatprep.mubr.f32.mxu0 %v4076
          %4898 = vmatmul.mubr.f32.gmra.mrb[0].mxu0 %v4075
          %v4899 = vpop.f32.mrb[0].mxu0
          %v4900 = vadd.f32 %v4516, %v4899
          %v4901 = vpop.f32.mrb[0].mxu0
          %4902 = vmatprep.mubr.f32.mxu0 %v4084
          %4903 = vmatmul.mubr.f32.gmra.mrb[0].mxu0 %v4083
          %v4904 = vpop.f32.mrb[0].mxu0
          %v4905 = vadd.f32 %v4521, %v4904
          %v4906 = vpop.f32.mrb[0].mxu0
          %4907 = vmatprep.mubr.f32.mxu0 %v4092
          %4908 = vmatmul.mubr.f32.gmra.mrb[0].mxu0 %v4091
          %v4909 = vpop.f32.mrb[0].mxu0
          %v4910 = vadd.f32 %v4526, %v4909
          %v4911 = vpop.f32.mrb[0].mxu0
          %4912 = vmatprep.mubr.f32.mxu0 %v4100
          %4913 = vmatmul.mubr.f32.gmra.mrb[0].mxu0 %v4099
          %v4914 = vpop.f32.mrb[0].mxu0
          %v4915 = vadd.f32 %v4531, %v4914
          %v4916 = vpop.f32.mrb[0].mxu0
          %4917 = vmatprep.mubr.f32.mxu0 %v4108
          %4918 = vmatmul.mubr.f32.gmra.mrb[0].mxu0 %v4107
          %v4919 = vpop.f32.mrb[0].mxu0
          %v4920 = vadd.f32 %v4536, %v4919
          %v4921 = vpop.f32.mrb[0].mxu0
          %4922 = vmatprep.mubr.f32.mxu0 %v4116
          %4923 = vmatmul.mubr.f32.gmra.mrb[0].mxu0 %v4115
          %v4924 = vpop.f32.mrb[0].mxu0
          %v4925 = vadd.f32 %v4541, %v4924
          %v4926 = vpop.f32.mrb[0].mxu0
          %4927 = vmatprep.mubr.f32.mxu0 %v4124
          %4928 = vmatmul.mubr.f32.gmra.mrb[0].mxu0 %v4123
          %v4929 = vpop.f32.mrb[0].mxu0
          %v4930 = vadd.f32 %v4546, %v4929
          %v4931 = vpop.f32.mrb[0].mxu0
          %4932 = vmatprep.mubr.f32.mxu0 %v4132
          %4933 = vmatmul.mubr.f32.gmra.mrb[0].mxu0 %v4131
          %v4934 = vpop.f32.mrb[0].mxu0
          %v4935 = vadd.f32 %v4551, %v4934
          %v4936 = vpop.f32.mrb[0].mxu0
          %4937 = vmatprep.mubr.f32.mxu0 %v4140
          %4938 = vmatmul.mubr.f32.gmra.mrb[0].mxu0 %v4139
          %v4939 = vpop.f32.mrb[0].mxu0
          %v4940 = vadd.f32 %v4556, %v4939
          %v4941 = vpop.f32.mrb[0].mxu0
          %4942 = vmatprep.mubr.f32.mxu0 %v4148
          %4943 = vmatmul.mubr.f32.gmra.mrb[0].mxu0 %v4147
          %v4944 = vpop.f32.mrb[0].mxu0
          %v4945 = vadd.f32 %v4561, %v4944
          %v4946 = vpop.f32.mrb[0].mxu0
          %4947 = vmatprep.mubr.f32.mxu0 %v4156
          %4948 = vmatmul.mubr.f32.gmra.mrb[0].mxu0 %v4155
          %v4949 = vpop.f32.mrb[0].mxu0
          %v4950 = vadd.f32 %v4566, %v4949
          %v4951 = vpop.f32.mrb[0].mxu0
          %4952 = vmatprep.mubr.f32.mxu0 %v4164
          %4953 = vmatmul.mubr.f32.gmra.mrb[0].mxu0 %v4163
          %v4954 = vpop.f32.mrb[0].mxu0
          %v4955 = vadd.f32 %v4571, %v4954
          %v4956 = vpop.f32.mrb[0].mxu0
          %4957 = vmatprep.mubr.f32.mxu0 %v4172
          %4958 = vmatmul.mubr.f32.gmra.mrb[0].mxu0 %v4171
          %v4959 = vpop.f32.mrb[0].mxu0
          %v4960 = vadd.f32 %v4576, %v4959
          %v4961 = vpop.f32.mrb[0].mxu0
          %4962 = vmatprep.mubr.f32.mxu0 %v4180
          %4963 = vmatmul.mubr.f32.gmra.mrb[0].mxu0 %v4179
          %v4964 = vpop.f32.mrb[0].mxu0
          %v4965 = vadd.f32 %v4581, %v4964
          %v4966 = vpop.f32.mrb[0].mxu0
          %4967 = vmatprep.mubr.f32.mxu0 %v4188
          %4968 = vmatmul.mubr.f32.gmra.mrb[0].mxu0 %v4187
          %v4969 = vpop.f32.mrb[0].mxu0
          %v4970 = vadd.f32 %v4586, %v4969
          %v4971 = vpop.f32.mrb[0].mxu0
          %4972 = vmatprep.mubr.f32.mxu0 %v4196
          %4973 = vmatmul.mubr.f32.gmra.mrb[0].mxu0 %v4195
          %v4974 = vpop.f32.mrb[0].mxu0
          %v4975 = vadd.f32 %v4591, %v4974
          %v4976 = vpop.f32.mrb[0].mxu0
          %4977 = vmatprep.mubr.f32.mxu0 %v4204
          %4978 = vmatmul.mubr.f32.gmra.mrb[0].mxu0 %v4203
          %v4979 = vpop.f32.mrb[0].mxu0
          %v4980 = vadd.f32 %v4596, %v4979
          %v4981 = vpop.f32.mrb[0].mxu0
          %4982 = vmatprep.mubr.f32.mxu0 %v4212
          %4983 = vmatmul.mubr.f32.gmra.mrb[0].mxu0 %v4211
          %v4984 = vpop.f32.mrb[0].mxu0
          %v4985 = vadd.f32 %v4601, %v4984
          %v4986 = vpop.f32.mrb[0].mxu0
          %4987 = vdwg.mxu0
          %4988 = vmatprep.subr.mxu0 0.0
          %4989 = vmatpush1.msra.mxu0 %v3611
          %4990 = vmatprep.subr.mxu0 0.0
          %4991 = vmatpush1.msra.mxu0 %v3612
          %4992 = vmatprep.subr.mxu0 0.0
          %4993 = vmatpush1.msra.mxu0 %v3613
          %4994 = vmatprep.subr.mxu0 0.0
          %4995 = vmatpush1.msra.mxu0 %v3614
          %4996 = vmatprep.subr.mxu0 0.0
          %4997 = vmatpush1.msra.mxu0 %v3615
          %4998 = vmatprep.subr.mxu0 0.0
          %4999 = vmatpush1.msra.mxu0 %v3616
          %5000 = vmatprep.subr.mxu0 0.0
          %5001 = vmatpush1.msra.mxu0 %v3617
          %5002 = vmatprep.subr.mxu0 0.0
          %5003 = vmatpush1.msra.mxu0 %v3618
          %5004 = vmatprep.subr.mxu0 0.0
          %5005 = vmatpush1.msra.mxu0 %v3619
          %5006 = vmatprep.subr.mxu0 0.0
          %5007 = vmatpush1.msra.mxu0 %v3620
          %5008 = vmatprep.subr.mxu0 0.0
          %5009 = vmatpush1.msra.mxu0 %v3621
          %5010 = vmatprep.subr.mxu0 0.0
          %5011 = vmatpush1.msra.mxu0 %v3622
          %5012 = vmatprep.subr.mxu0 0.0
          %5013 = vmatpush1.msra.mxu0 %v3623
          %5014 = vmatprep.subr.mxu0 0.0
          %5015 = vmatpush1.msra.mxu0 %v3624
          %5016 = vmatprep.subr.mxu0 0.0
          %5017 = vmatpush1.msra.mxu0 %v3625
          %5018 = vmatprep.subr.mxu0 0.0
          %5019 = vmatpush1.msra.mxu0 %v3626
          %5020 = vmatprep.subr.mxu0 0.0
          %5021 = vmatpush1.msra.mxu0 %v3627
          %5022 = vmatprep.subr.mxu0 0.0
          %5023 = vmatpush1.msra.mxu0 %v3628
          %5024 = vmatprep.subr.mxu0 0.0
          %5025 = vmatpush1.msra.mxu0 %v3629
          %5026 = vmatprep.subr.mxu0 0.0
          %5027 = vmatpush1.msra.mxu0 %v3630
          %5028 = vmatprep.subr.mxu0 0.0
          %5029 = vmatpush1.msra.mxu0 %v3631
          %5030 = vmatprep.subr.mxu0 0.0
          %5031 = vmatpush1.msra.mxu0 %v3632
          %5032 = vmatprep.subr.mxu0 0.0
          %5033 = vmatpush1.msra.mxu0 %v3633
          %5034 = vmatprep.subr.mxu0 0.0
          %5035 = vmatpush1.msra.mxu0 %v3634
          %5036 = vmatprep.subr.mxu0 0.0
          %5037 = vmatpush1.msra.mxu0 %v3635
          %5038 = vmatprep.subr.mxu0 0.0
          %5039 = vmatpush1.msra.mxu0 %v3636
          %5040 = vmatprep.subr.mxu0 0.0
          %5041 = vmatpush1.msra.mxu0 %v3637
          %5042 = vmatprep.subr.mxu0 0.0
          %5043 = vmatpush1.msra.mxu0 %v3638
          %5044 = vmatprep.subr.mxu0 0.0
          %5045 = vmatpush1.msra.mxu0 %v3639
          %5046 = vmatprep.subr.mxu0 0.0
          %5047 = vmatpush1.msra.mxu0 %v3640
          %5048 = vmatprep.subr.mxu0 0.0
          %5049 = vmatpush1.msra.mxu0 %v3641
          %5050 = vmatprep.subr.mxu0 0.0
          %5051 = vmatpush1.msra.mxu0 %v3642
          %5052 = vmatprep.mubr.f32.mxu0 %v3710
          %5053 = vmatmul.mubr.f32.gmra.mrb[0].mxu0 %v3709
          %v5054 = vpop.f32.mrb[0].mxu0
          %v5055 = vadd.f32 %v4670, %v5054
          %v5056 = vpop.f32.mrb[0].mxu0
          %5057 = vmatprep.mubr.f32.mxu0 %v3718
          %5058 = vmatmul.mubr.f32.gmra.mrb[0].mxu0 %v3717
          %v5059 = vpop.f32.mrb[0].mxu0
          %v5060 = vadd.f32 %v4675, %v5059
          %v5061 = vpop.f32.mrb[0].mxu0
          %5062 = vmatprep.mubr.f32.mxu0 %v3726
          %5063 = vmatmul.mubr.f32.gmra.mrb[0].mxu0 %v3725
          %v5064 = vpop.f32.mrb[0].mxu0
          %v5065 = vadd.f32 %v4680, %v5064
          %v5066 = vpop.f32.mrb[0].mxu0
          %5067 = vmatprep.mubr.f32.mxu0 %v3734
          %5068 = vmatmul.mubr.f32.gmra.mrb[0].mxu0 %v3733
          %v5069 = vpop.f32.mrb[0].mxu0
          %v5070 = vadd.f32 %v4685, %v5069
          %v5071 = vpop.f32.mrb[0].mxu0
          %5072 = vmatprep.mubr.f32.mxu0 %v3742
          %5073 = vmatmul.mubr.f32.gmra.mrb[0].mxu0 %v3741
          %v5074 = vpop.f32.mrb[0].mxu0
          %v5075 = vadd.f32 %v4690, %v5074
          %v5076 = vpop.f32.mrb[0].mxu0
          %5077 = vmatprep.mubr.f32.mxu0 %v3750
          %5078 = vmatmul.mubr.f32.gmra.mrb[0].mxu0 %v3749
          %v5079 = vpop.f32.mrb[0].mxu0
          %v5080 = vadd.f32 %v4695, %v5079
          %v5081 = vpop.f32.mrb[0].mxu0
          %5082 = vmatprep.mubr.f32.mxu0 %v3758
          %5083 = vmatmul.mubr.f32.gmra.mrb[0].mxu0 %v3757
          %v5084 = vpop.f32.mrb[0].mxu0
          %v5085 = vadd.f32 %v4700, %v5084
          %v5086 = vpop.f32.mrb[0].mxu0
          %5087 = vmatprep.mubr.f32.mxu0 %v3766
          %5088 = vmatmul.mubr.f32.gmra.mrb[0].mxu0 %v3765
          %v5089 = vpop.f32.mrb[0].mxu0
          %v5090 = vadd.f32 %v4705, %v5089
          %v5091 = vpop.f32.mrb[0].mxu0
          %5092 = vmatprep.mubr.f32.mxu0 %v3774
          %5093 = vmatmul.mubr.f32.gmra.mrb[0].mxu0 %v3773
          %v5094 = vpop.f32.mrb[0].mxu0
          %v5095 = vadd.f32 %v4710, %v5094
          %v5096 = vpop.f32.mrb[0].mxu0
          %5097 = vmatprep.mubr.f32.mxu0 %v3782
          %5098 = vmatmul.mubr.f32.gmra.mrb[0].mxu0 %v3781
          %v5099 = vpop.f32.mrb[0].mxu0
          %v5100 = vadd.f32 %v4715, %v5099
          %v5101 = vpop.f32.mrb[0].mxu0
          %5102 = vmatprep.mubr.f32.mxu0 %v3790
          %5103 = vmatmul.mubr.f32.gmra.mrb[0].mxu0 %v3789
          %v5104 = vpop.f32.mrb[0].mxu0
          %v5105 = vadd.f32 %v4720, %v5104
          %v5106 = vpop.f32.mrb[0].mxu0
          %5107 = vmatprep.mubr.f32.mxu0 %v3798
          %5108 = vmatmul.mubr.f32.gmra.mrb[0].mxu0 %v3797
          %v5109 = vpop.f32.mrb[0].mxu0
          %v5110 = vadd.f32 %v4725, %v5109
          %v5111 = vpop.f32.mrb[0].mxu0
          %5112 = vmatprep.mubr.f32.mxu0 %v3806
          %5113 = vmatmul.mubr.f32.gmra.mrb[0].mxu0 %v3805
          %v5114 = vpop.f32.mrb[0].mxu0
          %v5115 = vadd.f32 %v4730, %v5114
          %v5116 = vpop.f32.mrb[0].mxu0
          %5117 = vmatprep.mubr.f32.mxu0 %v3814
          %5118 = vmatmul.mubr.f32.gmra.mrb[0].mxu0 %v3813
          %v5119 = vpop.f32.mrb[0].mxu0
          %v5120 = vadd.f32 %v4735, %v5119
          %v5121 = vpop.f32.mrb[0].mxu0
          %5122 = vmatprep.mubr.f32.mxu0 %v3822
          %5123 = vmatmul.mubr.f32.gmra.mrb[0].mxu0 %v3821
          %v5124 = vpop.f32.mrb[0].mxu0
          %v5125 = vadd.f32 %v4740, %v5124
          %v5126 = vpop.f32.mrb[0].mxu0
          %5127 = vmatprep.mubr.f32.mxu0 %v3830
          %5128 = vmatmul.mubr.f32.gmra.mrb[0].mxu0 %v3829
          %v5129 = vpop.f32.mrb[0].mxu0
          %v5130 = vadd.f32 %v4745, %v5129
          %v5131 = vpop.f32.mrb[0].mxu0
          %5132 = vmatprep.mubr.f32.mxu0 %v3838
          %5133 = vmatmul.mubr.f32.gmra.mrb[0].mxu0 %v3837
          %v5134 = vpop.f32.mrb[0].mxu0
          %v5135 = vadd.f32 %v4750, %v5134
          %v5136 = vpop.f32.mrb[0].mxu0
          %5137 = vmatprep.mubr.f32.mxu0 %v3846
          %5138 = vmatmul.mubr.f32.gmra.mrb[0].mxu0 %v3845
          %v5139 = vpop.f32.mrb[0].mxu0
          %v5140 = vadd.f32 %v4755, %v5139
          %v5141 = vpop.f32.mrb[0].mxu0
          %5142 = vmatprep.mubr.f32.mxu0 %v3854
          %5143 = vmatmul.mubr.f32.gmra.mrb[0].mxu0 %v3853
          %v5144 = vpop.f32.mrb[0].mxu0
          %v5145 = vadd.f32 %v4760, %v5144
          %v5146 = vpop.f32.mrb[0].mxu0
          %5147 = vmatprep.mubr.f32.mxu0 %v3862
          %5148 = vmatmul.mubr.f32.gmra.mrb[0].mxu0 %v3861
          %v5149 = vpop.f32.mrb[0].mxu0
          %v5150 = vadd.f32 %v4765, %v5149
          %v5151 = vpop.f32.mrb[0].mxu0
          %5152 = vmatprep.mubr.f32.mxu0 %v3870
          %5153 = vmatmul.mubr.f32.gmra.mrb[0].mxu0 %v3869
          %v5154 = vpop.f32.mrb[0].mxu0
          %v5155 = vadd.f32 %v4770, %v5154
          %v5156 = vpop.f32.mrb[0].mxu0
          %5157 = vmatprep.mubr.f32.mxu0 %v3878
          %5158 = vmatmul.mubr.f32.gmra.mrb[0].mxu0 %v3877
          %v5159 = vpop.f32.mrb[0].mxu0
          %v5160 = vadd.f32 %v4775, %v5159
          %v5161 = vpop.f32.mrb[0].mxu0
          %5162 = vmatprep.mubr.f32.mxu0 %v3886
          %5163 = vmatmul.mubr.f32.gmra.mrb[0].mxu0 %v3885
          %v5164 = vpop.f32.mrb[0].mxu0
          %v5165 = vadd.f32 %v4780, %v5164
          %v5166 = vpop.f32.mrb[0].mxu0
          %5167 = vmatprep.mubr.f32.mxu0 %v3894
          %5168 = vmatmul.mubr.f32.gmra.mrb[0].mxu0 %v3893
          %v5169 = vpop.f32.mrb[0].mxu0
          %v5170 = vadd.f32 %v4785, %v5169
          %v5171 = vpop.f32.mrb[0].mxu0
          %5172 = vmatprep.mubr.f32.mxu0 %v3902
          %5173 = vmatmul.mubr.f32.gmra.mrb[0].mxu0 %v3901
          %v5174 = vpop.f32.mrb[0].mxu0
          %v5175 = vadd.f32 %v4790, %v5174
          %v5176 = vpop.f32.mrb[0].mxu0
          %5177 = vmatprep.mubr.f32.mxu0 %v3910
          %5178 = vmatmul.mubr.f32.gmra.mrb[0].mxu0 %v3909
          %v5179 = vpop.f32.mrb[0].mxu0
          %v5180 = vadd.f32 %v4795, %v5179
          %v5181 = vpop.f32.mrb[0].mxu0
          %5182 = vmatprep.mubr.f32.mxu0 %v3918
          %5183 = vmatmul.mubr.f32.gmra.mrb[0].mxu0 %v3917
          %v5184 = vpop.f32.mrb[0].mxu0
          %v5185 = vadd.f32 %v4800, %v5184
          %v5186 = vpop.f32.mrb[0].mxu0
          %5187 = vmatprep.mubr.f32.mxu0 %v3926
          %5188 = vmatmul.mubr.f32.gmra.mrb[0].mxu0 %v3925
          %v5189 = vpop.f32.mrb[0].mxu0
          %v5190 = vadd.f32 %v4805, %v5189
          %v5191 = vpop.f32.mrb[0].mxu0
          %5192 = vmatprep.mubr.f32.mxu0 %v3934
          %5193 = vmatmul.mubr.f32.gmra.mrb[0].mxu0 %v3933
          %v5194 = vpop.f32.mrb[0].mxu0
          %v5195 = vadd.f32 %v4810, %v5194
          %v5196 = vpop.f32.mrb[0].mxu0
          %5197 = vmatprep.mubr.f32.mxu0 %v3942
          %5198 = vmatmul.mubr.f32.gmra.mrb[0].mxu0 %v3941
          %v5199 = vpop.f32.mrb[0].mxu0
          %v5200 = vadd.f32 %v4815, %v5199
          %v5201 = vpop.f32.mrb[0].mxu0
          %5202 = vmatprep.mubr.f32.mxu0 %v3950
          %5203 = vmatmul.mubr.f32.gmra.mrb[0].mxu0 %v3949
          %v5204 = vpop.f32.mrb[0].mxu0
          %v5205 = vadd.f32 %v4820, %v5204
          %v5206 = vpop.f32.mrb[0].mxu0
          %5207 = vmatprep.mubr.f32.mxu0 %v3958
          %5208 = vmatmul.mubr.f32.gmra.mrb[0].mxu0 %v3957
          %v5209 = vpop.f32.mrb[0].mxu0
          %v5210 = vadd.f32 %v4825, %v5209
          %v5211 = vpop.f32.mrb[0].mxu0
          %5212 = vmatprep.mubr.f32.mxu0 %v3966
          %5213 = vmatmul.mubr.f32.gmra.mrb[0].mxu0 %v3965
          %v5214 = vpop.f32.mrb[0].mxu0
          %v5215 = vadd.f32 %v4830, %v5214
          %v5216 = vpop.f32.mrb[0].mxu0
          %5217 = vmatprep.mubr.f32.mxu0 %v3974
          %5218 = vmatmul.mubr.f32.gmra.mrb[0].mxu0 %v3973
          %v5219 = vpop.f32.mrb[0].mxu0
          %v5220 = vadd.f32 %v4835, %v5219
          %v5221 = vpop.f32.mrb[0].mxu0
          %5222 = vmatprep.mubr.f32.mxu0 %v3982
          %5223 = vmatmul.mubr.f32.gmra.mrb[0].mxu0 %v3981
          %v5224 = vpop.f32.mrb[0].mxu0
          %v5225 = vadd.f32 %v4840, %v5224
          %v5226 = vpop.f32.mrb[0].mxu0
          %5227 = vmatprep.mubr.f32.mxu0 %v3990
          %5228 = vmatmul.mubr.f32.gmra.mrb[0].mxu0 %v3989
          %v5229 = vpop.f32.mrb[0].mxu0
          %v5230 = vadd.f32 %v4845, %v5229
          %v5231 = vpop.f32.mrb[0].mxu0
          %5232 = vmatprep.mubr.f32.mxu0 %v3998
          %5233 = vmatmul.mubr.f32.gmra.mrb[0].mxu0 %v3997
          %v5234 = vpop.f32.mrb[0].mxu0
          %v5235 = vadd.f32 %v4850, %v5234
          %v5236 = vpop.f32.mrb[0].mxu0
          %5237 = vmatprep.mubr.f32.mxu0 %v4006
          %5238 = vmatmul.mubr.f32.gmra.mrb[0].mxu0 %v4005
          %v5239 = vpop.f32.mrb[0].mxu0
          %v5240 = vadd.f32 %v4855, %v5239
          %v5241 = vpop.f32.mrb[0].mxu0
          %5242 = vmatprep.mubr.f32.mxu0 %v4014
          %5243 = vmatmul.mubr.f32.gmra.mrb[0].mxu0 %v4013
          %v5244 = vpop.f32.mrb[0].mxu0
          %v5245 = vadd.f32 %v4860, %v5244
          %v5246 = vpop.f32.mrb[0].mxu0
          %5247 = vmatprep.mubr.f32.mxu0 %v4022
          %5248 = vmatmul.mubr.f32.gmra.mrb[0].mxu0 %v4021
          %v5249 = vpop.f32.mrb[0].mxu0
          %v5250 = vadd.f32 %v4865, %v5249
          %v5251 = vpop.f32.mrb[0].mxu0
          %5252 = vmatprep.mubr.f32.mxu0 %v4030
          %5253 = vmatmul.mubr.f32.gmra.mrb[0].mxu0 %v4029
          %v5254 = vpop.f32.mrb[0].mxu0
          %v5255 = vadd.f32 %v4870, %v5254
          %v5256 = vpop.f32.mrb[0].mxu0
          %5257 = vmatprep.mubr.f32.mxu0 %v4038
          %5258 = vmatmul.mubr.f32.gmra.mrb[0].mxu0 %v4037
          %v5259 = vpop.f32.mrb[0].mxu0
          %v5260 = vadd.f32 %v4875, %v5259
          %v5261 = vpop.f32.mrb[0].mxu0
          %5262 = vmatprep.mubr.f32.mxu0 %v4046
          %5263 = vmatmul.mubr.f32.gmra.mrb[0].mxu0 %v4045
          %v5264 = vpop.f32.mrb[0].mxu0
          %v5265 = vadd.f32 %v4880, %v5264
          %v5266 = vpop.f32.mrb[0].mxu0
          %5267 = vmatprep.mubr.f32.mxu0 %v4054
          %5268 = vmatmul.mubr.f32.gmra.mrb[0].mxu0 %v4053
          %v5269 = vpop.f32.mrb[0].mxu0
          %v5270 = vadd.f32 %v4885, %v5269
          %v5271 = vpop.f32.mrb[0].mxu0
          %5272 = vmatprep.mubr.f32.mxu0 %v4062
          %5273 = vmatmul.mubr.f32.gmra.mrb[0].mxu0 %v4061
          %v5274 = vpop.f32.mrb[0].mxu0
          %v5275 = vadd.f32 %v4890, %v5274
          %v5276 = vpop.f32.mrb[0].mxu0
          %5277 = vmatprep.mubr.f32.mxu0 %v4070
          %5278 = vmatmul.mubr.f32.gmra.mrb[0].mxu0 %v4069
          %v5279 = vpop.f32.mrb[0].mxu0
          %v5280 = vadd.f32 %v4895, %v5279
          %v5281 = vpop.f32.mrb[0].mxu0
          %5282 = vmatprep.mubr.f32.mxu0 %v4078
          %5283 = vmatmul.mubr.f32.gmra.mrb[0].mxu0 %v4077
          %v5284 = vpop.f32.mrb[0].mxu0
          %v5285 = vadd.f32 %v4900, %v5284
          %v5286 = vpop.f32.mrb[0].mxu0
          %5287 = vmatprep.mubr.f32.mxu0 %v4086
          %5288 = vmatmul.mubr.f32.gmra.mrb[0].mxu0 %v4085
          %v5289 = vpop.f32.mrb[0].mxu0
          %v5290 = vadd.f32 %v4905, %v5289
          %v5291 = vpop.f32.mrb[0].mxu0
          %5292 = vmatprep.mubr.f32.mxu0 %v4094
          %5293 = vmatmul.mubr.f32.gmra.mrb[0].mxu0 %v4093
          %v5294 = vpop.f32.mrb[0].mxu0
          %v5295 = vadd.f32 %v4910, %v5294
          %v5296 = vpop.f32.mrb[0].mxu0
          %5297 = vmatprep.mubr.f32.mxu0 %v4102
          %5298 = vmatmul.mubr.f32.gmra.mrb[0].mxu0 %v4101
          %v5299 = vpop.f32.mrb[0].mxu0
          %v5300 = vadd.f32 %v4915, %v5299
          %v5301 = vpop.f32.mrb[0].mxu0
          %5302 = vmatprep.mubr.f32.mxu0 %v4110
          %5303 = vmatmul.mubr.f32.gmra.mrb[0].mxu0 %v4109
          %v5304 = vpop.f32.mrb[0].mxu0
          %v5305 = vadd.f32 %v4920, %v5304
          %v5306 = vpop.f32.mrb[0].mxu0
          %5307 = vmatprep.mubr.f32.mxu0 %v4118
          %5308 = vmatmul.mubr.f32.gmra.mrb[0].mxu0 %v4117
          %v5309 = vpop.f32.mrb[0].mxu0
          %v5310 = vadd.f32 %v4925, %v5309
          %v5311 = vpop.f32.mrb[0].mxu0
          %5312 = vmatprep.mubr.f32.mxu0 %v4126
          %5313 = vmatmul.mubr.f32.gmra.mrb[0].mxu0 %v4125
          %v5314 = vpop.f32.mrb[0].mxu0
          %v5315 = vadd.f32 %v4930, %v5314
          %v5316 = vpop.f32.mrb[0].mxu0
          %5317 = vmatprep.mubr.f32.mxu0 %v4134
          %5318 = vmatmul.mubr.f32.gmra.mrb[0].mxu0 %v4133
          %v5319 = vpop.f32.mrb[0].mxu0
          %v5320 = vadd.f32 %v4935, %v5319
          %v5321 = vpop.f32.mrb[0].mxu0
          %5322 = vmatprep.mubr.f32.mxu0 %v4142
          %5323 = vmatmul.mubr.f32.gmra.mrb[0].mxu0 %v4141
          %v5324 = vpop.f32.mrb[0].mxu0
          %v5325 = vadd.f32 %v4940, %v5324
          %v5326 = vpop.f32.mrb[0].mxu0
          %5327 = vmatprep.mubr.f32.mxu0 %v4150
          %5328 = vmatmul.mubr.f32.gmra.mrb[0].mxu0 %v4149
          %v5329 = vpop.f32.mrb[0].mxu0
          %v5330 = vadd.f32 %v4945, %v5329
          %v5331 = vpop.f32.mrb[0].mxu0
          %5332 = vmatprep.mubr.f32.mxu0 %v4158
          %5333 = vmatmul.mubr.f32.gmra.mrb[0].mxu0 %v4157
          %v5334 = vpop.f32.mrb[0].mxu0
          %v5335 = vadd.f32 %v4950, %v5334
          %v5336 = vpop.f32.mrb[0].mxu0
          %5337 = vmatprep.mubr.f32.mxu0 %v4166
          %5338 = vmatmul.mubr.f32.gmra.mrb[0].mxu0 %v4165
          %v5339 = vpop.f32.mrb[0].mxu0
          %v5340 = vadd.f32 %v4955, %v5339
          %v5341 = vpop.f32.mrb[0].mxu0
          %5342 = vmatprep.mubr.f32.mxu0 %v4174
          %5343 = vmatmul.mubr.f32.gmra.mrb[0].mxu0 %v4173
          %v5344 = vpop.f32.mrb[0].mxu0
          %v5345 = vadd.f32 %v4960, %v5344
          %v5346 = vpop.f32.mrb[0].mxu0
          %5347 = vmatprep.mubr.f32.mxu0 %v4182
          %5348 = vmatmul.mubr.f32.gmra.mrb[0].mxu0 %v4181
          %v5349 = vpop.f32.mrb[0].mxu0
          %v5350 = vadd.f32 %v4965, %v5349
          %v5351 = vpop.f32.mrb[0].mxu0
          %5352 = vmatprep.mubr.f32.mxu0 %v4190
          %5353 = vmatmul.mubr.f32.gmra.mrb[0].mxu0 %v4189
          %v5354 = vpop.f32.mrb[0].mxu0
          %v5355 = vadd.f32 %v4970, %v5354
          %v5356 = vpop.f32.mrb[0].mxu0
          %5357 = vmatprep.mubr.f32.mxu0 %v4198
          %5358 = vmatmul.mubr.f32.gmra.mrb[0].mxu0 %v4197
          %v5359 = vpop.f32.mrb[0].mxu0
          %v5360 = vadd.f32 %v4975, %v5359
          %v5361 = vpop.f32.mrb[0].mxu0
          %5362 = vmatprep.mubr.f32.mxu0 %v4206
          %5363 = vmatmul.mubr.f32.gmra.mrb[0].mxu0 %v4205
          %v5364 = vpop.f32.mrb[0].mxu0
          %v5365 = vadd.f32 %v4980, %v5364
          %v5366 = vpop.f32.mrb[0].mxu0
          %5367 = vmatprep.mubr.f32.mxu0 %v4214
          %5368 = vmatmul.mubr.f32.gmra.mrb[0].mxu0 %v4213
          %v5369 = vpop.f32.mrb[0].mxu0
          %v5370 = vadd.f32 %v4985, %v5369
          %v5371 = vpop.f32.mrb[0].mxu0
          %5372 = vdwg.mxu0
          %5373 = vmatprep.subr.mxu0 0.0
          %5374 = vmatpush1.msra.mxu0 %v3643
          %5375 = vmatprep.subr.mxu0 0.0
          %5376 = vmatpush1.msra.mxu0 %v3644
          %5377 = vmatprep.subr.mxu0 0.0
          %5378 = vmatpush1.msra.mxu0 %v3645
          %5379 = vmatprep.subr.mxu0 0.0
          %5380 = vmatpush1.msra.mxu0 %v3646
          %5381 = vmatprep.subr.mxu0 0.0
          %5382 = vmatpush1.msra.mxu0 %v3647
          %5383 = vmatprep.subr.mxu0 0.0
          %5384 = vmatpush1.msra.mxu0 %v3648
          %5385 = vmatprep.subr.mxu0 0.0
          %5386 = vmatpush1.msra.mxu0 %v3649
          %5387 = vmatprep.subr.mxu0 0.0
          %5388 = vmatpush1.msra.mxu0 %v3650
          %5389 = vmatprep.subr.mxu0 0.0
          %5390 = vmatpush1.msra.mxu0 %v3651
          %5391 = vmatprep.subr.mxu0 0.0
          %5392 = vmatpush1.msra.mxu0 %v3652
          %5393 = vmatprep.subr.mxu0 0.0
          %5394 = vmatpush1.msra.mxu0 %v3653
          %5395 = vmatprep.subr.mxu0 0.0
          %5396 = vmatpush1.msra.mxu0 %v3654
          %5397 = vmatprep.subr.mxu0 0.0
          %5398 = vmatpush1.msra.mxu0 %v3655
          %5399 = vmatprep.subr.mxu0 0.0
          %5400 = vmatpush1.msra.mxu0 %v3656
          %5401 = vmatprep.subr.mxu0 0.0
          %5402 = vmatpush1.msra.mxu0 %v3657
          %5403 = vmatprep.subr.mxu0 0.0
          %5404 = vmatpush1.msra.mxu0 %v3658
          %5405 = vmatprep.subr.mxu0 0.0
          %5406 = vmatpush1.msra.mxu0 %v3659
          %5407 = vmatprep.subr.mxu0 0.0
          %5408 = vmatpush1.msra.mxu0 %v3660
          %5409 = vmatprep.subr.mxu0 0.0
          %5410 = vmatpush1.msra.mxu0 %v3661
          %5411 = vmatprep.subr.mxu0 0.0
          %5412 = vmatpush1.msra.mxu0 %v3662
          %5413 = vmatprep.subr.mxu0 0.0
          %5414 = vmatpush1.msra.mxu0 %v3663
          %5415 = vmatprep.subr.mxu0 0.0
          %5416 = vmatpush1.msra.mxu0 %v3664
          %5417 = vmatprep.subr.mxu0 0.0
          %5418 = vmatpush1.msra.mxu0 %v3665
          %5419 = vmatprep.subr.mxu0 0.0
          %5420 = vmatpush1.msra.mxu0 %v3666
          %5421 = vmatprep.subr.mxu0 0.0
          %5422 = vmatpush1.msra.mxu0 %v3667
          %5423 = vmatprep.subr.mxu0 0.0
          %5424 = vmatpush1.msra.mxu0 %v3668
          %5425 = vmatprep.subr.mxu0 0.0
          %5426 = vmatpush1.msra.mxu0 %v3669
          %5427 = vmatprep.subr.mxu0 0.0
          %5428 = vmatpush1.msra.mxu0 %v3670
          %5429 = vmatprep.subr.mxu0 0.0
          %5430 = vmatpush1.msra.mxu0 %v3671
          %5431 = vmatprep.subr.mxu0 0.0
          %5432 = vmatpush1.msra.mxu0 %v3672
          %5433 = vmatprep.subr.mxu0 0.0
          %5434 = vmatpush1.msra.mxu0 %v3673
          %5435 = vmatprep.subr.mxu0 0.0
          %5436 = vmatpush1.msra.mxu0 %v3674
          %5437 = vmatprep.mubr.f32.mxu0 %v3712
          %5438 = vmatmul.mubr.f32.gmra.mrb[0].mxu0 %v3711
          %v5439 = vpop.f32.mrb[0].mxu0
          %v5440 = vadd.f32 %v5055, %v5439
          %v5441 = vpop.f32.mrb[0].mxu0
          %5442 = vmatprep.mubr.f32.mxu0 %v3720
          %5443 = vmatmul.mubr.f32.gmra.mrb[0].mxu0 %v3719
          %v5444 = vpop.f32.mrb[0].mxu0
          %v5445 = vadd.f32 %v5060, %v5444
          %v5446 = vpop.f32.mrb[0].mxu0
          %5447 = vmatprep.mubr.f32.mxu0 %v3728
          %5448 = vmatmul.mubr.f32.gmra.mrb[0].mxu0 %v3727
          %v5449 = vpop.f32.mrb[0].mxu0
          %v5450 = vadd.f32 %v5065, %v5449
          %v5451 = vpop.f32.mrb[0].mxu0
          %5452 = vmatprep.mubr.f32.mxu0 %v3736
          %5453 = vmatmul.mubr.f32.gmra.mrb[0].mxu0 %v3735
          %v5454 = vpop.f32.mrb[0].mxu0
          %v5455 = vadd.f32 %v5070, %v5454
          %v5456 = vpop.f32.mrb[0].mxu0
          %5457 = vmatprep.mubr.f32.mxu0 %v3744
          %5458 = vmatmul.mubr.f32.gmra.mrb[0].mxu0 %v3743
          %v5459 = vpop.f32.mrb[0].mxu0
          %v5460 = vadd.f32 %v5075, %v5459
          %v5461 = vpop.f32.mrb[0].mxu0
          %5462 = vmatprep.mubr.f32.mxu0 %v3752
          %5463 = vmatmul.mubr.f32.gmra.mrb[0].mxu0 %v3751
          %v5464 = vpop.f32.mrb[0].mxu0
          %v5465 = vadd.f32 %v5080, %v5464
          %v5466 = vpop.f32.mrb[0].mxu0
          %5467 = vmatprep.mubr.f32.mxu0 %v3760
          %5468 = vmatmul.mubr.f32.gmra.mrb[0].mxu0 %v3759
          %v5469 = vpop.f32.mrb[0].mxu0
          %v5470 = vadd.f32 %v5085, %v5469
          %v5471 = vpop.f32.mrb[0].mxu0
          %5472 = vmatprep.mubr.f32.mxu0 %v3768
          %5473 = vmatmul.mubr.f32.gmra.mrb[0].mxu0 %v3767
          %v5474 = vpop.f32.mrb[0].mxu0
          %v5475 = vadd.f32 %v5090, %v5474
          %v5476 = vpop.f32.mrb[0].mxu0
          %5477 = vmatprep.mubr.f32.mxu0 %v3776
          %5478 = vmatmul.mubr.f32.gmra.mrb[0].mxu0 %v3775
          %v5479 = vpop.f32.mrb[0].mxu0
          %v5480 = vadd.f32 %v5095, %v5479
          %v5481 = vpop.f32.mrb[0].mxu0
          %5482 = vmatprep.mubr.f32.mxu0 %v3784
          %5483 = vmatmul.mubr.f32.gmra.mrb[0].mxu0 %v3783
          %v5484 = vpop.f32.mrb[0].mxu0
          %v5485 = vadd.f32 %v5100, %v5484
          %v5486 = vpop.f32.mrb[0].mxu0
          %5487 = vmatprep.mubr.f32.mxu0 %v3792
          %5488 = vmatmul.mubr.f32.gmra.mrb[0].mxu0 %v3791
          %v5489 = vpop.f32.mrb[0].mxu0
          %v5490 = vadd.f32 %v5105, %v5489
          %v5491 = vpop.f32.mrb[0].mxu0
          %5492 = vmatprep.mubr.f32.mxu0 %v3800
          %5493 = vmatmul.mubr.f32.gmra.mrb[0].mxu0 %v3799
          %v5494 = vpop.f32.mrb[0].mxu0
          %v5495 = vadd.f32 %v5110, %v5494
          %v5496 = vpop.f32.mrb[0].mxu0
          %5497 = vmatprep.mubr.f32.mxu0 %v3808
          %5498 = vmatmul.mubr.f32.gmra.mrb[0].mxu0 %v3807
          %v5499 = vpop.f32.mrb[0].mxu0
          %v5500 = vadd.f32 %v5115, %v5499
          %v5501 = vpop.f32.mrb[0].mxu0
          %5502 = vmatprep.mubr.f32.mxu0 %v3816
          %5503 = vmatmul.mubr.f32.gmra.mrb[0].mxu0 %v3815
          %v5504 = vpop.f32.mrb[0].mxu0
          %v5505 = vadd.f32 %v5120, %v5504
          %v5506 = vpop.f32.mrb[0].mxu0
          %5507 = vmatprep.mubr.f32.mxu0 %v3824
          %5508 = vmatmul.mubr.f32.gmra.mrb[0].mxu0 %v3823
          %v5509 = vpop.f32.mrb[0].mxu0
          %v5510 = vadd.f32 %v5125, %v5509
          %v5511 = vpop.f32.mrb[0].mxu0
          %5512 = vmatprep.mubr.f32.mxu0 %v3832
          %5513 = vmatmul.mubr.f32.gmra.mrb[0].mxu0 %v3831
          %v5514 = vpop.f32.mrb[0].mxu0
          %v5515 = vadd.f32 %v5130, %v5514
          %v5516 = vpop.f32.mrb[0].mxu0
          %5517 = vmatprep.mubr.f32.mxu0 %v3840
          %5518 = vmatmul.mubr.f32.gmra.mrb[0].mxu0 %v3839
          %v5519 = vpop.f32.mrb[0].mxu0
          %v5520 = vadd.f32 %v5135, %v5519
          %v5521 = vpop.f32.mrb[0].mxu0
          %5522 = vmatprep.mubr.f32.mxu0 %v3848
          %5523 = vmatmul.mubr.f32.gmra.mrb[0].mxu0 %v3847
          %v5524 = vpop.f32.mrb[0].mxu0
          %v5525 = vadd.f32 %v5140, %v5524
          %v5526 = vpop.f32.mrb[0].mxu0
          %5527 = vmatprep.mubr.f32.mxu0 %v3856
          %5528 = vmatmul.mubr.f32.gmra.mrb[0].mxu0 %v3855
          %v5529 = vpop.f32.mrb[0].mxu0
          %v5530 = vadd.f32 %v5145, %v5529
          %v5531 = vpop.f32.mrb[0].mxu0
          %5532 = vmatprep.mubr.f32.mxu0 %v3864
          %5533 = vmatmul.mubr.f32.gmra.mrb[0].mxu0 %v3863
          %v5534 = vpop.f32.mrb[0].mxu0
          %v5535 = vadd.f32 %v5150, %v5534
          %v5536 = vpop.f32.mrb[0].mxu0
          %5537 = vmatprep.mubr.f32.mxu0 %v3872
          %5538 = vmatmul.mubr.f32.gmra.mrb[0].mxu0 %v3871
          %v5539 = vpop.f32.mrb[0].mxu0
          %v5540 = vadd.f32 %v5155, %v5539
          %v5541 = vpop.f32.mrb[0].mxu0
          %5542 = vmatprep.mubr.f32.mxu0 %v3880
          %5543 = vmatmul.mubr.f32.gmra.mrb[0].mxu0 %v3879
          %v5544 = vpop.f32.mrb[0].mxu0
          %v5545 = vadd.f32 %v5160, %v5544
          %v5546 = vpop.f32.mrb[0].mxu0
          %5547 = vmatprep.mubr.f32.mxu0 %v3888
          %5548 = vmatmul.mubr.f32.gmra.mrb[0].mxu0 %v3887
          %v5549 = vpop.f32.mrb[0].mxu0
          %v5550 = vadd.f32 %v5165, %v5549
          %v5551 = vpop.f32.mrb[0].mxu0
          %5552 = vmatprep.mubr.f32.mxu0 %v3896
          %5553 = vmatmul.mubr.f32.gmra.mrb[0].mxu0 %v3895
          %v5554 = vpop.f32.mrb[0].mxu0
          %v5555 = vadd.f32 %v5170, %v5554
          %v5556 = vpop.f32.mrb[0].mxu0
          %5557 = vmatprep.mubr.f32.mxu0 %v3904
          %5558 = vmatmul.mubr.f32.gmra.mrb[0].mxu0 %v3903
          %v5559 = vpop.f32.mrb[0].mxu0
          %v5560 = vadd.f32 %v5175, %v5559
          %v5561 = vpop.f32.mrb[0].mxu0
          %5562 = vmatprep.mubr.f32.mxu0 %v3912
          %5563 = vmatmul.mubr.f32.gmra.mrb[0].mxu0 %v3911
          %v5564 = vpop.f32.mrb[0].mxu0
          %v5565 = vadd.f32 %v5180, %v5564
          %v5566 = vpop.f32.mrb[0].mxu0
          %5567 = vmatprep.mubr.f32.mxu0 %v3920
          %5568 = vmatmul.mubr.f32.gmra.mrb[0].mxu0 %v3919
          %v5569 = vpop.f32.mrb[0].mxu0
          %v5570 = vadd.f32 %v5185, %v5569
          %v5571 = vpop.f32.mrb[0].mxu0
          %5572 = vmatprep.mubr.f32.mxu0 %v3928
          %5573 = vmatmul.mubr.f32.gmra.mrb[0].mxu0 %v3927
          %v5574 = vpop.f32.mrb[0].mxu0
          %v5575 = vadd.f32 %v5190, %v5574
          %v5576 = vpop.f32.mrb[0].mxu0
          %5577 = vmatprep.mubr.f32.mxu0 %v3936
          %5578 = vmatmul.mubr.f32.gmra.mrb[0].mxu0 %v3935
          %v5579 = vpop.f32.mrb[0].mxu0
          %v5580 = vadd.f32 %v5195, %v5579
          %v5581 = vpop.f32.mrb[0].mxu0
          %5582 = vmatprep.mubr.f32.mxu0 %v3944
          %5583 = vmatmul.mubr.f32.gmra.mrb[0].mxu0 %v3943
          %v5584 = vpop.f32.mrb[0].mxu0
          %v5585 = vadd.f32 %v5200, %v5584
          %v5586 = vpop.f32.mrb[0].mxu0
          %5587 = vmatprep.mubr.f32.mxu0 %v3952
          %5588 = vmatmul.mubr.f32.gmra.mrb[0].mxu0 %v3951
          %v5589 = vpop.f32.mrb[0].mxu0
          %v5590 = vadd.f32 %v5205, %v5589
          %v5591 = vpop.f32.mrb[0].mxu0
          %5592 = vmatprep.mubr.f32.mxu0 %v3960
          %5593 = vmatmul.mubr.f32.gmra.mrb[0].mxu0 %v3959
          %v5594 = vpop.f32.mrb[0].mxu0
          %v5595 = vadd.f32 %v5210, %v5594
          %v5596 = vpop.f32.mrb[0].mxu0
          %5597 = vmatprep.mubr.f32.mxu0 %v3968
          %5598 = vmatmul.mubr.f32.gmra.mrb[0].mxu0 %v3967
          %v5599 = vpop.f32.mrb[0].mxu0
          %v5600 = vadd.f32 %v5215, %v5599
          %v5601 = vpop.f32.mrb[0].mxu0
          %5602 = vmatprep.mubr.f32.mxu0 %v3976
          %5603 = vmatmul.mubr.f32.gmra.mrb[0].mxu0 %v3975
          %v5604 = vpop.f32.mrb[0].mxu0
          %v5605 = vadd.f32 %v5220, %v5604
          %v5606 = vpop.f32.mrb[0].mxu0
          %5607 = vmatprep.mubr.f32.mxu0 %v3984
          %5608 = vmatmul.mubr.f32.gmra.mrb[0].mxu0 %v3983
          %v5609 = vpop.f32.mrb[0].mxu0
          %v5610 = vadd.f32 %v5225, %v5609
          %v5611 = vpop.f32.mrb[0].mxu0
          %5612 = vmatprep.mubr.f32.mxu0 %v3992
          %5613 = vmatmul.mubr.f32.gmra.mrb[0].mxu0 %v3991
          %v5614 = vpop.f32.mrb[0].mxu0
          %v5615 = vadd.f32 %v5230, %v5614
          %v5616 = vpop.f32.mrb[0].mxu0
          %5617 = vmatprep.mubr.f32.mxu0 %v4000
          %5618 = vmatmul.mubr.f32.gmra.mrb[0].mxu0 %v3999
          %v5619 = vpop.f32.mrb[0].mxu0
          %v5620 = vadd.f32 %v5235, %v5619
          %v5621 = vpop.f32.mrb[0].mxu0
          %5622 = vmatprep.mubr.f32.mxu0 %v4008
          %5623 = vmatmul.mubr.f32.gmra.mrb[0].mxu0 %v4007
          %v5624 = vpop.f32.mrb[0].mxu0
          %v5625 = vadd.f32 %v5240, %v5624
          %v5626 = vpop.f32.mrb[0].mxu0
          %5627 = vmatprep.mubr.f32.mxu0 %v4016
          %5628 = vmatmul.mubr.f32.gmra.mrb[0].mxu0 %v4015
          %v5629 = vpop.f32.mrb[0].mxu0
          %v5630 = vadd.f32 %v5245, %v5629
          %v5631 = vpop.f32.mrb[0].mxu0
          %5632 = vmatprep.mubr.f32.mxu0 %v4024
          %5633 = vmatmul.mubr.f32.gmra.mrb[0].mxu0 %v4023
          %v5634 = vpop.f32.mrb[0].mxu0
          %v5635 = vadd.f32 %v5250, %v5634
          %v5636 = vpop.f32.mrb[0].mxu0
          %5637 = vmatprep.mubr.f32.mxu0 %v4032
          %5638 = vmatmul.mubr.f32.gmra.mrb[0].mxu0 %v4031
          %v5639 = vpop.f32.mrb[0].mxu0
          %v5640 = vadd.f32 %v5255, %v5639
          %v5641 = vpop.f32.mrb[0].mxu0
          %5642 = vmatprep.mubr.f32.mxu0 %v4040
          %5643 = vmatmul.mubr.f32.gmra.mrb[0].mxu0 %v4039
          %v5644 = vpop.f32.mrb[0].mxu0
          %v5645 = vadd.f32 %v5260, %v5644
          %v5646 = vpop.f32.mrb[0].mxu0
          %5647 = vmatprep.mubr.f32.mxu0 %v4048
          %5648 = vmatmul.mubr.f32.gmra.mrb[0].mxu0 %v4047
          %v5649 = vpop.f32.mrb[0].mxu0
          %v5650 = vadd.f32 %v5265, %v5649
          %v5651 = vpop.f32.mrb[0].mxu0
          %5652 = vmatprep.mubr.f32.mxu0 %v4056
          %5653 = vmatmul.mubr.f32.gmra.mrb[0].mxu0 %v4055
          %v5654 = vpop.f32.mrb[0].mxu0
          %v5655 = vadd.f32 %v5270, %v5654
          %v5656 = vpop.f32.mrb[0].mxu0
          %5657 = vmatprep.mubr.f32.mxu0 %v4064
          %5658 = vmatmul.mubr.f32.gmra.mrb[0].mxu0 %v4063
          %v5659 = vpop.f32.mrb[0].mxu0
          %v5660 = vadd.f32 %v5275, %v5659
          %v5661 = vpop.f32.mrb[0].mxu0
          %5662 = vmatprep.mubr.f32.mxu0 %v4072
          %5663 = vmatmul.mubr.f32.gmra.mrb[0].mxu0 %v4071
          %v5664 = vpop.f32.mrb[0].mxu0
          %v5665 = vadd.f32 %v5280, %v5664
          %v5666 = vpop.f32.mrb[0].mxu0
          %5667 = vmatprep.mubr.f32.mxu0 %v4080
          %5668 = vmatmul.mubr.f32.gmra.mrb[0].mxu0 %v4079
          %v5669 = vpop.f32.mrb[0].mxu0
          %v5670 = vadd.f32 %v5285, %v5669
          %v5671 = vpop.f32.mrb[0].mxu0
          %5672 = vmatprep.mubr.f32.mxu0 %v4088
          %5673 = vmatmul.mubr.f32.gmra.mrb[0].mxu0 %v4087
          %v5674 = vpop.f32.mrb[0].mxu0
          %v5675 = vadd.f32 %v5290, %v5674
          %v5676 = vpop.f32.mrb[0].mxu0
          %5677 = vmatprep.mubr.f32.mxu0 %v4096
          %5678 = vmatmul.mubr.f32.gmra.mrb[0].mxu0 %v4095
          %v5679 = vpop.f32.mrb[0].mxu0
          %v5680 = vadd.f32 %v5295, %v5679
          %v5681 = vpop.f32.mrb[0].mxu0
          %5682 = vmatprep.mubr.f32.mxu0 %v4104
          %5683 = vmatmul.mubr.f32.gmra.mrb[0].mxu0 %v4103
          %v5684 = vpop.f32.mrb[0].mxu0
          %v5685 = vadd.f32 %v5300, %v5684
          %v5686 = vpop.f32.mrb[0].mxu0
          %5687 = vmatprep.mubr.f32.mxu0 %v4112
          %5688 = vmatmul.mubr.f32.gmra.mrb[0].mxu0 %v4111
          %v5689 = vpop.f32.mrb[0].mxu0
          %v5690 = vadd.f32 %v5305, %v5689
          %v5691 = vpop.f32.mrb[0].mxu0
          %5692 = vmatprep.mubr.f32.mxu0 %v4120
          %5693 = vmatmul.mubr.f32.gmra.mrb[0].mxu0 %v4119
          %v5694 = vpop.f32.mrb[0].mxu0
          %v5695 = vadd.f32 %v5310, %v5694
          %v5696 = vpop.f32.mrb[0].mxu0
          %5697 = vmatprep.mubr.f32.mxu0 %v4128
          %5698 = vmatmul.mubr.f32.gmra.mrb[0].mxu0 %v4127
          %v5699 = vpop.f32.mrb[0].mxu0
          %v5700 = vadd.f32 %v5315, %v5699
          %v5701 = vpop.f32.mrb[0].mxu0
          %5702 = vmatprep.mubr.f32.mxu0 %v4136
          %5703 = vmatmul.mubr.f32.gmra.mrb[0].mxu0 %v4135
          %v5704 = vpop.f32.mrb[0].mxu0
          %v5705 = vadd.f32 %v5320, %v5704
          %v5706 = vpop.f32.mrb[0].mxu0
          %5707 = vmatprep.mubr.f32.mxu0 %v4144
          %5708 = vmatmul.mubr.f32.gmra.mrb[0].mxu0 %v4143
          %v5709 = vpop.f32.mrb[0].mxu0
          %v5710 = vadd.f32 %v5325, %v5709
          %v5711 = vpop.f32.mrb[0].mxu0
          %5712 = vmatprep.mubr.f32.mxu0 %v4152
          %5713 = vmatmul.mubr.f32.gmra.mrb[0].mxu0 %v4151
          %v5714 = vpop.f32.mrb[0].mxu0
          %v5715 = vadd.f32 %v5330, %v5714
          %v5716 = vpop.f32.mrb[0].mxu0
          %5717 = vmatprep.mubr.f32.mxu0 %v4160
          %5718 = vmatmul.mubr.f32.gmra.mrb[0].mxu0 %v4159
          %v5719 = vpop.f32.mrb[0].mxu0
          %v5720 = vadd.f32 %v5335, %v5719
          %v5721 = vpop.f32.mrb[0].mxu0
          %5722 = vmatprep.mubr.f32.mxu0 %v4168
          %5723 = vmatmul.mubr.f32.gmra.mrb[0].mxu0 %v4167
          %v5724 = vpop.f32.mrb[0].mxu0
          %v5725 = vadd.f32 %v5340, %v5724
          %v5726 = vpop.f32.mrb[0].mxu0
          %5727 = vmatprep.mubr.f32.mxu0 %v4176
          %5728 = vmatmul.mubr.f32.gmra.mrb[0].mxu0 %v4175
          %v5729 = vpop.f32.mrb[0].mxu0
          %v5730 = vadd.f32 %v5345, %v5729
          %v5731 = vpop.f32.mrb[0].mxu0
          %5732 = vmatprep.mubr.f32.mxu0 %v4184
          %5733 = vmatmul.mubr.f32.gmra.mrb[0].mxu0 %v4183
          %v5734 = vpop.f32.mrb[0].mxu0
          %v5735 = vadd.f32 %v5350, %v5734
          %v5736 = vpop.f32.mrb[0].mxu0
          %5737 = vmatprep.mubr.f32.mxu0 %v4192
          %5738 = vmatmul.mubr.f32.gmra.mrb[0].mxu0 %v4191
          %v5739 = vpop.f32.mrb[0].mxu0
          %v5740 = vadd.f32 %v5355, %v5739
          %v5741 = vpop.f32.mrb[0].mxu0
          %5742 = vmatprep.mubr.f32.mxu0 %v4200
          %5743 = vmatmul.mubr.f32.gmra.mrb[0].mxu0 %v4199
          %v5744 = vpop.f32.mrb[0].mxu0
          %v5745 = vadd.f32 %v5360, %v5744
          %v5746 = vpop.f32.mrb[0].mxu0
          %5747 = vmatprep.mubr.f32.mxu0 %v4208
          %5748 = vmatmul.mubr.f32.gmra.mrb[0].mxu0 %v4207
          %v5749 = vpop.f32.mrb[0].mxu0
          %v5750 = vadd.f32 %v5365, %v5749
          %v5751 = vpop.f32.mrb[0].mxu0
          %5752 = vmatprep.mubr.f32.mxu0 %v4216
          %5753 = vmatmul.mubr.f32.gmra.mrb[0].mxu0 %v4215
          %v5754 = vpop.f32.mrb[0].mxu0
          %v5755 = vadd.f32 %v5370, %v5754
          %v5756 = vpop.f32.mrb[0].mxu0
          %5757 = vdwg.mxu0
          %5758 = vmatprep.subr.mxu0 0.0
          %5759 = vmatpush1.msra.mxu0 %v3675
          %5760 = vmatprep.subr.mxu0 0.0
          %5761 = vmatpush1.msra.mxu0 %v3676
          %5762 = vmatprep.subr.mxu0 0.0
          %5763 = vmatpush1.msra.mxu0 %v3677
          %5764 = vmatprep.subr.mxu0 0.0
          %5765 = vmatpush1.msra.mxu0 %v3678
          %5766 = vmatprep.subr.mxu0 0.0
          %5767 = vmatpush1.msra.mxu0 %v3679
          %5768 = vmatprep.subr.mxu0 0.0
          %5769 = vmatpush1.msra.mxu0 %v3680
          %5770 = vmatprep.subr.mxu0 0.0
          %5771 = vmatpush1.msra.mxu0 %v3681
          %5772 = vmatprep.subr.mxu0 0.0
          %5773 = vmatpush1.msra.mxu0 %v3682
          %5774 = vmatprep.subr.mxu0 0.0
          %5775 = vmatpush1.msra.mxu0 %v3683
          %5776 = vmatprep.subr.mxu0 0.0
          %5777 = vmatpush1.msra.mxu0 %v3684
          %5778 = vmatprep.subr.mxu0 0.0
          %5779 = vmatpush1.msra.mxu0 %v3685
          %5780 = vmatprep.subr.mxu0 0.0
          %5781 = vmatpush1.msra.mxu0 %v3686
          %5782 = vmatprep.subr.mxu0 0.0
          %5783 = vmatpush1.msra.mxu0 %v3687
          %5784 = vmatprep.subr.mxu0 0.0
          %5785 = vmatpush1.msra.mxu0 %v3688
          %5786 = vmatprep.subr.mxu0 0.0
          %5787 = vmatpush1.msra.mxu0 %v3689
          %5788 = vmatprep.subr.mxu0 0.0
          %5789 = vmatpush1.msra.mxu0 %v3690
          %5790 = vmatprep.subr.mxu0 0.0
          %5791 = vmatpush1.msra.mxu0 %v3691
          %5792 = vmatprep.subr.mxu0 0.0
          %5793 = vmatpush1.msra.mxu0 %v3692
          %5794 = vmatprep.subr.mxu0 0.0
          %5795 = vmatpush1.msra.mxu0 %v3693
          %5796 = vmatprep.subr.mxu0 0.0
          %5797 = vmatpush1.msra.mxu0 %v3694
          %5798 = vmatprep.subr.mxu0 0.0
          %5799 = vmatpush1.msra.mxu0 %v3695
          %5800 = vmatprep.subr.mxu0 0.0
          %5801 = vmatpush1.msra.mxu0 %v3696
          %5802 = vmatprep.subr.mxu0 0.0
          %5803 = vmatpush1.msra.mxu0 %v3697
          %5804 = vmatprep.subr.mxu0 0.0
          %5805 = vmatpush1.msra.mxu0 %v3698
          %5806 = vmatprep.subr.mxu0 0.0
          %5807 = vmatpush1.msra.mxu0 %v3699
          %5808 = vmatprep.subr.mxu0 0.0
          %5809 = vmatpush1.msra.mxu0 %v3700
          %5810 = vmatprep.subr.mxu0 0.0
          %5811 = vmatpush1.msra.mxu0 %v3701
          %5812 = vmatprep.subr.mxu0 0.0
          %5813 = vmatpush1.msra.mxu0 %v3702
          %5814 = vmatprep.subr.mxu0 0.0
          %5815 = vmatpush1.msra.mxu0 %v3703
          %5816 = vmatprep.subr.mxu0 0.0
          %5817 = vmatpush1.msra.mxu0 %v3704
          %5818 = vmatprep.subr.mxu0 0.0
          %5819 = vmatpush1.msra.mxu0 %v3705
          %5820 = vmatprep.subr.mxu0 0.0
          %5821 = vmatpush1.msra.mxu0 %v3706
          %5822 = vmatprep.mubr.f32.mxu0 %v3714
          %5823 = vmatmul.mubr.f32.gmra.mrb[0].mxu0 %v3713
          %v5824 = vpop.f32.mrb[0].mxu0
          %v5825 = vadd.f32 %v5440, %v5824
          %v5826 = vpop.f32.mrb[0].mxu0
          %5827 = vmatprep.mubr.f32.mxu0 %v3722
          %5828 = vmatmul.mubr.f32.gmra.mrb[0].mxu0 %v3721
          %v5829 = vpop.f32.mrb[0].mxu0
          %v5830 = vadd.f32 %v5445, %v5829
          %v5831 = vpop.f32.mrb[0].mxu0
          %5832 = vmatprep.mubr.f32.mxu0 %v3730
          %5833 = vmatmul.mubr.f32.gmra.mrb[0].mxu0 %v3729
          %v5834 = vpop.f32.mrb[0].mxu0
          %v5835 = vadd.f32 %v5450, %v5834
          %v5836 = vpop.f32.mrb[0].mxu0
          %5837 = vmatprep.mubr.f32.mxu0 %v3738
          %5838 = vmatmul.mubr.f32.gmra.mrb[0].mxu0 %v3737
          %v5839 = vpop.f32.mrb[0].mxu0
          %v5840 = vadd.f32 %v5455, %v5839
          %v5841 = vpop.f32.mrb[0].mxu0
          %5842 = vmatprep.mubr.f32.mxu0 %v3746
          %5843 = vmatmul.mubr.f32.gmra.mrb[0].mxu0 %v3745
          %v5844 = vpop.f32.mrb[0].mxu0
          %v5845 = vadd.f32 %v5460, %v5844
          %v5846 = vpop.f32.mrb[0].mxu0
          %5847 = vmatprep.mubr.f32.mxu0 %v3754
          %5848 = vmatmul.mubr.f32.gmra.mrb[0].mxu0 %v3753
          %v5849 = vpop.f32.mrb[0].mxu0
          %v5850 = vadd.f32 %v5465, %v5849
          %v5851 = vpop.f32.mrb[0].mxu0
          %5852 = vmatprep.mubr.f32.mxu0 %v3762
          %5853 = vmatmul.mubr.f32.gmra.mrb[0].mxu0 %v3761
          %v5854 = vpop.f32.mrb[0].mxu0
          %v5855 = vadd.f32 %v5470, %v5854
          %v5856 = vpop.f32.mrb[0].mxu0
          %5857 = vmatprep.mubr.f32.mxu0 %v3770
          %5858 = vmatmul.mubr.f32.gmra.mrb[0].mxu0 %v3769
          %v5859 = vpop.f32.mrb[0].mxu0
          %v5860 = vadd.f32 %v5475, %v5859
          %v5861 = vpop.f32.mrb[0].mxu0
          %5862 = vmatprep.mubr.f32.mxu0 %v3778
          %5863 = vmatmul.mubr.f32.gmra.mrb[0].mxu0 %v3777
          %v5864 = vpop.f32.mrb[0].mxu0
          %v5865 = vadd.f32 %v5480, %v5864
          %v5866 = vpop.f32.mrb[0].mxu0
          %5867 = vmatprep.mubr.f32.mxu0 %v3786
          %5868 = vmatmul.mubr.f32.gmra.mrb[0].mxu0 %v3785
          %v5869 = vpop.f32.mrb[0].mxu0
          %v5870 = vadd.f32 %v5485, %v5869
          %v5871 = vpop.f32.mrb[0].mxu0
          %5872 = vmatprep.mubr.f32.mxu0 %v3794
          %5873 = vmatmul.mubr.f32.gmra.mrb[0].mxu0 %v3793
          %v5874 = vpop.f32.mrb[0].mxu0
          %v5875 = vadd.f32 %v5490, %v5874
          %v5876 = vpop.f32.mrb[0].mxu0
          %5877 = vmatprep.mubr.f32.mxu0 %v3802
          %5878 = vmatmul.mubr.f32.gmra.mrb[0].mxu0 %v3801
          %v5879 = vpop.f32.mrb[0].mxu0
          %v5880 = vadd.f32 %v5495, %v5879
          %v5881 = vpop.f32.mrb[0].mxu0
          %5882 = vmatprep.mubr.f32.mxu0 %v3810
          %5883 = vmatmul.mubr.f32.gmra.mrb[0].mxu0 %v3809
          %v5884 = vpop.f32.mrb[0].mxu0
          %v5885 = vadd.f32 %v5500, %v5884
          %v5886 = vpop.f32.mrb[0].mxu0
          %5887 = vmatprep.mubr.f32.mxu0 %v3818
          %5888 = vmatmul.mubr.f32.gmra.mrb[0].mxu0 %v3817
          %v5889 = vpop.f32.mrb[0].mxu0
          %v5890 = vadd.f32 %v5505, %v5889
          %v5891 = vpop.f32.mrb[0].mxu0
          %5892 = vmatprep.mubr.f32.mxu0 %v3826
          %5893 = vmatmul.mubr.f32.gmra.mrb[0].mxu0 %v3825
          %v5894 = vpop.f32.mrb[0].mxu0
          %v5895 = vadd.f32 %v5510, %v5894
          %v5896 = vpop.f32.mrb[0].mxu0
          %5897 = vmatprep.mubr.f32.mxu0 %v3834
          %5898 = vmatmul.mubr.f32.gmra.mrb[0].mxu0 %v3833
          %v5899 = vpop.f32.mrb[0].mxu0
          %v5900 = vadd.f32 %v5515, %v5899
          %v5901 = vpop.f32.mrb[0].mxu0
          %5902 = vmatprep.mubr.f32.mxu0 %v3842
          %5903 = vmatmul.mubr.f32.gmra.mrb[0].mxu0 %v3841
          %v5904 = vpop.f32.mrb[0].mxu0
          %v5905 = vadd.f32 %v5520, %v5904
          %v5906 = vpop.f32.mrb[0].mxu0
          %5907 = vmatprep.mubr.f32.mxu0 %v3850
          %5908 = vmatmul.mubr.f32.gmra.mrb[0].mxu0 %v3849
          %v5909 = vpop.f32.mrb[0].mxu0
          %v5910 = vadd.f32 %v5525, %v5909
          %v5911 = vpop.f32.mrb[0].mxu0
          %5912 = vmatprep.mubr.f32.mxu0 %v3858
          %5913 = vmatmul.mubr.f32.gmra.mrb[0].mxu0 %v3857
          %v5914 = vpop.f32.mrb[0].mxu0
          %v5915 = vadd.f32 %v5530, %v5914
          %v5916 = vpop.f32.mrb[0].mxu0
          %5917 = vmatprep.mubr.f32.mxu0 %v3866
          %5918 = vmatmul.mubr.f32.gmra.mrb[0].mxu0 %v3865
          %v5919 = vpop.f32.mrb[0].mxu0
          %v5920 = vadd.f32 %v5535, %v5919
          %v5921 = vpop.f32.mrb[0].mxu0
          %5922 = vmatprep.mubr.f32.mxu0 %v3874
          %5923 = vmatmul.mubr.f32.gmra.mrb[0].mxu0 %v3873
          %v5924 = vpop.f32.mrb[0].mxu0
          %v5925 = vadd.f32 %v5540, %v5924
          %v5926 = vpop.f32.mrb[0].mxu0
          %5927 = vmatprep.mubr.f32.mxu0 %v3882
          %5928 = vmatmul.mubr.f32.gmra.mrb[0].mxu0 %v3881
          %v5929 = vpop.f32.mrb[0].mxu0
          %v5930 = vadd.f32 %v5545, %v5929
          %v5931 = vpop.f32.mrb[0].mxu0
          %5932 = vmatprep.mubr.f32.mxu0 %v3890
          %5933 = vmatmul.mubr.f32.gmra.mrb[0].mxu0 %v3889
          %v5934 = vpop.f32.mrb[0].mxu0
          %v5935 = vadd.f32 %v5550, %v5934
          %v5936 = vpop.f32.mrb[0].mxu0
          %5937 = vmatprep.mubr.f32.mxu0 %v3898
          %5938 = vmatmul.mubr.f32.gmra.mrb[0].mxu0 %v3897
          %v5939 = vpop.f32.mrb[0].mxu0
          %v5940 = vadd.f32 %v5555, %v5939
          %v5941 = vpop.f32.mrb[0].mxu0
          %5942 = vmatprep.mubr.f32.mxu0 %v3906
          %5943 = vmatmul.mubr.f32.gmra.mrb[0].mxu0 %v3905
          %v5944 = vpop.f32.mrb[0].mxu0
          %v5945 = vadd.f32 %v5560, %v5944
          %v5946 = vpop.f32.mrb[0].mxu0
          %5947 = vmatprep.mubr.f32.mxu0 %v3914
          %5948 = vmatmul.mubr.f32.gmra.mrb[0].mxu0 %v3913
          %v5949 = vpop.f32.mrb[0].mxu0
          %v5950 = vadd.f32 %v5565, %v5949
          %v5951 = vpop.f32.mrb[0].mxu0
          %5952 = vmatprep.mubr.f32.mxu0 %v3922
          %5953 = vmatmul.mubr.f32.gmra.mrb[0].mxu0 %v3921
          %v5954 = vpop.f32.mrb[0].mxu0
          %v5955 = vadd.f32 %v5570, %v5954
          %v5956 = vpop.f32.mrb[0].mxu0
          %5957 = vmatprep.mubr.f32.mxu0 %v3930
          %5958 = vmatmul.mubr.f32.gmra.mrb[0].mxu0 %v3929
          %v5959 = vpop.f32.mrb[0].mxu0
          %v5960 = vadd.f32 %v5575, %v5959
          %v5961 = vpop.f32.mrb[0].mxu0
          %5962 = vmatprep.mubr.f32.mxu0 %v3938
          %5963 = vmatmul.mubr.f32.gmra.mrb[0].mxu0 %v3937
          %v5964 = vpop.f32.mrb[0].mxu0
          %v5965 = vadd.f32 %v5580, %v5964
          %v5966 = vpop.f32.mrb[0].mxu0
          %5967 = vmatprep.mubr.f32.mxu0 %v3946
          %5968 = vmatmul.mubr.f32.gmra.mrb[0].mxu0 %v3945
          %v5969 = vpop.f32.mrb[0].mxu0
          %v5970 = vadd.f32 %v5585, %v5969
          %v5971 = vpop.f32.mrb[0].mxu0
          %5972 = vmatprep.mubr.f32.mxu0 %v3954
          %5973 = vmatmul.mubr.f32.gmra.mrb[0].mxu0 %v3953
          %v5974 = vpop.f32.mrb[0].mxu0
          %v5975 = vadd.f32 %v5590, %v5974
          %v5976 = vpop.f32.mrb[0].mxu0
          %5977 = vmatprep.mubr.f32.mxu0 %v3962
          %5978 = vmatmul.mubr.f32.gmra.mrb[0].mxu0 %v3961
          %v5979 = vpop.f32.mrb[0].mxu0
          %v5980 = vadd.f32 %v5595, %v5979
          %v5981 = vpop.f32.mrb[0].mxu0
          %5982 = vmatprep.mubr.f32.mxu0 %v3970
          %5983 = vmatmul.mubr.f32.gmra.mrb[0].mxu0 %v3969
          %v5984 = vpop.f32.mrb[0].mxu0
          %v5985 = vadd.f32 %v5600, %v5984
          %v5986 = vpop.f32.mrb[0].mxu0
          %5987 = vmatprep.mubr.f32.mxu0 %v3978
          %5988 = vmatmul.mubr.f32.gmra.mrb[0].mxu0 %v3977
          %v5989 = vpop.f32.mrb[0].mxu0
          %v5990 = vadd.f32 %v5605, %v5989
          %v5991 = vpop.f32.mrb[0].mxu0
          %5992 = vmatprep.mubr.f32.mxu0 %v3986
          %5993 = vmatmul.mubr.f32.gmra.mrb[0].mxu0 %v3985
          %v5994 = vpop.f32.mrb[0].mxu0
          %v5995 = vadd.f32 %v5610, %v5994
          %v5996 = vpop.f32.mrb[0].mxu0
          %5997 = vmatprep.mubr.f32.mxu0 %v3994
          %5998 = vmatmul.mubr.f32.gmra.mrb[0].mxu0 %v3993
          %v5999 = vpop.f32.mrb[0].mxu0
          %v6000 = vadd.f32 %v5615, %v5999
          %v6001 = vpop.f32.mrb[0].mxu0
          %6002 = vmatprep.mubr.f32.mxu0 %v4002
          %6003 = vmatmul.mubr.f32.gmra.mrb[0].mxu0 %v4001
          %v6004 = vpop.f32.mrb[0].mxu0
          %v6005 = vadd.f32 %v5620, %v6004
          %v6006 = vpop.f32.mrb[0].mxu0
          %6007 = vmatprep.mubr.f32.mxu0 %v4010
          %6008 = vmatmul.mubr.f32.gmra.mrb[0].mxu0 %v4009
          %v6009 = vpop.f32.mrb[0].mxu0
          %v6010 = vadd.f32 %v5625, %v6009
          %v6011 = vpop.f32.mrb[0].mxu0
          %6012 = vmatprep.mubr.f32.mxu0 %v4018
          %6013 = vmatmul.mubr.f32.gmra.mrb[0].mxu0 %v4017
          %v6014 = vpop.f32.mrb[0].mxu0
          %v6015 = vadd.f32 %v5630, %v6014
          %v6016 = vpop.f32.mrb[0].mxu0
          %6017 = vmatprep.mubr.f32.mxu0 %v4026
          %6018 = vmatmul.mubr.f32.gmra.mrb[0].mxu0 %v4025
          %v6019 = vpop.f32.mrb[0].mxu0
          %v6020 = vadd.f32 %v5635, %v6019
          %v6021 = vpop.f32.mrb[0].mxu0
          %6022 = vmatprep.mubr.f32.mxu0 %v4034
          %6023 = vmatmul.mubr.f32.gmra.mrb[0].mxu0 %v4033
          %v6024 = vpop.f32.mrb[0].mxu0
          %v6025 = vadd.f32 %v5640, %v6024
          %v6026 = vpop.f32.mrb[0].mxu0
          %6027 = vmatprep.mubr.f32.mxu0 %v4042
          %6028 = vmatmul.mubr.f32.gmra.mrb[0].mxu0 %v4041
          %v6029 = vpop.f32.mrb[0].mxu0
          %v6030 = vadd.f32 %v5645, %v6029
          %v6031 = vpop.f32.mrb[0].mxu0
          %6032 = vmatprep.mubr.f32.mxu0 %v4050
          %6033 = vmatmul.mubr.f32.gmra.mrb[0].mxu0 %v4049
          %v6034 = vpop.f32.mrb[0].mxu0
          %v6035 = vadd.f32 %v5650, %v6034
          %v6036 = vpop.f32.mrb[0].mxu0
          %6037 = vmatprep.mubr.f32.mxu0 %v4058
          %6038 = vmatmul.mubr.f32.gmra.mrb[0].mxu0 %v4057
          %v6039 = vpop.f32.mrb[0].mxu0
          %v6040 = vadd.f32 %v5655, %v6039
          %v6041 = vpop.f32.mrb[0].mxu0
          %6042 = vmatprep.mubr.f32.mxu0 %v4066
          %6043 = vmatmul.mubr.f32.gmra.mrb[0].mxu0 %v4065
          %v6044 = vpop.f32.mrb[0].mxu0
          %v6045 = vadd.f32 %v5660, %v6044
          %v6046 = vpop.f32.mrb[0].mxu0
          %6047 = vmatprep.mubr.f32.mxu0 %v4074
          %6048 = vmatmul.mubr.f32.gmra.mrb[0].mxu0 %v4073
          %v6049 = vpop.f32.mrb[0].mxu0
          %v6050 = vadd.f32 %v5665, %v6049
          %v6051 = vpop.f32.mrb[0].mxu0
          %6052 = vmatprep.mubr.f32.mxu0 %v4082
          %6053 = vmatmul.mubr.f32.gmra.mrb[0].mxu0 %v4081
          %v6054 = vpop.f32.mrb[0].mxu0
          %v6055 = vadd.f32 %v5670, %v6054
          %v6056 = vpop.f32.mrb[0].mxu0
          %6057 = vmatprep.mubr.f32.mxu0 %v4090
          %6058 = vmatmul.mubr.f32.gmra.mrb[0].mxu0 %v4089
          %v6059 = vpop.f32.mrb[0].mxu0
          %v6060 = vadd.f32 %v5675, %v6059
          %v6061 = vpop.f32.mrb[0].mxu0
          %6062 = vmatprep.mubr.f32.mxu0 %v4098
          %6063 = vmatmul.mubr.f32.gmra.mrb[0].mxu0 %v4097
          %v6064 = vpop.f32.mrb[0].mxu0
          %v6065 = vadd.f32 %v5680, %v6064
          %v6066 = vpop.f32.mrb[0].mxu0
          %6067 = vmatprep.mubr.f32.mxu0 %v4106
          %6068 = vmatmul.mubr.f32.gmra.mrb[0].mxu0 %v4105
          %v6069 = vpop.f32.mrb[0].mxu0
          %v6070 = vadd.f32 %v5685, %v6069
          %v6071 = vpop.f32.mrb[0].mxu0
          %6072 = vmatprep.mubr.f32.mxu0 %v4114
          %6073 = vmatmul.mubr.f32.gmra.mrb[0].mxu0 %v4113
          %v6074 = vpop.f32.mrb[0].mxu0
          %v6075 = vadd.f32 %v5690, %v6074
          %v6076 = vpop.f32.mrb[0].mxu0
          %6077 = vmatprep.mubr.f32.mxu0 %v4122
          %6078 = vmatmul.mubr.f32.gmra.mrb[0].mxu0 %v4121
          %v6079 = vpop.f32.mrb[0].mxu0
          %v6080 = vadd.f32 %v5695, %v6079
          %v6081 = vpop.f32.mrb[0].mxu0
          %6082 = vmatprep.mubr.f32.mxu0 %v4130
          %6083 = vmatmul.mubr.f32.gmra.mrb[0].mxu0 %v4129
          %v6084 = vpop.f32.mrb[0].mxu0
          %v6085 = vadd.f32 %v5700, %v6084
          %v6086 = vpop.f32.mrb[0].mxu0
          %6087 = vmatprep.mubr.f32.mxu0 %v4138
          %6088 = vmatmul.mubr.f32.gmra.mrb[0].mxu0 %v4137
          %v6089 = vpop.f32.mrb[0].mxu0
          %v6090 = vadd.f32 %v5705, %v6089
          %v6091 = vpop.f32.mrb[0].mxu0
          %6092 = vmatprep.mubr.f32.mxu0 %v4146
          %6093 = vmatmul.mubr.f32.gmra.mrb[0].mxu0 %v4145
          %v6094 = vpop.f32.mrb[0].mxu0
          %v6095 = vadd.f32 %v5710, %v6094
          %v6096 = vpop.f32.mrb[0].mxu0
          %6097 = vmatprep.mubr.f32.mxu0 %v4154
          %6098 = vmatmul.mubr.f32.gmra.mrb[0].mxu0 %v4153
          %v6099 = vpop.f32.mrb[0].mxu0
          %v6100 = vadd.f32 %v5715, %v6099
          %v6101 = vpop.f32.mrb[0].mxu0
          %6102 = vmatprep.mubr.f32.mxu0 %v4162
          %6103 = vmatmul.mubr.f32.gmra.mrb[0].mxu0 %v4161
          %v6104 = vpop.f32.mrb[0].mxu0
          %v6105 = vadd.f32 %v5720, %v6104
          %v6106 = vpop.f32.mrb[0].mxu0
          %6107 = vmatprep.mubr.f32.mxu0 %v4170
          %6108 = vmatmul.mubr.f32.gmra.mrb[0].mxu0 %v4169
          %v6109 = vpop.f32.mrb[0].mxu0
          %v6110 = vadd.f32 %v5725, %v6109
          %v6111 = vpop.f32.mrb[0].mxu0
          %6112 = vmatprep.mubr.f32.mxu0 %v4178
          %6113 = vmatmul.mubr.f32.gmra.mrb[0].mxu0 %v4177
          %v6114 = vpop.f32.mrb[0].mxu0
          %v6115 = vadd.f32 %v5730, %v6114
          %v6116 = vpop.f32.mrb[0].mxu0
          %6117 = vmatprep.mubr.f32.mxu0 %v4186
          %6118 = vmatmul.mubr.f32.gmra.mrb[0].mxu0 %v4185
          %v6119 = vpop.f32.mrb[0].mxu0
          %v6120 = vadd.f32 %v5735, %v6119
          %v6121 = vpop.f32.mrb[0].mxu0
          %6122 = vmatprep.mubr.f32.mxu0 %v4194
          %6123 = vmatmul.mubr.f32.gmra.mrb[0].mxu0 %v4193
          %v6124 = vpop.f32.mrb[0].mxu0
          %v6125 = vadd.f32 %v5740, %v6124
          %v6126 = vpop.f32.mrb[0].mxu0
          %6127 = vmatprep.mubr.f32.mxu0 %v4202
          %6128 = vmatmul.mubr.f32.gmra.mrb[0].mxu0 %v4201
          %v6129 = vpop.f32.mrb[0].mxu0
          %v6130 = vadd.f32 %v5745, %v6129
          %v6131 = vpop.f32.mrb[0].mxu0
          %6132 = vmatprep.mubr.f32.mxu0 %v4210
          %6133 = vmatmul.mubr.f32.gmra.mrb[0].mxu0 %v4209
          %v6134 = vpop.f32.mrb[0].mxu0
          %v6135 = vadd.f32 %v5750, %v6134
          %v6136 = vpop.f32.mrb[0].mxu0
          %6137 = vmatprep.mubr.f32.mxu0 %v4218
          %6138 = vmatmul.mubr.f32.gmra.mrb[0].mxu0 %v4217
          %v6139 = vpop.f32.mrb[0].mxu0
          %v6140 = vadd.f32 %v5755, %v6139
          %v6141 = vpop.f32.mrb[0].mxu0
          %6142 = vdwg.mxu0
          %v6143 = vmax.f32 %v5825, 0.0
          %v6144 = vmax.f32 %v5830, 0.0
          %v6145 = vmax.f32 %v5835, 0.0
          %v6146 = vmax.f32 %v5840, 0.0
          %v6147 = vmax.f32 %v5845, 0.0
          %v6148 = vmax.f32 %v5850, 0.0
          %v6149 = vmax.f32 %v5855, 0.0
          %v6150 = vmax.f32 %v5860, 0.0
          %v6151 = vmax.f32 %v5865, 0.0
          %v6152 = vmax.f32 %v5870, 0.0
          %v6153 = vmax.f32 %v5875, 0.0
          %v6154 = vmax.f32 %v5880, 0.0
          %v6155 = vmax.f32 %v5885, 0.0
          %v6156 = vmax.f32 %v5890, 0.0
          %v6157 = vmax.f32 %v5895, 0.0
          %v6158 = vmax.f32 %v5900, 0.0
          %v6159 = vmax.f32 %v5905, 0.0
          %v6160 = vmax.f32 %v5910, 0.0
          %v6161 = vmax.f32 %v5915, 0.0
          %v6162 = vmax.f32 %v5920, 0.0
          %v6163 = vmax.f32 %v5925, 0.0
          %v6164 = vmax.f32 %v5930, 0.0
          %v6165 = vmax.f32 %v5935, 0.0
          %v6166 = vmax.f32 %v5940, 0.0
          %v6167 = vmax.f32 %v5945, 0.0
          %v6168 = vmax.f32 %v5950, 0.0
          %v6169 = vmax.f32 %v5955, 0.0
          %v6170 = vmax.f32 %v5960, 0.0
          %v6171 = vmax.f32 %v5965, 0.0
          %v6172 = vmax.f32 %v5970, 0.0
          %v6173 = vmax.f32 %v5975, 0.0
          %v6174 = vmax.f32 %v5980, 0.0
          %v6175 = vmax.f32 %v5985, 0.0
          %v6176 = vmax.f32 %v5990, 0.0
          %v6177 = vmax.f32 %v5995, 0.0
          %v6178 = vmax.f32 %v6000, 0.0
          %v6179 = vmax.f32 %v6005, 0.0
          %v6180 = vmax.f32 %v6010, 0.0
          %v6181 = vmax.f32 %v6015, 0.0
          %v6182 = vmax.f32 %v6020, 0.0
          %v6183 = vmax.f32 %v6025, 0.0
          %v6184 = vmax.f32 %v6030, 0.0
          %v6185 = vmax.f32 %v6035, 0.0
          %v6186 = vmax.f32 %v6040, 0.0
          %v6187 = vmax.f32 %v6045, 0.0
          %v6188 = vmax.f32 %v6050, 0.0
          %v6189 = vmax.f32 %v6055, 0.0
          %v6190 = vmax.f32 %v6060, 0.0
          %v6191 = vmax.f32 %v6065, 0.0
          %v6192 = vmax.f32 %v6070, 0.0
          %v6193 = vmax.f32 %v6075, 0.0
          %v6194 = vmax.f32 %v6080, 0.0
          %v6195 = vmax.f32 %v6085, 0.0
          %v6196 = vmax.f32 %v6090, 0.0
          %v6197 = vmax.f32 %v6095, 0.0
          %v6198 = vmax.f32 %v6100, 0.0
          %v6199 = vmax.f32 %v6105, 0.0
          %v6200 = vmax.f32 %v6110, 0.0
          %v6201 = vmax.f32 %v6115, 0.0
          %v6202 = vmax.f32 %v6120, 0.0
          %v6203 = vmax.f32 %v6125, 0.0
          %v6204 = vmax.f32 %v6130, 0.0
          %v6205 = vmax.f32 %v6135, 0.0
          %v6206 = vmax.f32 %v6140, 0.0
          %v6207 = vld [vmem:[#allocation7] sm:$0xff]
          %v6208 = vld [vmem:[#allocation7 + $0x8] sm:$0xff]
          %v6209 = vld [vmem:[#allocation7 + $0x10] sm:$0xff]
          %v6210 = vld [vmem:[#allocation7 + $0x18] sm:$0xff]
          %v6211 = vld [vmem:[#allocation7 + $0x20] sm:$0xff]
          %v6212 = vld [vmem:[#allocation7 + $0x28] sm:$0xff]
          %v6213 = vld [vmem:[#allocation7 + $0x30] sm:$0xff]
          %v6214 = vld [vmem:[#allocation7 + $0x38] sm:$0xff]
          %v6215 = vld [vmem:[#allocation7 + $0x40] sm:$0xff]
          %v6216 = vld [vmem:[#allocation7 + $0x48] sm:$0xff]
          %v6217 = vld [vmem:[#allocation7 + $0x50] sm:$0xff]
          %v6218 = vld [vmem:[#allocation7 + $0x58] sm:$0xff]
          %v6219 = vld [vmem:[#allocation7 + $0x60] sm:$0xff]
          %v6220 = vld [vmem:[#allocation7 + $0x68] sm:$0xff]
          %v6221 = vld [vmem:[#allocation7 + $0x70] sm:$0xff]
          %v6222 = vld [vmem:[#allocation7 + $0x78] sm:$0xff]
          %v6223 = vld [vmem:[#allocation7 + $0x80] sm:$0xff]
          %v6224 = vld [vmem:[#allocation7 + $0x88] sm:$0xff]
          %v6225 = vld [vmem:[#allocation7 + $0x90] sm:$0xff]
          %v6226 = vld [vmem:[#allocation7 + $0x98] sm:$0xff]
          %v6227 = vld [vmem:[#allocation7 + $0xa0] sm:$0xff]
          %v6228 = vld [vmem:[#allocation7 + $0xa8] sm:$0xff]
          %v6229 = vld [vmem:[#allocation7 + $0xb0] sm:$0xff]
          %v6230 = vld [vmem:[#allocation7 + $0xb8] sm:$0xff]
          %v6231 = vld [vmem:[#allocation7 + $0xc0] sm:$0xff]
          %v6232 = vld [vmem:[#allocation7 + $0xc8] sm:$0xff]
          %v6233 = vld [vmem:[#allocation7 + $0xd0] sm:$0xff]
          %v6234 = vld [vmem:[#allocation7 + $0xd8] sm:$0xff]
          %v6235 = vld [vmem:[#allocation7 + $0xe0] sm:$0xff]
          %v6236 = vld [vmem:[#allocation7 + $0xe8] sm:$0xff]
          %v6237 = vld [vmem:[#allocation7 + $0xf0] sm:$0xff]
          %v6238 = vld [vmem:[#allocation7 + $0xf8] sm:$0xff]
          %v6239 = vld [vmem:[#allocation7 + $0x100] sm:$0xff]
          %v6240 = vld [vmem:[#allocation7 + $0x108] sm:$0xff]
          %v6241 = vld [vmem:[#allocation7 + $0x110] sm:$0xff]
          %v6242 = vld [vmem:[#allocation7 + $0x118] sm:$0xff]
          %v6243 = vld [vmem:[#allocation7 + $0x120] sm:$0xff]
          %v6244 = vld [vmem:[#allocation7 + $0x128] sm:$0xff]
          %v6245 = vld [vmem:[#allocation7 + $0x130] sm:$0xff]
          %v6246 = vld [vmem:[#allocation7 + $0x138] sm:$0xff]
          %v6247 = vld [vmem:[#allocation7 + $0x140] sm:$0xff]
          %v6248 = vld [vmem:[#allocation7 + $0x148] sm:$0xff]
          %v6249 = vld [vmem:[#allocation7 + $0x150] sm:$0xff]
          %v6250 = vld [vmem:[#allocation7 + $0x158] sm:$0xff]
          %v6251 = vld [vmem:[#allocation7 + $0x160] sm:$0xff]
          %v6252 = vld [vmem:[#allocation7 + $0x168] sm:$0xff]
          %v6253 = vld [vmem:[#allocation7 + $0x170] sm:$0xff]
          %v6254 = vld [vmem:[#allocation7 + $0x178] sm:$0xff]
          %v6255 = vld [vmem:[#allocation7 + $0x180] sm:$0xff]
          %v6256 = vld [vmem:[#allocation7 + $0x188] sm:$0xff]
          %v6257 = vld [vmem:[#allocation7 + $0x190] sm:$0xff]
          %v6258 = vld [vmem:[#allocation7 + $0x198] sm:$0xff]
          %v6259 = vld [vmem:[#allocation7 + $0x1a0] sm:$0xff]
          %v6260 = vld [vmem:[#allocation7 + $0x1a8] sm:$0xff]
          %v6261 = vld [vmem:[#allocation7 + $0x1b0] sm:$0xff]
          %v6262 = vld [vmem:[#allocation7 + $0x1b8] sm:$0xff]
          %v6263 = vld [vmem:[#allocation7 + $0x1c0] sm:$0xff]
          %v6264 = vld [vmem:[#allocation7 + $0x1c8] sm:$0xff]
          %v6265 = vld [vmem:[#allocation7 + $0x1d0] sm:$0xff]
          %v6266 = vld [vmem:[#allocation7 + $0x1d8] sm:$0xff]
          %v6267 = vld [vmem:[#allocation7 + $0x1e0] sm:$0xff]
          %v6268 = vld [vmem:[#allocation7 + $0x1e8] sm:$0xff]
          %v6269 = vld [vmem:[#allocation7 + $0x1f0] sm:$0xff]
          %v6270 = vld [vmem:[#allocation7 + $0x1f8] sm:$0xff]
          %v6271 = vld [vmem:[#allocation7 + $0x200] sm:$0xff]
          %v6272 = vld [vmem:[#allocation7 + $0x208] sm:$0xff]
          %v6273 = vld [vmem:[#allocation7 + $0x210] sm:$0xff]
          %v6274 = vld [vmem:[#allocation7 + $0x218] sm:$0xff]
          %v6275 = vld [vmem:[#allocation7 + $0x220] sm:$0xff]
          %v6276 = vld [vmem:[#allocation7 + $0x228] sm:$0xff]
          %v6277 = vld [vmem:[#allocation7 + $0x230] sm:$0xff]
          %v6278 = vld [vmem:[#allocation7 + $0x238] sm:$0xff]
          %v6279 = vld [vmem:[#allocation7 + $0x240] sm:$0xff]
          %v6280 = vld [vmem:[#allocation7 + $0x248] sm:$0xff]
          %v6281 = vld [vmem:[#allocation7 + $0x250] sm:$0xff]
          %v6282 = vld [vmem:[#allocation7 + $0x258] sm:$0xff]
          %v6283 = vld [vmem:[#allocation7 + $0x260] sm:$0xff]
          %v6284 = vld [vmem:[#allocation7 + $0x268] sm:$0xff]
          %v6285 = vld [vmem:[#allocation7 + $0x270] sm:$0xff]
          %v6286 = vld [vmem:[#allocation7 + $0x278] sm:$0xff]
          %v6287 = vld [vmem:[#allocation7 + $0x280] sm:$0xff]
          %v6288 = vld [vmem:[#allocation7 + $0x288] sm:$0xff]
          %v6289 = vld [vmem:[#allocation7 + $0x290] sm:$0xff]
          %v6290 = vld [vmem:[#allocation7 + $0x298] sm:$0xff]
          %v6291 = vld [vmem:[#allocation7 + $0x2a0] sm:$0xff]
          %v6292 = vld [vmem:[#allocation7 + $0x2a8] sm:$0xff]
          %v6293 = vld [vmem:[#allocation7 + $0x2b0] sm:$0xff]
          %v6294 = vld [vmem:[#allocation7 + $0x2b8] sm:$0xff]
          %v6295 = vld [vmem:[#allocation7 + $0x2c0] sm:$0xff]
          %v6296 = vld [vmem:[#allocation7 + $0x2c8] sm:$0xff]
          %v6297 = vld [vmem:[#allocation7 + $0x2d0] sm:$0xff]
          %v6298 = vld [vmem:[#allocation7 + $0x2d8] sm:$0xff]
          %v6299 = vld [vmem:[#allocation7 + $0x2e0] sm:$0xff]
          %v6300 = vld [vmem:[#allocation7 + $0x2e8] sm:$0xff]
          %v6301 = vld [vmem:[#allocation7 + $0x2f0] sm:$0xff]
          %v6302 = vld [vmem:[#allocation7 + $0x2f8] sm:$0xff]
          %v6303 = vld [vmem:[#allocation7 + $0x300] sm:$0xff]
          %v6304 = vld [vmem:[#allocation7 + $0x308] sm:$0xff]
          %v6305 = vld [vmem:[#allocation7 + $0x310] sm:$0xff]
          %v6306 = vld [vmem:[#allocation7 + $0x318] sm:$0xff]
          %v6307 = vld [vmem:[#allocation7 + $0x320] sm:$0xff]
          %v6308 = vld [vmem:[#allocation7 + $0x328] sm:$0xff]
          %v6309 = vld [vmem:[#allocation7 + $0x330] sm:$0xff]
          %v6310 = vld [vmem:[#allocation7 + $0x338] sm:$0xff]
          %v6311 = vld [vmem:[#allocation7 + $0x340] sm:$0xff]
          %v6312 = vld [vmem:[#allocation7 + $0x348] sm:$0xff]
          %v6313 = vld [vmem:[#allocation7 + $0x350] sm:$0xff]
          %v6314 = vld [vmem:[#allocation7 + $0x358] sm:$0xff]
          %v6315 = vld [vmem:[#allocation7 + $0x360] sm:$0xff]
          %v6316 = vld [vmem:[#allocation7 + $0x368] sm:$0xff]
          %v6317 = vld [vmem:[#allocation7 + $0x370] sm:$0xff]
          %v6318 = vld [vmem:[#allocation7 + $0x378] sm:$0xff]
          %v6319 = vld [vmem:[#allocation7 + $0x380] sm:$0xff]
          %v6320 = vld [vmem:[#allocation7 + $0x388] sm:$0xff]
          %v6321 = vld [vmem:[#allocation7 + $0x390] sm:$0xff]
          %v6322 = vld [vmem:[#allocation7 + $0x398] sm:$0xff]
          %v6323 = vld [vmem:[#allocation7 + $0x3a0] sm:$0xff]
          %v6324 = vld [vmem:[#allocation7 + $0x3a8] sm:$0xff]
          %v6325 = vld [vmem:[#allocation7 + $0x3b0] sm:$0xff]
          %v6326 = vld [vmem:[#allocation7 + $0x3b8] sm:$0xff]
          %v6327 = vld [vmem:[#allocation7 + $0x3c0] sm:$0xff]
          %v6328 = vld [vmem:[#allocation7 + $0x3c8] sm:$0xff]
          %v6329 = vld [vmem:[#allocation7 + $0x3d0] sm:$0xff]
          %v6330 = vld [vmem:[#allocation7 + $0x3d8] sm:$0xff]
          %v6331 = vld [vmem:[#allocation7 + $0x3e0] sm:$0xff]
          %v6332 = vld [vmem:[#allocation7 + $0x3e8] sm:$0xff]
          %v6333 = vld [vmem:[#allocation7 + $0x3f0] sm:$0xff]
          %v6334 = vld [vmem:[#allocation7 + $0x3f8] sm:$0xff]
          %v6335 = vld [vmem:[%s10] sm:$0xff]
          %v6336 = vld [vmem:[%s10 + $0x8] sm:$0xff]
          %v6337 = vld [vmem:[%s10 + $0x10] sm:$0xff]
          %v6338 = vld [vmem:[%s10 + $0x18] sm:$0xff]
          %v6339 = vld [vmem:[%s10 + $0x20] sm:$0xff]
          %v6340 = vld [vmem:[%s10 + $0x28] sm:$0xff]
          %v6341 = vld [vmem:[%s10 + $0x30] sm:$0xff]
          %v6342 = vld [vmem:[%s10 + $0x38] sm:$0xff]
          %v6343 = vld [vmem:[%s10 + $0x40] sm:$0xff]
          %v6344 = vld [vmem:[%s10 + $0x48] sm:$0xff]
          %v6345 = vld [vmem:[%s10 + $0x50] sm:$0xff]
          %v6346 = vld [vmem:[%s10 + $0x58] sm:$0xff]
          %v6347 = vld [vmem:[%s10 + $0x60] sm:$0xff]
          %v6348 = vld [vmem:[%s10 + $0x68] sm:$0xff]
          %v6349 = vld [vmem:[%s10 + $0x70] sm:$0xff]
          %v6350 = vld [vmem:[%s10 + $0x78] sm:$0xff]
          %v6351 = vld [vmem:[%s10 + $0x80] sm:$0xff]
          %v6352 = vld [vmem:[%s10 + $0x88] sm:$0xff]
          %v6353 = vld [vmem:[%s10 + $0x90] sm:$0xff]
          %v6354 = vld [vmem:[%s10 + $0x98] sm:$0xff]
          %v6355 = vld [vmem:[%s10 + $0xa0] sm:$0xff]
          %v6356 = vld [vmem:[%s10 + $0xa8] sm:$0xff]
          %v6357 = vld [vmem:[%s10 + $0xb0] sm:$0xff]
          %v6358 = vld [vmem:[%s10 + $0xb8] sm:$0xff]
          %v6359 = vld [vmem:[%s10 + $0xc0] sm:$0xff]
          %v6360 = vld [vmem:[%s10 + $0xc8] sm:$0xff]
          %v6361 = vld [vmem:[%s10 + $0xd0] sm:$0xff]
          %v6362 = vld [vmem:[%s10 + $0xd8] sm:$0xff]
          %v6363 = vld [vmem:[%s10 + $0xe0] sm:$0xff]
          %v6364 = vld [vmem:[%s10 + $0xe8] sm:$0xff]
          %v6365 = vld [vmem:[%s10 + $0xf0] sm:$0xff]
          %v6366 = vld [vmem:[%s10 + $0xf8] sm:$0xff]
          %6368 = vset.pattern.permute.xlu0 0
          %6369 = vperm.xlu0 %6368, %v6335
          %v6370 = vpop.permute.xlu0 %6369
          %6373 = vset.pattern.permute.xlu0 0
          %6374 = vperm.xlu0 %6373, %v6336
          %v6375 = vpop.permute.xlu0 %6374
          %6378 = vset.pattern.permute.xlu0 0
          %6379 = vperm.xlu0 %6378, %v6337
          %v6380 = vpop.permute.xlu0 %6379
          %6383 = vset.pattern.permute.xlu0 0
          %6384 = vperm.xlu0 %6383, %v6338
          %v6385 = vpop.permute.xlu0 %6384
          %6388 = vset.pattern.permute.xlu0 0
          %6389 = vperm.xlu0 %6388, %v6339
          %v6390 = vpop.permute.xlu0 %6389
          %6393 = vset.pattern.permute.xlu0 0
          %6394 = vperm.xlu0 %6393, %v6340
          %v6395 = vpop.permute.xlu0 %6394
          %6398 = vset.pattern.permute.xlu0 0
          %6399 = vperm.xlu0 %6398, %v6341
          %v6400 = vpop.permute.xlu0 %6399
          %6403 = vset.pattern.permute.xlu0 0
          %6404 = vperm.xlu0 %6403, %v6342
          %v6405 = vpop.permute.xlu0 %6404
          %6408 = vset.pattern.permute.xlu0 0
          %6409 = vperm.xlu0 %6408, %v6343
          %v6410 = vpop.permute.xlu0 %6409
          %6413 = vset.pattern.permute.xlu0 0
          %6414 = vperm.xlu0 %6413, %v6344
          %v6415 = vpop.permute.xlu0 %6414
          %6418 = vset.pattern.permute.xlu0 0
          %6419 = vperm.xlu0 %6418, %v6345
          %v6420 = vpop.permute.xlu0 %6419
          %6423 = vset.pattern.permute.xlu0 0
          %6424 = vperm.xlu0 %6423, %v6346
          %v6425 = vpop.permute.xlu0 %6424
          %6428 = vset.pattern.permute.xlu0 0
          %6429 = vperm.xlu0 %6428, %v6347
          %v6430 = vpop.permute.xlu0 %6429
          %6433 = vset.pattern.permute.xlu0 0
          %6434 = vperm.xlu0 %6433, %v6348
          %v6435 = vpop.permute.xlu0 %6434
          %6438 = vset.pattern.permute.xlu0 0
          %6439 = vperm.xlu0 %6438, %v6349
          %v6440 = vpop.permute.xlu0 %6439
          %6443 = vset.pattern.permute.xlu0 0
          %6444 = vperm.xlu0 %6443, %v6350
          %v6445 = vpop.permute.xlu0 %6444
          %6448 = vset.pattern.permute.xlu0 0
          %6449 = vperm.xlu0 %6448, %v6351
          %v6450 = vpop.permute.xlu0 %6449
          %6453 = vset.pattern.permute.xlu0 0
          %6454 = vperm.xlu0 %6453, %v6352
          %v6455 = vpop.permute.xlu0 %6454
          %6458 = vset.pattern.permute.xlu0 0
          %6459 = vperm.xlu0 %6458, %v6353
          %v6460 = vpop.permute.xlu0 %6459
          %6463 = vset.pattern.permute.xlu0 0
          %6464 = vperm.xlu0 %6463, %v6354
          %v6465 = vpop.permute.xlu0 %6464
          %6468 = vset.pattern.permute.xlu0 0
          %6469 = vperm.xlu0 %6468, %v6355
          %v6470 = vpop.permute.xlu0 %6469
          %6473 = vset.pattern.permute.xlu0 0
          %6474 = vperm.xlu0 %6473, %v6356
          %v6475 = vpop.permute.xlu0 %6474
          %6478 = vset.pattern.permute.xlu0 0
          %6479 = vperm.xlu0 %6478, %v6357
          %v6480 = vpop.permute.xlu0 %6479
          %6483 = vset.pattern.permute.xlu0 0
          %6484 = vperm.xlu0 %6483, %v6358
          %v6485 = vpop.permute.xlu0 %6484
          %6488 = vset.pattern.permute.xlu0 0
          %6489 = vperm.xlu0 %6488, %v6359
          %v6490 = vpop.permute.xlu0 %6489
          %6493 = vset.pattern.permute.xlu0 0
          %6494 = vperm.xlu0 %6493, %v6360
          %v6495 = vpop.permute.xlu0 %6494
          %6498 = vset.pattern.permute.xlu0 0
          %6499 = vperm.xlu0 %6498, %v6361
          %v6500 = vpop.permute.xlu0 %6499
          %6503 = vset.pattern.permute.xlu0 0
          %6504 = vperm.xlu0 %6503, %v6362
          %v6505 = vpop.permute.xlu0 %6504
          %6508 = vset.pattern.permute.xlu0 0
          %6509 = vperm.xlu0 %6508, %v6363
          %v6510 = vpop.permute.xlu0 %6509
          %6513 = vset.pattern.permute.xlu0 0
          %6514 = vperm.xlu0 %6513, %v6364
          %v6515 = vpop.permute.xlu0 %6514
          %6518 = vset.pattern.permute.xlu0 0
          %6519 = vperm.xlu0 %6518, %v6365
          %v6520 = vpop.permute.xlu0 %6519
          %6523 = vset.pattern.permute.xlu0 0
          %6524 = vperm.xlu0 %6523, %v6366
          %v6525 = vpop.permute.xlu0 %6524
          %6527 = vmatprep.subr.mxu0 0.0
          %6528 = vmatpush1.msra.mxu0 %v6143
          %6529 = vmatprep.subr.mxu0 0.0
          %6530 = vmatpush1.msra.mxu0 %v6144
          %6531 = vmatprep.subr.mxu0 0.0
          %6532 = vmatpush1.msra.mxu0 %v6145
          %6533 = vmatprep.subr.mxu0 0.0
          %6534 = vmatpush1.msra.mxu0 %v6146
          %6535 = vmatprep.subr.mxu0 0.0
          %6536 = vmatpush1.msra.mxu0 %v6147
          %6537 = vmatprep.subr.mxu0 0.0
          %6538 = vmatpush1.msra.mxu0 %v6148
          %6539 = vmatprep.subr.mxu0 0.0
          %6540 = vmatpush1.msra.mxu0 %v6149
          %6541 = vmatprep.subr.mxu0 0.0
          %6542 = vmatpush1.msra.mxu0 %v6150
          %6543 = vmatprep.subr.mxu0 0.0
          %6544 = vmatpush1.msra.mxu0 %v6151
          %6545 = vmatprep.subr.mxu0 0.0
          %6546 = vmatpush1.msra.mxu0 %v6152
          %6547 = vmatprep.subr.mxu0 0.0
          %6548 = vmatpush1.msra.mxu0 %v6153
          %6549 = vmatprep.subr.mxu0 0.0
          %6550 = vmatpush1.msra.mxu0 %v6154
          %6551 = vmatprep.subr.mxu0 0.0
          %6552 = vmatpush1.msra.mxu0 %v6155
          %6553 = vmatprep.subr.mxu0 0.0
          %6554 = vmatpush1.msra.mxu0 %v6156
          %6555 = vmatprep.subr.mxu0 0.0
          %6556 = vmatpush1.msra.mxu0 %v6157
          %6557 = vmatprep.subr.mxu0 0.0
          %6558 = vmatpush1.msra.mxu0 %v6158
          %6559 = vmatprep.subr.mxu0 0.0
          %6560 = vmatpush1.msra.mxu0 %v6159
          %6561 = vmatprep.subr.mxu0 0.0
          %6562 = vmatpush1.msra.mxu0 %v6160
          %6563 = vmatprep.subr.mxu0 0.0
          %6564 = vmatpush1.msra.mxu0 %v6161
          %6565 = vmatprep.subr.mxu0 0.0
          %6566 = vmatpush1.msra.mxu0 %v6162
          %6567 = vmatprep.subr.mxu0 0.0
          %6568 = vmatpush1.msra.mxu0 %v6163
          %6569 = vmatprep.subr.mxu0 0.0
          %6570 = vmatpush1.msra.mxu0 %v6164
          %6571 = vmatprep.subr.mxu0 0.0
          %6572 = vmatpush1.msra.mxu0 %v6165
          %6573 = vmatprep.subr.mxu0 0.0
          %6574 = vmatpush1.msra.mxu0 %v6166
          %6575 = vmatprep.subr.mxu0 0.0
          %6576 = vmatpush1.msra.mxu0 %v6167
          %6577 = vmatprep.subr.mxu0 0.0
          %6578 = vmatpush1.msra.mxu0 %v6168
          %6579 = vmatprep.subr.mxu0 0.0
          %6580 = vmatpush1.msra.mxu0 %v6169
          %6581 = vmatprep.subr.mxu0 0.0
          %6582 = vmatpush1.msra.mxu0 %v6170
          %6583 = vmatprep.subr.mxu0 0.0
          %6584 = vmatpush1.msra.mxu0 %v6171
          %6585 = vmatprep.subr.mxu0 0.0
          %6586 = vmatpush1.msra.mxu0 %v6172
          %6587 = vmatprep.subr.mxu0 0.0
          %6588 = vmatpush1.msra.mxu0 %v6173
          %6589 = vmatprep.subr.mxu0 0.0
          %6590 = vmatpush1.msra.mxu0 %v6174
          %6591 = vmatprep.mubr.f32.mxu0 %v6208
          %6592 = vmatmul.mubr.f32.gmra.mrb[0].mxu0 %v6207
          %v6593 = vpop.f32.mrb[0].mxu0
          %v6594 = vadd.f32 %v6370, %v6593
          %v6595 = vpop.f32.mrb[0].mxu0
          %6596 = vmatprep.mubr.f32.mxu0 %v6212
          %6597 = vmatmul.mubr.f32.gmra.mrb[0].mxu0 %v6211
          %v6598 = vpop.f32.mrb[0].mxu0
          %v6599 = vadd.f32 %v6375, %v6598
          %v6600 = vpop.f32.mrb[0].mxu0
          %6601 = vmatprep.mubr.f32.mxu0 %v6216
          %6602 = vmatmul.mubr.f32.gmra.mrb[0].mxu0 %v6215
          %v6603 = vpop.f32.mrb[0].mxu0
          %v6604 = vadd.f32 %v6380, %v6603
          %v6605 = vpop.f32.mrb[0].mxu0
          %6606 = vmatprep.mubr.f32.mxu0 %v6220
          %6607 = vmatmul.mubr.f32.gmra.mrb[0].mxu0 %v6219
          %v6608 = vpop.f32.mrb[0].mxu0
          %v6609 = vadd.f32 %v6385, %v6608
          %v6610 = vpop.f32.mrb[0].mxu0
          %6611 = vmatprep.mubr.f32.mxu0 %v6224
          %6612 = vmatmul.mubr.f32.gmra.mrb[0].mxu0 %v6223
          %v6613 = vpop.f32.mrb[0].mxu0
          %v6614 = vadd.f32 %v6390, %v6613
          %v6615 = vpop.f32.mrb[0].mxu0
          %6616 = vmatprep.mubr.f32.mxu0 %v6228
          %6617 = vmatmul.mubr.f32.gmra.mrb[0].mxu0 %v6227
          %v6618 = vpop.f32.mrb[0].mxu0
          %v6619 = vadd.f32 %v6395, %v6618
          %v6620 = vpop.f32.mrb[0].mxu0
          %6621 = vmatprep.mubr.f32.mxu0 %v6232
          %6622 = vmatmul.mubr.f32.gmra.mrb[0].mxu0 %v6231
          %v6623 = vpop.f32.mrb[0].mxu0
          %v6624 = vadd.f32 %v6400, %v6623
          %v6625 = vpop.f32.mrb[0].mxu0
          %6626 = vmatprep.mubr.f32.mxu0 %v6236
          %6627 = vmatmul.mubr.f32.gmra.mrb[0].mxu0 %v6235
          %v6628 = vpop.f32.mrb[0].mxu0
          %v6629 = vadd.f32 %v6405, %v6628
          %v6630 = vpop.f32.mrb[0].mxu0
          %6631 = vmatprep.mubr.f32.mxu0 %v6240
          %6632 = vmatmul.mubr.f32.gmra.mrb[0].mxu0 %v6239
          %v6633 = vpop.f32.mrb[0].mxu0
          %v6634 = vadd.f32 %v6410, %v6633
          %v6635 = vpop.f32.mrb[0].mxu0
          %6636 = vmatprep.mubr.f32.mxu0 %v6244
          %6637 = vmatmul.mubr.f32.gmra.mrb[0].mxu0 %v6243
          %v6638 = vpop.f32.mrb[0].mxu0
          %v6639 = vadd.f32 %v6415, %v6638
          %v6640 = vpop.f32.mrb[0].mxu0
          %6641 = vmatprep.mubr.f32.mxu0 %v6248
          %6642 = vmatmul.mubr.f32.gmra.mrb[0].mxu0 %v6247
          %v6643 = vpop.f32.mrb[0].mxu0
          %v6644 = vadd.f32 %v6420, %v6643
          %v6645 = vpop.f32.mrb[0].mxu0
          %6646 = vmatprep.mubr.f32.mxu0 %v6252
          %6647 = vmatmul.mubr.f32.gmra.mrb[0].mxu0 %v6251
          %v6648 = vpop.f32.mrb[0].mxu0
          %v6649 = vadd.f32 %v6425, %v6648
          %v6650 = vpop.f32.mrb[0].mxu0
          %6651 = vmatprep.mubr.f32.mxu0 %v6256
          %6652 = vmatmul.mubr.f32.gmra.mrb[0].mxu0 %v6255
          %v6653 = vpop.f32.mrb[0].mxu0
          %v6654 = vadd.f32 %v6430, %v6653
          %v6655 = vpop.f32.mrb[0].mxu0
          %6656 = vmatprep.mubr.f32.mxu0 %v6260
          %6657 = vmatmul.mubr.f32.gmra.mrb[0].mxu0 %v6259
          %v6658 = vpop.f32.mrb[0].mxu0
          %v6659 = vadd.f32 %v6435, %v6658
          %v6660 = vpop.f32.mrb[0].mxu0
          %6661 = vmatprep.mubr.f32.mxu0 %v6264
          %6662 = vmatmul.mubr.f32.gmra.mrb[0].mxu0 %v6263
          %v6663 = vpop.f32.mrb[0].mxu0
          %v6664 = vadd.f32 %v6440, %v6663
          %v6665 = vpop.f32.mrb[0].mxu0
          %6666 = vmatprep.mubr.f32.mxu0 %v6268
          %6667 = vmatmul.mubr.f32.gmra.mrb[0].mxu0 %v6267
          %v6668 = vpop.f32.mrb[0].mxu0
          %v6669 = vadd.f32 %v6445, %v6668
          %v6670 = vpop.f32.mrb[0].mxu0
          %6671 = vmatprep.mubr.f32.mxu0 %v6272
          %6672 = vmatmul.mubr.f32.gmra.mrb[0].mxu0 %v6271
          %v6673 = vpop.f32.mrb[0].mxu0
          %v6674 = vadd.f32 %v6450, %v6673
          %v6675 = vpop.f32.mrb[0].mxu0
          %6676 = vmatprep.mubr.f32.mxu0 %v6276
          %6677 = vmatmul.mubr.f32.gmra.mrb[0].mxu0 %v6275
          %v6678 = vpop.f32.mrb[0].mxu0
          %v6679 = vadd.f32 %v6455, %v6678
          %v6680 = vpop.f32.mrb[0].mxu0
          %6681 = vmatprep.mubr.f32.mxu0 %v6280
          %6682 = vmatmul.mubr.f32.gmra.mrb[0].mxu0 %v6279
          %v6683 = vpop.f32.mrb[0].mxu0
          %v6684 = vadd.f32 %v6460, %v6683
          %v6685 = vpop.f32.mrb[0].mxu0
          %6686 = vmatprep.mubr.f32.mxu0 %v6284
          %6687 = vmatmul.mubr.f32.gmra.mrb[0].mxu0 %v6283
          %v6688 = vpop.f32.mrb[0].mxu0
          %v6689 = vadd.f32 %v6465, %v6688
          %v6690 = vpop.f32.mrb[0].mxu0
          %6691 = vmatprep.mubr.f32.mxu0 %v6288
          %6692 = vmatmul.mubr.f32.gmra.mrb[0].mxu0 %v6287
          %v6693 = vpop.f32.mrb[0].mxu0
          %v6694 = vadd.f32 %v6470, %v6693
          %v6695 = vpop.f32.mrb[0].mxu0
          %6696 = vmatprep.mubr.f32.mxu0 %v6292
          %6697 = vmatmul.mubr.f32.gmra.mrb[0].mxu0 %v6291
          %v6698 = vpop.f32.mrb[0].mxu0
          %v6699 = vadd.f32 %v6475, %v6698
          %v6700 = vpop.f32.mrb[0].mxu0
          %6701 = vmatprep.mubr.f32.mxu0 %v6296
          %6702 = vmatmul.mubr.f32.gmra.mrb[0].mxu0 %v6295
          %v6703 = vpop.f32.mrb[0].mxu0
          %v6704 = vadd.f32 %v6480, %v6703
          %v6705 = vpop.f32.mrb[0].mxu0
          %6706 = vmatprep.mubr.f32.mxu0 %v6300
          %6707 = vmatmul.mubr.f32.gmra.mrb[0].mxu0 %v6299
          %v6708 = vpop.f32.mrb[0].mxu0
          %v6709 = vadd.f32 %v6485, %v6708
          %v6710 = vpop.f32.mrb[0].mxu0
          %6711 = vmatprep.mubr.f32.mxu0 %v6304
          %6712 = vmatmul.mubr.f32.gmra.mrb[0].mxu0 %v6303
          %v6713 = vpop.f32.mrb[0].mxu0
          %v6714 = vadd.f32 %v6490, %v6713
          %v6715 = vpop.f32.mrb[0].mxu0
          %6716 = vmatprep.mubr.f32.mxu0 %v6308
          %6717 = vmatmul.mubr.f32.gmra.mrb[0].mxu0 %v6307
          %v6718 = vpop.f32.mrb[0].mxu0
          %v6719 = vadd.f32 %v6495, %v6718
          %v6720 = vpop.f32.mrb[0].mxu0
          %6721 = vmatprep.mubr.f32.mxu0 %v6312
          %6722 = vmatmul.mubr.f32.gmra.mrb[0].mxu0 %v6311
          %v6723 = vpop.f32.mrb[0].mxu0
          %v6724 = vadd.f32 %v6500, %v6723
          %v6725 = vpop.f32.mrb[0].mxu0
          %6726 = vmatprep.mubr.f32.mxu0 %v6316
          %6727 = vmatmul.mubr.f32.gmra.mrb[0].mxu0 %v6315
          %v6728 = vpop.f32.mrb[0].mxu0
          %v6729 = vadd.f32 %v6505, %v6728
          %v6730 = vpop.f32.mrb[0].mxu0
          %6731 = vmatprep.mubr.f32.mxu0 %v6320
          %6732 = vmatmul.mubr.f32.gmra.mrb[0].mxu0 %v6319
          %v6733 = vpop.f32.mrb[0].mxu0
          %v6734 = vadd.f32 %v6510, %v6733
          %v6735 = vpop.f32.mrb[0].mxu0
          %6736 = vmatprep.mubr.f32.mxu0 %v6324
          %6737 = vmatmul.mubr.f32.gmra.mrb[0].mxu0 %v6323
          %v6738 = vpop.f32.mrb[0].mxu0
          %v6739 = vadd.f32 %v6515, %v6738
          %v6740 = vpop.f32.mrb[0].mxu0
          %6741 = vmatprep.mubr.f32.mxu0 %v6328
          %6742 = vmatmul.mubr.f32.gmra.mrb[0].mxu0 %v6327
          %v6743 = vpop.f32.mrb[0].mxu0
          %v6744 = vadd.f32 %v6520, %v6743
          %v6745 = vpop.f32.mrb[0].mxu0
          %6746 = vmatprep.mubr.f32.mxu0 %v6332
          %6747 = vmatmul.mubr.f32.gmra.mrb[0].mxu0 %v6331
          %v6748 = vpop.f32.mrb[0].mxu0
          %v6749 = vadd.f32 %v6525, %v6748
          %v6750 = vpop.f32.mrb[0].mxu0
          %6751 = vdwg.mxu0
          %6752 = vmatprep.subr.mxu0 0.0
          %6753 = vmatpush1.msra.mxu0 %v6175
          %6754 = vmatprep.subr.mxu0 0.0
          %6755 = vmatpush1.msra.mxu0 %v6176
          %6756 = vmatprep.subr.mxu0 0.0
          %6757 = vmatpush1.msra.mxu0 %v6177
          %6758 = vmatprep.subr.mxu0 0.0
          %6759 = vmatpush1.msra.mxu0 %v6178
          %6760 = vmatprep.subr.mxu0 0.0
          %6761 = vmatpush1.msra.mxu0 %v6179
          %6762 = vmatprep.subr.mxu0 0.0
          %6763 = vmatpush1.msra.mxu0 %v6180
          %6764 = vmatprep.subr.mxu0 0.0
          %6765 = vmatpush1.msra.mxu0 %v6181
          %6766 = vmatprep.subr.mxu0 0.0
          %6767 = vmatpush1.msra.mxu0 %v6182
          %6768 = vmatprep.subr.mxu0 0.0
          %6769 = vmatpush1.msra.mxu0 %v6183
          %6770 = vmatprep.subr.mxu0 0.0
          %6771 = vmatpush1.msra.mxu0 %v6184
          %6772 = vmatprep.subr.mxu0 0.0
          %6773 = vmatpush1.msra.mxu0 %v6185
          %6774 = vmatprep.subr.mxu0 0.0
          %6775 = vmatpush1.msra.mxu0 %v6186
          %6776 = vmatprep.subr.mxu0 0.0
          %6777 = vmatpush1.msra.mxu0 %v6187
          %6778 = vmatprep.subr.mxu0 0.0
          %6779 = vmatpush1.msra.mxu0 %v6188
          %6780 = vmatprep.subr.mxu0 0.0
          %6781 = vmatpush1.msra.mxu0 %v6189
          %6782 = vmatprep.subr.mxu0 0.0
          %6783 = vmatpush1.msra.mxu0 %v6190
          %6784 = vmatprep.subr.mxu0 0.0
          %6785 = vmatpush1.msra.mxu0 %v6191
          %6786 = vmatprep.subr.mxu0 0.0
          %6787 = vmatpush1.msra.mxu0 %v6192
          %6788 = vmatprep.subr.mxu0 0.0
          %6789 = vmatpush1.msra.mxu0 %v6193
          %6790 = vmatprep.subr.mxu0 0.0
          %6791 = vmatpush1.msra.mxu0 %v6194
          %6792 = vmatprep.subr.mxu0 0.0
          %6793 = vmatpush1.msra.mxu0 %v6195
          %6794 = vmatprep.subr.mxu0 0.0
          %6795 = vmatpush1.msra.mxu0 %v6196
          %6796 = vmatprep.subr.mxu0 0.0
          %6797 = vmatpush1.msra.mxu0 %v6197
          %6798 = vmatprep.subr.mxu0 0.0
          %6799 = vmatpush1.msra.mxu0 %v6198
          %6800 = vmatprep.subr.mxu0 0.0
          %6801 = vmatpush1.msra.mxu0 %v6199
          %6802 = vmatprep.subr.mxu0 0.0
          %6803 = vmatpush1.msra.mxu0 %v6200
          %6804 = vmatprep.subr.mxu0 0.0
          %6805 = vmatpush1.msra.mxu0 %v6201
          %6806 = vmatprep.subr.mxu0 0.0
          %6807 = vmatpush1.msra.mxu0 %v6202
          %6808 = vmatprep.subr.mxu0 0.0
          %6809 = vmatpush1.msra.mxu0 %v6203
          %6810 = vmatprep.subr.mxu0 0.0
          %6811 = vmatpush1.msra.mxu0 %v6204
          %6812 = vmatprep.subr.mxu0 0.0
          %6813 = vmatpush1.msra.mxu0 %v6205
          %6814 = vmatprep.subr.mxu0 0.0
          %6815 = vmatpush1.msra.mxu0 %v6206
          %6816 = vmatprep.mubr.f32.mxu0 %v6210
          %6817 = vmatmul.mubr.f32.gmra.mrb[0].mxu0 %v6209
          %v6818 = vpop.f32.mrb[0].mxu0
          %v6819 = vadd.f32 %v6594, %v6818
          %v6820 = vpop.f32.mrb[0].mxu0
          %6821 = vmatprep.mubr.f32.mxu0 %v6214
          %6822 = vmatmul.mubr.f32.gmra.mrb[0].mxu0 %v6213
          %v6823 = vpop.f32.mrb[0].mxu0
          %v6824 = vadd.f32 %v6599, %v6823
          %v6825 = vpop.f32.mrb[0].mxu0
          %6826 = vmatprep.mubr.f32.mxu0 %v6218
          %6827 = vmatmul.mubr.f32.gmra.mrb[0].mxu0 %v6217
          %v6828 = vpop.f32.mrb[0].mxu0
          %v6829 = vadd.f32 %v6604, %v6828
          %v6830 = vpop.f32.mrb[0].mxu0
          %6831 = vmatprep.mubr.f32.mxu0 %v6222
          %6832 = vmatmul.mubr.f32.gmra.mrb[0].mxu0 %v6221
          %v6833 = vpop.f32.mrb[0].mxu0
          %v6834 = vadd.f32 %v6609, %v6833
          %v6835 = vpop.f32.mrb[0].mxu0
          %6836 = vmatprep.mubr.f32.mxu0 %v6226
          %6837 = vmatmul.mubr.f32.gmra.mrb[0].mxu0 %v6225
          %v6838 = vpop.f32.mrb[0].mxu0
          %v6839 = vadd.f32 %v6614, %v6838
          %v6840 = vpop.f32.mrb[0].mxu0
          %6841 = vmatprep.mubr.f32.mxu0 %v6230
          %6842 = vmatmul.mubr.f32.gmra.mrb[0].mxu0 %v6229
          %v6843 = vpop.f32.mrb[0].mxu0
          %v6844 = vadd.f32 %v6619, %v6843
          %v6845 = vpop.f32.mrb[0].mxu0
          %6846 = vmatprep.mubr.f32.mxu0 %v6234
          %6847 = vmatmul.mubr.f32.gmra.mrb[0].mxu0 %v6233
          %v6848 = vpop.f32.mrb[0].mxu0
          %v6849 = vadd.f32 %v6624, %v6848
          %v6850 = vpop.f32.mrb[0].mxu0
          %6851 = vmatprep.mubr.f32.mxu0 %v6238
          %6852 = vmatmul.mubr.f32.gmra.mrb[0].mxu0 %v6237
          %v6853 = vpop.f32.mrb[0].mxu0
          %v6854 = vadd.f32 %v6629, %v6853
          %v6855 = vpop.f32.mrb[0].mxu0
          %6856 = vmatprep.mubr.f32.mxu0 %v6242
          %6857 = vmatmul.mubr.f32.gmra.mrb[0].mxu0 %v6241
          %v6858 = vpop.f32.mrb[0].mxu0
          %v6859 = vadd.f32 %v6634, %v6858
          %v6860 = vpop.f32.mrb[0].mxu0
          %6861 = vmatprep.mubr.f32.mxu0 %v6246
          %6862 = vmatmul.mubr.f32.gmra.mrb[0].mxu0 %v6245
          %v6863 = vpop.f32.mrb[0].mxu0
          %v6864 = vadd.f32 %v6639, %v6863
          %v6865 = vpop.f32.mrb[0].mxu0
          %6866 = vmatprep.mubr.f32.mxu0 %v6250
          %6867 = vmatmul.mubr.f32.gmra.mrb[0].mxu0 %v6249
          %v6868 = vpop.f32.mrb[0].mxu0
          %v6869 = vadd.f32 %v6644, %v6868
          %v6870 = vpop.f32.mrb[0].mxu0
          %6871 = vmatprep.mubr.f32.mxu0 %v6254
          %6872 = vmatmul.mubr.f32.gmra.mrb[0].mxu0 %v6253
          %v6873 = vpop.f32.mrb[0].mxu0
          %v6874 = vadd.f32 %v6649, %v6873
          %v6875 = vpop.f32.mrb[0].mxu0
          %6876 = vmatprep.mubr.f32.mxu0 %v6258
          %6877 = vmatmul.mubr.f32.gmra.mrb[0].mxu0 %v6257
          %v6878 = vpop.f32.mrb[0].mxu0
          %v6879 = vadd.f32 %v6654, %v6878
          %v6880 = vpop.f32.mrb[0].mxu0
          %6881 = vmatprep.mubr.f32.mxu0 %v6262
          %6882 = vmatmul.mubr.f32.gmra.mrb[0].mxu0 %v6261
          %v6883 = vpop.f32.mrb[0].mxu0
          %v6884 = vadd.f32 %v6659, %v6883
          %v6885 = vpop.f32.mrb[0].mxu0
          %6886 = vmatprep.mubr.f32.mxu0 %v6266
          %6887 = vmatmul.mubr.f32.gmra.mrb[0].mxu0 %v6265
          %v6888 = vpop.f32.mrb[0].mxu0
          %v6889 = vadd.f32 %v6664, %v6888
          %v6890 = vpop.f32.mrb[0].mxu0
          %6891 = vmatprep.mubr.f32.mxu0 %v6270
          %6892 = vmatmul.mubr.f32.gmra.mrb[0].mxu0 %v6269
          %v6893 = vpop.f32.mrb[0].mxu0
          %v6894 = vadd.f32 %v6669, %v6893
          %v6895 = vpop.f32.mrb[0].mxu0
          %6896 = vmatprep.mubr.f32.mxu0 %v6274
          %6897 = vmatmul.mubr.f32.gmra.mrb[0].mxu0 %v6273
          %v6898 = vpop.f32.mrb[0].mxu0
          %v6899 = vadd.f32 %v6674, %v6898
          %v6900 = vpop.f32.mrb[0].mxu0
          %6901 = vmatprep.mubr.f32.mxu0 %v6278
          %6902 = vmatmul.mubr.f32.gmra.mrb[0].mxu0 %v6277
          %v6903 = vpop.f32.mrb[0].mxu0
          %v6904 = vadd.f32 %v6679, %v6903
          %v6905 = vpop.f32.mrb[0].mxu0
          %6906 = vmatprep.mubr.f32.mxu0 %v6282
          %6907 = vmatmul.mubr.f32.gmra.mrb[0].mxu0 %v6281
          %v6908 = vpop.f32.mrb[0].mxu0
          %v6909 = vadd.f32 %v6684, %v6908
          %v6910 = vpop.f32.mrb[0].mxu0
          %6911 = vmatprep.mubr.f32.mxu0 %v6286
          %6912 = vmatmul.mubr.f32.gmra.mrb[0].mxu0 %v6285
          %v6913 = vpop.f32.mrb[0].mxu0
          %v6914 = vadd.f32 %v6689, %v6913
          %v6915 = vpop.f32.mrb[0].mxu0
          %6916 = vmatprep.mubr.f32.mxu0 %v6290
          %6917 = vmatmul.mubr.f32.gmra.mrb[0].mxu0 %v6289
          %v6918 = vpop.f32.mrb[0].mxu0
          %v6919 = vadd.f32 %v6694, %v6918
          %v6920 = vpop.f32.mrb[0].mxu0
          %6921 = vmatprep.mubr.f32.mxu0 %v6294
          %6922 = vmatmul.mubr.f32.gmra.mrb[0].mxu0 %v6293
          %v6923 = vpop.f32.mrb[0].mxu0
          %v6924 = vadd.f32 %v6699, %v6923
          %v6925 = vpop.f32.mrb[0].mxu0
          %6926 = vmatprep.mubr.f32.mxu0 %v6298
          %6927 = vmatmul.mubr.f32.gmra.mrb[0].mxu0 %v6297
          %v6928 = vpop.f32.mrb[0].mxu0
          %v6929 = vadd.f32 %v6704, %v6928
          %v6930 = vpop.f32.mrb[0].mxu0
          %6931 = vmatprep.mubr.f32.mxu0 %v6302
          %6932 = vmatmul.mubr.f32.gmra.mrb[0].mxu0 %v6301
          %v6933 = vpop.f32.mrb[0].mxu0
          %v6934 = vadd.f32 %v6709, %v6933
          %v6935 = vpop.f32.mrb[0].mxu0
          %6936 = vmatprep.mubr.f32.mxu0 %v6306
          %6937 = vmatmul.mubr.f32.gmra.mrb[0].mxu0 %v6305
          %v6938 = vpop.f32.mrb[0].mxu0
          %v6939 = vadd.f32 %v6714, %v6938
          %v6940 = vpop.f32.mrb[0].mxu0
          %6941 = vmatprep.mubr.f32.mxu0 %v6310
          %6942 = vmatmul.mubr.f32.gmra.mrb[0].mxu0 %v6309
          %v6943 = vpop.f32.mrb[0].mxu0
          %v6944 = vadd.f32 %v6719, %v6943
          %v6945 = vpop.f32.mrb[0].mxu0
          %6946 = vmatprep.mubr.f32.mxu0 %v6314
          %6947 = vmatmul.mubr.f32.gmra.mrb[0].mxu0 %v6313
          %v6948 = vpop.f32.mrb[0].mxu0
          %v6949 = vadd.f32 %v6724, %v6948
          %v6950 = vpop.f32.mrb[0].mxu0
          %6951 = vmatprep.mubr.f32.mxu0 %v6318
          %6952 = vmatmul.mubr.f32.gmra.mrb[0].mxu0 %v6317
          %v6953 = vpop.f32.mrb[0].mxu0
          %v6954 = vadd.f32 %v6729, %v6953
          %v6955 = vpop.f32.mrb[0].mxu0
          %6956 = vmatprep.mubr.f32.mxu0 %v6322
          %6957 = vmatmul.mubr.f32.gmra.mrb[0].mxu0 %v6321
          %v6958 = vpop.f32.mrb[0].mxu0
          %v6959 = vadd.f32 %v6734, %v6958
          %v6960 = vpop.f32.mrb[0].mxu0
          %6961 = vmatprep.mubr.f32.mxu0 %v6326
          %6962 = vmatmul.mubr.f32.gmra.mrb[0].mxu0 %v6325
          %v6963 = vpop.f32.mrb[0].mxu0
          %v6964 = vadd.f32 %v6739, %v6963
          %v6965 = vpop.f32.mrb[0].mxu0
          %6966 = vmatprep.mubr.f32.mxu0 %v6330
          %6967 = vmatmul.mubr.f32.gmra.mrb[0].mxu0 %v6329
          %v6968 = vpop.f32.mrb[0].mxu0
          %v6969 = vadd.f32 %v6744, %v6968
          %v6970 = vpop.f32.mrb[0].mxu0
          %6971 = vmatprep.mubr.f32.mxu0 %v6334
          %6972 = vmatmul.mubr.f32.gmra.mrb[0].mxu0 %v6333
          %v6973 = vpop.f32.mrb[0].mxu0
          %v6974 = vadd.f32 %v6749, %v6973
          %v6975 = vpop.f32.mrb[0].mxu0
          %6976 = vdwg.mxu0
          %v6977 = vmax.f32 %v6819, 0.0
          %v6978 = vmax.f32 %v6824, 0.0
          %v6979 = vmax.f32 %v6829, 0.0
          %v6980 = vmax.f32 %v6834, 0.0
          %v6981 = vmax.f32 %v6839, 0.0
          %v6982 = vmax.f32 %v6844, 0.0
          %v6983 = vmax.f32 %v6849, 0.0
          %v6984 = vmax.f32 %v6854, 0.0
          %v6985 = vmax.f32 %v6859, 0.0
          %v6986 = vmax.f32 %v6864, 0.0
          %v6987 = vmax.f32 %v6869, 0.0
          %v6988 = vmax.f32 %v6874, 0.0
          %v6989 = vmax.f32 %v6879, 0.0
          %v6990 = vmax.f32 %v6884, 0.0
          %v6991 = vmax.f32 %v6889, 0.0
          %v6992 = vmax.f32 %v6894, 0.0
          %v6993 = vmax.f32 %v6899, 0.0
          %v6994 = vmax.f32 %v6904, 0.0
          %v6995 = vmax.f32 %v6909, 0.0
          %v6996 = vmax.f32 %v6914, 0.0
          %v6997 = vmax.f32 %v6919, 0.0
          %v6998 = vmax.f32 %v6924, 0.0
          %v6999 = vmax.f32 %v6929, 0.0
          %v7000 = vmax.f32 %v6934, 0.0
          %v7001 = vmax.f32 %v6939, 0.0
          %v7002 = vmax.f32 %v6944, 0.0
          %v7003 = vmax.f32 %v6949, 0.0
          %v7004 = vmax.f32 %v6954, 0.0
          %v7005 = vmax.f32 %v6959, 0.0
          %v7006 = vmax.f32 %v6964, 0.0
          %v7007 = vmax.f32 %v6969, 0.0
          %v7008 = vmax.f32 %v6974, 0.0
          %v7009 = vld [vmem:[#allocation8] sm:$0xff]
          %v7010 = vld [vmem:[#allocation8 + $0x8] sm:$0xff]
          %v7011 = vld [vmem:[#allocation8 + $0x10] sm:$0x1]
          %v7012 = vld [vmem:[#allocation8 + $0x18] sm:$0x1]
          %v7013 = vld [vmem:[%s12] sm:$0xff]
          %v7014 = vld [vmem:[%s12 + $0x8] sm:$0x1]
          %7016 = vset.pattern.permute.xlu0 0
          %7017 = vperm.xlu0 %7016, %v7013
          %v7018 = vpop.permute.xlu0 %7017
          %7021 = vset.pattern.permute.xlu0 0
          %7022 = vperm.xlu0 %7021, %v7014
          %v7023 = vpop.permute.xlu0 %7022
          %7025 = vmatprep.subr.mxu0 0.0
          %7026 = vmatpush1.msra.mxu0 %v6977
          %7027 = vmatprep.subr.mxu0 0.0
          %7028 = vmatpush1.msra.mxu0 %v6978
          %7029 = vmatprep.subr.mxu0 0.0
          %7030 = vmatpush1.msra.mxu0 %v6979
          %7031 = vmatprep.subr.mxu0 0.0
          %7032 = vmatpush1.msra.mxu0 %v6980
          %7033 = vmatprep.subr.mxu0 0.0
          %7034 = vmatpush1.msra.mxu0 %v6981
          %7035 = vmatprep.subr.mxu0 0.0
          %7036 = vmatpush1.msra.mxu0 %v6982
          %7037 = vmatprep.subr.mxu0 0.0
          %7038 = vmatpush1.msra.mxu0 %v6983
          %7039 = vmatprep.subr.mxu0 0.0
          %7040 = vmatpush1.msra.mxu0 %v6984
          %7041 = vmatprep.subr.mxu0 0.0
          %7042 = vmatpush1.msra.mxu0 %v6985
          %7043 = vmatprep.subr.mxu0 0.0
          %7044 = vmatpush1.msra.mxu0 %v6986
          %7045 = vmatprep.subr.mxu0 0.0
          %7046 = vmatpush1.msra.mxu0 %v6987
          %7047 = vmatprep.subr.mxu0 0.0
          %7048 = vmatpush1.msra.mxu0 %v6988
          %7049 = vmatprep.subr.mxu0 0.0
          %7050 = vmatpush1.msra.mxu0 %v6989
          %7051 = vmatprep.subr.mxu0 0.0
          %7052 = vmatpush1.msra.mxu0 %v6990
          %7053 = vmatprep.subr.mxu0 0.0
          %7054 = vmatpush1.msra.mxu0 %v6991
          %7055 = vmatprep.subr.mxu0 0.0
          %7056 = vmatpush1.msra.mxu0 %v6992
          %7057 = vmatprep.subr.mxu0 0.0
          %7058 = vmatpush1.msra.mxu0 %v6993
          %7059 = vmatprep.subr.mxu0 0.0
          %7060 = vmatpush1.msra.mxu0 %v6994
          %7061 = vmatprep.subr.mxu0 0.0
          %7062 = vmatpush1.msra.mxu0 %v6995
          %7063 = vmatprep.subr.mxu0 0.0
          %7064 = vmatpush1.msra.mxu0 %v6996
          %7065 = vmatprep.subr.mxu0 0.0
          %7066 = vmatpush1.msra.mxu0 %v6997
          %7067 = vmatprep.subr.mxu0 0.0
          %7068 = vmatpush1.msra.mxu0 %v6998
          %7069 = vmatprep.subr.mxu0 0.0
          %7070 = vmatpush1.msra.mxu0 %v6999
          %7071 = vmatprep.subr.mxu0 0.0
          %7072 = vmatpush1.msra.mxu0 %v7000
          %7073 = vmatprep.subr.mxu0 0.0
          %7074 = vmatpush1.msra.mxu0 %v7001
          %7075 = vmatprep.subr.mxu0 0.0
          %7076 = vmatpush1.msra.mxu0 %v7002
          %7077 = vmatprep.subr.mxu0 0.0
          %7078 = vmatpush1.msra.mxu0 %v7003
          %7079 = vmatprep.subr.mxu0 0.0
          %7080 = vmatpush1.msra.mxu0 %v7004
          %7081 = vmatprep.subr.mxu0 0.0
          %7082 = vmatpush1.msra.mxu0 %v7005
          %7083 = vmatprep.subr.mxu0 0.0
          %7084 = vmatpush1.msra.mxu0 %v7006
          %7085 = vmatprep.subr.mxu0 0.0
          %7086 = vmatpush1.msra.mxu0 %v7007
          %7087 = vmatprep.subr.mxu0 0.0
          %7088 = vmatpush1.msra.mxu0 %v7008
          %7089 = vmatprep.mubr.f32.mxu0 %v7010
          %7090 = vmatmul.mubr.f32.gmra.mrb[0].mxu0 %v7009
          %v7091 = vpop.f32.mrb[0].mxu0
          %v7092 = vadd.f32 %v7018, %v7091
          %v7093 = vpop.f32.mrb[0].mxu0
          %7094 = vmatprep.mubr.f32.mxu0 %v7012
          %7095 = vmatmul.mubr.f32.gmra.mrb[0].mxu0 %v7011
          %v7096 = vpop.f32.mrb[0].mxu0
          %v7097 = vadd.f32 %v7023, %v7096
          %v7098 = vpop.f32.mrb[0].mxu0
          %7099 = vdwg.mxu0
          %7100 = vst [vmem:[%s522] sm:$0xff] %v7092
          %7101 = vst [vmem:[%s522 + $0x8] sm:$0x1] %v7097
        $region96: #{stn3d_forward.1} parent=71 // pred_fallthru
          _
        %p7102 = scmp.lt.s32.totalorder %s31, 1
        %s7103 = scalar_select %p7102, %s31, 1
        %s7104 = smul.addr %s7103, 2
        %s7105 = smul.addr %s7104, 8
        %s7106 = scalar_lea.vmem %s13, %s7105
        // Predicated region
        $region97: #{stn3d_forward.1} parent=71 // pred_check
          %p7107 = pneg %p337
        $region98: #{stn3d_forward.1} parent=71 // pred_check_branch
          %7109 = sbr.rel (%p7107) target = $region100
        $region99: #{stn3d_forward.1} parent=71 // pred_region
          _
        $region100: #{stn3d_forward.1} parent=71 // pred_fallthru
          _
      $region72: #{stn3d_forward.1} parent=5 // pred_fallthru
        _
      %p7110 = scmp.le.s32.totalorder 2, %s22
      // Predicated region
      $region101: #{stn3d_forward.1} parent=5 // pred_check
        %p7111 = pneg %p7110
      $region102: #{stn3d_forward.1} parent=5 // pred_check_branch
        %7113 = sbr.rel (%p7111) target = $region104
      $region103: #{stn3d_forward.1} parent=5 // pred_region
        %s7114 = ssub.s32 %s22, 2
        // Predicated region
        $region105: #{stn3d_forward.1} parent=103 // pred_check
          %p7115 = pneg %p343
        $region106: #{stn3d_forward.1} parent=103 // pred_check_branch
          %7117 = sbr.rel (%p7115) target = $region108
        $region107: #{stn3d_forward.1} parent=103 // pred_region
          %p7118 = scmp.lt.s32.totalorder %s33, 1
          %s7119 = scalar_select %p7118, %s33, 1
          %s7120 = smul.addr %s7119, 2
          %s7121 = smul.addr %s7120, 8
          %s7122 = scalar_lea.vmem %s13, %s7121
        $region108: #{stn3d_forward.1} parent=103 // pred_fallthru
          _
      $region104: #{stn3d_forward.1} parent=5 // pred_fallthru
        _
    $region6: #{stn3d_forward.1} parent=1 // loop_footer
      %s26 = sadd.s32 1, %s22
    $region7: #{stn3d_forward.1} parent=1 // loop_footer_branch
      %21 = sbr.rel target = $region3
    $region8: #{stn3d_forward.1} parent=1 // loop_exit
      _
    %7123 = vsyncpa [#allocation4], 1
    %s7124 = scalar_lea.sflag [#allocation4], 1
    %7125 = vsyncpa %s7124, 1
    %7126 = vsyncpa [#allocation6], 1
    %7127 = vsyncpa [#allocation9], 1

</llo_original>
